<compile_context>
chip_gen: v7x
topology: tpu7x:2x2x1
jax: 0.10.0
libtpu: 0.0.40
codegen_flags: <defaults>
</compile_context>

<pallas_src>
import functools
import math

import numpy as np
import jax
import jax.numpy as jnp
from jax import lax
from jax.experimental import pallas as pl
from jax.experimental.pallas import tpu as pltpu


# ----------------------------- configuration --------------------------------
OPTIONS = dict(
    cnn_N_filt=[8, 8],
    cnn_len_filt_W=[31, 3],        # layer-0 sinc kernel length (odd), layer-1 conv W
    cnn_len_filt_H=[1, 3],         # layer-0 unused, layer-1 conv H
    cnn_max_pool_len_W=[2, 2],
    cnn_max_pool_len_H=[1, 2],
    use_SincConv_fast=True,
    cnn_energy_L=10,
    cnn_energy_stride=5,
    cnn_act=['relu', 'leaky_relu'],
    cnn_drop=[0.0, 0.0],           # p=0 -> identity
    cnn_use_laynorm=[True, True],
    cnn_use_batchnorm=[False, False],
    cnn_use_laynorm_inp=False,
    cnn_use_batchnorm_inp=False,
    input_dim=800,
    fs=16000,
)
LN_EPS = 1e-5          # nn.LayerNorm default (weight=1, bias=0 at init)
LEAKY_SLOPE = 0.2      # act_fun('leaky_relu') -> nn.LeakyReLU(0.2)
LOG_EPS = 0.001        # SincNet2D.tensorLogScale


# ---------------------- sinc filter construction (glue) ---------------------
def _to_mel(hz):
    return 2595.0 * np.log10(1.0 + hz / 700.0)


def _to_hz(mel):
    return 700.0 * (10.0 ** (mel / 2595.0) - 1.0)


def make_sinc_filters(out_channels, kernel_size, sample_rate,
                      min_low_hz=50, min_band_hz=50):
    """Replicates SincConv_fast.__init__ + the filter math in its forward()."""
    K = kernel_size + (1 if kernel_size % 2 == 0 else 0)
    low_hz = 30.0
    high_hz = sample_rate / 2 - (min_low_hz + min_band_hz)
    mel = np.linspace(_to_mel(low_hz), _to_mel(high_hz), out_channels + 1)
    hz = _to_hz(mel)
    low_hz_ = hz[:-1].reshape(-1, 1)
    band_hz_ = np.diff(hz).reshape(-1, 1)

    n_lin = np.linspace(0.0, K / 2 - 1, int(K / 2))
    window = 0.54 - 0.46 * np.cos(2 * math.pi * n_lin / K)              # (K//2,)
    n = (K - 1) / 2.0
    n_ = 2 * math.pi * np.arange(-n, 0.0).reshape(1, -1) / sample_rate  # (1, K//2)

    low = min_low_hz + np.abs(low_hz_)
    high = np.clip(low + min_band_hz + np.abs(band_hz_), min_low_hz, sample_rate / 2)
    band = (high - low)[:, 0]
    f_t_low = low @ n_
    f_t_high = high @ n_
    bp_left = (np.sin(f_t_high) - np.sin(f_t_low)) / (n_ / 2) * window
    bp_center = 2 * band.reshape(-1, 1)
    bp_right = bp_left[:, ::-1]
    bp = np.concatenate([bp_left, bp_center, bp_right], axis=1)
    bp = bp / (2 * band[:, None])
    return jnp.asarray(bp, jnp.float32)                                 # (F0, K)


# ------------------------------ fused Pallas kernel --------------------------
def sincnet2d_kernel(x_ref, a_ref, c_ref, m_ref, selw_ref, bias_ref, o_ref, xs_ref,
                     *, k0, mp_w0, kw, mp_w1, mp_h1, f0):
    """Fused SincNet2D layers 0+1 for one block of `bt` samples.

    x_ref:    (bt, L)                 raw waveforms
    a_ref:    (bt*f0, k0*bt)          sinc filters embedded in the im2col contraction
    c_ref:    (L, w_e)                layer-0 maxpool stride-select + energy average
    m_ref:    (kw, mp_h1*bt*f1*hp, bt*f0)  conv2 weights folded with H-shift,
                                      maxpool2d H-row pick + channel-major reorder
    selw_ref: (w_e, wp)               maxpool2d W-stride selection
    bias_ref: (bt*f1*hp, 1)           conv2 bias per output row
    o_ref:    (bt, f1*hp, wp)         output block
    xs_ref:   (k0*bt, L)              VMEM scratch for the rolled (im2col) waveforms
    """
    bt, seq = x_ref.shape
    w_e = c_ref.shape[1]
    rows_h = m_ref.shape[1]
    half = rows_h // mp_h1                 # bt * f1 * hp
    chan_rows = half // bt                 # f1 * hp
    wp = selw_ref.shape[1]

    # ---- layer 0: SincConv1d as im2col (XLU rolls) + one MXU matmul ---------
    x = x_ref[...]                                              # (bt, L)
    xs_ref[0:bt, :] = x
    for k in range(1, k0):
        # xs[k*bt + b, t] = x[b, (t + k) mod L]; wrapped lanes only reach
        # t >= L - k0 + 1, which matrix C masks with zero coefficients.
        xs_ref[k * bt:(k + 1) * bt, :] = pltpu.roll(x, (seq - k) % seq, axis=1)
    conv = jnp.dot(a_ref[...], xs_ref[...],
                   preferred_element_type=jnp.float32)          # (bt*f0, L)

    # abs -> max_pool1d(mp_w0) -> ^2  ==  shifted max of squares; the stride
    # down-select and the energy avg_pool window are folded into matrix C.
    sq = conv * conv
    msq = sq
    for s in range(1, mp_w0):
        msq = jnp.maximum(msq, pltpu.roll(sq, (seq - s) % seq, axis=1))
    energy = jnp.dot(msq, c_ref[...],
                     preferred_element_type=jnp.float32)        # (bt*f0, w_e)
    e = jnp.log10(LOG_EPS + energy)                             # tensorLogScale

    # per-sample LayerNorm([1, f0, w_e]) (weight=1, bias=0) + ReLU,
    # with fused single-pass mean / variance.
    e3 = e.reshape(bt, f0, w_e)
    n0 = float(f0 * w_e)
    s1 = jnp.sum(jnp.sum(e3, axis=2, keepdims=True), axis=1, keepdims=True)
    s2 = jnp.sum(jnp.sum(e3 * e3, axis=2, keepdims=True), axis=1, keepdims=True)
    mu0 = s1 / n0
    var0 = jnp.maximum(s2 / n0 - mu0 * mu0, 0.0)
    h0 = jnp.maximum((e3 - mu0) * lax.rsqrt(var0 + LN_EPS), 0.0)
    h0 = h0.reshape(bt * f0, w_e)

    # ---- layer 1: Conv2d(1->f1,(kh,kw)) folded into per-dw selection matmuls
    acc = jnp.dot(m_ref[0], h0, preferred_element_type=jnp.float32)
    for dw in range(1, kw):
        h0s = pltpu.roll(h0, (w_e - dw) % w_e, axis=1)
        acc = acc + jnp.dot(m_ref[dw], h0s,
                            preferred_element_type=jnp.float32)  # (rows_h, w_e)

    # max_pool2d: W-direction shifted max, H-direction max of the mp_h1 row
    # halves (row pick + channel-major reorder already baked into m_ref),
    # then the W-stride selection matmul and the per-channel conv bias.
    accw = acc
    for s in range(1, mp_w1):
        accw = jnp.maximum(accw, pltpu.roll(acc, (w_e - s) % w_e, axis=1))
    pooled = accw[0:half, :]
    for s in range(1, mp_h1):
        pooled = jnp.maximum(pooled, accw[s * half:(s + 1) * half, :])
    mw = jnp.dot(pooled, selw_ref[...],
                 preferred_element_type=jnp.float32)            # (bt*f1*hp, wp)
    mw = mw + bias_ref[...]

    # per-sample LayerNorm([f1, hp, wp]) + LeakyReLU(0.2); dropout p=0 = identity
    y3 = mw.reshape(bt, chan_rows, wp)
    n1 = float(chan_rows * wp)
    t1 = jnp.sum(jnp.sum(y3, axis=2, keepdims=True), axis=1, keepdims=True)
    t2 = jnp.sum(jnp.sum(y3 * y3, axis=2, keepdims=True), axis=1, keepdims=True)
    mu1 = t1 / n1
    var1 = jnp.maximum(t2 / n1 - mu1 * mu1, 0.0)
    y = (y3 - mu1) * lax.rsqrt(var1 + LN_EPS)
    o_ref[...] = jnp.where(y > 0, y, LEAKY_SLOPE * y)


# ------------------------------- forward glue --------------------------------
def sincnet2d_forward(x, sinc_filters, conv2_w, conv2_b, opts, *, samples_per_step=8):
    """SincNet2D forward: one fused Pallas call over blocks of `samples_per_step`."""
    batch, seq_len = x.shape
    f0 = opts['cnn_N_filt'][0]
    k0 = sinc_filters.shape[1]
    mp_w0 = opts['cnn_max_pool_len_W'][0]
    e_len = opts['cnn_energy_L']
    e_stride = opts['cnn_energy_stride']
    f1 = opts['cnn_N_filt'][1]
    kh = opts['cnn_len_filt_H'][1]
    kw = opts['cnn_len_filt_W'][1]
    mp_h1 = opts['cnn_max_pool_len_H'][1]
    mp_w1 = opts['cnn_max_pool_len_W'][1]

    # the fused kernel hardcodes this (reference-default) configuration
    assert sinc_filters.shape[0] == f0 and seq_len == opts['input_dim']
    assert opts['cnn_use_laynorm'] == [True, True]
    assert opts['cnn_use_batchnorm'] == [False, False]
    assert not opts['cnn_use_laynorm_inp'] and not opts['cnn_use_batchnorm_inp']
    assert opts['cnn_drop'] == [0.0, 0.0]
    assert opts['cnn_act'] == ['relu', 'leaky_relu']

    # ---- static shape algebra (mirrors the module's spec_H / spec_W math) ---
    t_conv = seq_len - k0 + 1
    t_pool = t_conv // mp_w0
    e_pad = int((e_stride - (t_pool - e_len) % e_stride) / 2)
    assert 0 <= e_pad and 2 * e_pad <= e_len, "invalid energy avg_pool padding"
    w_e = (t_pool + 2 * e_pad - e_len) // e_stride + 1
    assert w_e == int(np.ceil((t_pool - e_len) / e_stride + 1))
    ho, wo = f0 - kh + 1, w_e - kw + 1
    hp, wp = ho // mp_h1, wo // mp_w1

    # roll-wraparound garbage must only land in columns masked by the matrices
    assert mp_w0 * (t_pool - 1) + (mp_w0 - 1) <= t_conv - 1
    assert t_conv - 1 + (k0 - 1) <= seq_len - 1
    assert mp_w1 * (wp - 1) + (mp_w1 - 1) + (kw - 1) <= w_e - 1
    assert mp_h1 * (hp - 1) + (mp_h1 - 1) + (kh - 1) <= f0 - 1
    # sublane-tile alignment assumptions of the kernel's layout-free reshapes
    bt = int(samples_per_step)
    assert bt >= 8 and bt % 8 == 0
    assert f0 % 8 == 0 and (f1 * hp) % 8 == 0

    # ---- hoisted constant matrices (built once; VMEM-resident across grid) ---
    w0_np = np.asarray(sinc_filters, np.float32)
    # A embeds the sinc filters in the im2col contraction:
    #   conv[b*f0+f, t] = sum_{k,b'} A[b*f0+f, k*bt+b'] * x[b', t+k]
    a_mat = np.zeros((bt * f0, k0 * bt), np.float32)
    for b in range(bt):
        for k in range(k0):
            a_mat[b * f0:(b + 1) * f0, k * bt + b] = w0_np[:, k]

    # C folds: layer-0 maxpool stride-select + energy avg_pool (count_include_pad)
    c_mat = np.zeros((seq_len, w_e), np.float32)
    for j in range(w_e):
        lo = j * e_stride - e_pad
        for i in range(max(lo, 0), min(lo + e_len, t_pool)):
            c_mat[mp_w0 * i, j] = 1.0 / e_len

    # M[dw] folds: conv2 weights + H-shift + maxpool2d H-row pick + channel-major
    # reorder.  Row rho = ((s*bt + b)*f1 + f)*hp + i holds conv2 H-row (mp_h1*i+s)
    # of sample b / out-channel f; the kernel max-reduces over the s halves.
    w1_np = np.asarray(conv2_w, np.float32).reshape(f1, kh, kw)
    rows_h = mp_h1 * bt * f1 * hp
    m_mat = np.zeros((kw, rows_h, bt * f0), np.float32)
    for dw in range(kw):
        for s in range(mp_h1):
            for b in range(bt):
                for f in range(f1):
                    for i in range(hp):
                        row = ((s * bt + b) * f1 + f) * hp + i
                        for dh in range(kh):
                            m_mat[dw, row, b * f0 + mp_h1 * i + s + dh] = w1_np[f, dh, dw]

    # maxpool2d W-direction stride selection
    selw_mat = np.zeros((w_e, wp), np.float32)
    for j in range(wp):
        selw_mat[mp_w1 * j, j] = 1.0

    # conv2 bias per output row (channel-major rows f*hp + i, tiled over samples)
    bias_col = np.tile(np.repeat(np.asarray(conv2_b, np.float32), hp), bt).reshape(-1, 1)

    # ---- batch blocking ------------------------------------------------------
    x = x.astype(jnp.float32)
    n_pad = (-batch) % bt
    if n_pad:
        x = jnp.concatenate([x, jnp.zeros((n_pad, seq_len), jnp.float32)], axis=0)
    steps = (batch + n_pad) // bt

    kernel = functools.partial(sincnet2d_kernel, k0=k0, mp_w0=mp_w0, kw=kw,
                               mp_w1=mp_w1, mp_h1=mp_h1, f0=f0)
    out = pl.pallas_call(
        kernel,
        out_shape=jax.ShapeDtypeStruct((batch + n_pad, f1 * hp, wp), jnp.float32),
        grid=(steps,),
        in_specs=[
            pl.BlockSpec((bt, seq_len), lambda g: (g, 0)),                # x block
            pl.BlockSpec((bt * f0, k0 * bt), lambda g: (0, 0)),           # A
            pl.BlockSpec((seq_len, w_e), lambda g: (0, 0)),               # C
            pl.BlockSpec((kw, rows_h, bt * f0), lambda g: (0, 0, 0)),     # M
            pl.BlockSpec((w_e, wp), lambda g: (0, 0)),                    # sel_w
            pl.BlockSpec((bt * f1 * hp, 1), lambda g: (0, 0)),            # bias rows
        ],
        out_specs=pl.BlockSpec((bt, f1 * hp, wp), lambda g: (g, 0, 0)),
        scratch_shapes=[pltpu.VMEM((k0 * bt, seq_len), jnp.float32)],     # im2col buffer
        compiler_params=pltpu.CompilerParams(
            # megacore split only pays off with enough grid steps per core
            dimension_semantics=("parallel",) if steps >= 4 else ("arbitrary",)),
    )(x, jnp.asarray(a_mat), jnp.asarray(c_mat), jnp.asarray(m_mat),
      jnp.asarray(selw_mat), jnp.asarray(bias_col))

    # rows are already channel-major (f1, i) -> plain flatten == torch order
    return out[:batch].reshape(batch, f1 * hp * wp)


# ------------------------ pure-JAX reference (for checking) ------------------
def sincnet2d_reference(x, sinc_filters, conv2_w, conv2_b, opts):
    """Pure-JAX replica of SincNet2D.forward (identity dropout, default-init LNs)."""
    batch, seq_len = x.shape
    f0, k0 = sinc_filters.shape
    mp_w0 = opts['cnn_max_pool_len_W'][0]
    e_len, e_stride = opts['cnn_energy_L'], opts['cnn_energy_stride']
    f1 = opts['cnn_N_filt'][1]
    kh, kw = opts['cnn_len_filt_H'][1], opts['cnn_len_filt_W'][1]
    mp_h1, mp_w1 = opts['cnn_max_pool_len_H'][1], opts['cnn_max_pool_len_W'][1]
    hi = lax.Precision.HIGHEST

    def layer_norm(v):                       # identity affine, eps = 1e-5
        ax = tuple(range(1, v.ndim))
        mu = jnp.mean(v, axis=ax, keepdims=True)
        var = jnp.mean((v - mu) ** 2, axis=ax, keepdims=True)
        return (v - mu) / jnp.sqrt(var + LN_EPS)

    # layer 0: SincConv1d (valid cross-correlation) -> abs -> maxpool1d -> energy
    t_conv = seq_len - k0 + 1
    cols = jnp.stack([x[:, k:k + t_conv] for k in range(k0)], axis=1)
    conv = jnp.einsum('fk,bkt->bft', sinc_filters, cols, precision=hi)
    a = jnp.abs(conv)
    t_pool = t_conv // mp_w0
    a = a[:, :, :t_pool * mp_w0].reshape(batch, f0, t_pool, mp_w0).max(axis=3)
    e_pad = int((e_stride - (t_pool - e_len) % e_stride) / 2)
    w_e = (t_pool + 2 * e_pad - e_len) // e_stride + 1
    sqp = jnp.pad(a * a, ((0, 0), (0, 0), (e_pad, e_pad)))
    energy = jnp.stack([sqp[:, :, j * e_stride:j * e_stride + e_len].sum(axis=2)
                        for j in range(w_e)], axis=2) / e_len
    h = jax.nn.relu(layer_norm(jnp.log10(LOG_EPS + energy)))          # (B, f0, w_e)

    # layer 1: Conv2d(1->f1,(kh,kw)) + bias -> maxpool2d -> LayerNorm -> LeakyReLU
    ho, wo = f0 - kh + 1, w_e - kw + 1
    patches = jnp.stack([h[:, dh:dh + ho, dw:dw + wo]
                         for dh in range(kh) for dw in range(kw)], axis=1)
    w1 = jnp.asarray(conv2_w, jnp.float32).reshape(f1, kh * kw)
    conv2 = jnp.einsum('fp,bpij->bfij', w1, patches, precision=hi)
    conv2 = conv2 + conv2_b[None, :, None, None]
    hp, wp = ho // mp_h1, wo // mp_w1
    pooled = conv2[:, :, :hp * mp_h1, :wp * mp_w1]
    pooled = pooled.reshape(batch, f1, hp, mp_h1, wp, mp_w1).max(axis=(3, 5))
    y = layer_norm(pooled)
    y = jnp.where(y > 0, y, LEAKY_SLOPE * y)
    return y.reshape(batch, -1)


# ----------------------------------- main ------------------------------------
if __name__ == "__main__":
    opts = OPTIONS
    batch = 16

    key = jax.random.PRNGKey(0)
    k_x, k_w, k_b = jax.random.split(key, 3)

    # input waveform batch: (batch, seq_len)
    x = jax.random.normal(k_x, (batch, opts['input_dim']), dtype=jnp.float32)

    # layer-0 sinc filters (deterministic mel-spaced init, as in SincConv_fast)
    sinc_filt = make_sinc_filters(opts['cnn_N_filt'][0],
                                  opts['cnn_len_filt_W'][0], opts['fs'])

    # layer-1 Conv2d(1, F1, (kh, kw)) weights/bias, deterministic uniform init
    f1 = opts['cnn_N_filt'][1]
    kh1, kw1 = opts['cnn_len_filt_H'][1], opts['cnn_len_filt_W'][1]
    bound = 1.0 / math.sqrt(1 * kh1 * kw1)
    conv2_w = jax.random.uniform(k_w, (f1, 1, kh1, kw1), jnp.float32, -bound, bound)
    conv2_b = jax.random.uniform(k_b, (f1,), jnp.float32, -bound, bound)

    out = sincnet2d_forward(x, sinc_filt, conv2_w, conv2_b, opts)
    out = jax.block_until_ready(out)

    # out_dim = N_filt * spec_H * spec_W = 8 * 3 * 37 = 888
    assert out.shape == (batch, 888), out.shape
    assert bool(jnp.all(jnp.isfinite(out)))

    # numerical check against a pure-JAX replica of the torch forward pass
    # (thresholds sit well above MXU default-precision noise, well below bug level)
    ref = sincnet2d_reference(x, sinc_filt, conv2_w, conv2_b, opts)
    err = jnp.abs(out - ref)
    assert float(jnp.mean(err)) < 2e-2 and float(jnp.max(err)) < 2.5e-1, \
        (float(jnp.mean(err)), float(jnp.max(err)))

    print("KERNEL_OK")
</pallas_src>

<mosaic_0001>
module attributes {stable_mosaic.version = 11 : i64} {
  func.func @sincnet2d_kernel(%arg0: i32, %arg1: memref<8x800xf32, #tpu.memory_space<vmem>>, %arg2: memref<64x248xf32, #tpu.memory_space<vmem>>, %arg3: memref<800x76xf32, #tpu.memory_space<vmem>>, %arg4: memref<3x384x64xf32, #tpu.memory_space<vmem>>, %arg5: memref<76x37xf32, #tpu.memory_space<vmem>>, %arg6: memref<192x1xf32, #tpu.memory_space<vmem>>, %arg7: memref<8x24x37xf32, #tpu.memory_space<vmem>>, %arg8: memref<248x800xf32, #tpu.memory_space<vmem>>) attributes {dimension_semantics = [#tpu.dimension_semantics<arbitrary>], iteration_bounds = array<i64: 2>, scalar_prefetch = 0 : i64, scratch_operands = 1 : i64, tpu.core_type = #tpu.core_type<tc>, window_params = [{transform_indices = @transform_0, window_bounds = array<i64: 8, 800>}, {pipeline_mode = #tpu.pipeline_mode<synchronous>, transform_indices = @transform_1, window_bounds = array<i64: 64, 248>}, {pipeline_mode = #tpu.pipeline_mode<synchronous>, transform_indices = @transform_2, window_bounds = array<i64: 800, 76>}, {pipeline_mode = #tpu.pipeline_mode<synchronous>, transform_indices = @transform_3, window_bounds = array<i64: 3, 384, 64>}, {pipeline_mode = #tpu.pipeline_mode<synchronous>, transform_indices = @transform_4, window_bounds = array<i64: 76, 37>}, {pipeline_mode = #tpu.pipeline_mode<synchronous>, transform_indices = @transform_5, window_bounds = array<i64: 192, 1>}, {transform_indices = @transform_6, window_bounds = array<i64: 8, 24, 37>}]} {
    %c0 = arith.constant 0 : index
    %c0_0 = arith.constant 0 : index
    %0 = vector.load %arg1[%c0, %c0_0] : memref<8x800xf32, #tpu.memory_space<vmem>>, vector<8x800xf32>
    %c0_1 = arith.constant 0 : index
    %c0_2 = arith.constant 0 : index
    %1 = vector.load %arg8[%c0_1, %c0_2] : memref<248x800xf32, #tpu.memory_space<vmem>>, vector<8x800xf32>
    tpu.vector_store %arg8[%c0_1, %c0_2], %0 {strides = array<i32>} : memref<248x800xf32, #tpu.memory_space<vmem>>, vector<8x800xf32>,
    %c799_i32 = arith.constant 799 : i32
    %2 = tpu.dynamic_rotate %0 by %c799_i32 dim 1 : vector<8x800xf32>, i32 -> vector<8x800xf32>
    %c8 = arith.constant 8 : index
    %c0_3 = arith.constant 0 : index
    %3 = vector.load %arg8[%c8, %c0_3] : memref<248x800xf32, #tpu.memory_space<vmem>>, vector<8x800xf32>
    tpu.vector_store %arg8[%c8, %c0_3], %2 {strides = array<i32>} : memref<248x800xf32, #tpu.memory_space<vmem>>, vector<8x800xf32>,
    %c798_i32 = arith.constant 798 : i32
    %4 = tpu.dynamic_rotate %0 by %c798_i32 dim 1 : vector<8x800xf32>, i32 -> vector<8x800xf32>
    %c16 = arith.constant 16 : index
    %c0_4 = arith.constant 0 : index
    %5 = vector.load %arg8[%c16, %c0_4] : memref<248x800xf32, #tpu.memory_space<vmem>>, vector<8x800xf32>
    tpu.vector_store %arg8[%c16, %c0_4], %4 {strides = array<i32>} : memref<248x800xf32, #tpu.memory_space<vmem>>, vector<8x800xf32>,
    %c797_i32 = arith.constant 797 : i32
    %6 = tpu.dynamic_rotate %0 by %c797_i32 dim 1 : vector<8x800xf32>, i32 -> vector<8x800xf32>
    %c24 = arith.constant 24 : index
    %c0_5 = arith.constant 0 : index
    %7 = vector.load %arg8[%c24, %c0_5] : memref<248x800xf32, #tpu.memory_space<vmem>>, vector<8x800xf32>
    tpu.vector_store %arg8[%c24, %c0_5], %6 {strides = array<i32>} : memref<248x800xf32, #tpu.memory_space<vmem>>, vector<8x800xf32>,
    %c796_i32 = arith.constant 796 : i32
    %8 = tpu.dynamic_rotate %0 by %c796_i32 dim 1 : vector<8x800xf32>, i32 -> vector<8x800xf32>
    %c32 = arith.constant 32 : index
    %c0_6 = arith.constant 0 : index
    %9 = vector.load %arg8[%c32, %c0_6] : memref<248x800xf32, #tpu.memory_space<vmem>>, vector<8x800xf32>
    tpu.vector_store %arg8[%c32, %c0_6], %8 {strides = array<i32>} : memref<248x800xf32, #tpu.memory_space<vmem>>, vector<8x800xf32>,
    %c795_i32 = arith.constant 795 : i32
    %10 = tpu.dynamic_rotate %0 by %c795_i32 dim 1 : vector<8x800xf32>, i32 -> vector<8x800xf32>
    %c40 = arith.constant 40 : index
    %c0_7 = arith.constant 0 : index
    %11 = vector.load %arg8[%c40, %c0_7] : memref<248x800xf32, #tpu.memory_space<vmem>>, vector<8x800xf32>
    tpu.vector_store %arg8[%c40, %c0_7], %10 {strides = array<i32>} : memref<248x800xf32, #tpu.memory_space<vmem>>, vector<8x800xf32>,
    %c794_i32 = arith.constant 794 : i32
    %12 = tpu.dynamic_rotate %0 by %c794_i32 dim 1 : vector<8x800xf32>, i32 -> vector<8x800xf32>
    %c48 = arith.constant 48 : index
    %c0_8 = arith.constant 0 : index
    %13 = vector.load %arg8[%c48, %c0_8] : memref<248x800xf32, #tpu.memory_space<vmem>>, vector<8x800xf32>
    tpu.vector_store %arg8[%c48, %c0_8], %12 {strides = array<i32>} : memref<248x800xf32, #tpu.memory_space<vmem>>, vector<8x800xf32>,
    %c793_i32 = arith.constant 793 : i32
    %14 = tpu.dynamic_rotate %0 by %c793_i32 dim 1 : vector<8x800xf32>, i32 -> vector<8x800xf32>
    %c56 = arith.constant 56 : index
    %c0_9 = arith.constant 0 : index
    %15 = vector.load %arg8[%c56, %c0_9] : memref<248x800xf32, #tpu.memory_space<vmem>>, vector<8x800xf32>
    tpu.vector_store %arg8[%c56, %c0_9], %14 {strides = array<i32>} : memref<248x800xf32, #tpu.memory_space<vmem>>, vector<8x800xf32>,
    %c792_i32 = arith.constant 792 : i32
    %16 = tpu.dynamic_rotate %0 by %c792_i32 dim 1 : vector<8x800xf32>, i32 -> vector<8x800xf32>
    %c64 = arith.constant 64 : index
    %c0_10 = arith.constant 0 : index
    %17 = vector.load %arg8[%c64, %c0_10] : memref<248x800xf32, #tpu.memory_space<vmem>>, vector<8x800xf32>
    tpu.vector_store %arg8[%c64, %c0_10], %16 {strides = array<i32>} : memref<248x800xf32, #tpu.memory_space<vmem>>, vector<8x800xf32>,
    %c791_i32 = arith.constant 791 : i32
    %18 = tpu.dynamic_rotate %0 by %c791_i32 dim 1 : vector<8x800xf32>, i32 -> vector<8x800xf32>
    %c72 = arith.constant 72 : index
    %c0_11 = arith.constant 0 : index
    %19 = vector.load %arg8[%c72, %c0_11] : memref<248x800xf32, #tpu.memory_space<vmem>>, vector<8x800xf32>
    tpu.vector_store %arg8[%c72, %c0_11], %18 {strides = array<i32>} : memref<248x800xf32, #tpu.memory_space<vmem>>, vector<8x800xf32>,
    %c790_i32 = arith.constant 790 : i32
    %20 = tpu.dynamic_rotate %0 by %c790_i32 dim 1 : vector<8x800xf32>, i32 -> vector<8x800xf32>
    %c80 = arith.constant 80 : index
    %c0_12 = arith.constant 0 : index
    %21 = vector.load %arg8[%c80, %c0_12] : memref<248x800xf32, #tpu.memory_space<vmem>>, vector<8x800xf32>
    tpu.vector_store %arg8[%c80, %c0_12], %20 {strides = array<i32>} : memref<248x800xf32, #tpu.memory_space<vmem>>, vector<8x800xf32>,
    %c789_i32 = arith.constant 789 : i32
    %22 = tpu.dynamic_rotate %0 by %c789_i32 dim 1 : vector<8x800xf32>, i32 -> vector<8x800xf32>
    %c88 = arith.constant 88 : index
    %c0_13 = arith.constant 0 : index
    %23 = vector.load %arg8[%c88, %c0_13] : memref<248x800xf32, #tpu.memory_space<vmem>>, vector<8x800xf32>
    tpu.vector_store %arg8[%c88, %c0_13], %22 {strides = array<i32>} : memref<248x800xf32, #tpu.memory_space<vmem>>, vector<8x800xf32>,
    %c788_i32 = arith.constant 788 : i32
    %24 = tpu.dynamic_rotate %0 by %c788_i32 dim 1 : vector<8x800xf32>, i32 -> vector<8x800xf32>
    %c96 = arith.constant 96 : index
    %c0_14 = arith.constant 0 : index
    %25 = vector.load %arg8[%c96, %c0_14] : memref<248x800xf32, #tpu.memory_space<vmem>>, vector<8x800xf32>
    tpu.vector_store %arg8[%c96, %c0_14], %24 {strides = array<i32>} : memref<248x800xf32, #tpu.memory_space<vmem>>, vector<8x800xf32>,
    %c787_i32 = arith.constant 787 : i32
    %26 = tpu.dynamic_rotate %0 by %c787_i32 dim 1 : vector<8x800xf32>, i32 -> vector<8x800xf32>
    %c104 = arith.constant 104 : index
    %c0_15 = arith.constant 0 : index
    %27 = vector.load %arg8[%c104, %c0_15] : memref<248x800xf32, #tpu.memory_space<vmem>>, vector<8x800xf32>
    tpu.vector_store %arg8[%c104, %c0_15], %26 {strides = array<i32>} : memref<248x800xf32, #tpu.memory_space<vmem>>, vector<8x800xf32>,
    %c786_i32 = arith.constant 786 : i32
    %28 = tpu.dynamic_rotate %0 by %c786_i32 dim 1 : vector<8x800xf32>, i32 -> vector<8x800xf32>
    %c112 = arith.constant 112 : index
    %c0_16 = arith.constant 0 : index
    %29 = vector.load %arg8[%c112, %c0_16] : memref<248x800xf32, #tpu.memory_space<vmem>>, vector<8x800xf32>
    tpu.vector_store %arg8[%c112, %c0_16], %28 {strides = array<i32>} : memref<248x800xf32, #tpu.memory_space<vmem>>, vector<8x800xf32>,
    %c785_i32 = arith.constant 785 : i32
    %30 = tpu.dynamic_rotate %0 by %c785_i32 dim 1 : vector<8x800xf32>, i32 -> vector<8x800xf32>
    %c120 = arith.constant 120 : index
    %c0_17 = arith.constant 0 : index
    %31 = vector.load %arg8[%c120, %c0_17] : memref<248x800xf32, #tpu.memory_space<vmem>>, vector<8x800xf32>
    tpu.vector_store %arg8[%c120, %c0_17], %30 {strides = array<i32>} : memref<248x800xf32, #tpu.memory_space<vmem>>, vector<8x800xf32>,
    %c784_i32 = arith.constant 784 : i32
    %32 = tpu.dynamic_rotate %0 by %c784_i32 dim 1 : vector<8x800xf32>, i32 -> vector<8x800xf32>
    %c128 = arith.constant 128 : index
    %c0_18 = arith.constant 0 : index
    %33 = vector.load %arg8[%c128, %c0_18] : memref<248x800xf32, #tpu.memory_space<vmem>>, vector<8x800xf32>
    tpu.vector_store %arg8[%c128, %c0_18], %32 {strides = array<i32>} : memref<248x800xf32, #tpu.memory_space<vmem>>, vector<8x800xf32>,
    %c783_i32 = arith.constant 783 : i32
    %34 = tpu.dynamic_rotate %0 by %c783_i32 dim 1 : vector<8x800xf32>, i32 -> vector<8x800xf32>
    %c136 = arith.constant 136 : index
    %c0_19 = arith.constant 0 : index
    %35 = vector.load %arg8[%c136, %c0_19] : memref<248x800xf32, #tpu.memory_space<vmem>>, vector<8x800xf32>
    tpu.vector_store %arg8[%c136, %c0_19], %34 {strides = array<i32>} : memref<248x800xf32, #tpu.memory_space<vmem>>, vector<8x800xf32>,
    %c782_i32 = arith.constant 782 : i32
    %36 = tpu.dynamic_rotate %0 by %c782_i32 dim 1 : vector<8x800xf32>, i32 -> vector<8x800xf32>
    %c144 = arith.constant 144 : index
    %c0_20 = arith.constant 0 : index
    %37 = vector.load %arg8[%c144, %c0_20] : memref<248x800xf32, #tpu.memory_space<vmem>>, vector<8x800xf32>
    tpu.vector_store %arg8[%c144, %c0_20], %36 {strides = array<i32>} : memref<248x800xf32, #tpu.memory_space<vmem>>, vector<8x800xf32>,
    %c781_i32 = arith.constant 781 : i32
    %38 = tpu.dynamic_rotate %0 by %c781_i32 dim 1 : vector<8x800xf32>, i32 -> vector<8x800xf32>
    %c152 = arith.constant 152 : index
    %c0_21 = arith.constant 0 : index
    %39 = vector.load %arg8[%c152, %c0_21] : memref<248x800xf32, #tpu.memory_space<vmem>>, vector<8x800xf32>
    tpu.vector_store %arg8[%c152, %c0_21], %38 {strides = array<i32>} : memref<248x800xf32, #tpu.memory_space<vmem>>, vector<8x800xf32>,
    %c780_i32 = arith.constant 780 : i32
    %40 = tpu.dynamic_rotate %0 by %c780_i32 dim 1 : vector<8x800xf32>, i32 -> vector<8x800xf32>
    %c160 = arith.constant 160 : index
    %c0_22 = arith.constant 0 : index
    %41 = vector.load %arg8[%c160, %c0_22] : memref<248x800xf32, #tpu.memory_space<vmem>>, vector<8x800xf32>
    tpu.vector_store %arg8[%c160, %c0_22], %40 {strides = array<i32>} : memref<248x800xf32, #tpu.memory_space<vmem>>, vector<8x800xf32>,
    %c779_i32 = arith.constant 779 : i32
    %42 = tpu.dynamic_rotate %0 by %c779_i32 dim 1 : vector<8x800xf32>, i32 -> vector<8x800xf32>
    %c168 = arith.constant 168 : index
    %c0_23 = arith.constant 0 : index
    %43 = vector.load %arg8[%c168, %c0_23] : memref<248x800xf32, #tpu.memory_space<vmem>>, vector<8x800xf32>
    tpu.vector_store %arg8[%c168, %c0_23], %42 {strides = array<i32>} : memref<248x800xf32, #tpu.memory_space<vmem>>, vector<8x800xf32>,
    %c778_i32 = arith.constant 778 : i32
    %44 = tpu.dynamic_rotate %0 by %c778_i32 dim 1 : vector<8x800xf32>, i32 -> vector<8x800xf32>
    %c176 = arith.constant 176 : index
    %c0_24 = arith.constant 0 : index
    %45 = vector.load %arg8[%c176, %c0_24] : memref<248x800xf32, #tpu.memory_space<vmem>>, vector<8x800xf32>
    tpu.vector_store %arg8[%c176, %c0_24], %44 {strides = array<i32>} : memref<248x800xf32, #tpu.memory_space<vmem>>, vector<8x800xf32>,
    %c777_i32 = arith.constant 777 : i32
    %46 = tpu.dynamic_rotate %0 by %c777_i32 dim 1 : vector<8x800xf32>, i32 -> vector<8x800xf32>
    %c184 = arith.constant 184 : index
    %c0_25 = arith.constant 0 : index
    %47 = vector.load %arg8[%c184, %c0_25] : memref<248x800xf32, #tpu.memory_space<vmem>>, vector<8x800xf32>
    tpu.vector_store %arg8[%c184, %c0_25], %46 {strides = array<i32>} : memref<248x800xf32, #tpu.memory_space<vmem>>, vector<8x800xf32>,
    %c776_i32 = arith.constant 776 : i32
    %48 = tpu.dynamic_rotate %0 by %c776_i32 dim 1 : vector<8x800xf32>, i32 -> vector<8x800xf32>
    %c192 = arith.constant 192 : index
    %c0_26 = arith.constant 0 : index
    %49 = vector.load %arg8[%c192, %c0_26] : memref<248x800xf32, #tpu.memory_space<vmem>>, vector<8x800xf32>
    tpu.vector_store %arg8[%c192, %c0_26], %48 {strides = array<i32>} : memref<248x800xf32, #tpu.memory_space<vmem>>, vector<8x800xf32>,
    %c775_i32 = arith.constant 775 : i32
    %50 = tpu.dynamic_rotate %0 by %c775_i32 dim 1 : vector<8x800xf32>, i32 -> vector<8x800xf32>
    %c200 = arith.constant 200 : index
    %c0_27 = arith.constant 0 : index
    %51 = vector.load %arg8[%c200, %c0_27] : memref<248x800xf32, #tpu.memory_space<vmem>>, vector<8x800xf32>
    tpu.vector_store %arg8[%c200, %c0_27], %50 {strides = array<i32>} : memref<248x800xf32, #tpu.memory_space<vmem>>, vector<8x800xf32>,
    %c774_i32 = arith.constant 774 : i32
    %52 = tpu.dynamic_rotate %0 by %c774_i32 dim 1 : vector<8x800xf32>, i32 -> vector<8x800xf32>
    %c208 = arith.constant 208 : index
    %c0_28 = arith.constant 0 : index
    %53 = vector.load %arg8[%c208, %c0_28] : memref<248x800xf32, #tpu.memory_space<vmem>>, vector<8x800xf32>
    tpu.vector_store %arg8[%c208, %c0_28], %52 {strides = array<i32>} : memref<248x800xf32, #tpu.memory_space<vmem>>, vector<8x800xf32>,
    %c773_i32 = arith.constant 773 : i32
    %54 = tpu.dynamic_rotate %0 by %c773_i32 dim 1 : vector<8x800xf32>, i32 -> vector<8x800xf32>
    %c216 = arith.constant 216 : index
    %c0_29 = arith.constant 0 : index
    %55 = vector.load %arg8[%c216, %c0_29] : memref<248x800xf32, #tpu.memory_space<vmem>>, vector<8x800xf32>
    tpu.vector_store %arg8[%c216, %c0_29], %54 {strides = array<i32>} : memref<248x800xf32, #tpu.memory_space<vmem>>, vector<8x800xf32>,
    %c772_i32 = arith.constant 772 : i32
    %56 = tpu.dynamic_rotate %0 by %c772_i32 dim 1 : vector<8x800xf32>, i32 -> vector<8x800xf32>
    %c224 = arith.constant 224 : index
    %c0_30 = arith.constant 0 : index
    %57 = vector.load %arg8[%c224, %c0_30] : memref<248x800xf32, #tpu.memory_space<vmem>>, vector<8x800xf32>
    tpu.vector_store %arg8[%c224, %c0_30], %56 {strides = array<i32>} : memref<248x800xf32, #tpu.memory_space<vmem>>, vector<8x800xf32>,
    %c771_i32 = arith.constant 771 : i32
    %58 = tpu.dynamic_rotate %0 by %c771_i32 dim 1 : vector<8x800xf32>, i32 -> vector<8x800xf32>
    %c232 = arith.constant 232 : index
    %c0_31 = arith.constant 0 : index
    %59 = vector.load %arg8[%c232, %c0_31] : memref<248x800xf32, #tpu.memory_space<vmem>>, vector<8x800xf32>
    tpu.vector_store %arg8[%c232, %c0_31], %58 {strides = array<i32>} : memref<248x800xf32, #tpu.memory_space<vmem>>, vector<8x800xf32>,
    %c770_i32 = arith.constant 770 : i32
    %60 = tpu.dynamic_rotate %0 by %c770_i32 dim 1 : vector<8x800xf32>, i32 -> vector<8x800xf32>
    %c240 = arith.constant 240 : index
    %c0_32 = arith.constant 0 : index
    %61 = vector.load %arg8[%c240, %c0_32] : memref<248x800xf32, #tpu.memory_space<vmem>>, vector<8x800xf32>
    tpu.vector_store %arg8[%c240, %c0_32], %60 {strides = array<i32>} : memref<248x800xf32, #tpu.memory_space<vmem>>, vector<8x800xf32>,
    %c0_33 = arith.constant 0 : index
    %c0_34 = arith.constant 0 : index
    %62 = vector.load %arg2[%c0_33, %c0_34] : memref<64x248xf32, #tpu.memory_space<vmem>>, vector<64x248xf32>
    %c0_35 = arith.constant 0 : index
    %c0_36 = arith.constant 0 : index
    %63 = vector.load %arg8[%c0_35, %c0_36] : memref<248x800xf32, #tpu.memory_space<vmem>>, vector<248x800xf32>
    %cst = arith.constant dense<0.000000e+00> : vector<64x800xf32>
    %64 = tpu.matmul %62, %63, %cst {dimension_numbers = #tpu.dot_dimension_numbers<[1], [0], [0], [1], [0, 0, 1, 1], [], []>} : vector<64x248xf32>, vector<248x800xf32>, vector<64x800xf32> -> vector<64x800xf32>
    %65 = arith.mulf %64, %64 : vector<64x800xf32>
    %c799_i32_37 = arith.constant 799 : i32
    %66 = tpu.dynamic_rotate %65 by %c799_i32_37 dim 1 : vector<64x800xf32>, i32 -> vector<64x800xf32>
    %67 = arith.maximumf %65, %66 : vector<64x800xf32>
    %c0_38 = arith.constant 0 : index
    %c0_39 = arith.constant 0 : index
    %68 = vector.load %arg3[%c0_38, %c0_39] : memref<800x76xf32, #tpu.memory_space<vmem>>, vector<800x76xf32>
    %cst_40 = arith.constant dense<0.000000e+00> : vector<64x76xf32>
    %69 = tpu.matmul %67, %68, %cst_40 {dimension_numbers = #tpu.dot_dimension_numbers<[1], [0], [0], [1], [0, 0, 1, 1], [], []>} : vector<64x800xf32>, vector<800x76xf32>, vector<64x76xf32> -> vector<64x76xf32>
    %cst_41 = arith.constant 1.000000e-03 : f32
    %70 = vector.broadcast %cst_41 : f32 to vector<64x76xf32>
    %71 = arith.addf %70, %69 : vector<64x76xf32>
    %72 = math.log %71 : vector<64x76xf32>
    %cst_42 = arith.constant 0.434294492 : f32
    %73 = vector.broadcast %cst_42 : f32 to vector<64x76xf32>
    %74 = arith.mulf %72, %73 : vector<64x76xf32>
    %75 = vector.shape_cast %74 : vector<64x76xf32> to vector<8x8x76xf32>
    %cst_43 = arith.constant dense<0.000000e+00> : vector<8x8xf32>
    %76 = vector.multi_reduction <add>, %75, %cst_43 [2] : vector<8x8x76xf32> to vector<8x8xf32>
    %77 = vector.shape_cast %76 : vector<8x8xf32> to vector<8x8x1xf32>
    %cst_44 = arith.constant dense<0.000000e+00> : vector<8x1xf32>
    %78 = vector.multi_reduction <add>, %77, %cst_44 [1] : vector<8x8x1xf32> to vector<8x1xf32>
    %79 = vector.shape_cast %78 : vector<8x1xf32> to vector<8x1x1xf32>
    %80 = arith.mulf %75, %75 : vector<8x8x76xf32>
    %cst_45 = arith.constant dense<0.000000e+00> : vector<8x8xf32>
    %81 = vector.multi_reduction <add>, %80, %cst_45 [2] : vector<8x8x76xf32> to vector<8x8xf32>
    %82 = vector.shape_cast %81 : vector<8x8xf32> to vector<8x8x1xf32>
    %cst_46 = arith.constant dense<0.000000e+00> : vector<8x1xf32>
    %83 = vector.multi_reduction <add>, %82, %cst_46 [1] : vector<8x8x1xf32> to vector<8x1xf32>
    %84 = vector.shape_cast %83 : vector<8x1xf32> to vector<8x1x1xf32>
    %cst_47 = arith.constant 6.080000e+02 : f32
    %85 = vector.broadcast %cst_47 : f32 to vector<8x1x1xf32>
    %86 = arith.divf %79, %85 : vector<8x1x1xf32>
    %cst_48 = arith.constant 6.080000e+02 : f32
    %87 = vector.broadcast %cst_48 : f32 to vector<8x1x1xf32>
    %88 = arith.divf %84, %87 : vector<8x1x1xf32>
    %89 = arith.mulf %86, %86 : vector<8x1x1xf32>
    %90 = arith.subf %88, %89 : vector<8x1x1xf32>
    %cst_49 = arith.constant 0.000000e+00 : f32
    %91 = vector.broadcast %cst_49 : f32 to vector<8x1x1xf32>
    %92 = arith.maximumf %90, %91 : vector<8x1x1xf32>
    %93 = vector.broadcast %86 : vector<8x1x1xf32> to vector<8x8x76xf32>
    %94 = arith.subf %75, %93 : vector<8x8x76xf32>
    %cst_50 = arith.constant 9.99999974E-6 : f32
    %95 = vector.broadcast %cst_50 : f32 to vector<8x1x1xf32>
    %96 = arith.addf %92, %95 : vector<8x1x1xf32>
    %97 = math.rsqrt %96 : vector<8x1x1xf32>
    %98 = vector.broadcast %97 : vector<8x1x1xf32> to vector<8x8x76xf32>
    %99 = arith.mulf %94, %98 : vector<8x8x76xf32>
    %cst_51 = arith.constant 0.000000e+00 : f32
    %100 = vector.broadcast %cst_51 : f32 to vector<8x8x76xf32>
    %101 = arith.maximumf %99, %100 : vector<8x8x76xf32>
    %102 = vector.shape_cast %101 : vector<8x8x76xf32> to vector<64x76xf32>
    %c0_52 = arith.constant 0 : index
    %c0_53 = arith.constant 0 : index
    %c0_54 = arith.constant 0 : index
    %103 = vector.load %arg4[%c0_52, %c0_53, %c0_54] : memref<3x384x64xf32, #tpu.memory_space<vmem>>, vector<1x384x64xf32>
    %104 = vector.shape_cast %103 : vector<1x384x64xf32> to vector<384x64xf32>
    %cst_55 = arith.constant dense<0.000000e+00> : vector<384x76xf32>
    %105 = tpu.matmul %104, %102, %cst_55 {dimension_numbers = #tpu.dot_dimension_numbers<[1], [0], [0], [1], [0, 0, 1, 1], [], []>} : vector<384x64xf32>, vector<64x76xf32>, vector<384x76xf32> -> vector<384x76xf32>
    %c75_i32 = arith.constant 75 : i32
    %106 = tpu.dynamic_rotate %102 by %c75_i32 dim 1 : vector<64x76xf32>, i32 -> vector<64x76xf32>
    %c1 = arith.constant 1 : index
    %c0_56 = arith.constant 0 : index
    %c0_57 = arith.constant 0 : index
    %107 = vector.load %arg4[%c1, %c0_56, %c0_57] : memref<3x384x64xf32, #tpu.memory_space<vmem>>, vector<1x384x64xf32>
    %108 = vector.shape_cast %107 : vector<1x384x64xf32> to vector<384x64xf32>
    %cst_58 = arith.constant dense<0.000000e+00> : vector<384x76xf32>
    %109 = tpu.matmul %108, %106, %cst_58 {dimension_numbers = #tpu.dot_dimension_numbers<[1], [0], [0], [1], [0, 0, 1, 1], [], []>} : vector<384x64xf32>, vector<64x76xf32>, vector<384x76xf32> -> vector<384x76xf32>
    %110 = arith.addf %105, %109 : vector<384x76xf32>
    %c74_i32 = arith.constant 74 : i32
    %111 = tpu.dynamic_rotate %102 by %c74_i32 dim 1 : vector<64x76xf32>, i32 -> vector<64x76xf32>
    %c2 = arith.constant 2 : index
    %c0_59 = arith.constant 0 : index
    %c0_60 = arith.constant 0 : index
    %112 = vector.load %arg4[%c2, %c0_59, %c0_60] : memref<3x384x64xf32, #tpu.memory_space<vmem>>, vector<1x384x64xf32>
    %113 = vector.shape_cast %112 : vector<1x384x64xf32> to vector<384x64xf32>
    %cst_61 = arith.constant dense<0.000000e+00> : vector<384x76xf32>
    %114 = tpu.matmul %113, %111, %cst_61 {dimension_numbers = #tpu.dot_dimension_numbers<[1], [0], [0], [1], [0, 0, 1, 1], [], []>} : vector<384x64xf32>, vector<64x76xf32>, vector<384x76xf32> -> vector<384x76xf32>
    %115 = arith.addf %110, %114 : vector<384x76xf32>
    %c75_i32_62 = arith.constant 75 : i32
    %116 = tpu.dynamic_rotate %115 by %c75_i32_62 dim 1 : vector<384x76xf32>, i32 -> vector<384x76xf32>
    %117 = arith.maximumf %115, %116 : vector<384x76xf32>
    %118 = vector.extract_strided_slice %117 {offsets = [0, 0], sizes = [192, 76], strides = [1, 1]} : vector<384x76xf32> to vector<192x76xf32>
    %119 = vector.extract_strided_slice %117 {offsets = [192, 0], sizes = [192, 76], strides = [1, 1]} : vector<384x76xf32> to vector<192x76xf32>
    %120 = arith.maximumf %118, %119 : vector<192x76xf32>
    %c0_63 = arith.constant 0 : index
    %c0_64 = arith.constant 0 : index
    %121 = vector.load %arg5[%c0_63, %c0_64] : memref<76x37xf32, #tpu.memory_space<vmem>>, vector<76x37xf32>
    %cst_65 = arith.constant dense<0.000000e+00> : vector<192x37xf32>
    %122 = tpu.matmul %120, %121, %cst_65 {dimension_numbers = #tpu.dot_dimension_numbers<[1], [0], [0], [1], [0, 0, 1, 1], [], []>} : vector<192x76xf32>, vector<76x37xf32>, vector<192x37xf32> -> vector<192x37xf32>
    %c0_66 = arith.constant 0 : index
    %c0_67 = arith.constant 0 : index
    %123 = vector.load %arg6[%c0_66, %c0_67] : memref<192x1xf32, #tpu.memory_space<vmem>>, vector<192x1xf32>
    %124 = vector.broadcast %123 : vector<192x1xf32> to vector<192x37xf32>
    %125 = arith.addf %122, %124 : vector<192x37xf32>
    %126 = vector.shape_cast %125 : vector<192x37xf32> to vector<8x24x37xf32>
    %cst_68 = arith.constant dense<0.000000e+00> : vector<8x24xf32>
    %127 = vector.multi_reduction <add>, %126, %cst_68 [2] : vector<8x24x37xf32> to vector<8x24xf32>
    %128 = vector.shape_cast %127 : vector<8x24xf32> to vector<8x24x1xf32>
    %cst_69 = arith.constant dense<0.000000e+00> : vector<8x1xf32>
    %129 = vector.multi_reduction <add>, %128, %cst_69 [1] : vector<8x24x1xf32> to vector<8x1xf32>
    %130 = vector.shape_cast %129 : vector<8x1xf32> to vector<8x1x1xf32>
    %131 = arith.mulf %126, %126 : vector<8x24x37xf32>
    %cst_70 = arith.constant dense<0.000000e+00> : vector<8x24xf32>
    %132 = vector.multi_reduction <add>, %131, %cst_70 [2] : vector<8x24x37xf32> to vector<8x24xf32>
    %133 = vector.shape_cast %132 : vector<8x24xf32> to vector<8x24x1xf32>
    %cst_71 = arith.constant dense<0.000000e+00> : vector<8x1xf32>
    %134 = vector.multi_reduction <add>, %133, %cst_71 [1] : vector<8x24x1xf32> to vector<8x1xf32>
    %135 = vector.shape_cast %134 : vector<8x1xf32> to vector<8x1x1xf32>
    %cst_72 = arith.constant 8.880000e+02 : f32
    %136 = vector.broadcast %cst_72 : f32 to vector<8x1x1xf32>
    %137 = arith.divf %130, %136 : vector<8x1x1xf32>
    %cst_73 = arith.constant 8.880000e+02 : f32
    %138 = vector.broadcast %cst_73 : f32 to vector<8x1x1xf32>
    %139 = arith.divf %135, %138 : vector<8x1x1xf32>
    %140 = arith.mulf %137, %137 : vector<8x1x1xf32>
    %141 = arith.subf %139, %140 : vector<8x1x1xf32>
    %cst_74 = arith.constant 0.000000e+00 : f32
    %142 = vector.broadcast %cst_74 : f32 to vector<8x1x1xf32>
    %143 = arith.maximumf %141, %142 : vector<8x1x1xf32>
    %144 = vector.broadcast %137 : vector<8x1x1xf32> to vector<8x24x37xf32>
    %145 = arith.subf %126, %144 : vector<8x24x37xf32>
    %cst_75 = arith.constant 9.99999974E-6 : f32
    %146 = vector.broadcast %cst_75 : f32 to vector<8x1x1xf32>
    %147 = arith.addf %143, %146 : vector<8x1x1xf32>
    %148 = math.rsqrt %147 : vector<8x1x1xf32>
    %149 = vector.broadcast %148 : vector<8x1x1xf32> to vector<8x24x37xf32>
    %150 = arith.mulf %145, %149 : vector<8x24x37xf32>
    %cst_76 = arith.constant 0.000000e+00 : f32
    %151 = vector.broadcast %cst_76 : f32 to vector<8x24x37xf32>
    %152 = arith.cmpf ogt, %150, %151 : vector<8x24x37xf32>
    %cst_77 = arith.constant 2.000000e-01 : f32
    %153 = vector.broadcast %cst_77 : f32 to vector<8x24x37xf32>
    %154 = arith.mulf %153, %150 : vector<8x24x37xf32>
    %155 = arith.select %152, %150, %154 : vector<8x24x37xi1>, vector<8x24x37xf32>
    %c0_78 = arith.constant 0 : index
    %c0_79 = arith.constant 0 : index
    %c0_80 = arith.constant 0 : index
    %156 = vector.load %arg7[%c0_78, %c0_79, %c0_80] : memref<8x24x37xf32, #tpu.memory_space<vmem>>, vector<8x24x37xf32>
    tpu.vector_store %arg7[%c0_78, %c0_79, %c0_80], %155 {strides = array<i32>} : memref<8x24x37xf32, #tpu.memory_space<vmem>>, vector<8x24x37xf32>,
    return
  }
  func.func @transform_0(%arg0: i32) -> (i32, i32) {
    %c0_i32 = arith.constant 0 : i32
    %c0_i32_0 = arith.constant 0 : i32
    return %arg0, %c0_i32 : i32, i32
  }
  func.func @transform_1(%arg0: i32) -> (i32, i32) {
    %c0_i32 = arith.constant 0 : i32
    %c0_i32_0 = arith.constant 0 : i32
    %c0_i32_1 = arith.constant 0 : i32
    return %c0_i32, %c0_i32_0 : i32, i32
  }
  func.func @transform_2(%arg0: i32) -> (i32, i32) {
    %c0_i32 = arith.constant 0 : i32
    %c0_i32_0 = arith.constant 0 : i32
    %c0_i32_1 = arith.constant 0 : i32
    return %c0_i32, %c0_i32_0 : i32, i32
  }
  func.func @transform_3(%arg0: i32) -> (i32, i32, i32) {
    %c0_i32 = arith.constant 0 : i32
    %c0_i32_0 = arith.constant 0 : i32
    %c0_i32_1 = arith.constant 0 : i32
    %c0_i32_2 = arith.constant 0 : i32
    return %c0_i32, %c0_i32_0, %c0_i32_1 : i32, i32, i32
  }
  func.func @transform_4(%arg0: i32) -> (i32, i32) {
    %c0_i32 = arith.constant 0 : i32
    %c0_i32_0 = arith.constant 0 : i32
    %c0_i32_1 = arith.constant 0 : i32
    return %c0_i32, %c0_i32_0 : i32, i32
  }
  func.func @transform_5(%arg0: i32) -> (i32, i32) {
    %c0_i32 = arith.constant 0 : i32
    %c0_i32_0 = arith.constant 0 : i32
    %c0_i32_1 = arith.constant 0 : i32
    return %c0_i32, %c0_i32_0 : i32, i32
  }
  func.func @transform_6(%arg0: i32) -> (i32, i32, i32) {
    %c0_i32 = arith.constant 0 : i32
    %c0_i32_0 = arith.constant 0 : i32
    %c0_i32_1 = arith.constant 0 : i32
    return %arg0, %c0_i32, %c0_i32_0 : i32, i32, i32
  }
}

</mosaic_0001>

<llo_original>
// kernel: tpu_custom_call.1
$region0: #{tpu_custom_call.1}
  #allocation0 [shape = 'u32[]', space=smem, size = 0x4, offset = 0x4, fixed_abs, tag = 'smem constant byte address 0x4 - core index']
  #allocation1 [shape = 'u32[144,128]{1,0:T(1,128)}', space=vmem, size = 0x12000, scoped, tag = 'internal scratch']
  #allocation2 [shape = 'f32[248,800]{1,0:T(8,128)}', space=vmem, size = 0xd9000, scoped, tag = 'scratch operand']
  %s0 = inlined_call_operand.vmem [shape: f32[16,800], index: 0, kind: input, shape index: {}]
  %s1 = inlined_call_operand.vmem [shape: f32[64,248], index: 1, kind: input, shape index: {}]
  %s2 = inlined_call_operand.vmem [shape: f32[800,76], index: 2, kind: input, shape index: {}]
  %s3 = inlined_call_operand.vmem [shape: f32[3,384,64], index: 3, kind: input, shape index: {}]
  %s4 = inlined_call_operand.vmem [shape: f32[76,37], index: 4, kind: input, shape index: {}]
  %s5 = inlined_call_operand.vmem [shape: f32[192,1], index: 5, kind: input, shape index: {}]
  %s6 = inlined_call_operand.hbm [shape: f32[16,24,37], index: 6, kind: output, shape index: {}]
  %s7 = sld [smem:[#allocation0]]
  $region57: #{tpu_custom_call.1} parent=0
    _
  %s9 = ssub.s32 1, %s7
  %s10 = scalar_select 0, %s9, %s7
  $region1: #{tpu_custom_call.1} parent=0
    #allocation3 [shape = 'u8[196608]{0}', space=vmem, size = 0x30000, scoped, tag = 'output window, operand 0']
    #allocation4 [shape = 's32[2]{0}', space=sflag, size = 0x8, scoped, tag = 'scoped memory for tpu_custom_call.1']
    %11 = vsyncpa [#allocation4], 0
    %s12 = scalar_lea.sflag [#allocation4], 1
    %13 = vsyncpa %s12, 0
    loop: start=0, step=1, limit=4
    $region2: #{tpu_custom_call.1} parent=1 // loop_pre_header
      _
    $region3: #{tpu_custom_call.1} parent=1 // loop_header
      %s15 = sphi 0, %s19
      %p16 = scmp.ge.s32.totalorder %s15, 4
      %s25 = sphi 0, %s27
      %s28 = sphi 0, %s25
      %s29 = sphi 0, %s28
      %s45 = sphi 0, %s29
      %s49 = sphi 0, %s49
      %s51 = sphi 0, %s49
      %s52 = sphi 0, %s51
      %s66 = sphi 0, %s52
      %s70 = sphi 0, %s70
      %s72 = sphi 0, %s70
      %s73 = sphi 0, %s72
      %s87 = sphi 0, %s73
      %s91 = sphi 0, %s91
      %s93 = sphi 0, %s91
      %s94 = sphi 0, %s93
      %s108 = sphi 0, %s94
      %s112 = sphi 0, %s112
      %s114 = sphi 0, %s112
      %s115 = sphi 0, %s114
      %s129 = sphi 0, %s115
      %s133 = sphi 0, %s133
      %s135 = sphi 0, %s133
      %s136 = sphi 0, %s135
      %s150 = sphi 0, %s136
      %s156 = sphi 0, %s158
      %s159 = sphi 0, %s156
      %s160 = sphi 0, %s159
      %s176 = sphi 0, %s160
    $region4: #{tpu_custom_call.1} parent=1 // loop_header_branch
      %18 = sbr.rel (%p16) target = $region8
    $region5: #{tpu_custom_call.1} parent=1 // loop_body
      %s20 = ssub.s32 %s15, 1
      %s21 = ssub.s32 %s15, 2
      %s22 = sadd.s32 %s15, 1
      %s23 = ssub.s32 %s15, %s22
      %p24 = scmp.eq.s32.totalorder %s23, 0
      %s26 = sadd.s32 %s25, 1
      %s27 = scalar_select %p24, %s25, %s26
      %p30 = pneg %p24
      %p31 = scmp.eq.s32.totalorder %s15, 1
      %p32 = por %p30, %p31
      %p33 = scmp.ne.s32.totalorder %s25, %s28
      %p34 = scmp.eq.s32.totalorder %s15, 0
      %p35 = por %p33, %p34
      %p36 = scmp.ne.s32.totalorder %s25, %s28
      %p37 = scmp.eq.s32.totalorder %s20, 1
      %p38 = por %p36, %p37
      %p39 = scmp.ne.s32.totalorder %s28, %s29
      %p40 = scmp.eq.s32.totalorder %s20, 0
      %p41 = por %p39, %p40
      %p42 = scmp.ne.s32.totalorder %s28, %s29
      %p43 = scmp.eq.s32.totalorder %s21, 1
      %p44 = por %p42, %p43
      %p46 = scmp.ne.s32.totalorder %s29, %s45
      %p47 = scmp.eq.s32.totalorder %s21, 0
      %p48 = por %p46, %p47
      %s50 = sadd.s32 %s49, 1
      %p53 = scmp.eq.s32.totalorder %s15, 1
      %p54 = scmp.ne.s32.totalorder %s49, %s51
      %p55 = scmp.eq.s32.totalorder %s15, 0
      %p56 = por %p54, %p55
      %p57 = scmp.ne.s32.totalorder %s49, %s51
      %p58 = scmp.eq.s32.totalorder %s20, 1
      %p59 = por %p57, %p58
      %p60 = scmp.ne.s32.totalorder %s51, %s52
      %p61 = scmp.eq.s32.totalorder %s20, 0
      %p62 = por %p60, %p61
      %p63 = scmp.ne.s32.totalorder %s51, %s52
      %p64 = scmp.eq.s32.totalorder %s21, 1
      %p65 = por %p63, %p64
      %p67 = scmp.ne.s32.totalorder %s52, %s66
      %p68 = scmp.eq.s32.totalorder %s21, 0
      %p69 = por %p67, %p68
      %s71 = sadd.s32 %s70, 1
      %p74 = scmp.eq.s32.totalorder %s15, 1
      %p75 = scmp.ne.s32.totalorder %s70, %s72
      %p76 = scmp.eq.s32.totalorder %s15, 0
      %p77 = por %p75, %p76
      %p78 = scmp.ne.s32.totalorder %s70, %s72
      %p79 = scmp.eq.s32.totalorder %s20, 1
      %p80 = por %p78, %p79
      %p81 = scmp.ne.s32.totalorder %s72, %s73
      %p82 = scmp.eq.s32.totalorder %s20, 0
      %p83 = por %p81, %p82
      %p84 = scmp.ne.s32.totalorder %s72, %s73
      %p85 = scmp.eq.s32.totalorder %s21, 1
      %p86 = por %p84, %p85
      %p88 = scmp.ne.s32.totalorder %s73, %s87
      %p89 = scmp.eq.s32.totalorder %s21, 0
      %p90 = por %p88, %p89
      %s92 = sadd.s32 %s91, 1
      %p95 = scmp.eq.s32.totalorder %s15, 1
      %p96 = scmp.ne.s32.totalorder %s91, %s93
      %p97 = scmp.eq.s32.totalorder %s15, 0
      %p98 = por %p96, %p97
      %p99 = scmp.ne.s32.totalorder %s91, %s93
      %p100 = scmp.eq.s32.totalorder %s20, 1
      %p101 = por %p99, %p100
      %p102 = scmp.ne.s32.totalorder %s93, %s94
      %p103 = scmp.eq.s32.totalorder %s20, 0
      %p104 = por %p102, %p103
      %p105 = scmp.ne.s32.totalorder %s93, %s94
      %p106 = scmp.eq.s32.totalorder %s21, 1
      %p107 = por %p105, %p106
      %p109 = scmp.ne.s32.totalorder %s94, %s108
      %p110 = scmp.eq.s32.totalorder %s21, 0
      %p111 = por %p109, %p110
      %s113 = sadd.s32 %s112, 1
      %p116 = scmp.eq.s32.totalorder %s15, 1
      %p117 = scmp.ne.s32.totalorder %s112, %s114
      %p118 = scmp.eq.s32.totalorder %s15, 0
      %p119 = por %p117, %p118
      %p120 = scmp.ne.s32.totalorder %s112, %s114
      %p121 = scmp.eq.s32.totalorder %s20, 1
      %p122 = por %p120, %p121
      %p123 = scmp.ne.s32.totalorder %s114, %s115
      %p124 = scmp.eq.s32.totalorder %s20, 0
      %p125 = por %p123, %p124
      %p126 = scmp.ne.s32.totalorder %s114, %s115
      %p127 = scmp.eq.s32.totalorder %s21, 1
      %p128 = por %p126, %p127
      %p130 = scmp.ne.s32.totalorder %s115, %s129
      %p131 = scmp.eq.s32.totalorder %s21, 0
      %p132 = por %p130, %p131
      %s134 = sadd.s32 %s133, 1
      %p137 = scmp.eq.s32.totalorder %s15, 1
      %p138 = scmp.ne.s32.totalorder %s133, %s135
      %p139 = scmp.eq.s32.totalorder %s15, 0
      %p140 = por %p138, %p139
      %p141 = scmp.ne.s32.totalorder %s133, %s135
      %p142 = scmp.eq.s32.totalorder %s20, 1
      %p143 = por %p141, %p142
      %p144 = scmp.ne.s32.totalorder %s135, %s136
      %p145 = scmp.eq.s32.totalorder %s20, 0
      %p146 = por %p144, %p145
      %p147 = scmp.ne.s32.totalorder %s135, %s136
      %p148 = scmp.eq.s32.totalorder %s21, 1
      %p149 = por %p147, %p148
      %p151 = scmp.ne.s32.totalorder %s136, %s150
      %p152 = scmp.eq.s32.totalorder %s21, 0
      %p153 = por %p151, %p152
      %s154 = ssub.s32 %s15, %s22
      %p155 = scmp.eq.s32.totalorder %s154, 0
      %s157 = sadd.s32 %s156, 1
      %s158 = scalar_select %p155, %s156, %s157
      %p161 = pneg %p155
      %p162 = scmp.eq.s32.totalorder %s15, 1
      %p163 = por %p161, %p162
      %p164 = scmp.ne.s32.totalorder %s156, %s159
      %p165 = scmp.eq.s32.totalorder %s15, 0
      %p166 = por %p164, %p165
      %p167 = scmp.ne.s32.totalorder %s156, %s159
      %p168 = scmp.eq.s32.totalorder %s20, 1
      %p169 = por %p167, %p168
      %p170 = scmp.ne.s32.totalorder %s159, %s160
      %p171 = scmp.eq.s32.totalorder %s20, 0
      %p172 = por %p170, %p171
      %p173 = scmp.ne.s32.totalorder %s159, %s160
      %p174 = scmp.eq.s32.totalorder %s21, 1
      %p175 = por %p173, %p174
      %p177 = scmp.ne.s32.totalorder %s160, %s176
      %p178 = scmp.eq.s32.totalorder %s21, 0
      %p179 = por %p177, %p178
      %p180 = scmp.le.s32.totalorder 1, %s15
      %p181 = scmp.lt.s32.totalorder %s15, 3
      %p182 = pnand %p180, %p181
      %p183 = pneg %p182
      // Predicated region
      $region9: #{tpu_custom_call.1} parent=5 // pred_check
        _
      $region10: #{tpu_custom_call.1} parent=5 // pred_check_branch
        %185 = sbr.rel (%p182) target = $region12
      $region11: #{tpu_custom_call.1} parent=5 // pred_region
        %s186 = ssub.s32 %s15, 1
        // Predicated region
        $region13: #{tpu_custom_call.1} parent=11 // pred_check
          %p187 = pneg %p62
        $region14: #{tpu_custom_call.1} parent=11 // pred_check_branch
          %189 = sbr.rel (%p187) target = $region16
        $region15: #{tpu_custom_call.1} parent=11 // pred_region
          _
        $region16: #{tpu_custom_call.1} parent=11 // pred_fallthru
          _
        // Predicated region
        $region17: #{tpu_custom_call.1} parent=11 // pred_check
          %p190 = pneg %p83
        $region18: #{tpu_custom_call.1} parent=11 // pred_check_branch
          %192 = sbr.rel (%p190) target = $region20
        $region19: #{tpu_custom_call.1} parent=11 // pred_region
          _
        $region20: #{tpu_custom_call.1} parent=11 // pred_fallthru
          _
        // Predicated region
        $region21: #{tpu_custom_call.1} parent=11 // pred_check
          %p193 = pneg %p104
        $region22: #{tpu_custom_call.1} parent=11 // pred_check_branch
          %195 = sbr.rel (%p193) target = $region24
        $region23: #{tpu_custom_call.1} parent=11 // pred_region
          _
        $region24: #{tpu_custom_call.1} parent=11 // pred_fallthru
          _
        // Predicated region
        $region25: #{tpu_custom_call.1} parent=11 // pred_check
          %p196 = pneg %p125
        $region26: #{tpu_custom_call.1} parent=11 // pred_check_branch
          %198 = sbr.rel (%p196) target = $region28
        $region27: #{tpu_custom_call.1} parent=11 // pred_region
          _
        $region28: #{tpu_custom_call.1} parent=11 // pred_fallthru
          _
        // Predicated region
        $region29: #{tpu_custom_call.1} parent=11 // pred_check
          %p199 = pneg %p146
        $region30: #{tpu_custom_call.1} parent=11 // pred_check_branch
          %201 = sbr.rel (%p199) target = $region32
        $region31: #{tpu_custom_call.1} parent=11 // pred_region
          _
        $region32: #{tpu_custom_call.1} parent=11 // pred_fallthru
          _
      $region12: #{tpu_custom_call.1} parent=5 // pred_fallthru
        _
      %p202 = scmp.lt.s32.totalorder %s15, 2
      // Predicated region
      $region33: #{tpu_custom_call.1} parent=5 // pred_check
        %p203 = pneg %p202
      $region34: #{tpu_custom_call.1} parent=5 // pred_check_branch
        %205 = sbr.rel (%p203) target = $region36
      $region35: #{tpu_custom_call.1} parent=5 // pred_region
        // Predicated region
        $region37: #{tpu_custom_call.1} parent=35 // pred_check
          %p206 = pneg %p35
        $region38: #{tpu_custom_call.1} parent=35 // pred_check_branch
          %208 = sbr.rel (%p206) target = $region40
        $region39: #{tpu_custom_call.1} parent=35 // pred_region
          %p209 = scmp.lt.s32.totalorder %s15, 1
          %s210 = scalar_select %p209, %s15, 1
          %s211 = smul.addr %s210, 7
          %s212 = smul.addr %s211, 8
          %s213 = scalar_lea.vmem %s0, %s212
        $region40: #{tpu_custom_call.1} parent=35 // pred_fallthru
          _
      $region36: #{tpu_custom_call.1} parent=5 // pred_fallthru
        _
      %p214 = scmp.le.s32.totalorder 1, %s15
      %p215 = scmp.lt.s32.totalorder %s15, 3
      %p216 = pnand %p214, %p215
      %p217 = pneg %p216
      // Predicated region
      $region41: #{tpu_custom_call.1} parent=5 // pred_check
        _
      $region42: #{tpu_custom_call.1} parent=5 // pred_check_branch
        %219 = sbr.rel (%p216) target = $region44
      $region43: #{tpu_custom_call.1} parent=5 // pred_region
        %s220 = ssub.s32 %s15, 1
        %p221 = scmp.lt.s32.totalorder %s20, 1
        %s222 = scalar_select %p221, %s20, 1
        %s223 = smul.addr %s222, 7
        %s224 = smul.addr %s223, 8
        %s225 = scalar_lea.vmem %s0, %s224
        %p226 = pneg %p41
        %p227 = pneg %p38
        %p228 = pneg %p62
        %p229 = pneg %p59
        %p230 = pneg %p83
        %p231 = pneg %p80
        %p232 = pneg %p104
        %p233 = pneg %p101
        %p234 = pneg %p125
        %p235 = pneg %p122
        %p236 = pneg %p146
        %p237 = pneg %p143
        %p238 = pneg %p172
        %p239 = pneg %p169
        %s240 = sand.u32 %s159, 1
        %s241 = scalar_lea.sflag [#allocation4], %s240
        %s242 = sand.u32 %s159, 1
        %s243 = smul.addr %s242, 192
        %s244 = scalar_lea.vmem [#allocation3], %s243
        %p245 = scmp.lt.s32.totalorder %s20, 1
        %s246 = scalar_select %p245, %s20, 1
        %s247 = smul.addr %s246, 7
        %s248 = smul.addr %s247, 8
        %s249 = scalar_lea.vmem %s0, %s248
        %s250 = smul.u32 8, %s20
        %v251 = vld [vmem:[%s249] sm:$0xff]
        %v252 = vld [vmem:[%s249 + $0x8] sm:$0xff]
        %v253 = vld [vmem:[%s249 + $0x10] sm:$0xff]
        %v254 = vld [vmem:[%s249 + $0x18] sm:$0xff]
        %v255 = vld [vmem:[%s249 + $0x20] sm:$0xff]
        %v256 = vld [vmem:[%s249 + $0x28] sm:$0xff]
        %v257 = vld [vmem:[%s249 + $0x30] sm:$0xff]
        %258 = vst [vmem:[#allocation2] sm:$0xff] %v251
        %259 = vst [vmem:[#allocation2 + $0x8] sm:$0xff] %v252
        %260 = vst [vmem:[#allocation2 + $0x10] sm:$0xff] %v253
        %261 = vst [vmem:[#allocation2 + $0x18] sm:$0xff] %v254
        %262 = vst [vmem:[#allocation2 + $0x20] sm:$0xff] %v255
        %263 = vst [vmem:[#allocation2 + $0x28] sm:$0xff] %v256
        %vm264 = vcmask 261120
        %265 = vst.msk [vmem:[#allocation2 + $0x30] sm:$0xff] %vm264, %v257
        %vm266 = vcmask 1047808
        %267 = vrot.lane.b32.xlu0 %v251, 32
        %v268 = vpop.permute.xlu0 %267
        %v269 = vsel %vm266, %v268, %v257
        %277 = vrot.lane.b32.xlu0 %v251, 127
        %v278 = vpop.permute.xlu0 %277
        %279 = vrot.lane.b32.xlu0 %v252, 127
        %v280 = vpop.permute.xlu0 %279
        %281 = vrot.lane.b32.xlu0 %v253, 127
        %v282 = vpop.permute.xlu0 %281
        %283 = vrot.lane.b32.xlu0 %v254, 127
        %v284 = vpop.permute.xlu0 %283
        %285 = vrot.lane.b32.xlu0 %v255, 127
        %v286 = vpop.permute.xlu0 %285
        %287 = vrot.lane.b32.xlu0 %v256, 127
        %v288 = vpop.permute.xlu0 %287
        %289 = vrot.lane.b32.xlu0 %v269, 127
        %v290 = vpop.permute.xlu0 %289
        %vm291 = vcmask 1039360
        %v292 = vsel %vm291, %v278, %v280
        %v293 = vsel %vm291, %v280, %v282
        %v294 = vsel %vm291, %v282, %v284
        %v295 = vsel %vm291, %v284, %v286
        %v296 = vsel %vm291, %v286, %v288
        %v297 = vsel %vm291, %v288, %v290
        %305 = vst [vmem:[#allocation2 + $0x38] sm:$0xff] %v292
        %306 = vst [vmem:[#allocation2 + $0x40] sm:$0xff] %v293
        %307 = vst [vmem:[#allocation2 + $0x48] sm:$0xff] %v294
        %308 = vst [vmem:[#allocation2 + $0x50] sm:$0xff] %v295
        %309 = vst [vmem:[#allocation2 + $0x58] sm:$0xff] %v296
        %310 = vst [vmem:[#allocation2 + $0x60] sm:$0xff] %v297
        %311 = vst.msk [vmem:[#allocation2 + $0x68] sm:$0xff] %vm264, %v290
        %312 = vrot.lane.b32.xlu0 %v251, 126
        %v313 = vpop.permute.xlu0 %312
        %314 = vrot.lane.b32.xlu0 %v252, 126
        %v315 = vpop.permute.xlu0 %314
        %316 = vrot.lane.b32.xlu0 %v253, 126
        %v317 = vpop.permute.xlu0 %316
        %318 = vrot.lane.b32.xlu0 %v254, 126
        %v319 = vpop.permute.xlu0 %318
        %320 = vrot.lane.b32.xlu0 %v255, 126
        %v321 = vpop.permute.xlu0 %320
        %322 = vrot.lane.b32.xlu0 %v256, 126
        %v323 = vpop.permute.xlu0 %322
        %324 = vrot.lane.b32.xlu0 %v269, 126
        %v325 = vpop.permute.xlu0 %324
        %vm326 = vcmask 1031168
        %v327 = vsel %vm326, %v313, %v315
        %v328 = vsel %vm326, %v315, %v317
        %v329 = vsel %vm326, %v317, %v319
        %v330 = vsel %vm326, %v319, %v321
        %v331 = vsel %vm326, %v321, %v323
        %v332 = vsel %vm326, %v323, %v325
        %340 = vst [vmem:[#allocation2 + $0x70] sm:$0xff] %v327
        %341 = vst [vmem:[#allocation2 + $0x78] sm:$0xff] %v328
        %342 = vst [vmem:[#allocation2 + $0x80] sm:$0xff] %v329
        %343 = vst [vmem:[#allocation2 + $0x88] sm:$0xff] %v330
        %344 = vst [vmem:[#allocation2 + $0x90] sm:$0xff] %v331
        %345 = vst [vmem:[#allocation2 + $0x98] sm:$0xff] %v332
        %346 = vst.msk [vmem:[#allocation2 + $0xa0] sm:$0xff] %vm264, %v325
        %347 = vrot.lane.b32.xlu0 %v251, 125
        %v348 = vpop.permute.xlu0 %347
        %349 = vrot.lane.b32.xlu0 %v252, 125
        %v350 = vpop.permute.xlu0 %349
        %351 = vrot.lane.b32.xlu0 %v253, 125
        %v352 = vpop.permute.xlu0 %351
        %353 = vrot.lane.b32.xlu0 %v254, 125
        %v354 = vpop.permute.xlu0 %353
        %355 = vrot.lane.b32.xlu0 %v255, 125
        %v356 = vpop.permute.xlu0 %355
        %357 = vrot.lane.b32.xlu0 %v256, 125
        %v358 = vpop.permute.xlu0 %357
        %359 = vrot.lane.b32.xlu0 %v269, 125
        %v360 = vpop.permute.xlu0 %359
        %vm361 = vcmask 1022976
        %v362 = vsel %vm361, %v348, %v350
        %v363 = vsel %vm361, %v350, %v352
        %v364 = vsel %vm361, %v352, %v354
        %v365 = vsel %vm361, %v354, %v356
        %v366 = vsel %vm361, %v356, %v358
        %v367 = vsel %vm361, %v358, %v360
        %375 = vst [vmem:[#allocation2 + $0xa8] sm:$0xff] %v362
        %376 = vst [vmem:[#allocation2 + $0xb0] sm:$0xff] %v363
        %377 = vst [vmem:[#allocation2 + $0xb8] sm:$0xff] %v364
        %378 = vst [vmem:[#allocation2 + $0xc0] sm:$0xff] %v365
        %379 = vst [vmem:[#allocation2 + $0xc8] sm:$0xff] %v366
        %380 = vst [vmem:[#allocation2 + $0xd0] sm:$0xff] %v367
        %381 = vst.msk [vmem:[#allocation2 + $0xd8] sm:$0xff] %vm264, %v360
        %382 = vrot.lane.b32.xlu0 %v251, 124
        %v383 = vpop.permute.xlu0 %382
        %384 = vrot.lane.b32.xlu0 %v252, 124
        %v385 = vpop.permute.xlu0 %384
        %386 = vrot.lane.b32.xlu0 %v253, 124
        %v387 = vpop.permute.xlu0 %386
        %388 = vrot.lane.b32.xlu0 %v254, 124
        %v389 = vpop.permute.xlu0 %388
        %390 = vrot.lane.b32.xlu0 %v255, 124
        %v391 = vpop.permute.xlu0 %390
        %392 = vrot.lane.b32.xlu0 %v256, 124
        %v393 = vpop.permute.xlu0 %392
        %394 = vrot.lane.b32.xlu0 %v269, 124
        %v395 = vpop.permute.xlu0 %394
        %vm396 = vcmask 1014784
        %v397 = vsel %vm396, %v383, %v385
        %v398 = vsel %vm396, %v385, %v387
        %v399 = vsel %vm396, %v387, %v389
        %v400 = vsel %vm396, %v389, %v391
        %v401 = vsel %vm396, %v391, %v393
        %v402 = vsel %vm396, %v393, %v395
        %410 = vst [vmem:[#allocation2 + $0xe0] sm:$0xff] %v397
        %411 = vst [vmem:[#allocation2 + $0xe8] sm:$0xff] %v398
        %412 = vst [vmem:[#allocation2 + $0xf0] sm:$0xff] %v399
        %413 = vst [vmem:[#allocation2 + $0xf8] sm:$0xff] %v400
        %414 = vst [vmem:[#allocation2 + $0x100] sm:$0xff] %v401
        %415 = vst [vmem:[#allocation2 + $0x108] sm:$0xff] %v402
        %416 = vst.msk [vmem:[#allocation2 + $0x110] sm:$0xff] %vm264, %v395
        %417 = vrot.lane.b32.xlu0 %v251, 123
        %v418 = vpop.permute.xlu0 %417
        %419 = vrot.lane.b32.xlu0 %v252, 123
        %v420 = vpop.permute.xlu0 %419
        %421 = vrot.lane.b32.xlu0 %v253, 123
        %v422 = vpop.permute.xlu0 %421
        %423 = vrot.lane.b32.xlu0 %v254, 123
        %v424 = vpop.permute.xlu0 %423
        %425 = vrot.lane.b32.xlu0 %v255, 123
        %v426 = vpop.permute.xlu0 %425
        %427 = vrot.lane.b32.xlu0 %v256, 123
        %v428 = vpop.permute.xlu0 %427
        %429 = vrot.lane.b32.xlu0 %v269, 123
        %v430 = vpop.permute.xlu0 %429
        %vm431 = vcmask 1006592
        %v432 = vsel %vm431, %v418, %v420
        %v433 = vsel %vm431, %v420, %v422
        %v434 = vsel %vm431, %v422, %v424
        %v435 = vsel %vm431, %v424, %v426
        %v436 = vsel %vm431, %v426, %v428
        %v437 = vsel %vm431, %v428, %v430
        %445 = vst [vmem:[#allocation2 + $0x118] sm:$0xff] %v432
        %446 = vst [vmem:[#allocation2 + $0x120] sm:$0xff] %v433
        %447 = vst [vmem:[#allocation2 + $0x128] sm:$0xff] %v434
        %448 = vst [vmem:[#allocation2 + $0x130] sm:$0xff] %v435
        %449 = vst [vmem:[#allocation2 + $0x138] sm:$0xff] %v436
        %450 = vst [vmem:[#allocation2 + $0x140] sm:$0xff] %v437
        %451 = vst.msk [vmem:[#allocation2 + $0x148] sm:$0xff] %vm264, %v430
        %452 = vrot.lane.b32.xlu0 %v251, 122
        %v453 = vpop.permute.xlu0 %452
        %454 = vrot.lane.b32.xlu0 %v252, 122
        %v455 = vpop.permute.xlu0 %454
        %456 = vrot.lane.b32.xlu0 %v253, 122
        %v457 = vpop.permute.xlu0 %456
        %458 = vrot.lane.b32.xlu0 %v254, 122
        %v459 = vpop.permute.xlu0 %458
        %460 = vrot.lane.b32.xlu0 %v255, 122
        %v461 = vpop.permute.xlu0 %460
        %462 = vrot.lane.b32.xlu0 %v256, 122
        %v463 = vpop.permute.xlu0 %462
        %464 = vrot.lane.b32.xlu0 %v269, 122
        %v465 = vpop.permute.xlu0 %464
        %vm466 = vcmask 998400
        %v467 = vsel %vm466, %v453, %v455
        %v468 = vsel %vm466, %v455, %v457
        %v469 = vsel %vm466, %v457, %v459
        %v470 = vsel %vm466, %v459, %v461
        %v471 = vsel %vm466, %v461, %v463
        %v472 = vsel %vm466, %v463, %v465
        %480 = vst [vmem:[#allocation2 + $0x150] sm:$0xff] %v467
        %481 = vst [vmem:[#allocation2 + $0x158] sm:$0xff] %v468
        %482 = vst [vmem:[#allocation2 + $0x160] sm:$0xff] %v469
        %483 = vst [vmem:[#allocation2 + $0x168] sm:$0xff] %v470
        %484 = vst [vmem:[#allocation2 + $0x170] sm:$0xff] %v471
        %485 = vst [vmem:[#allocation2 + $0x178] sm:$0xff] %v472
        %486 = vst.msk [vmem:[#allocation2 + $0x180] sm:$0xff] %vm264, %v465
        %487 = vrot.lane.b32.xlu0 %v251, 121
        %v488 = vpop.permute.xlu0 %487
        %489 = vrot.lane.b32.xlu0 %v252, 121
        %v490 = vpop.permute.xlu0 %489
        %491 = vrot.lane.b32.xlu0 %v253, 121
        %v492 = vpop.permute.xlu0 %491
        %493 = vrot.lane.b32.xlu0 %v254, 121
        %v494 = vpop.permute.xlu0 %493
        %495 = vrot.lane.b32.xlu0 %v255, 121
        %v496 = vpop.permute.xlu0 %495
        %497 = vrot.lane.b32.xlu0 %v256, 121
        %v498 = vpop.permute.xlu0 %497
        %499 = vrot.lane.b32.xlu0 %v269, 121
        %v500 = vpop.permute.xlu0 %499
        %vm501 = vcmask 990208
        %v502 = vsel %vm501, %v488, %v490
        %v503 = vsel %vm501, %v490, %v492
        %v504 = vsel %vm501, %v492, %v494
        %v505 = vsel %vm501, %v494, %v496
        %v506 = vsel %vm501, %v496, %v498
        %v507 = vsel %vm501, %v498, %v500
        %515 = vst [vmem:[#allocation2 + $0x188] sm:$0xff] %v502
        %516 = vst [vmem:[#allocation2 + $0x190] sm:$0xff] %v503
        %517 = vst [vmem:[#allocation2 + $0x198] sm:$0xff] %v504
        %518 = vst [vmem:[#allocation2 + $0x1a0] sm:$0xff] %v505
        %519 = vst [vmem:[#allocation2 + $0x1a8] sm:$0xff] %v506
        %520 = vst [vmem:[#allocation2 + $0x1b0] sm:$0xff] %v507
        %521 = vst.msk [vmem:[#allocation2 + $0x1b8] sm:$0xff] %vm264, %v500
        %522 = vrot.lane.b32.xlu0 %v251, 120
        %v523 = vpop.permute.xlu0 %522
        %524 = vrot.lane.b32.xlu0 %v252, 120
        %v525 = vpop.permute.xlu0 %524
        %526 = vrot.lane.b32.xlu0 %v253, 120
        %v527 = vpop.permute.xlu0 %526
        %528 = vrot.lane.b32.xlu0 %v254, 120
        %v529 = vpop.permute.xlu0 %528
        %530 = vrot.lane.b32.xlu0 %v255, 120
        %v531 = vpop.permute.xlu0 %530
        %532 = vrot.lane.b32.xlu0 %v256, 120
        %v533 = vpop.permute.xlu0 %532
        %534 = vrot.lane.b32.xlu0 %v269, 120
        %v535 = vpop.permute.xlu0 %534
        %vm536 = vcmask 982016
        %v537 = vsel %vm536, %v523, %v525
        %v538 = vsel %vm536, %v525, %v527
        %v539 = vsel %vm536, %v527, %v529
        %v540 = vsel %vm536, %v529, %v531
        %v541 = vsel %vm536, %v531, %v533
        %v542 = vsel %vm536, %v533, %v535
        %550 = vst [vmem:[#allocation2 + $0x1c0] sm:$0xff] %v537
        %551 = vst [vmem:[#allocation2 + $0x1c8] sm:$0xff] %v538
        %552 = vst [vmem:[#allocation2 + $0x1d0] sm:$0xff] %v539
        %553 = vst [vmem:[#allocation2 + $0x1d8] sm:$0xff] %v540
        %554 = vst [vmem:[#allocation2 + $0x1e0] sm:$0xff] %v541
        %555 = vst [vmem:[#allocation2 + $0x1e8] sm:$0xff] %v542
        %556 = vst.msk [vmem:[#allocation2 + $0x1f0] sm:$0xff] %vm264, %v535
        %557 = vrot.lane.b32.xlu0 %v251, 119
        %v558 = vpop.permute.xlu0 %557
        %559 = vrot.lane.b32.xlu0 %v252, 119
        %v560 = vpop.permute.xlu0 %559
        %561 = vrot.lane.b32.xlu0 %v253, 119
        %v562 = vpop.permute.xlu0 %561
        %563 = vrot.lane.b32.xlu0 %v254, 119
        %v564 = vpop.permute.xlu0 %563
        %565 = vrot.lane.b32.xlu0 %v255, 119
        %v566 = vpop.permute.xlu0 %565
        %567 = vrot.lane.b32.xlu0 %v256, 119
        %v568 = vpop.permute.xlu0 %567
        %569 = vrot.lane.b32.xlu0 %v269, 119
        %v570 = vpop.permute.xlu0 %569
        %vm571 = vcmask 973824
        %v572 = vsel %vm571, %v558, %v560
        %v573 = vsel %vm571, %v560, %v562
        %v574 = vsel %vm571, %v562, %v564
        %v575 = vsel %vm571, %v564, %v566
        %v576 = vsel %vm571, %v566, %v568
        %v577 = vsel %vm571, %v568, %v570
        %585 = vst [vmem:[#allocation2 + $0x1f8] sm:$0xff] %v572
        %586 = vst [vmem:[#allocation2 + $0x200] sm:$0xff] %v573
        %587 = vst [vmem:[#allocation2 + $0x208] sm:$0xff] %v574
        %588 = vst [vmem:[#allocation2 + $0x210] sm:$0xff] %v575
        %589 = vst [vmem:[#allocation2 + $0x218] sm:$0xff] %v576
        %590 = vst [vmem:[#allocation2 + $0x220] sm:$0xff] %v577
        %591 = vst.msk [vmem:[#allocation2 + $0x228] sm:$0xff] %vm264, %v570
        %592 = vrot.lane.b32.xlu0 %v251, 118
        %v593 = vpop.permute.xlu0 %592
        %594 = vrot.lane.b32.xlu0 %v252, 118
        %v595 = vpop.permute.xlu0 %594
        %596 = vrot.lane.b32.xlu0 %v253, 118
        %v597 = vpop.permute.xlu0 %596
        %598 = vrot.lane.b32.xlu0 %v254, 118
        %v599 = vpop.permute.xlu0 %598
        %600 = vrot.lane.b32.xlu0 %v255, 118
        %v601 = vpop.permute.xlu0 %600
        %602 = vrot.lane.b32.xlu0 %v256, 118
        %v603 = vpop.permute.xlu0 %602
        %604 = vrot.lane.b32.xlu0 %v269, 118
        %v605 = vpop.permute.xlu0 %604
        %vm606 = vcmask 965632
        %v607 = vsel %vm606, %v593, %v595
        %v608 = vsel %vm606, %v595, %v597
        %v609 = vsel %vm606, %v597, %v599
        %v610 = vsel %vm606, %v599, %v601
        %v611 = vsel %vm606, %v601, %v603
        %v612 = vsel %vm606, %v603, %v605
        %620 = vst [vmem:[#allocation2 + $0x230] sm:$0xff] %v607
        %621 = vst [vmem:[#allocation2 + $0x238] sm:$0xff] %v608
        %622 = vst [vmem:[#allocation2 + $0x240] sm:$0xff] %v609
        %623 = vst [vmem:[#allocation2 + $0x248] sm:$0xff] %v610
        %624 = vst [vmem:[#allocation2 + $0x250] sm:$0xff] %v611
        %625 = vst [vmem:[#allocation2 + $0x258] sm:$0xff] %v612
        %626 = vst.msk [vmem:[#allocation2 + $0x260] sm:$0xff] %vm264, %v605
        %627 = vrot.lane.b32.xlu0 %v251, 117
        %v628 = vpop.permute.xlu0 %627
        %629 = vrot.lane.b32.xlu0 %v252, 117
        %v630 = vpop.permute.xlu0 %629
        %631 = vrot.lane.b32.xlu0 %v253, 117
        %v632 = vpop.permute.xlu0 %631
        %633 = vrot.lane.b32.xlu0 %v254, 117
        %v634 = vpop.permute.xlu0 %633
        %635 = vrot.lane.b32.xlu0 %v255, 117
        %v636 = vpop.permute.xlu0 %635
        %637 = vrot.lane.b32.xlu0 %v256, 117
        %v638 = vpop.permute.xlu0 %637
        %639 = vrot.lane.b32.xlu0 %v269, 117
        %v640 = vpop.permute.xlu0 %639
        %vm641 = vcmask 957440
        %v642 = vsel %vm641, %v628, %v630
        %v643 = vsel %vm641, %v630, %v632
        %v644 = vsel %vm641, %v632, %v634
        %v645 = vsel %vm641, %v634, %v636
        %v646 = vsel %vm641, %v636, %v638
        %v647 = vsel %vm641, %v638, %v640
        %655 = vst [vmem:[#allocation2 + $0x268] sm:$0xff] %v642
        %656 = vst [vmem:[#allocation2 + $0x270] sm:$0xff] %v643
        %657 = vst [vmem:[#allocation2 + $0x278] sm:$0xff] %v644
        %658 = vst [vmem:[#allocation2 + $0x280] sm:$0xff] %v645
        %659 = vst [vmem:[#allocation2 + $0x288] sm:$0xff] %v646
        %660 = vst [vmem:[#allocation2 + $0x290] sm:$0xff] %v647
        %661 = vst.msk [vmem:[#allocation2 + $0x298] sm:$0xff] %vm264, %v640
        %662 = vrot.lane.b32.xlu0 %v251, 116
        %v663 = vpop.permute.xlu0 %662
        %664 = vrot.lane.b32.xlu0 %v252, 116
        %v665 = vpop.permute.xlu0 %664
        %666 = vrot.lane.b32.xlu0 %v253, 116
        %v667 = vpop.permute.xlu0 %666
        %668 = vrot.lane.b32.xlu0 %v254, 116
        %v669 = vpop.permute.xlu0 %668
        %670 = vrot.lane.b32.xlu0 %v255, 116
        %v671 = vpop.permute.xlu0 %670
        %672 = vrot.lane.b32.xlu0 %v256, 116
        %v673 = vpop.permute.xlu0 %672
        %674 = vrot.lane.b32.xlu0 %v269, 116
        %v675 = vpop.permute.xlu0 %674
        %vm676 = vcmask 949248
        %v677 = vsel %vm676, %v663, %v665
        %v678 = vsel %vm676, %v665, %v667
        %v679 = vsel %vm676, %v667, %v669
        %v680 = vsel %vm676, %v669, %v671
        %v681 = vsel %vm676, %v671, %v673
        %v682 = vsel %vm676, %v673, %v675
        %690 = vst [vmem:[#allocation2 + $0x2a0] sm:$0xff] %v677
        %691 = vst [vmem:[#allocation2 + $0x2a8] sm:$0xff] %v678
        %692 = vst [vmem:[#allocation2 + $0x2b0] sm:$0xff] %v679
        %693 = vst [vmem:[#allocation2 + $0x2b8] sm:$0xff] %v680
        %694 = vst [vmem:[#allocation2 + $0x2c0] sm:$0xff] %v681
        %695 = vst [vmem:[#allocation2 + $0x2c8] sm:$0xff] %v682
        %696 = vst.msk [vmem:[#allocation2 + $0x2d0] sm:$0xff] %vm264, %v675
        %697 = vrot.lane.b32.xlu0 %v251, 115
        %v698 = vpop.permute.xlu0 %697
        %699 = vrot.lane.b32.xlu0 %v252, 115
        %v700 = vpop.permute.xlu0 %699
        %701 = vrot.lane.b32.xlu0 %v253, 115
        %v702 = vpop.permute.xlu0 %701
        %703 = vrot.lane.b32.xlu0 %v254, 115
        %v704 = vpop.permute.xlu0 %703
        %705 = vrot.lane.b32.xlu0 %v255, 115
        %v706 = vpop.permute.xlu0 %705
        %707 = vrot.lane.b32.xlu0 %v256, 115
        %v708 = vpop.permute.xlu0 %707
        %709 = vrot.lane.b32.xlu0 %v269, 115
        %v710 = vpop.permute.xlu0 %709
        %vm711 = vcmask 941056
        %v712 = vsel %vm711, %v698, %v700
        %v713 = vsel %vm711, %v700, %v702
        %v714 = vsel %vm711, %v702, %v704
        %v715 = vsel %vm711, %v704, %v706
        %v716 = vsel %vm711, %v706, %v708
        %v717 = vsel %vm711, %v708, %v710
        %725 = vst [vmem:[#allocation2 + $0x2d8] sm:$0xff] %v712
        %726 = vst [vmem:[#allocation2 + $0x2e0] sm:$0xff] %v713
        %727 = vst [vmem:[#allocation2 + $0x2e8] sm:$0xff] %v714
        %728 = vst [vmem:[#allocation2 + $0x2f0] sm:$0xff] %v715
        %729 = vst [vmem:[#allocation2 + $0x2f8] sm:$0xff] %v716
        %730 = vst [vmem:[#allocation2 + $0x300] sm:$0xff] %v717
        %731 = vst.msk [vmem:[#allocation2 + $0x308] sm:$0xff] %vm264, %v710
        %732 = vrot.lane.b32.xlu0 %v251, 114
        %v733 = vpop.permute.xlu0 %732
        %734 = vrot.lane.b32.xlu0 %v252, 114
        %v735 = vpop.permute.xlu0 %734
        %736 = vrot.lane.b32.xlu0 %v253, 114
        %v737 = vpop.permute.xlu0 %736
        %738 = vrot.lane.b32.xlu0 %v254, 114
        %v739 = vpop.permute.xlu0 %738
        %740 = vrot.lane.b32.xlu0 %v255, 114
        %v741 = vpop.permute.xlu0 %740
        %742 = vrot.lane.b32.xlu0 %v256, 114
        %v743 = vpop.permute.xlu0 %742
        %744 = vrot.lane.b32.xlu0 %v269, 114
        %v745 = vpop.permute.xlu0 %744
        %vm746 = vcmask 932864
        %v747 = vsel %vm746, %v733, %v735
        %v748 = vsel %vm746, %v735, %v737
        %v749 = vsel %vm746, %v737, %v739
        %v750 = vsel %vm746, %v739, %v741
        %v751 = vsel %vm746, %v741, %v743
        %v752 = vsel %vm746, %v743, %v745
        %760 = vst [vmem:[#allocation2 + $0x310] sm:$0xff] %v747
        %761 = vst [vmem:[#allocation2 + $0x318] sm:$0xff] %v748
        %762 = vst [vmem:[#allocation2 + $0x320] sm:$0xff] %v749
        %763 = vst [vmem:[#allocation2 + $0x328] sm:$0xff] %v750
        %764 = vst [vmem:[#allocation2 + $0x330] sm:$0xff] %v751
        %765 = vst [vmem:[#allocation2 + $0x338] sm:$0xff] %v752
        %766 = vst.msk [vmem:[#allocation2 + $0x340] sm:$0xff] %vm264, %v745
        %767 = vrot.lane.b32.xlu0 %v251, 113
        %v768 = vpop.permute.xlu0 %767
        %769 = vrot.lane.b32.xlu0 %v252, 113
        %v770 = vpop.permute.xlu0 %769
        %771 = vrot.lane.b32.xlu0 %v253, 113
        %v772 = vpop.permute.xlu0 %771
        %773 = vrot.lane.b32.xlu0 %v254, 113
        %v774 = vpop.permute.xlu0 %773
        %775 = vrot.lane.b32.xlu0 %v255, 113
        %v776 = vpop.permute.xlu0 %775
        %777 = vrot.lane.b32.xlu0 %v256, 113
        %v778 = vpop.permute.xlu0 %777
        %779 = vrot.lane.b32.xlu0 %v269, 113
        %v780 = vpop.permute.xlu0 %779
        %vm781 = vcmask 924672
        %v782 = vsel %vm781, %v768, %v770
        %v783 = vsel %vm781, %v770, %v772
        %v784 = vsel %vm781, %v772, %v774
        %v785 = vsel %vm781, %v774, %v776
        %v786 = vsel %vm781, %v776, %v778
        %v787 = vsel %vm781, %v778, %v780
        %795 = vst [vmem:[#allocation2 + $0x348] sm:$0xff] %v782
        %796 = vst [vmem:[#allocation2 + $0x350] sm:$0xff] %v783
        %797 = vst [vmem:[#allocation2 + $0x358] sm:$0xff] %v784
        %798 = vst [vmem:[#allocation2 + $0x360] sm:$0xff] %v785
        %799 = vst [vmem:[#allocation2 + $0x368] sm:$0xff] %v786
        %800 = vst [vmem:[#allocation2 + $0x370] sm:$0xff] %v787
        %801 = vst.msk [vmem:[#allocation2 + $0x378] sm:$0xff] %vm264, %v780
        %802 = vrot.lane.b32.xlu0 %v251, 112
        %v803 = vpop.permute.xlu0 %802
        %804 = vrot.lane.b32.xlu0 %v252, 112
        %v805 = vpop.permute.xlu0 %804
        %806 = vrot.lane.b32.xlu0 %v253, 112
        %v807 = vpop.permute.xlu0 %806
        %808 = vrot.lane.b32.xlu0 %v254, 112
        %v809 = vpop.permute.xlu0 %808
        %810 = vrot.lane.b32.xlu0 %v255, 112
        %v811 = vpop.permute.xlu0 %810
        %812 = vrot.lane.b32.xlu0 %v256, 112
        %v813 = vpop.permute.xlu0 %812
        %814 = vrot.lane.b32.xlu0 %v269, 112
        %v815 = vpop.permute.xlu0 %814
        %vm816 = vcmask 916480
        %v817 = vsel %vm816, %v803, %v805
        %v818 = vsel %vm816, %v805, %v807
        %v819 = vsel %vm816, %v807, %v809
        %v820 = vsel %vm816, %v809, %v811
        %v821 = vsel %vm816, %v811, %v813
        %v822 = vsel %vm816, %v813, %v815
        %830 = vst [vmem:[#allocation2 + $0x380] sm:$0xff] %v817
        %831 = vst [vmem:[#allocation2 + $0x388] sm:$0xff] %v818
        %832 = vst [vmem:[#allocation2 + $0x390] sm:$0xff] %v819
        %833 = vst [vmem:[#allocation2 + $0x398] sm:$0xff] %v820
        %834 = vst [vmem:[#allocation2 + $0x3a0] sm:$0xff] %v821
        %835 = vst [vmem:[#allocation2 + $0x3a8] sm:$0xff] %v822
        %836 = vst.msk [vmem:[#allocation2 + $0x3b0] sm:$0xff] %vm264, %v815
        %837 = vrot.lane.b32.xlu0 %v251, 111
        %v838 = vpop.permute.xlu0 %837
        %839 = vrot.lane.b32.xlu0 %v252, 111
        %v840 = vpop.permute.xlu0 %839
        %841 = vrot.lane.b32.xlu0 %v253, 111
        %v842 = vpop.permute.xlu0 %841
        %843 = vrot.lane.b32.xlu0 %v254, 111
        %v844 = vpop.permute.xlu0 %843
        %845 = vrot.lane.b32.xlu0 %v255, 111
        %v846 = vpop.permute.xlu0 %845
        %847 = vrot.lane.b32.xlu0 %v256, 111
        %v848 = vpop.permute.xlu0 %847
        %849 = vrot.lane.b32.xlu0 %v269, 111
        %v850 = vpop.permute.xlu0 %849
        %vm851 = vcmask 908288
        %v852 = vsel %vm851, %v838, %v840
        %v853 = vsel %vm851, %v840, %v842
        %v854 = vsel %vm851, %v842, %v844
        %v855 = vsel %vm851, %v844, %v846
        %v856 = vsel %vm851, %v846, %v848
        %v857 = vsel %vm851, %v848, %v850
        %865 = vst [vmem:[#allocation2 + $0x3b8] sm:$0xff] %v852
        %866 = vst [vmem:[#allocation2 + $0x3c0] sm:$0xff] %v853
        %867 = vst [vmem:[#allocation2 + $0x3c8] sm:$0xff] %v854
        %868 = vst [vmem:[#allocation2 + $0x3d0] sm:$0xff] %v855
        %869 = vst [vmem:[#allocation2 + $0x3d8] sm:$0xff] %v856
        %870 = vst [vmem:[#allocation2 + $0x3e0] sm:$0xff] %v857
        %871 = vst.msk [vmem:[#allocation2 + $0x3e8] sm:$0xff] %vm264, %v850
        %872 = vrot.lane.b32.xlu0 %v251, 110
        %v873 = vpop.permute.xlu0 %872
        %874 = vrot.lane.b32.xlu0 %v252, 110
        %v875 = vpop.permute.xlu0 %874
        %876 = vrot.lane.b32.xlu0 %v253, 110
        %v877 = vpop.permute.xlu0 %876
        %878 = vrot.lane.b32.xlu0 %v254, 110
        %v879 = vpop.permute.xlu0 %878
        %880 = vrot.lane.b32.xlu0 %v255, 110
        %v881 = vpop.permute.xlu0 %880
        %882 = vrot.lane.b32.xlu0 %v256, 110
        %v883 = vpop.permute.xlu0 %882
        %884 = vrot.lane.b32.xlu0 %v269, 110
        %v885 = vpop.permute.xlu0 %884
        %vm886 = vcmask 900096
        %v887 = vsel %vm886, %v873, %v875
        %v888 = vsel %vm886, %v875, %v877
        %v889 = vsel %vm886, %v877, %v879
        %v890 = vsel %vm886, %v879, %v881
        %v891 = vsel %vm886, %v881, %v883
        %v892 = vsel %vm886, %v883, %v885
        %900 = vst [vmem:[#allocation2 + $0x3f0] sm:$0xff] %v887
        %901 = vst [vmem:[#allocation2 + $0x3f8] sm:$0xff] %v888
        %902 = vst [vmem:[#allocation2 + $0x400] sm:$0xff] %v889
        %903 = vst [vmem:[#allocation2 + $0x408] sm:$0xff] %v890
        %904 = vst [vmem:[#allocation2 + $0x410] sm:$0xff] %v891
        %905 = vst [vmem:[#allocation2 + $0x418] sm:$0xff] %v892
        %906 = vst.msk [vmem:[#allocation2 + $0x420] sm:$0xff] %vm264, %v885
        %907 = vrot.lane.b32.xlu0 %v251, 109
        %v908 = vpop.permute.xlu0 %907
        %909 = vrot.lane.b32.xlu0 %v252, 109
        %v910 = vpop.permute.xlu0 %909
        %911 = vrot.lane.b32.xlu0 %v253, 109
        %v912 = vpop.permute.xlu0 %911
        %913 = vrot.lane.b32.xlu0 %v254, 109
        %v914 = vpop.permute.xlu0 %913
        %915 = vrot.lane.b32.xlu0 %v255, 109
        %v916 = vpop.permute.xlu0 %915
        %917 = vrot.lane.b32.xlu0 %v256, 109
        %v918 = vpop.permute.xlu0 %917
        %919 = vrot.lane.b32.xlu0 %v269, 109
        %v920 = vpop.permute.xlu0 %919
        %vm921 = vcmask 891904
        %v922 = vsel %vm921, %v908, %v910
        %v923 = vsel %vm921, %v910, %v912
        %v924 = vsel %vm921, %v912, %v914
        %v925 = vsel %vm921, %v914, %v916
        %v926 = vsel %vm921, %v916, %v918
        %v927 = vsel %vm921, %v918, %v920
        %935 = vst [vmem:[#allocation2 + $0x428] sm:$0xff] %v922
        %936 = vst [vmem:[#allocation2 + $0x430] sm:$0xff] %v923
        %937 = vst [vmem:[#allocation2 + $0x438] sm:$0xff] %v924
        %938 = vst [vmem:[#allocation2 + $0x440] sm:$0xff] %v925
        %939 = vst [vmem:[#allocation2 + $0x448] sm:$0xff] %v926
        %940 = vst [vmem:[#allocation2 + $0x450] sm:$0xff] %v927
        %941 = vst.msk [vmem:[#allocation2 + $0x458] sm:$0xff] %vm264, %v920
        %942 = vrot.lane.b32.xlu0 %v251, 108
        %v943 = vpop.permute.xlu0 %942
        %944 = vrot.lane.b32.xlu0 %v252, 108
        %v945 = vpop.permute.xlu0 %944
        %946 = vrot.lane.b32.xlu0 %v253, 108
        %v947 = vpop.permute.xlu0 %946
        %948 = vrot.lane.b32.xlu0 %v254, 108
        %v949 = vpop.permute.xlu0 %948
        %950 = vrot.lane.b32.xlu0 %v255, 108
        %v951 = vpop.permute.xlu0 %950
        %952 = vrot.lane.b32.xlu0 %v256, 108
        %v953 = vpop.permute.xlu0 %952
        %954 = vrot.lane.b32.xlu0 %v269, 108
        %v955 = vpop.permute.xlu0 %954
        %vm956 = vcmask 883712
        %v957 = vsel %vm956, %v943, %v945
        %v958 = vsel %vm956, %v945, %v947
        %v959 = vsel %vm956, %v947, %v949
        %v960 = vsel %vm956, %v949, %v951
        %v961 = vsel %vm956, %v951, %v953
        %v962 = vsel %vm956, %v953, %v955
        %970 = vst [vmem:[#allocation2 + $0x460] sm:$0xff] %v957
        %971 = vst [vmem:[#allocation2 + $0x468] sm:$0xff] %v958
        %972 = vst [vmem:[#allocation2 + $0x470] sm:$0xff] %v959
        %973 = vst [vmem:[#allocation2 + $0x478] sm:$0xff] %v960
        %974 = vst [vmem:[#allocation2 + $0x480] sm:$0xff] %v961
        %975 = vst [vmem:[#allocation2 + $0x488] sm:$0xff] %v962
        %976 = vst.msk [vmem:[#allocation2 + $0x490] sm:$0xff] %vm264, %v955
        %977 = vrot.lane.b32.xlu0 %v251, 107
        %v978 = vpop.permute.xlu0 %977
        %979 = vrot.lane.b32.xlu0 %v252, 107
        %v980 = vpop.permute.xlu0 %979
        %981 = vrot.lane.b32.xlu0 %v253, 107
        %v982 = vpop.permute.xlu0 %981
        %983 = vrot.lane.b32.xlu0 %v254, 107
        %v984 = vpop.permute.xlu0 %983
        %985 = vrot.lane.b32.xlu0 %v255, 107
        %v986 = vpop.permute.xlu0 %985
        %987 = vrot.lane.b32.xlu0 %v256, 107
        %v988 = vpop.permute.xlu0 %987
        %989 = vrot.lane.b32.xlu0 %v269, 107
        %v990 = vpop.permute.xlu0 %989
        %vm991 = vcmask 875520
        %v992 = vsel %vm991, %v978, %v980
        %v993 = vsel %vm991, %v980, %v982
        %v994 = vsel %vm991, %v982, %v984
        %v995 = vsel %vm991, %v984, %v986
        %v996 = vsel %vm991, %v986, %v988
        %v997 = vsel %vm991, %v988, %v990
        %1005 = vst [vmem:[#allocation2 + $0x498] sm:$0xff] %v992
        %1006 = vst [vmem:[#allocation2 + $0x4a0] sm:$0xff] %v993
        %1007 = vst [vmem:[#allocation2 + $0x4a8] sm:$0xff] %v994
        %1008 = vst [vmem:[#allocation2 + $0x4b0] sm:$0xff] %v995
        %1009 = vst [vmem:[#allocation2 + $0x4b8] sm:$0xff] %v996
        %1010 = vst [vmem:[#allocation2 + $0x4c0] sm:$0xff] %v997
        %1011 = vst.msk [vmem:[#allocation2 + $0x4c8] sm:$0xff] %vm264, %v990
        %1012 = vrot.lane.b32.xlu0 %v251, 106
        %v1013 = vpop.permute.xlu0 %1012
        %1014 = vrot.lane.b32.xlu0 %v252, 106
        %v1015 = vpop.permute.xlu0 %1014
        %1016 = vrot.lane.b32.xlu0 %v253, 106
        %v1017 = vpop.permute.xlu0 %1016
        %1018 = vrot.lane.b32.xlu0 %v254, 106
        %v1019 = vpop.permute.xlu0 %1018
        %1020 = vrot.lane.b32.xlu0 %v255, 106
        %v1021 = vpop.permute.xlu0 %1020
        %1022 = vrot.lane.b32.xlu0 %v256, 106
        %v1023 = vpop.permute.xlu0 %1022
        %1024 = vrot.lane.b32.xlu0 %v269, 106
        %v1025 = vpop.permute.xlu0 %1024
        %vm1026 = vcmask 867328
        %v1027 = vsel %vm1026, %v1013, %v1015
        %v1028 = vsel %vm1026, %v1015, %v1017
        %v1029 = vsel %vm1026, %v1017, %v1019
        %v1030 = vsel %vm1026, %v1019, %v1021
        %v1031 = vsel %vm1026, %v1021, %v1023
        %v1032 = vsel %vm1026, %v1023, %v1025
        %1040 = vst [vmem:[#allocation2 + $0x4d0] sm:$0xff] %v1027
        %1041 = vst [vmem:[#allocation2 + $0x4d8] sm:$0xff] %v1028
        %1042 = vst [vmem:[#allocation2 + $0x4e0] sm:$0xff] %v1029
        %1043 = vst [vmem:[#allocation2 + $0x4e8] sm:$0xff] %v1030
        %1044 = vst [vmem:[#allocation2 + $0x4f0] sm:$0xff] %v1031
        %1045 = vst [vmem:[#allocation2 + $0x4f8] sm:$0xff] %v1032
        %1046 = vst.msk [vmem:[#allocation2 + $0x500] sm:$0xff] %vm264, %v1025
        %1047 = vrot.lane.b32.xlu0 %v251, 105
        %v1048 = vpop.permute.xlu0 %1047
        %1049 = vrot.lane.b32.xlu0 %v252, 105
        %v1050 = vpop.permute.xlu0 %1049
        %1051 = vrot.lane.b32.xlu0 %v253, 105
        %v1052 = vpop.permute.xlu0 %1051
        %1053 = vrot.lane.b32.xlu0 %v254, 105
        %v1054 = vpop.permute.xlu0 %1053
        %1055 = vrot.lane.b32.xlu0 %v255, 105
        %v1056 = vpop.permute.xlu0 %1055
        %1057 = vrot.lane.b32.xlu0 %v256, 105
        %v1058 = vpop.permute.xlu0 %1057
        %1059 = vrot.lane.b32.xlu0 %v269, 105
        %v1060 = vpop.permute.xlu0 %1059
        %vm1061 = vcmask 859136
        %v1062 = vsel %vm1061, %v1048, %v1050
        %v1063 = vsel %vm1061, %v1050, %v1052
        %v1064 = vsel %vm1061, %v1052, %v1054
        %v1065 = vsel %vm1061, %v1054, %v1056
        %v1066 = vsel %vm1061, %v1056, %v1058
        %v1067 = vsel %vm1061, %v1058, %v1060
        %1075 = vst [vmem:[#allocation2 + $0x508] sm:$0xff] %v1062
        %1076 = vst [vmem:[#allocation2 + $0x510] sm:$0xff] %v1063
        %1077 = vst [vmem:[#allocation2 + $0x518] sm:$0xff] %v1064
        %1078 = vst [vmem:[#allocation2 + $0x520] sm:$0xff] %v1065
        %1079 = vst [vmem:[#allocation2 + $0x528] sm:$0xff] %v1066
        %1080 = vst [vmem:[#allocation2 + $0x530] sm:$0xff] %v1067
        %1081 = vst.msk [vmem:[#allocation2 + $0x538] sm:$0xff] %vm264, %v1060
        %1082 = vrot.lane.b32.xlu0 %v251, 104
        %v1083 = vpop.permute.xlu0 %1082
        %1084 = vrot.lane.b32.xlu0 %v252, 104
        %v1085 = vpop.permute.xlu0 %1084
        %1086 = vrot.lane.b32.xlu0 %v253, 104
        %v1087 = vpop.permute.xlu0 %1086
        %1088 = vrot.lane.b32.xlu0 %v254, 104
        %v1089 = vpop.permute.xlu0 %1088
        %1090 = vrot.lane.b32.xlu0 %v255, 104
        %v1091 = vpop.permute.xlu0 %1090
        %1092 = vrot.lane.b32.xlu0 %v256, 104
        %v1093 = vpop.permute.xlu0 %1092
        %1094 = vrot.lane.b32.xlu0 %v269, 104
        %v1095 = vpop.permute.xlu0 %1094
        %vm1096 = vcmask 850944
        %v1097 = vsel %vm1096, %v1083, %v1085
        %v1098 = vsel %vm1096, %v1085, %v1087
        %v1099 = vsel %vm1096, %v1087, %v1089
        %v1100 = vsel %vm1096, %v1089, %v1091
        %v1101 = vsel %vm1096, %v1091, %v1093
        %v1102 = vsel %vm1096, %v1093, %v1095
        %1110 = vst [vmem:[#allocation2 + $0x540] sm:$0xff] %v1097
        %1111 = vst [vmem:[#allocation2 + $0x548] sm:$0xff] %v1098
        %1112 = vst [vmem:[#allocation2 + $0x550] sm:$0xff] %v1099
        %1113 = vst [vmem:[#allocation2 + $0x558] sm:$0xff] %v1100
        %1114 = vst [vmem:[#allocation2 + $0x560] sm:$0xff] %v1101
        %1115 = vst [vmem:[#allocation2 + $0x568] sm:$0xff] %v1102
        %1116 = vst.msk [vmem:[#allocation2 + $0x570] sm:$0xff] %vm264, %v1095
        %1117 = vrot.lane.b32.xlu0 %v251, 103
        %v1118 = vpop.permute.xlu0 %1117
        %1119 = vrot.lane.b32.xlu0 %v252, 103
        %v1120 = vpop.permute.xlu0 %1119
        %1121 = vrot.lane.b32.xlu0 %v253, 103
        %v1122 = vpop.permute.xlu0 %1121
        %1123 = vrot.lane.b32.xlu0 %v254, 103
        %v1124 = vpop.permute.xlu0 %1123
        %1125 = vrot.lane.b32.xlu0 %v255, 103
        %v1126 = vpop.permute.xlu0 %1125
        %1127 = vrot.lane.b32.xlu0 %v256, 103
        %v1128 = vpop.permute.xlu0 %1127
        %1129 = vrot.lane.b32.xlu0 %v269, 103
        %v1130 = vpop.permute.xlu0 %1129
        %vm1131 = vcmask 842752
        %v1132 = vsel %vm1131, %v1118, %v1120
        %v1133 = vsel %vm1131, %v1120, %v1122
        %v1134 = vsel %vm1131, %v1122, %v1124
        %v1135 = vsel %vm1131, %v1124, %v1126
        %v1136 = vsel %vm1131, %v1126, %v1128
        %v1137 = vsel %vm1131, %v1128, %v1130
        %1145 = vst [vmem:[#allocation2 + $0x578] sm:$0xff] %v1132
        %1146 = vst [vmem:[#allocation2 + $0x580] sm:$0xff] %v1133
        %1147 = vst [vmem:[#allocation2 + $0x588] sm:$0xff] %v1134
        %1148 = vst [vmem:[#allocation2 + $0x590] sm:$0xff] %v1135
        %1149 = vst [vmem:[#allocation2 + $0x598] sm:$0xff] %v1136
        %1150 = vst [vmem:[#allocation2 + $0x5a0] sm:$0xff] %v1137
        %1151 = vst.msk [vmem:[#allocation2 + $0x5a8] sm:$0xff] %vm264, %v1130
        %1152 = vrot.lane.b32.xlu0 %v251, 102
        %v1153 = vpop.permute.xlu0 %1152
        %1154 = vrot.lane.b32.xlu0 %v252, 102
        %v1155 = vpop.permute.xlu0 %1154
        %1156 = vrot.lane.b32.xlu0 %v253, 102
        %v1157 = vpop.permute.xlu0 %1156
        %1158 = vrot.lane.b32.xlu0 %v254, 102
        %v1159 = vpop.permute.xlu0 %1158
        %1160 = vrot.lane.b32.xlu0 %v255, 102
        %v1161 = vpop.permute.xlu0 %1160
        %1162 = vrot.lane.b32.xlu0 %v256, 102
        %v1163 = vpop.permute.xlu0 %1162
        %1164 = vrot.lane.b32.xlu0 %v269, 102
        %v1165 = vpop.permute.xlu0 %1164
        %vm1166 = vcmask 834560
        %v1167 = vsel %vm1166, %v1153, %v1155
        %v1168 = vsel %vm1166, %v1155, %v1157
        %v1169 = vsel %vm1166, %v1157, %v1159
        %v1170 = vsel %vm1166, %v1159, %v1161
        %v1171 = vsel %vm1166, %v1161, %v1163
        %v1172 = vsel %vm1166, %v1163, %v1165
        %1180 = vst [vmem:[#allocation2 + $0x5b0] sm:$0xff] %v1167
        %1181 = vst [vmem:[#allocation2 + $0x5b8] sm:$0xff] %v1168
        %1182 = vst [vmem:[#allocation2 + $0x5c0] sm:$0xff] %v1169
        %1183 = vst [vmem:[#allocation2 + $0x5c8] sm:$0xff] %v1170
        %1184 = vst [vmem:[#allocation2 + $0x5d0] sm:$0xff] %v1171
        %1185 = vst [vmem:[#allocation2 + $0x5d8] sm:$0xff] %v1172
        %1186 = vst.msk [vmem:[#allocation2 + $0x5e0] sm:$0xff] %vm264, %v1165
        %1187 = vrot.lane.b32.xlu0 %v251, 101
        %v1188 = vpop.permute.xlu0 %1187
        %1189 = vrot.lane.b32.xlu0 %v252, 101
        %v1190 = vpop.permute.xlu0 %1189
        %1191 = vrot.lane.b32.xlu0 %v253, 101
        %v1192 = vpop.permute.xlu0 %1191
        %1193 = vrot.lane.b32.xlu0 %v254, 101
        %v1194 = vpop.permute.xlu0 %1193
        %1195 = vrot.lane.b32.xlu0 %v255, 101
        %v1196 = vpop.permute.xlu0 %1195
        %1197 = vrot.lane.b32.xlu0 %v256, 101
        %v1198 = vpop.permute.xlu0 %1197
        %1199 = vrot.lane.b32.xlu0 %v269, 101
        %v1200 = vpop.permute.xlu0 %1199
        %vm1201 = vcmask 826368
        %v1202 = vsel %vm1201, %v1188, %v1190
        %v1203 = vsel %vm1201, %v1190, %v1192
        %v1204 = vsel %vm1201, %v1192, %v1194
        %v1205 = vsel %vm1201, %v1194, %v1196
        %v1206 = vsel %vm1201, %v1196, %v1198
        %v1207 = vsel %vm1201, %v1198, %v1200
        %1215 = vst [vmem:[#allocation2 + $0x5e8] sm:$0xff] %v1202
        %1216 = vst [vmem:[#allocation2 + $0x5f0] sm:$0xff] %v1203
        %1217 = vst [vmem:[#allocation2 + $0x5f8] sm:$0xff] %v1204
        %1218 = vst [vmem:[#allocation2 + $0x600] sm:$0xff] %v1205
        %1219 = vst [vmem:[#allocation2 + $0x608] sm:$0xff] %v1206
        %1220 = vst [vmem:[#allocation2 + $0x610] sm:$0xff] %v1207
        %1221 = vst.msk [vmem:[#allocation2 + $0x618] sm:$0xff] %vm264, %v1200
        %1222 = vrot.lane.b32.xlu0 %v251, 100
        %v1223 = vpop.permute.xlu0 %1222
        %1224 = vrot.lane.b32.xlu0 %v252, 100
        %v1225 = vpop.permute.xlu0 %1224
        %1226 = vrot.lane.b32.xlu0 %v253, 100
        %v1227 = vpop.permute.xlu0 %1226
        %1228 = vrot.lane.b32.xlu0 %v254, 100
        %v1229 = vpop.permute.xlu0 %1228
        %1230 = vrot.lane.b32.xlu0 %v255, 100
        %v1231 = vpop.permute.xlu0 %1230
        %1232 = vrot.lane.b32.xlu0 %v256, 100
        %v1233 = vpop.permute.xlu0 %1232
        %1234 = vrot.lane.b32.xlu0 %v269, 100
        %v1235 = vpop.permute.xlu0 %1234
        %vm1236 = vcmask 818176
        %v1237 = vsel %vm1236, %v1223, %v1225
        %v1238 = vsel %vm1236, %v1225, %v1227
        %v1239 = vsel %vm1236, %v1227, %v1229
        %v1240 = vsel %vm1236, %v1229, %v1231
        %v1241 = vsel %vm1236, %v1231, %v1233
        %v1242 = vsel %vm1236, %v1233, %v1235
        %1250 = vst [vmem:[#allocation2 + $0x620] sm:$0xff] %v1237
        %1251 = vst [vmem:[#allocation2 + $0x628] sm:$0xff] %v1238
        %1252 = vst [vmem:[#allocation2 + $0x630] sm:$0xff] %v1239
        %1253 = vst [vmem:[#allocation2 + $0x638] sm:$0xff] %v1240
        %1254 = vst [vmem:[#allocation2 + $0x640] sm:$0xff] %v1241
        %1255 = vst [vmem:[#allocation2 + $0x648] sm:$0xff] %v1242
        %1256 = vst.msk [vmem:[#allocation2 + $0x650] sm:$0xff] %vm264, %v1235
        %1257 = vrot.lane.b32.xlu0 %v251, 99
        %v1258 = vpop.permute.xlu0 %1257
        %1259 = vrot.lane.b32.xlu0 %v252, 99
        %v1260 = vpop.permute.xlu0 %1259
        %1261 = vrot.lane.b32.xlu0 %v253, 99
        %v1262 = vpop.permute.xlu0 %1261
        %1263 = vrot.lane.b32.xlu0 %v254, 99
        %v1264 = vpop.permute.xlu0 %1263
        %1265 = vrot.lane.b32.xlu0 %v255, 99
        %v1266 = vpop.permute.xlu0 %1265
        %1267 = vrot.lane.b32.xlu0 %v256, 99
        %v1268 = vpop.permute.xlu0 %1267
        %1269 = vrot.lane.b32.xlu0 %v269, 99
        %v1270 = vpop.permute.xlu0 %1269
        %vm1271 = vcmask 809984
        %v1272 = vsel %vm1271, %v1258, %v1260
        %v1273 = vsel %vm1271, %v1260, %v1262
        %v1274 = vsel %vm1271, %v1262, %v1264
        %v1275 = vsel %vm1271, %v1264, %v1266
        %v1276 = vsel %vm1271, %v1266, %v1268
        %v1277 = vsel %vm1271, %v1268, %v1270
        %1285 = vst [vmem:[#allocation2 + $0x658] sm:$0xff] %v1272
        %1286 = vst [vmem:[#allocation2 + $0x660] sm:$0xff] %v1273
        %1287 = vst [vmem:[#allocation2 + $0x668] sm:$0xff] %v1274
        %1288 = vst [vmem:[#allocation2 + $0x670] sm:$0xff] %v1275
        %1289 = vst [vmem:[#allocation2 + $0x678] sm:$0xff] %v1276
        %1290 = vst [vmem:[#allocation2 + $0x680] sm:$0xff] %v1277
        %1291 = vst.msk [vmem:[#allocation2 + $0x688] sm:$0xff] %vm264, %v1270
        %1292 = vrot.lane.b32.xlu0 %v251, 98
        %v1293 = vpop.permute.xlu0 %1292
        %1294 = vrot.lane.b32.xlu0 %v252, 98
        %v1295 = vpop.permute.xlu0 %1294
        %1296 = vrot.lane.b32.xlu0 %v253, 98
        %v1297 = vpop.permute.xlu0 %1296
        %1298 = vrot.lane.b32.xlu0 %v254, 98
        %v1299 = vpop.permute.xlu0 %1298
        %1300 = vrot.lane.b32.xlu0 %v255, 98
        %v1301 = vpop.permute.xlu0 %1300
        %1302 = vrot.lane.b32.xlu0 %v256, 98
        %v1303 = vpop.permute.xlu0 %1302
        %1304 = vrot.lane.b32.xlu0 %v269, 98
        %v1305 = vpop.permute.xlu0 %1304
        %vm1306 = vcmask 801792
        %v1307 = vsel %vm1306, %v1293, %v1295
        %v1308 = vsel %vm1306, %v1295, %v1297
        %v1309 = vsel %vm1306, %v1297, %v1299
        %v1310 = vsel %vm1306, %v1299, %v1301
        %v1311 = vsel %vm1306, %v1301, %v1303
        %v1312 = vsel %vm1306, %v1303, %v1305
        %1320 = vst [vmem:[#allocation2 + $0x690] sm:$0xff] %v1307
        %1321 = vst [vmem:[#allocation2 + $0x698] sm:$0xff] %v1308
        %1322 = vst [vmem:[#allocation2 + $0x6a0] sm:$0xff] %v1309
        %1323 = vst [vmem:[#allocation2 + $0x6a8] sm:$0xff] %v1310
        %1324 = vst [vmem:[#allocation2 + $0x6b0] sm:$0xff] %v1311
        %1325 = vst [vmem:[#allocation2 + $0x6b8] sm:$0xff] %v1312
        %1326 = vst.msk [vmem:[#allocation2 + $0x6c0] sm:$0xff] %vm264, %v1305
        %v1327 = vld [vmem:[%s1] sm:$0xff]
        %v1328 = vld [vmem:[%s1 + $0x8] sm:$0xff]
        %v1329 = vld [vmem:[%s1 + $0x10] sm:$0xff]
        %v1330 = vld [vmem:[%s1 + $0x18] sm:$0xff]
        %v1331 = vld [vmem:[%s1 + $0x20] sm:$0xff]
        %v1332 = vld [vmem:[%s1 + $0x28] sm:$0xff]
        %v1333 = vld [vmem:[%s1 + $0x30] sm:$0xff]
        %v1334 = vld [vmem:[%s1 + $0x38] sm:$0xff]
        %v1335 = vld [vmem:[%s1 + $0x40] sm:$0xff]
        %v1336 = vld [vmem:[%s1 + $0x48] sm:$0xff]
        %v1337 = vld [vmem:[%s1 + $0x50] sm:$0xff]
        %v1338 = vld [vmem:[%s1 + $0x58] sm:$0xff]
        %v1339 = vld [vmem:[%s1 + $0x60] sm:$0xff]
        %v1340 = vld [vmem:[%s1 + $0x68] sm:$0xff]
        %v1341 = vld [vmem:[%s1 + $0x70] sm:$0xff]
        %v1342 = vld [vmem:[%s1 + $0x78] sm:$0xff]
        %v1343 = vld [vmem:[#allocation2] sm:$0xff]
        %v1344 = vld [vmem:[#allocation2 + $0x8] sm:$0xff]
        %v1345 = vld [vmem:[#allocation2 + $0x10] sm:$0xff]
        %v1346 = vld [vmem:[#allocation2 + $0x18] sm:$0xff]
        %v1347 = vld [vmem:[#allocation2 + $0x20] sm:$0xff]
        %v1348 = vld [vmem:[#allocation2 + $0x28] sm:$0xff]
        %v1349 = vld [vmem:[#allocation2 + $0x30] sm:$0xff]
        %v1350 = vld [vmem:[#allocation2 + $0x38] sm:$0xff]
        %v1351 = vld [vmem:[#allocation2 + $0x40] sm:$0xff]
        %v1352 = vld [vmem:[#allocation2 + $0x48] sm:$0xff]
        %v1353 = vld [vmem:[#allocation2 + $0x50] sm:$0xff]
        %v1354 = vld [vmem:[#allocation2 + $0x58] sm:$0xff]
        %v1355 = vld [vmem:[#allocation2 + $0x60] sm:$0xff]
        %v1356 = vld [vmem:[#allocation2 + $0x68] sm:$0xff]
        %v1357 = vld [vmem:[#allocation2 + $0x70] sm:$0xff]
        %v1358 = vld [vmem:[#allocation2 + $0x78] sm:$0xff]
        %v1359 = vld [vmem:[#allocation2 + $0x80] sm:$0xff]
        %v1360 = vld [vmem:[#allocation2 + $0x88] sm:$0xff]
        %v1361 = vld [vmem:[#allocation2 + $0x90] sm:$0xff]
        %v1362 = vld [vmem:[#allocation2 + $0x98] sm:$0xff]
        %v1363 = vld [vmem:[#allocation2 + $0xa0] sm:$0xff]
        %v1364 = vld [vmem:[#allocation2 + $0xa8] sm:$0xff]
        %v1365 = vld [vmem:[#allocation2 + $0xb0] sm:$0xff]
        %v1366 = vld [vmem:[#allocation2 + $0xb8] sm:$0xff]
        %v1367 = vld [vmem:[#allocation2 + $0xc0] sm:$0xff]
        %v1368 = vld [vmem:[#allocation2 + $0xc8] sm:$0xff]
        %v1369 = vld [vmem:[#allocation2 + $0xd0] sm:$0xff]
        %v1370 = vld [vmem:[#allocation2 + $0xd8] sm:$0xff]
        %v1371 = vld [vmem:[#allocation2 + $0xe0] sm:$0xff]
        %v1372 = vld [vmem:[#allocation2 + $0xe8] sm:$0xff]
        %v1373 = vld [vmem:[#allocation2 + $0xf0] sm:$0xff]
        %v1374 = vld [vmem:[#allocation2 + $0xf8] sm:$0xff]
        %v1375 = vld [vmem:[#allocation2 + $0x100] sm:$0xff]
        %v1376 = vld [vmem:[#allocation2 + $0x108] sm:$0xff]
        %v1377 = vld [vmem:[#allocation2 + $0x110] sm:$0xff]
        %v1378 = vld [vmem:[#allocation2 + $0x118] sm:$0xff]
        %v1379 = vld [vmem:[#allocation2 + $0x120] sm:$0xff]
        %v1380 = vld [vmem:[#allocation2 + $0x128] sm:$0xff]
        %v1381 = vld [vmem:[#allocation2 + $0x130] sm:$0xff]
        %v1382 = vld [vmem:[#allocation2 + $0x138] sm:$0xff]
        %v1383 = vld [vmem:[#allocation2 + $0x140] sm:$0xff]
        %v1384 = vld [vmem:[#allocation2 + $0x148] sm:$0xff]
        %v1385 = vld [vmem:[#allocation2 + $0x150] sm:$0xff]
        %v1386 = vld [vmem:[#allocation2 + $0x158] sm:$0xff]
        %v1387 = vld [vmem:[#allocation2 + $0x160] sm:$0xff]
        %v1388 = vld [vmem:[#allocation2 + $0x168] sm:$0xff]
        %v1389 = vld [vmem:[#allocation2 + $0x170] sm:$0xff]
        %v1390 = vld [vmem:[#allocation2 + $0x178] sm:$0xff]
        %v1391 = vld [vmem:[#allocation2 + $0x180] sm:$0xff]
        %v1392 = vld [vmem:[#allocation2 + $0x188] sm:$0xff]
        %v1393 = vld [vmem:[#allocation2 + $0x190] sm:$0xff]
        %v1394 = vld [vmem:[#allocation2 + $0x198] sm:$0xff]
        %v1395 = vld [vmem:[#allocation2 + $0x1a0] sm:$0xff]
        %v1396 = vld [vmem:[#allocation2 + $0x1a8] sm:$0xff]
        %v1397 = vld [vmem:[#allocation2 + $0x1b0] sm:$0xff]
        %v1398 = vld [vmem:[#allocation2 + $0x1b8] sm:$0xff]
        %v1399 = vld [vmem:[#allocation2 + $0x1c0] sm:$0xff]
        %v1400 = vld [vmem:[#allocation2 + $0x1c8] sm:$0xff]
        %v1401 = vld [vmem:[#allocation2 + $0x1d0] sm:$0xff]
        %v1402 = vld [vmem:[#allocation2 + $0x1d8] sm:$0xff]
        %v1403 = vld [vmem:[#allocation2 + $0x1e0] sm:$0xff]
        %v1404 = vld [vmem:[#allocation2 + $0x1e8] sm:$0xff]
        %v1405 = vld [vmem:[#allocation2 + $0x1f0] sm:$0xff]
        %v1406 = vld [vmem:[#allocation2 + $0x1f8] sm:$0xff]
        %v1407 = vld [vmem:[#allocation2 + $0x200] sm:$0xff]
        %v1408 = vld [vmem:[#allocation2 + $0x208] sm:$0xff]
        %v1409 = vld [vmem:[#allocation2 + $0x210] sm:$0xff]
        %v1410 = vld [vmem:[#allocation2 + $0x218] sm:$0xff]
        %v1411 = vld [vmem:[#allocation2 + $0x220] sm:$0xff]
        %v1412 = vld [vmem:[#allocation2 + $0x228] sm:$0xff]
        %v1413 = vld [vmem:[#allocation2 + $0x230] sm:$0xff]
        %v1414 = vld [vmem:[#allocation2 + $0x238] sm:$0xff]
        %v1415 = vld [vmem:[#allocation2 + $0x240] sm:$0xff]
        %v1416 = vld [vmem:[#allocation2 + $0x248] sm:$0xff]
        %v1417 = vld [vmem:[#allocation2 + $0x250] sm:$0xff]
        %v1418 = vld [vmem:[#allocation2 + $0x258] sm:$0xff]
        %v1419 = vld [vmem:[#allocation2 + $0x260] sm:$0xff]
        %v1420 = vld [vmem:[#allocation2 + $0x268] sm:$0xff]
        %v1421 = vld [vmem:[#allocation2 + $0x270] sm:$0xff]
        %v1422 = vld [vmem:[#allocation2 + $0x278] sm:$0xff]
        %v1423 = vld [vmem:[#allocation2 + $0x280] sm:$0xff]
        %v1424 = vld [vmem:[#allocation2 + $0x288] sm:$0xff]
        %v1425 = vld [vmem:[#allocation2 + $0x290] sm:$0xff]
        %v1426 = vld [vmem:[#allocation2 + $0x298] sm:$0xff]
        %v1427 = vld [vmem:[#allocation2 + $0x2a0] sm:$0xff]
        %v1428 = vld [vmem:[#allocation2 + $0x2a8] sm:$0xff]
        %v1429 = vld [vmem:[#allocation2 + $0x2b0] sm:$0xff]
        %v1430 = vld [vmem:[#allocation2 + $0x2b8] sm:$0xff]
        %v1431 = vld [vmem:[#allocation2 + $0x2c0] sm:$0xff]
        %v1432 = vld [vmem:[#allocation2 + $0x2c8] sm:$0xff]
        %v1433 = vld [vmem:[#allocation2 + $0x2d0] sm:$0xff]
        %v1434 = vld [vmem:[#allocation2 + $0x2d8] sm:$0xff]
        %v1435 = vld [vmem:[#allocation2 + $0x2e0] sm:$0xff]
        %v1436 = vld [vmem:[#allocation2 + $0x2e8] sm:$0xff]
        %v1437 = vld [vmem:[#allocation2 + $0x2f0] sm:$0xff]
        %v1438 = vld [vmem:[#allocation2 + $0x2f8] sm:$0xff]
        %v1439 = vld [vmem:[#allocation2 + $0x300] sm:$0xff]
        %v1440 = vld [vmem:[#allocation2 + $0x308] sm:$0xff]
        %v1441 = vld [vmem:[#allocation2 + $0x310] sm:$0xff]
        %v1442 = vld [vmem:[#allocation2 + $0x318] sm:$0xff]
        %v1443 = vld [vmem:[#allocation2 + $0x320] sm:$0xff]
        %v1444 = vld [vmem:[#allocation2 + $0x328] sm:$0xff]
        %v1445 = vld [vmem:[#allocation2 + $0x330] sm:$0xff]
        %v1446 = vld [vmem:[#allocation2 + $0x338] sm:$0xff]
        %v1447 = vld [vmem:[#allocation2 + $0x340] sm:$0xff]
        %v1448 = vld [vmem:[#allocation2 + $0x348] sm:$0xff]
        %v1449 = vld [vmem:[#allocation2 + $0x350] sm:$0xff]
        %v1450 = vld [vmem:[#allocation2 + $0x358] sm:$0xff]
        %v1451 = vld [vmem:[#allocation2 + $0x360] sm:$0xff]
        %v1452 = vld [vmem:[#allocation2 + $0x368] sm:$0xff]
        %v1453 = vld [vmem:[#allocation2 + $0x370] sm:$0xff]
        %v1454 = vld [vmem:[#allocation2 + $0x378] sm:$0xff]
        %v1455 = vld [vmem:[#allocation2 + $0x380] sm:$0xff]
        %v1456 = vld [vmem:[#allocation2 + $0x388] sm:$0xff]
        %v1457 = vld [vmem:[#allocation2 + $0x390] sm:$0xff]
        %v1458 = vld [vmem:[#allocation2 + $0x398] sm:$0xff]
        %v1459 = vld [vmem:[#allocation2 + $0x3a0] sm:$0xff]
        %v1460 = vld [vmem:[#allocation2 + $0x3a8] sm:$0xff]
        %v1461 = vld [vmem:[#allocation2 + $0x3b0] sm:$0xff]
        %v1462 = vld [vmem:[#allocation2 + $0x3b8] sm:$0xff]
        %v1463 = vld [vmem:[#allocation2 + $0x3c0] sm:$0xff]
        %v1464 = vld [vmem:[#allocation2 + $0x3c8] sm:$0xff]
        %v1465 = vld [vmem:[#allocation2 + $0x3d0] sm:$0xff]
        %v1466 = vld [vmem:[#allocation2 + $0x3d8] sm:$0xff]
        %v1467 = vld [vmem:[#allocation2 + $0x3e0] sm:$0xff]
        %v1468 = vld [vmem:[#allocation2 + $0x3e8] sm:$0xff]
        %v1469 = vld [vmem:[#allocation2 + $0x3f0] sm:$0xff]
        %v1470 = vld [vmem:[#allocation2 + $0x3f8] sm:$0xff]
        %v1471 = vld [vmem:[#allocation2 + $0x400] sm:$0xff]
        %v1472 = vld [vmem:[#allocation2 + $0x408] sm:$0xff]
        %v1473 = vld [vmem:[#allocation2 + $0x410] sm:$0xff]
        %v1474 = vld [vmem:[#allocation2 + $0x418] sm:$0xff]
        %v1475 = vld [vmem:[#allocation2 + $0x420] sm:$0xff]
        %v1476 = vld [vmem:[#allocation2 + $0x428] sm:$0xff]
        %v1477 = vld [vmem:[#allocation2 + $0x430] sm:$0xff]
        %v1478 = vld [vmem:[#allocation2 + $0x438] sm:$0xff]
        %v1479 = vld [vmem:[#allocation2 + $0x440] sm:$0xff]
        %v1480 = vld [vmem:[#allocation2 + $0x448] sm:$0xff]
        %v1481 = vld [vmem:[#allocation2 + $0x450] sm:$0xff]
        %v1482 = vld [vmem:[#allocation2 + $0x458] sm:$0xff]
        %v1483 = vld [vmem:[#allocation2 + $0x460] sm:$0xff]
        %v1484 = vld [vmem:[#allocation2 + $0x468] sm:$0xff]
        %v1485 = vld [vmem:[#allocation2 + $0x470] sm:$0xff]
        %v1486 = vld [vmem:[#allocation2 + $0x478] sm:$0xff]
        %v1487 = vld [vmem:[#allocation2 + $0x480] sm:$0xff]
        %v1488 = vld [vmem:[#allocation2 + $0x488] sm:$0xff]
        %v1489 = vld [vmem:[#allocation2 + $0x490] sm:$0xff]
        %v1490 = vld [vmem:[#allocation2 + $0x498] sm:$0xff]
        %v1491 = vld [vmem:[#allocation2 + $0x4a0] sm:$0xff]
        %v1492 = vld [vmem:[#allocation2 + $0x4a8] sm:$0xff]
        %v1493 = vld [vmem:[#allocation2 + $0x4b0] sm:$0xff]
        %v1494 = vld [vmem:[#allocation2 + $0x4b8] sm:$0xff]
        %v1495 = vld [vmem:[#allocation2 + $0x4c0] sm:$0xff]
        %v1496 = vld [vmem:[#allocation2 + $0x4c8] sm:$0xff]
        %v1497 = vld [vmem:[#allocation2 + $0x4d0] sm:$0xff]
        %v1498 = vld [vmem:[#allocation2 + $0x4d8] sm:$0xff]
        %v1499 = vld [vmem:[#allocation2 + $0x4e0] sm:$0xff]
        %v1500 = vld [vmem:[#allocation2 + $0x4e8] sm:$0xff]
        %v1501 = vld [vmem:[#allocation2 + $0x4f0] sm:$0xff]
        %v1502 = vld [vmem:[#allocation2 + $0x4f8] sm:$0xff]
        %v1503 = vld [vmem:[#allocation2 + $0x500] sm:$0xff]
        %v1504 = vld [vmem:[#allocation2 + $0x508] sm:$0xff]
        %v1505 = vld [vmem:[#allocation2 + $0x510] sm:$0xff]
        %v1506 = vld [vmem:[#allocation2 + $0x518] sm:$0xff]
        %v1507 = vld [vmem:[#allocation2 + $0x520] sm:$0xff]
        %v1508 = vld [vmem:[#allocation2 + $0x528] sm:$0xff]
        %v1509 = vld [vmem:[#allocation2 + $0x530] sm:$0xff]
        %v1510 = vld [vmem:[#allocation2 + $0x538] sm:$0xff]
        %v1511 = vld [vmem:[#allocation2 + $0x540] sm:$0xff]
        %v1512 = vld [vmem:[#allocation2 + $0x548] sm:$0xff]
        %v1513 = vld [vmem:[#allocation2 + $0x550] sm:$0xff]
        %v1514 = vld [vmem:[#allocation2 + $0x558] sm:$0xff]
        %v1515 = vld [vmem:[#allocation2 + $0x560] sm:$0xff]
        %v1516 = vld [vmem:[#allocation2 + $0x568] sm:$0xff]
        %v1517 = vld [vmem:[#allocation2 + $0x570] sm:$0xff]
        %v1518 = vld [vmem:[#allocation2 + $0x578] sm:$0xff]
        %v1519 = vld [vmem:[#allocation2 + $0x580] sm:$0xff]
        %v1520 = vld [vmem:[#allocation2 + $0x588] sm:$0xff]
        %v1521 = vld [vmem:[#allocation2 + $0x590] sm:$0xff]
        %v1522 = vld [vmem:[#allocation2 + $0x598] sm:$0xff]
        %v1523 = vld [vmem:[#allocation2 + $0x5a0] sm:$0xff]
        %v1524 = vld [vmem:[#allocation2 + $0x5a8] sm:$0xff]
        %v1525 = vld [vmem:[#allocation2 + $0x5b0] sm:$0xff]
        %v1526 = vld [vmem:[#allocation2 + $0x5b8] sm:$0xff]
        %v1527 = vld [vmem:[#allocation2 + $0x5c0] sm:$0xff]
        %v1528 = vld [vmem:[#allocation2 + $0x5c8] sm:$0xff]
        %v1529 = vld [vmem:[#allocation2 + $0x5d0] sm:$0xff]
        %v1530 = vld [vmem:[#allocation2 + $0x5d8] sm:$0xff]
        %v1531 = vld [vmem:[#allocation2 + $0x5e0] sm:$0xff]
        %v1532 = vld [vmem:[#allocation2 + $0x5e8] sm:$0xff]
        %v1533 = vld [vmem:[#allocation2 + $0x5f0] sm:$0xff]
        %v1534 = vld [vmem:[#allocation2 + $0x5f8] sm:$0xff]
        %v1535 = vld [vmem:[#allocation2 + $0x600] sm:$0xff]
        %v1536 = vld [vmem:[#allocation2 + $0x608] sm:$0xff]
        %v1537 = vld [vmem:[#allocation2 + $0x610] sm:$0xff]
        %v1538 = vld [vmem:[#allocation2 + $0x618] sm:$0xff]
        %v1539 = vld [vmem:[#allocation2 + $0x620] sm:$0xff]
        %v1540 = vld [vmem:[#allocation2 + $0x628] sm:$0xff]
        %v1541 = vld [vmem:[#allocation2 + $0x630] sm:$0xff]
        %v1542 = vld [vmem:[#allocation2 + $0x638] sm:$0xff]
        %v1543 = vld [vmem:[#allocation2 + $0x640] sm:$0xff]
        %v1544 = vld [vmem:[#allocation2 + $0x648] sm:$0xff]
        %v1545 = vld [vmem:[#allocation2 + $0x650] sm:$0xff]
        %v1546 = vld [vmem:[#allocation2 + $0x658] sm:$0xff]
        %v1547 = vld [vmem:[#allocation2 + $0x660] sm:$0xff]
        %v1548 = vld [vmem:[#allocation2 + $0x668] sm:$0xff]
        %v1549 = vld [vmem:[#allocation2 + $0x670] sm:$0xff]
        %v1550 = vld [vmem:[#allocation2 + $0x678] sm:$0xff]
        %v1551 = vld [vmem:[#allocation2 + $0x680] sm:$0xff]
        %v1552 = vld [vmem:[#allocation2 + $0x688] sm:$0xff]
        %v1553 = vld [vmem:[#allocation2 + $0x690] sm:$0xff]
        %v1554 = vld [vmem:[#allocation2 + $0x698] sm:$0xff]
        %v1555 = vld [vmem:[#allocation2 + $0x6a0] sm:$0xff]
        %v1556 = vld [vmem:[#allocation2 + $0x6a8] sm:$0xff]
        %v1557 = vld [vmem:[#allocation2 + $0x6b0] sm:$0xff]
        %v1558 = vld [vmem:[#allocation2 + $0x6b8] sm:$0xff]
        %v1559 = vld [vmem:[#allocation2 + $0x6c0] sm:$0xff]
        %v1561 = vsel %vm536, %v1328, 0
        %v1564 = vsel %vm536, %v1330, 0
        %v1567 = vsel %vm536, %v1332, 0
        %v1570 = vsel %vm536, %v1334, 0
        %v1573 = vsel %vm536, %v1336, 0
        %v1576 = vsel %vm536, %v1338, 0
        %v1579 = vsel %vm536, %v1340, 0
        %v1582 = vsel %vm536, %v1342, 0
        %1584 = vmatprep.subr.mxu0 %v1344
        %1585 = vmatpush1.msra.mxu0 %v1343
        %1586 = vmatprep.subr.mxu0 %v1351
        %1587 = vmatpush1.msra.mxu0 %v1350
        %1588 = vmatprep.subr.mxu0 %v1358
        %1589 = vmatpush1.msra.mxu0 %v1357
        %1590 = vmatprep.subr.mxu0 %v1365
        %1591 = vmatpush1.msra.mxu0 %v1364
        %1592 = vmatprep.subr.mxu0 %v1372
        %1593 = vmatpush1.msra.mxu0 %v1371
        %1594 = vmatprep.subr.mxu0 %v1379
        %1595 = vmatpush1.msra.mxu0 %v1378
        %1596 = vmatprep.subr.mxu0 %v1386
        %1597 = vmatpush1.msra.mxu0 %v1385
        %1598 = vmatprep.subr.mxu0 %v1393
        %1599 = vmatpush1.msra.mxu0 %v1392
        %1600 = vmatprep.subr.mxu0 %v1400
        %1601 = vmatpush1.msra.mxu0 %v1399
        %1602 = vmatprep.subr.mxu0 %v1407
        %1603 = vmatpush1.msra.mxu0 %v1406
        %1604 = vmatprep.subr.mxu0 %v1414
        %1605 = vmatpush1.msra.mxu0 %v1413
        %1606 = vmatprep.subr.mxu0 %v1421
        %1607 = vmatpush1.msra.mxu0 %v1420
        %1608 = vmatprep.subr.mxu0 %v1428
        %1609 = vmatpush1.msra.mxu0 %v1427
        %1610 = vmatprep.subr.mxu0 %v1435
        %1611 = vmatpush1.msra.mxu0 %v1434
        %1612 = vmatprep.subr.mxu0 %v1442
        %1613 = vmatpush1.msra.mxu0 %v1441
        %1614 = vmatprep.subr.mxu0 %v1449
        %1615 = vmatpush1.msra.mxu0 %v1448
        %1616 = vmatprep.subr.mxu0 %v1456
        %1617 = vmatpush1.msra.mxu0 %v1455
        %1618 = vmatprep.subr.mxu0 %v1463
        %1619 = vmatpush1.msra.mxu0 %v1462
        %1620 = vmatprep.subr.mxu0 %v1470
        %1621 = vmatpush1.msra.mxu0 %v1469
        %1622 = vmatprep.subr.mxu0 %v1477
        %1623 = vmatpush1.msra.mxu0 %v1476
        %1624 = vmatprep.subr.mxu0 %v1484
        %1625 = vmatpush1.msra.mxu0 %v1483
        %1626 = vmatprep.subr.mxu0 %v1491
        %1627 = vmatpush1.msra.mxu0 %v1490
        %1628 = vmatprep.subr.mxu0 %v1498
        %1629 = vmatpush1.msra.mxu0 %v1497
        %1630 = vmatprep.subr.mxu0 %v1505
        %1631 = vmatpush1.msra.mxu0 %v1504
        %1632 = vmatprep.subr.mxu0 %v1512
        %1633 = vmatpush1.msra.mxu0 %v1511
        %1634 = vmatprep.subr.mxu0 %v1519
        %1635 = vmatpush1.msra.mxu0 %v1518
        %1636 = vmatprep.subr.mxu0 %v1526
        %1637 = vmatpush1.msra.mxu0 %v1525
        %1638 = vmatprep.subr.mxu0 %v1533
        %1639 = vmatpush1.msra.mxu0 %v1532
        %1640 = vmatprep.subr.mxu0 %v1540
        %1641 = vmatpush1.msra.mxu0 %v1539
        %1642 = vmatprep.subr.mxu0 %v1547
        %1643 = vmatpush1.msra.mxu0 %v1546
        %1644 = vmatprep.subr.mxu0 %v1554
        %1645 = vmatpush1.msra.mxu0 %v1553
        %1646 = vmatprep.subr.mxu0 0.0
        %1647 = vmatpush1.msra.mxu0 0.0
        %1648 = vmatprep.mubr.f32.mxu0 %v1561
        %1649 = vmatmul.mubr.f32.gmra.mrb[0].mxu0 %v1327
        %v1650 = vpop.f32.mrb[0].mxu0
        %v1651 = vadd.f32 0.0, %v1650
        %v1652 = vpop.f32.mrb[0].mxu0
        %v1653 = vadd.f32 0.0, %v1652
        %1654 = vmatprep.mubr.f32.mxu0 %v1564
        %1655 = vmatmul.mubr.f32.gmra.mrb[0].mxu0 %v1329
        %v1656 = vpop.f32.mrb[0].mxu0
        %v1657 = vadd.f32 0.0, %v1656
        %v1658 = vpop.f32.mrb[0].mxu0
        %v1659 = vadd.f32 0.0, %v1658
        %1660 = vmatprep.mubr.f32.mxu0 %v1567
        %1661 = vmatmul.mubr.f32.gmra.mrb[0].mxu0 %v1331
        %v1662 = vpop.f32.mrb[0].mxu0
        %v1663 = vadd.f32 0.0, %v1662
        %v1664 = vpop.f32.mrb[0].mxu0
        %v1665 = vadd.f32 0.0, %v1664
        %1666 = vmatprep.mubr.f32.mxu0 %v1570
        %1667 = vmatmul.mubr.f32.gmra.mrb[0].mxu0 %v1333
        %v1668 = vpop.f32.mrb[0].mxu0
        %v1669 = vadd.f32 0.0, %v1668
        %v1670 = vpop.f32.mrb[0].mxu0
        %v1671 = vadd.f32 0.0, %v1670
        %1672 = vmatprep.mubr.f32.mxu0 %v1573
        %1673 = vmatmul.mubr.f32.gmra.mrb[0].mxu0 %v1335
        %v1674 = vpop.f32.mrb[0].mxu0
        %v1675 = vadd.f32 0.0, %v1674
        %v1676 = vpop.f32.mrb[0].mxu0
        %v1677 = vadd.f32 0.0, %v1676
        %1678 = vmatprep.mubr.f32.mxu0 %v1576
        %1679 = vmatmul.mubr.f32.gmra.mrb[0].mxu0 %v1337
        %v1680 = vpop.f32.mrb[0].mxu0
        %v1681 = vadd.f32 0.0, %v1680
        %v1682 = vpop.f32.mrb[0].mxu0
        %v1683 = vadd.f32 0.0, %v1682
        %1684 = vmatprep.mubr.f32.mxu0 %v1579
        %1685 = vmatmul.mubr.f32.gmra.mrb[0].mxu0 %v1339
        %v1686 = vpop.f32.mrb[0].mxu0
        %v1687 = vadd.f32 0.0, %v1686
        %v1688 = vpop.f32.mrb[0].mxu0
        %v1689 = vadd.f32 0.0, %v1688
        %1690 = vmatprep.mubr.f32.mxu0 %v1582
        %1691 = vmatmul.mubr.f32.gmra.mrb[0].mxu0 %v1341
        %v1692 = vpop.f32.mrb[0].mxu0
        %v1693 = vadd.f32 0.0, %v1692
        %v1694 = vpop.f32.mrb[0].mxu0
        %v1695 = vadd.f32 0.0, %v1694
        %1696 = vdwg.mxu0
        %1697 = vmatprep.subr.mxu0 %v1346
        %1698 = vmatpush1.msra.mxu0 %v1345
        %1699 = vmatprep.subr.mxu0 %v1353
        %1700 = vmatpush1.msra.mxu0 %v1352
        %1701 = vmatprep.subr.mxu0 %v1360
        %1702 = vmatpush1.msra.mxu0 %v1359
        %1703 = vmatprep.subr.mxu0 %v1367
        %1704 = vmatpush1.msra.mxu0 %v1366
        %1705 = vmatprep.subr.mxu0 %v1374
        %1706 = vmatpush1.msra.mxu0 %v1373
        %1707 = vmatprep.subr.mxu0 %v1381
        %1708 = vmatpush1.msra.mxu0 %v1380
        %1709 = vmatprep.subr.mxu0 %v1388
        %1710 = vmatpush1.msra.mxu0 %v1387
        %1711 = vmatprep.subr.mxu0 %v1395
        %1712 = vmatpush1.msra.mxu0 %v1394
        %1713 = vmatprep.subr.mxu0 %v1402
        %1714 = vmatpush1.msra.mxu0 %v1401
        %1715 = vmatprep.subr.mxu0 %v1409
        %1716 = vmatpush1.msra.mxu0 %v1408
        %1717 = vmatprep.subr.mxu0 %v1416
        %1718 = vmatpush1.msra.mxu0 %v1415
        %1719 = vmatprep.subr.mxu0 %v1423
        %1720 = vmatpush1.msra.mxu0 %v1422
        %1721 = vmatprep.subr.mxu0 %v1430
        %1722 = vmatpush1.msra.mxu0 %v1429
        %1723 = vmatprep.subr.mxu0 %v1437
        %1724 = vmatpush1.msra.mxu0 %v1436
        %1725 = vmatprep.subr.mxu0 %v1444
        %1726 = vmatpush1.msra.mxu0 %v1443
        %1727 = vmatprep.subr.mxu0 %v1451
        %1728 = vmatpush1.msra.mxu0 %v1450
        %1729 = vmatprep.subr.mxu0 %v1458
        %1730 = vmatpush1.msra.mxu0 %v1457
        %1731 = vmatprep.subr.mxu0 %v1465
        %1732 = vmatpush1.msra.mxu0 %v1464
        %1733 = vmatprep.subr.mxu0 %v1472
        %1734 = vmatpush1.msra.mxu0 %v1471
        %1735 = vmatprep.subr.mxu0 %v1479
        %1736 = vmatpush1.msra.mxu0 %v1478
        %1737 = vmatprep.subr.mxu0 %v1486
        %1738 = vmatpush1.msra.mxu0 %v1485
        %1739 = vmatprep.subr.mxu0 %v1493
        %1740 = vmatpush1.msra.mxu0 %v1492
        %1741 = vmatprep.subr.mxu0 %v1500
        %1742 = vmatpush1.msra.mxu0 %v1499
        %1743 = vmatprep.subr.mxu0 %v1507
        %1744 = vmatpush1.msra.mxu0 %v1506
        %1745 = vmatprep.subr.mxu0 %v1514
        %1746 = vmatpush1.msra.mxu0 %v1513
        %1747 = vmatprep.subr.mxu0 %v1521
        %1748 = vmatpush1.msra.mxu0 %v1520
        %1749 = vmatprep.subr.mxu0 %v1528
        %1750 = vmatpush1.msra.mxu0 %v1527
        %1751 = vmatprep.subr.mxu0 %v1535
        %1752 = vmatpush1.msra.mxu0 %v1534
        %1753 = vmatprep.subr.mxu0 %v1542
        %1754 = vmatpush1.msra.mxu0 %v1541
        %1755 = vmatprep.subr.mxu0 %v1549
        %1756 = vmatpush1.msra.mxu0 %v1548
        %1757 = vmatprep.subr.mxu0 %v1556
        %1758 = vmatpush1.msra.mxu0 %v1555
        %1759 = vmatprep.subr.mxu0 0.0
        %1760 = vmatpush1.msra.mxu0 0.0
        %1761 = vmatprep.mubr.f32.mxu0 %v1561
        %1762 = vmatmul.mubr.f32.gmra.mrb[0].mxu0 %v1327
        %v1763 = vpop.f32.mrb[0].mxu0
        %v1764 = vadd.f32 0.0, %v1763
        %v1765 = vpop.f32.mrb[0].mxu0
        %v1766 = vadd.f32 0.0, %v1765
        %1767 = vmatprep.mubr.f32.mxu0 %v1564
        %1768 = vmatmul.mubr.f32.gmra.mrb[0].mxu0 %v1329
        %v1769 = vpop.f32.mrb[0].mxu0
        %v1770 = vadd.f32 0.0, %v1769
        %v1771 = vpop.f32.mrb[0].mxu0
        %v1772 = vadd.f32 0.0, %v1771
        %1773 = vmatprep.mubr.f32.mxu0 %v1567
        %1774 = vmatmul.mubr.f32.gmra.mrb[0].mxu0 %v1331
        %v1775 = vpop.f32.mrb[0].mxu0
        %v1776 = vadd.f32 0.0, %v1775
        %v1777 = vpop.f32.mrb[0].mxu0
        %v1778 = vadd.f32 0.0, %v1777
        %1779 = vmatprep.mubr.f32.mxu0 %v1570
        %1780 = vmatmul.mubr.f32.gmra.mrb[0].mxu0 %v1333
        %v1781 = vpop.f32.mrb[0].mxu0
        %v1782 = vadd.f32 0.0, %v1781
        %v1783 = vpop.f32.mrb[0].mxu0
        %v1784 = vadd.f32 0.0, %v1783
        %1785 = vmatprep.mubr.f32.mxu0 %v1573
        %1786 = vmatmul.mubr.f32.gmra.mrb[0].mxu0 %v1335
        %v1787 = vpop.f32.mrb[0].mxu0
        %v1788 = vadd.f32 0.0, %v1787
        %v1789 = vpop.f32.mrb[0].mxu0
        %v1790 = vadd.f32 0.0, %v1789
        %1791 = vmatprep.mubr.f32.mxu0 %v1576
        %1792 = vmatmul.mubr.f32.gmra.mrb[0].mxu0 %v1337
        %v1793 = vpop.f32.mrb[0].mxu0
        %v1794 = vadd.f32 0.0, %v1793
        %v1795 = vpop.f32.mrb[0].mxu0
        %v1796 = vadd.f32 0.0, %v1795
        %1797 = vmatprep.mubr.f32.mxu0 %v1579
        %1798 = vmatmul.mubr.f32.gmra.mrb[0].mxu0 %v1339
        %v1799 = vpop.f32.mrb[0].mxu0
        %v1800 = vadd.f32 0.0, %v1799
        %v1801 = vpop.f32.mrb[0].mxu0
        %v1802 = vadd.f32 0.0, %v1801
        %1803 = vmatprep.mubr.f32.mxu0 %v1582
        %1804 = vmatmul.mubr.f32.gmra.mrb[0].mxu0 %v1341
        %v1805 = vpop.f32.mrb[0].mxu0
        %v1806 = vadd.f32 0.0, %v1805
        %v1807 = vpop.f32.mrb[0].mxu0
        %v1808 = vadd.f32 0.0, %v1807
        %1809 = vdwg.mxu0
        %1810 = vmatprep.subr.mxu0 %v1348
        %1811 = vmatpush1.msra.mxu0 %v1347
        %1812 = vmatprep.subr.mxu0 %v1355
        %1813 = vmatpush1.msra.mxu0 %v1354
        %1814 = vmatprep.subr.mxu0 %v1362
        %1815 = vmatpush1.msra.mxu0 %v1361
        %1816 = vmatprep.subr.mxu0 %v1369
        %1817 = vmatpush1.msra.mxu0 %v1368
        %1818 = vmatprep.subr.mxu0 %v1376
        %1819 = vmatpush1.msra.mxu0 %v1375
        %1820 = vmatprep.subr.mxu0 %v1383
        %1821 = vmatpush1.msra.mxu0 %v1382
        %1822 = vmatprep.subr.mxu0 %v1390
        %1823 = vmatpush1.msra.mxu0 %v1389
        %1824 = vmatprep.subr.mxu0 %v1397
        %1825 = vmatpush1.msra.mxu0 %v1396
        %1826 = vmatprep.subr.mxu0 %v1404
        %1827 = vmatpush1.msra.mxu0 %v1403
        %1828 = vmatprep.subr.mxu0 %v1411
        %1829 = vmatpush1.msra.mxu0 %v1410
        %1830 = vmatprep.subr.mxu0 %v1418
        %1831 = vmatpush1.msra.mxu0 %v1417
        %1832 = vmatprep.subr.mxu0 %v1425
        %1833 = vmatpush1.msra.mxu0 %v1424
        %1834 = vmatprep.subr.mxu0 %v1432
        %1835 = vmatpush1.msra.mxu0 %v1431
        %1836 = vmatprep.subr.mxu0 %v1439
        %1837 = vmatpush1.msra.mxu0 %v1438
        %1838 = vmatprep.subr.mxu0 %v1446
        %1839 = vmatpush1.msra.mxu0 %v1445
        %1840 = vmatprep.subr.mxu0 %v1453
        %1841 = vmatpush1.msra.mxu0 %v1452
        %1842 = vmatprep.subr.mxu0 %v1460
        %1843 = vmatpush1.msra.mxu0 %v1459
        %1844 = vmatprep.subr.mxu0 %v1467
        %1845 = vmatpush1.msra.mxu0 %v1466
        %1846 = vmatprep.subr.mxu0 %v1474
        %1847 = vmatpush1.msra.mxu0 %v1473
        %1848 = vmatprep.subr.mxu0 %v1481
        %1849 = vmatpush1.msra.mxu0 %v1480
        %1850 = vmatprep.subr.mxu0 %v1488
        %1851 = vmatpush1.msra.mxu0 %v1487
        %1852 = vmatprep.subr.mxu0 %v1495
        %1853 = vmatpush1.msra.mxu0 %v1494
        %1854 = vmatprep.subr.mxu0 %v1502
        %1855 = vmatpush1.msra.mxu0 %v1501
        %1856 = vmatprep.subr.mxu0 %v1509
        %1857 = vmatpush1.msra.mxu0 %v1508
        %1858 = vmatprep.subr.mxu0 %v1516
        %1859 = vmatpush1.msra.mxu0 %v1515
        %1860 = vmatprep.subr.mxu0 %v1523
        %1861 = vmatpush1.msra.mxu0 %v1522
        %1862 = vmatprep.subr.mxu0 %v1530
        %1863 = vmatpush1.msra.mxu0 %v1529
        %1864 = vmatprep.subr.mxu0 %v1537
        %1865 = vmatpush1.msra.mxu0 %v1536
        %1866 = vmatprep.subr.mxu0 %v1544
        %1867 = vmatpush1.msra.mxu0 %v1543
        %1868 = vmatprep.subr.mxu0 %v1551
        %1869 = vmatpush1.msra.mxu0 %v1550
        %1870 = vmatprep.subr.mxu0 %v1558
        %1871 = vmatpush1.msra.mxu0 %v1557
        %1872 = vmatprep.subr.mxu0 0.0
        %1873 = vmatpush1.msra.mxu0 0.0
        %1874 = vmatprep.mubr.f32.mxu0 %v1561
        %1875 = vmatmul.mubr.f32.gmra.mrb[0].mxu0 %v1327
        %v1876 = vpop.f32.mrb[0].mxu0
        %v1877 = vadd.f32 0.0, %v1876
        %v1878 = vpop.f32.mrb[0].mxu0
        %v1879 = vadd.f32 0.0, %v1878
        %1880 = vmatprep.mubr.f32.mxu0 %v1564
        %1881 = vmatmul.mubr.f32.gmra.mrb[0].mxu0 %v1329
        %v1882 = vpop.f32.mrb[0].mxu0
        %v1883 = vadd.f32 0.0, %v1882
        %v1884 = vpop.f32.mrb[0].mxu0
        %v1885 = vadd.f32 0.0, %v1884
        %1886 = vmatprep.mubr.f32.mxu0 %v1567
        %1887 = vmatmul.mubr.f32.gmra.mrb[0].mxu0 %v1331
        %v1888 = vpop.f32.mrb[0].mxu0
        %v1889 = vadd.f32 0.0, %v1888
        %v1890 = vpop.f32.mrb[0].mxu0
        %v1891 = vadd.f32 0.0, %v1890
        %1892 = vmatprep.mubr.f32.mxu0 %v1570
        %1893 = vmatmul.mubr.f32.gmra.mrb[0].mxu0 %v1333
        %v1894 = vpop.f32.mrb[0].mxu0
        %v1895 = vadd.f32 0.0, %v1894
        %v1896 = vpop.f32.mrb[0].mxu0
        %v1897 = vadd.f32 0.0, %v1896
        %1898 = vmatprep.mubr.f32.mxu0 %v1573
        %1899 = vmatmul.mubr.f32.gmra.mrb[0].mxu0 %v1335
        %v1900 = vpop.f32.mrb[0].mxu0
        %v1901 = vadd.f32 0.0, %v1900
        %v1902 = vpop.f32.mrb[0].mxu0
        %v1903 = vadd.f32 0.0, %v1902
        %1904 = vmatprep.mubr.f32.mxu0 %v1576
        %1905 = vmatmul.mubr.f32.gmra.mrb[0].mxu0 %v1337
        %v1906 = vpop.f32.mrb[0].mxu0
        %v1907 = vadd.f32 0.0, %v1906
        %v1908 = vpop.f32.mrb[0].mxu0
        %v1909 = vadd.f32 0.0, %v1908
        %1910 = vmatprep.mubr.f32.mxu0 %v1579
        %1911 = vmatmul.mubr.f32.gmra.mrb[0].mxu0 %v1339
        %v1912 = vpop.f32.mrb[0].mxu0
        %v1913 = vadd.f32 0.0, %v1912
        %v1914 = vpop.f32.mrb[0].mxu0
        %v1915 = vadd.f32 0.0, %v1914
        %1916 = vmatprep.mubr.f32.mxu0 %v1582
        %1917 = vmatmul.mubr.f32.gmra.mrb[0].mxu0 %v1341
        %v1918 = vpop.f32.mrb[0].mxu0
        %v1919 = vadd.f32 0.0, %v1918
        %v1920 = vpop.f32.mrb[0].mxu0
        %v1921 = vadd.f32 0.0, %v1920
        %1922 = vdwg.mxu0
        %1923 = vmatprep.subr.mxu0 0.0
        %1924 = vmatpush1.msra.mxu0 %v1349
        %1925 = vmatprep.subr.mxu0 0.0
        %1926 = vmatpush1.msra.mxu0 %v1356
        %1927 = vmatprep.subr.mxu0 0.0
        %1928 = vmatpush1.msra.mxu0 %v1363
        %1929 = vmatprep.subr.mxu0 0.0
        %1930 = vmatpush1.msra.mxu0 %v1370
        %1931 = vmatprep.subr.mxu0 0.0
        %1932 = vmatpush1.msra.mxu0 %v1377
        %1933 = vmatprep.subr.mxu0 0.0
        %1934 = vmatpush1.msra.mxu0 %v1384
        %1935 = vmatprep.subr.mxu0 0.0
        %1936 = vmatpush1.msra.mxu0 %v1391
        %1937 = vmatprep.subr.mxu0 0.0
        %1938 = vmatpush1.msra.mxu0 %v1398
        %1939 = vmatprep.subr.mxu0 0.0
        %1940 = vmatpush1.msra.mxu0 %v1405
        %1941 = vmatprep.subr.mxu0 0.0
        %1942 = vmatpush1.msra.mxu0 %v1412
        %1943 = vmatprep.subr.mxu0 0.0
        %1944 = vmatpush1.msra.mxu0 %v1419
        %1945 = vmatprep.subr.mxu0 0.0
        %1946 = vmatpush1.msra.mxu0 %v1426
        %1947 = vmatprep.subr.mxu0 0.0
        %1948 = vmatpush1.msra.mxu0 %v1433
        %1949 = vmatprep.subr.mxu0 0.0
        %1950 = vmatpush1.msra.mxu0 %v1440
        %1951 = vmatprep.subr.mxu0 0.0
        %1952 = vmatpush1.msra.mxu0 %v1447
        %1953 = vmatprep.subr.mxu0 0.0
        %1954 = vmatpush1.msra.mxu0 %v1454
        %1955 = vmatprep.subr.mxu0 0.0
        %1956 = vmatpush1.msra.mxu0 %v1461
        %1957 = vmatprep.subr.mxu0 0.0
        %1958 = vmatpush1.msra.mxu0 %v1468
        %1959 = vmatprep.subr.mxu0 0.0
        %1960 = vmatpush1.msra.mxu0 %v1475
        %1961 = vmatprep.subr.mxu0 0.0
        %1962 = vmatpush1.msra.mxu0 %v1482
        %1963 = vmatprep.subr.mxu0 0.0
        %1964 = vmatpush1.msra.mxu0 %v1489
        %1965 = vmatprep.subr.mxu0 0.0
        %1966 = vmatpush1.msra.mxu0 %v1496
        %1967 = vmatprep.subr.mxu0 0.0
        %1968 = vmatpush1.msra.mxu0 %v1503
        %1969 = vmatprep.subr.mxu0 0.0
        %1970 = vmatpush1.msra.mxu0 %v1510
        %1971 = vmatprep.subr.mxu0 0.0
        %1972 = vmatpush1.msra.mxu0 %v1517
        %1973 = vmatprep.subr.mxu0 0.0
        %1974 = vmatpush1.msra.mxu0 %v1524
        %1975 = vmatprep.subr.mxu0 0.0
        %1976 = vmatpush1.msra.mxu0 %v1531
        %1977 = vmatprep.subr.mxu0 0.0
        %1978 = vmatpush1.msra.mxu0 %v1538
        %1979 = vmatprep.subr.mxu0 0.0
        %1980 = vmatpush1.msra.mxu0 %v1545
        %1981 = vmatprep.subr.mxu0 0.0
        %1982 = vmatpush1.msra.mxu0 %v1552
        %1983 = vmatprep.subr.mxu0 0.0
        %1984 = vmatpush1.msra.mxu0 %v1559
        %1985 = vmatprep.subr.mxu0 0.0
        %1986 = vmatpush1.msra.mxu0 0.0
        %1987 = vmatprep.mubr.f32.mxu0 %v1561
        %1988 = vmatmul.mubr.f32.gmra.mrb[0].mxu0 %v1327
        %v1989 = vpop.f32.mrb[0].mxu0
        %v1990 = vadd.f32 0.0, %v1989
        %v1991 = vpop.f32.mrb[0].mxu0
        %1992 = vmatprep.mubr.f32.mxu0 %v1564
        %1993 = vmatmul.mubr.f32.gmra.mrb[0].mxu0 %v1329
        %v1994 = vpop.f32.mrb[0].mxu0
        %v1995 = vadd.f32 0.0, %v1994
        %v1996 = vpop.f32.mrb[0].mxu0
        %1997 = vmatprep.mubr.f32.mxu0 %v1567
        %1998 = vmatmul.mubr.f32.gmra.mrb[0].mxu0 %v1331
        %v1999 = vpop.f32.mrb[0].mxu0
        %v2000 = vadd.f32 0.0, %v1999
        %v2001 = vpop.f32.mrb[0].mxu0
        %2002 = vmatprep.mubr.f32.mxu0 %v1570
        %2003 = vmatmul.mubr.f32.gmra.mrb[0].mxu0 %v1333
        %v2004 = vpop.f32.mrb[0].mxu0
        %v2005 = vadd.f32 0.0, %v2004
        %v2006 = vpop.f32.mrb[0].mxu0
        %2007 = vmatprep.mubr.f32.mxu0 %v1573
        %2008 = vmatmul.mubr.f32.gmra.mrb[0].mxu0 %v1335
        %v2009 = vpop.f32.mrb[0].mxu0
        %v2010 = vadd.f32 0.0, %v2009
        %v2011 = vpop.f32.mrb[0].mxu0
        %2012 = vmatprep.mubr.f32.mxu0 %v1576
        %2013 = vmatmul.mubr.f32.gmra.mrb[0].mxu0 %v1337
        %v2014 = vpop.f32.mrb[0].mxu0
        %v2015 = vadd.f32 0.0, %v2014
        %v2016 = vpop.f32.mrb[0].mxu0
        %2017 = vmatprep.mubr.f32.mxu0 %v1579
        %2018 = vmatmul.mubr.f32.gmra.mrb[0].mxu0 %v1339
        %v2019 = vpop.f32.mrb[0].mxu0
        %v2020 = vadd.f32 0.0, %v2019
        %v2021 = vpop.f32.mrb[0].mxu0
        %2022 = vmatprep.mubr.f32.mxu0 %v1582
        %2023 = vmatmul.mubr.f32.gmra.mrb[0].mxu0 %v1341
        %v2024 = vpop.f32.mrb[0].mxu0
        %v2025 = vadd.f32 0.0, %v2024
        %v2026 = vpop.f32.mrb[0].mxu0
        %2027 = vdwg.mxu0
        %v2028 = vmul.f32 %v1651, %v1651
        %v2029 = vmul.f32 %v1653, %v1653
        %v2030 = vmul.f32 %v1764, %v1764
        %v2031 = vmul.f32 %v1766, %v1766
        %v2032 = vmul.f32 %v1877, %v1877
        %v2033 = vmul.f32 %v1879, %v1879
        %v2034 = vmul.f32 %v1990, %v1990
        %v2035 = vmul.f32 %v1657, %v1657
        %v2036 = vmul.f32 %v1659, %v1659
        %v2037 = vmul.f32 %v1770, %v1770
        %v2038 = vmul.f32 %v1772, %v1772
        %v2039 = vmul.f32 %v1883, %v1883
        %v2040 = vmul.f32 %v1885, %v1885
        %v2041 = vmul.f32 %v1995, %v1995
        %v2042 = vmul.f32 %v1663, %v1663
        %v2043 = vmul.f32 %v1665, %v1665
        %v2044 = vmul.f32 %v1776, %v1776
        %v2045 = vmul.f32 %v1778, %v1778
        %v2046 = vmul.f32 %v1889, %v1889
        %v2047 = vmul.f32 %v1891, %v1891
        %v2048 = vmul.f32 %v2000, %v2000
        %v2049 = vmul.f32 %v1669, %v1669
        %v2050 = vmul.f32 %v1671, %v1671
        %v2051 = vmul.f32 %v1782, %v1782
        %v2052 = vmul.f32 %v1784, %v1784
        %v2053 = vmul.f32 %v1895, %v1895
        %v2054 = vmul.f32 %v1897, %v1897
        %v2055 = vmul.f32 %v2005, %v2005
        %v2056 = vmul.f32 %v1675, %v1675
        %v2057 = vmul.f32 %v1677, %v1677
        %v2058 = vmul.f32 %v1788, %v1788
        %v2059 = vmul.f32 %v1790, %v1790
        %v2060 = vmul.f32 %v1901, %v1901
        %v2061 = vmul.f32 %v1903, %v1903
        %v2062 = vmul.f32 %v2010, %v2010
        %v2063 = vmul.f32 %v1681, %v1681
        %v2064 = vmul.f32 %v1683, %v1683
        %v2065 = vmul.f32 %v1794, %v1794
        %v2066 = vmul.f32 %v1796, %v1796
        %v2067 = vmul.f32 %v1907, %v1907
        %v2068 = vmul.f32 %v1909, %v1909
        %v2069 = vmul.f32 %v2015, %v2015
        %v2070 = vmul.f32 %v1687, %v1687
        %v2071 = vmul.f32 %v1689, %v1689
        %v2072 = vmul.f32 %v1800, %v1800
        %v2073 = vmul.f32 %v1802, %v1802
        %v2074 = vmul.f32 %v1913, %v1913
        %v2075 = vmul.f32 %v1915, %v1915
        %v2076 = vmul.f32 %v2020, %v2020
        %v2077 = vmul.f32 %v1693, %v1693
        %v2078 = vmul.f32 %v1695, %v1695
        %v2079 = vmul.f32 %v1806, %v1806
        %v2080 = vmul.f32 %v1808, %v1808
        %v2081 = vmul.f32 %v1919, %v1919
        %v2082 = vmul.f32 %v1921, %v1921
        %v2083 = vmul.f32 %v2025, %v2025
        %2084 = vrot.lane.b32.xlu0 %v2028, 32
        %v2085 = vpop.permute.xlu0 %2084
        %2086 = vrot.lane.b32.xlu0 %v2035, 32
        %v2087 = vpop.permute.xlu0 %2086
        %2088 = vrot.lane.b32.xlu0 %v2042, 32
        %v2089 = vpop.permute.xlu0 %2088
        %2090 = vrot.lane.b32.xlu0 %v2049, 32
        %v2091 = vpop.permute.xlu0 %2090
        %2092 = vrot.lane.b32.xlu0 %v2056, 32
        %v2093 = vpop.permute.xlu0 %2092
        %2094 = vrot.lane.b32.xlu0 %v2063, 32
        %v2095 = vpop.permute.xlu0 %2094
        %2096 = vrot.lane.b32.xlu0 %v2070, 32
        %v2097 = vpop.permute.xlu0 %2096
        %2098 = vrot.lane.b32.xlu0 %v2077, 32
        %v2099 = vpop.permute.xlu0 %2098
        %v2100 = vsel %vm266, %v2085, %v2034
        %v2101 = vsel %vm266, %v2087, %v2041
        %v2102 = vsel %vm266, %v2089, %v2048
        %v2103 = vsel %vm266, %v2091, %v2055
        %v2104 = vsel %vm266, %v2093, %v2062
        %v2105 = vsel %vm266, %v2095, %v2069
        %v2106 = vsel %vm266, %v2097, %v2076
        %v2107 = vsel %vm266, %v2099, %v2083
        %2164 = vrot.lane.b32.xlu0 %v2028, 127
        %v2165 = vpop.permute.xlu0 %2164
        %2166 = vrot.lane.b32.xlu0 %v2029, 127
        %v2167 = vpop.permute.xlu0 %2166
        %2168 = vrot.lane.b32.xlu0 %v2030, 127
        %v2169 = vpop.permute.xlu0 %2168
        %2170 = vrot.lane.b32.xlu0 %v2031, 127
        %v2171 = vpop.permute.xlu0 %2170
        %2172 = vrot.lane.b32.xlu0 %v2032, 127
        %v2173 = vpop.permute.xlu0 %2172
        %2174 = vrot.lane.b32.xlu0 %v2033, 127
        %v2175 = vpop.permute.xlu0 %2174
        %2176 = vrot.lane.b32.xlu0 %v2100, 127
        %v2177 = vpop.permute.xlu0 %2176
        %2178 = vrot.lane.b32.xlu0 %v2035, 127
        %v2179 = vpop.permute.xlu0 %2178
        %2180 = vrot.lane.b32.xlu0 %v2036, 127
        %v2181 = vpop.permute.xlu0 %2180
        %2182 = vrot.lane.b32.xlu0 %v2037, 127
        %v2183 = vpop.permute.xlu0 %2182
        %2184 = vrot.lane.b32.xlu0 %v2038, 127
        %v2185 = vpop.permute.xlu0 %2184
        %2186 = vrot.lane.b32.xlu0 %v2039, 127
        %v2187 = vpop.permute.xlu0 %2186
        %2188 = vrot.lane.b32.xlu0 %v2040, 127
        %v2189 = vpop.permute.xlu0 %2188
        %2190 = vrot.lane.b32.xlu0 %v2101, 127
        %v2191 = vpop.permute.xlu0 %2190
        %2192 = vrot.lane.b32.xlu0 %v2042, 127
        %v2193 = vpop.permute.xlu0 %2192
        %2194 = vrot.lane.b32.xlu0 %v2043, 127
        %v2195 = vpop.permute.xlu0 %2194
        %2196 = vrot.lane.b32.xlu0 %v2044, 127
        %v2197 = vpop.permute.xlu0 %2196
        %2198 = vrot.lane.b32.xlu0 %v2045, 127
        %v2199 = vpop.permute.xlu0 %2198
        %2200 = vrot.lane.b32.xlu0 %v2046, 127
        %v2201 = vpop.permute.xlu0 %2200
        %2202 = vrot.lane.b32.xlu0 %v2047, 127
        %v2203 = vpop.permute.xlu0 %2202
        %2204 = vrot.lane.b32.xlu0 %v2102, 127
        %v2205 = vpop.permute.xlu0 %2204
        %2206 = vrot.lane.b32.xlu0 %v2049, 127
        %v2207 = vpop.permute.xlu0 %2206
        %2208 = vrot.lane.b32.xlu0 %v2050, 127
        %v2209 = vpop.permute.xlu0 %2208
        %2210 = vrot.lane.b32.xlu0 %v2051, 127
        %v2211 = vpop.permute.xlu0 %2210
        %2212 = vrot.lane.b32.xlu0 %v2052, 127
        %v2213 = vpop.permute.xlu0 %2212
        %2214 = vrot.lane.b32.xlu0 %v2053, 127
        %v2215 = vpop.permute.xlu0 %2214
        %2216 = vrot.lane.b32.xlu0 %v2054, 127
        %v2217 = vpop.permute.xlu0 %2216
        %2218 = vrot.lane.b32.xlu0 %v2103, 127
        %v2219 = vpop.permute.xlu0 %2218
        %2220 = vrot.lane.b32.xlu0 %v2056, 127
        %v2221 = vpop.permute.xlu0 %2220
        %2222 = vrot.lane.b32.xlu0 %v2057, 127
        %v2223 = vpop.permute.xlu0 %2222
        %2224 = vrot.lane.b32.xlu0 %v2058, 127
        %v2225 = vpop.permute.xlu0 %2224
        %2226 = vrot.lane.b32.xlu0 %v2059, 127
        %v2227 = vpop.permute.xlu0 %2226
        %2228 = vrot.lane.b32.xlu0 %v2060, 127
        %v2229 = vpop.permute.xlu0 %2228
        %2230 = vrot.lane.b32.xlu0 %v2061, 127
        %v2231 = vpop.permute.xlu0 %2230
        %2232 = vrot.lane.b32.xlu0 %v2104, 127
        %v2233 = vpop.permute.xlu0 %2232
        %2234 = vrot.lane.b32.xlu0 %v2063, 127
        %v2235 = vpop.permute.xlu0 %2234
        %2236 = vrot.lane.b32.xlu0 %v2064, 127
        %v2237 = vpop.permute.xlu0 %2236
        %2238 = vrot.lane.b32.xlu0 %v2065, 127
        %v2239 = vpop.permute.xlu0 %2238
        %2240 = vrot.lane.b32.xlu0 %v2066, 127
        %v2241 = vpop.permute.xlu0 %2240
        %2242 = vrot.lane.b32.xlu0 %v2067, 127
        %v2243 = vpop.permute.xlu0 %2242
        %2244 = vrot.lane.b32.xlu0 %v2068, 127
        %v2245 = vpop.permute.xlu0 %2244
        %2246 = vrot.lane.b32.xlu0 %v2105, 127
        %v2247 = vpop.permute.xlu0 %2246
        %2248 = vrot.lane.b32.xlu0 %v2070, 127
        %v2249 = vpop.permute.xlu0 %2248
        %2250 = vrot.lane.b32.xlu0 %v2071, 127
        %v2251 = vpop.permute.xlu0 %2250
        %2252 = vrot.lane.b32.xlu0 %v2072, 127
        %v2253 = vpop.permute.xlu0 %2252
        %2254 = vrot.lane.b32.xlu0 %v2073, 127
        %v2255 = vpop.permute.xlu0 %2254
        %2256 = vrot.lane.b32.xlu0 %v2074, 127
        %v2257 = vpop.permute.xlu0 %2256
        %2258 = vrot.lane.b32.xlu0 %v2075, 127
        %v2259 = vpop.permute.xlu0 %2258
        %2260 = vrot.lane.b32.xlu0 %v2106, 127
        %v2261 = vpop.permute.xlu0 %2260
        %2262 = vrot.lane.b32.xlu0 %v2077, 127
        %v2263 = vpop.permute.xlu0 %2262
        %2264 = vrot.lane.b32.xlu0 %v2078, 127
        %v2265 = vpop.permute.xlu0 %2264
        %2266 = vrot.lane.b32.xlu0 %v2079, 127
        %v2267 = vpop.permute.xlu0 %2266
        %2268 = vrot.lane.b32.xlu0 %v2080, 127
        %v2269 = vpop.permute.xlu0 %2268
        %2270 = vrot.lane.b32.xlu0 %v2081, 127
        %v2271 = vpop.permute.xlu0 %2270
        %2272 = vrot.lane.b32.xlu0 %v2082, 127
        %v2273 = vpop.permute.xlu0 %2272
        %2274 = vrot.lane.b32.xlu0 %v2107, 127
        %v2275 = vpop.permute.xlu0 %2274
        %v2276 = vsel %vm291, %v2165, %v2167
        %v2277 = vsel %vm291, %v2167, %v2169
        %v2278 = vsel %vm291, %v2169, %v2171
        %v2279 = vsel %vm291, %v2171, %v2173
        %v2280 = vsel %vm291, %v2173, %v2175
        %v2281 = vsel %vm291, %v2175, %v2177
        %v2282 = vsel %vm291, %v2179, %v2181
        %v2283 = vsel %vm291, %v2181, %v2183
        %v2284 = vsel %vm291, %v2183, %v2185
        %v2285 = vsel %vm291, %v2185, %v2187
        %v2286 = vsel %vm291, %v2187, %v2189
        %v2287 = vsel %vm291, %v2189, %v2191
        %v2288 = vsel %vm291, %v2193, %v2195
        %v2289 = vsel %vm291, %v2195, %v2197
        %v2290 = vsel %vm291, %v2197, %v2199
        %v2291 = vsel %vm291, %v2199, %v2201
        %v2292 = vsel %vm291, %v2201, %v2203
        %v2293 = vsel %vm291, %v2203, %v2205
        %v2294 = vsel %vm291, %v2207, %v2209
        %v2295 = vsel %vm291, %v2209, %v2211
        %v2296 = vsel %vm291, %v2211, %v2213
        %v2297 = vsel %vm291, %v2213, %v2215
        %v2298 = vsel %vm291, %v2215, %v2217
        %v2299 = vsel %vm291, %v2217, %v2219
        %v2300 = vsel %vm291, %v2221, %v2223
        %v2301 = vsel %vm291, %v2223, %v2225
        %v2302 = vsel %vm291, %v2225, %v2227
        %v2303 = vsel %vm291, %v2227, %v2229
        %v2304 = vsel %vm291, %v2229, %v2231
        %v2305 = vsel %vm291, %v2231, %v2233
        %v2306 = vsel %vm291, %v2235, %v2237
        %v2307 = vsel %vm291, %v2237, %v2239
        %v2308 = vsel %vm291, %v2239, %v2241
        %v2309 = vsel %vm291, %v2241, %v2243
        %v2310 = vsel %vm291, %v2243, %v2245
        %v2311 = vsel %vm291, %v2245, %v2247
        %v2312 = vsel %vm291, %v2249, %v2251
        %v2313 = vsel %vm291, %v2251, %v2253
        %v2314 = vsel %vm291, %v2253, %v2255
        %v2315 = vsel %vm291, %v2255, %v2257
        %v2316 = vsel %vm291, %v2257, %v2259
        %v2317 = vsel %vm291, %v2259, %v2261
        %v2318 = vsel %vm291, %v2263, %v2265
        %v2319 = vsel %vm291, %v2265, %v2267
        %v2320 = vsel %vm291, %v2267, %v2269
        %v2321 = vsel %vm291, %v2269, %v2271
        %v2322 = vsel %vm291, %v2271, %v2273
        %v2323 = vsel %vm291, %v2273, %v2275
        %v2380 = vmax.f32 %v2028, %v2276
        %v2381 = vmax.f32 %v2029, %v2277
        %v2382 = vmax.f32 %v2030, %v2278
        %v2383 = vmax.f32 %v2031, %v2279
        %v2384 = vmax.f32 %v2032, %v2280
        %v2385 = vmax.f32 %v2033, %v2281
        %v2386 = vmax.f32 %v2034, %v2177
        %v2387 = vmax.f32 %v2035, %v2282
        %v2388 = vmax.f32 %v2036, %v2283
        %v2389 = vmax.f32 %v2037, %v2284
        %v2390 = vmax.f32 %v2038, %v2285
        %v2391 = vmax.f32 %v2039, %v2286
        %v2392 = vmax.f32 %v2040, %v2287
        %v2393 = vmax.f32 %v2041, %v2191
        %v2394 = vmax.f32 %v2042, %v2288
        %v2395 = vmax.f32 %v2043, %v2289
        %v2396 = vmax.f32 %v2044, %v2290
        %v2397 = vmax.f32 %v2045, %v2291
        %v2398 = vmax.f32 %v2046, %v2292
        %v2399 = vmax.f32 %v2047, %v2293
        %v2400 = vmax.f32 %v2048, %v2205
        %v2401 = vmax.f32 %v2049, %v2294
        %v2402 = vmax.f32 %v2050, %v2295
        %v2403 = vmax.f32 %v2051, %v2296
        %v2404 = vmax.f32 %v2052, %v2297
        %v2405 = vmax.f32 %v2053, %v2298
        %v2406 = vmax.f32 %v2054, %v2299
        %v2407 = vmax.f32 %v2055, %v2219
        %v2408 = vmax.f32 %v2056, %v2300
        %v2409 = vmax.f32 %v2057, %v2301
        %v2410 = vmax.f32 %v2058, %v2302
        %v2411 = vmax.f32 %v2059, %v2303
        %v2412 = vmax.f32 %v2060, %v2304
        %v2413 = vmax.f32 %v2061, %v2305
        %v2414 = vmax.f32 %v2062, %v2233
        %v2415 = vmax.f32 %v2063, %v2306
        %v2416 = vmax.f32 %v2064, %v2307
        %v2417 = vmax.f32 %v2065, %v2308
        %v2418 = vmax.f32 %v2066, %v2309
        %v2419 = vmax.f32 %v2067, %v2310
        %v2420 = vmax.f32 %v2068, %v2311
        %v2421 = vmax.f32 %v2069, %v2247
        %v2422 = vmax.f32 %v2070, %v2312
        %v2423 = vmax.f32 %v2071, %v2313
        %v2424 = vmax.f32 %v2072, %v2314
        %v2425 = vmax.f32 %v2073, %v2315
        %v2426 = vmax.f32 %v2074, %v2316
        %v2427 = vmax.f32 %v2075, %v2317
        %v2428 = vmax.f32 %v2076, %v2261
        %v2429 = vmax.f32 %v2077, %v2318
        %v2430 = vmax.f32 %v2078, %v2319
        %v2431 = vmax.f32 %v2079, %v2320
        %v2432 = vmax.f32 %v2080, %v2321
        %v2433 = vmax.f32 %v2081, %v2322
        %v2434 = vmax.f32 %v2082, %v2323
        %v2435 = vmax.f32 %v2083, %v2275
        %v2436 = vld [vmem:[%s2] sm:$0xff]
        %v2437 = vld [vmem:[%s2 + $0x8] sm:$0xff]
        %v2438 = vld [vmem:[%s2 + $0x10] sm:$0xff]
        %v2439 = vld [vmem:[%s2 + $0x18] sm:$0xff]
        %v2440 = vld [vmem:[%s2 + $0x20] sm:$0xff]
        %v2441 = vld [vmem:[%s2 + $0x28] sm:$0xff]
        %v2442 = vld [vmem:[%s2 + $0x30] sm:$0xff]
        %v2443 = vld [vmem:[%s2 + $0x38] sm:$0xff]
        %v2444 = vld [vmem:[%s2 + $0x40] sm:$0xff]
        %v2445 = vld [vmem:[%s2 + $0x48] sm:$0xff]
        %v2446 = vld [vmem:[%s2 + $0x50] sm:$0xff]
        %v2447 = vld [vmem:[%s2 + $0x58] sm:$0xff]
        %v2448 = vld [vmem:[%s2 + $0x60] sm:$0xff]
        %v2449 = vld [vmem:[%s2 + $0x68] sm:$0xff]
        %v2450 = vld [vmem:[%s2 + $0x70] sm:$0xff]
        %v2451 = vld [vmem:[%s2 + $0x78] sm:$0xff]
        %v2452 = vld [vmem:[%s2 + $0x80] sm:$0xff]
        %v2453 = vld [vmem:[%s2 + $0x88] sm:$0xff]
        %v2454 = vld [vmem:[%s2 + $0x90] sm:$0xff]
        %v2455 = vld [vmem:[%s2 + $0x98] sm:$0xff]
        %v2456 = vld [vmem:[%s2 + $0xa0] sm:$0xff]
        %v2457 = vld [vmem:[%s2 + $0xa8] sm:$0xff]
        %v2458 = vld [vmem:[%s2 + $0xb0] sm:$0xff]
        %v2459 = vld [vmem:[%s2 + $0xb8] sm:$0xff]
        %v2460 = vld [vmem:[%s2 + $0xc0] sm:$0xff]
        %v2461 = vld [vmem:[%s2 + $0xc8] sm:$0xff]
        %v2462 = vld [vmem:[%s2 + $0xd0] sm:$0xff]
        %v2463 = vld [vmem:[%s2 + $0xd8] sm:$0xff]
        %v2464 = vld [vmem:[%s2 + $0xe0] sm:$0xff]
        %v2465 = vld [vmem:[%s2 + $0xe8] sm:$0xff]
        %v2466 = vld [vmem:[%s2 + $0xf0] sm:$0xff]
        %v2467 = vld [vmem:[%s2 + $0xf8] sm:$0xff]
        %v2468 = vld [vmem:[%s2 + $0x100] sm:$0xff]
        %v2469 = vld [vmem:[%s2 + $0x108] sm:$0xff]
        %v2470 = vld [vmem:[%s2 + $0x110] sm:$0xff]
        %v2471 = vld [vmem:[%s2 + $0x118] sm:$0xff]
        %v2472 = vld [vmem:[%s2 + $0x120] sm:$0xff]
        %v2473 = vld [vmem:[%s2 + $0x128] sm:$0xff]
        %v2474 = vld [vmem:[%s2 + $0x130] sm:$0xff]
        %v2475 = vld [vmem:[%s2 + $0x138] sm:$0xff]
        %v2476 = vld [vmem:[%s2 + $0x140] sm:$0xff]
        %v2477 = vld [vmem:[%s2 + $0x148] sm:$0xff]
        %v2478 = vld [vmem:[%s2 + $0x150] sm:$0xff]
        %v2479 = vld [vmem:[%s2 + $0x158] sm:$0xff]
        %v2480 = vld [vmem:[%s2 + $0x160] sm:$0xff]
        %v2481 = vld [vmem:[%s2 + $0x168] sm:$0xff]
        %v2482 = vld [vmem:[%s2 + $0x170] sm:$0xff]
        %v2483 = vld [vmem:[%s2 + $0x178] sm:$0xff]
        %v2484 = vld [vmem:[%s2 + $0x180] sm:$0xff]
        %v2485 = vld [vmem:[%s2 + $0x188] sm:$0xff]
        %v2486 = vld [vmem:[%s2 + $0x190] sm:$0xff]
        %v2487 = vld [vmem:[%s2 + $0x198] sm:$0xff]
        %v2488 = vld [vmem:[%s2 + $0x1a0] sm:$0xff]
        %v2489 = vld [vmem:[%s2 + $0x1a8] sm:$0xff]
        %v2490 = vld [vmem:[%s2 + $0x1b0] sm:$0xff]
        %v2491 = vld [vmem:[%s2 + $0x1b8] sm:$0xff]
        %v2492 = vld [vmem:[%s2 + $0x1c0] sm:$0xff]
        %v2493 = vld [vmem:[%s2 + $0x1c8] sm:$0xff]
        %v2494 = vld [vmem:[%s2 + $0x1d0] sm:$0xff]
        %v2495 = vld [vmem:[%s2 + $0x1d8] sm:$0xff]
        %v2496 = vld [vmem:[%s2 + $0x1e0] sm:$0xff]
        %v2497 = vld [vmem:[%s2 + $0x1e8] sm:$0xff]
        %v2498 = vld [vmem:[%s2 + $0x1f0] sm:$0xff]
        %v2499 = vld [vmem:[%s2 + $0x1f8] sm:$0xff]
        %v2500 = vld [vmem:[%s2 + $0x200] sm:$0xff]
        %v2501 = vld [vmem:[%s2 + $0x208] sm:$0xff]
        %v2502 = vld [vmem:[%s2 + $0x210] sm:$0xff]
        %v2503 = vld [vmem:[%s2 + $0x218] sm:$0xff]
        %v2504 = vld [vmem:[%s2 + $0x220] sm:$0xff]
        %v2505 = vld [vmem:[%s2 + $0x228] sm:$0xff]
        %v2506 = vld [vmem:[%s2 + $0x230] sm:$0xff]
        %v2507 = vld [vmem:[%s2 + $0x238] sm:$0xff]
        %v2508 = vld [vmem:[%s2 + $0x240] sm:$0xff]
        %v2509 = vld [vmem:[%s2 + $0x248] sm:$0xff]
        %v2510 = vld [vmem:[%s2 + $0x250] sm:$0xff]
        %v2511 = vld [vmem:[%s2 + $0x258] sm:$0xff]
        %v2512 = vld [vmem:[%s2 + $0x260] sm:$0xff]
        %v2513 = vld [vmem:[%s2 + $0x268] sm:$0xff]
        %v2514 = vld [vmem:[%s2 + $0x270] sm:$0xff]
        %v2515 = vld [vmem:[%s2 + $0x278] sm:$0xff]
        %v2516 = vld [vmem:[%s2 + $0x280] sm:$0xff]
        %v2517 = vld [vmem:[%s2 + $0x288] sm:$0xff]
        %v2518 = vld [vmem:[%s2 + $0x290] sm:$0xff]
        %v2519 = vld [vmem:[%s2 + $0x298] sm:$0xff]
        %v2520 = vld [vmem:[%s2 + $0x2a0] sm:$0xff]
        %v2521 = vld [vmem:[%s2 + $0x2a8] sm:$0xff]
        %v2522 = vld [vmem:[%s2 + $0x2b0] sm:$0xff]
        %v2523 = vld [vmem:[%s2 + $0x2b8] sm:$0xff]
        %v2524 = vld [vmem:[%s2 + $0x2c0] sm:$0xff]
        %v2525 = vld [vmem:[%s2 + $0x2c8] sm:$0xff]
        %v2526 = vld [vmem:[%s2 + $0x2d0] sm:$0xff]
        %v2527 = vld [vmem:[%s2 + $0x2d8] sm:$0xff]
        %v2528 = vld [vmem:[%s2 + $0x2e0] sm:$0xff]
        %v2529 = vld [vmem:[%s2 + $0x2e8] sm:$0xff]
        %v2530 = vld [vmem:[%s2 + $0x2f0] sm:$0xff]
        %v2531 = vld [vmem:[%s2 + $0x2f8] sm:$0xff]
        %v2532 = vld [vmem:[%s2 + $0x300] sm:$0xff]
        %v2533 = vld [vmem:[%s2 + $0x308] sm:$0xff]
        %v2534 = vld [vmem:[%s2 + $0x310] sm:$0xff]
        %v2535 = vld [vmem:[%s2 + $0x318] sm:$0xff]
        %v2537 = vsel %vm264, %v2386, 0
        %v2540 = vsel %vm264, %v2393, 0
        %v2543 = vsel %vm264, %v2400, 0
        %v2546 = vsel %vm264, %v2407, 0
        %v2549 = vsel %vm264, %v2414, 0
        %v2552 = vsel %vm264, %v2421, 0
        %v2555 = vsel %vm264, %v2428, 0
        %v2558 = vsel %vm264, %v2435, 0
        %2560 = vmatprep.subr.mxu0 0.0
        %2561 = vmatpush1.msra.mxu0 %v2436
        %2562 = vmatprep.subr.mxu0 0.0
        %2563 = vmatpush1.msra.mxu0 %v2437
        %2564 = vmatprep.subr.mxu0 0.0
        %2565 = vmatpush1.msra.mxu0 %v2438
        %2566 = vmatprep.subr.mxu0 0.0
        %2567 = vmatpush1.msra.mxu0 %v2439
        %2568 = vmatprep.subr.mxu0 0.0
        %2569 = vmatpush1.msra.mxu0 %v2440
        %2570 = vmatprep.subr.mxu0 0.0
        %2571 = vmatpush1.msra.mxu0 %v2441
        %2572 = vmatprep.subr.mxu0 0.0
        %2573 = vmatpush1.msra.mxu0 %v2442
        %2574 = vmatprep.subr.mxu0 0.0
        %2575 = vmatpush1.msra.mxu0 %v2443
        %2576 = vmatprep.subr.mxu0 0.0
        %2577 = vmatpush1.msra.mxu0 %v2444
        %2578 = vmatprep.subr.mxu0 0.0
        %2579 = vmatpush1.msra.mxu0 %v2445
        %2580 = vmatprep.subr.mxu0 0.0
        %2581 = vmatpush1.msra.mxu0 %v2446
        %2582 = vmatprep.subr.mxu0 0.0
        %2583 = vmatpush1.msra.mxu0 %v2447
        %2584 = vmatprep.subr.mxu0 0.0
        %2585 = vmatpush1.msra.mxu0 %v2448
        %2586 = vmatprep.subr.mxu0 0.0
        %2587 = vmatpush1.msra.mxu0 %v2449
        %2588 = vmatprep.subr.mxu0 0.0
        %2589 = vmatpush1.msra.mxu0 %v2450
        %2590 = vmatprep.subr.mxu0 0.0
        %2591 = vmatpush1.msra.mxu0 %v2451
        %2592 = vmatprep.subr.mxu0 0.0
        %2593 = vmatpush1.msra.mxu0 %v2452
        %2594 = vmatprep.subr.mxu0 0.0
        %2595 = vmatpush1.msra.mxu0 %v2453
        %2596 = vmatprep.subr.mxu0 0.0
        %2597 = vmatpush1.msra.mxu0 %v2454
        %2598 = vmatprep.subr.mxu0 0.0
        %2599 = vmatpush1.msra.mxu0 %v2455
        %2600 = vmatprep.subr.mxu0 0.0
        %2601 = vmatpush1.msra.mxu0 %v2456
        %2602 = vmatprep.subr.mxu0 0.0
        %2603 = vmatpush1.msra.mxu0 %v2457
        %2604 = vmatprep.subr.mxu0 0.0
        %2605 = vmatpush1.msra.mxu0 %v2458
        %2606 = vmatprep.subr.mxu0 0.0
        %2607 = vmatpush1.msra.mxu0 %v2459
        %2608 = vmatprep.subr.mxu0 0.0
        %2609 = vmatpush1.msra.mxu0 %v2460
        %2610 = vmatprep.subr.mxu0 0.0
        %2611 = vmatpush1.msra.mxu0 %v2461
        %2612 = vmatprep.subr.mxu0 0.0
        %2613 = vmatpush1.msra.mxu0 %v2462
        %2614 = vmatprep.subr.mxu0 0.0
        %2615 = vmatpush1.msra.mxu0 %v2463
        %2616 = vmatprep.subr.mxu0 0.0
        %2617 = vmatpush1.msra.mxu0 %v2464
        %2618 = vmatprep.subr.mxu0 0.0
        %2619 = vmatpush1.msra.mxu0 %v2465
        %2620 = vmatprep.subr.mxu0 0.0
        %2621 = vmatpush1.msra.mxu0 %v2466
        %2622 = vmatprep.subr.mxu0 0.0
        %2623 = vmatpush1.msra.mxu0 %v2467
        %2624 = vmatprep.mubr.f32.mxu0 %v2381
        %2625 = vmatmul.mubr.f32.gmra.mrb[0].mxu0 %v2380
        %v2626 = vpop.f32.mrb[0].mxu0
        %v2627 = vadd.f32 0.001, %v2626
        %v2628 = vpop.f32.mrb[0].mxu0
        %2629 = vmatprep.mubr.f32.mxu0 %v2388
        %2630 = vmatmul.mubr.f32.gmra.mrb[0].mxu0 %v2387
        %v2631 = vpop.f32.mrb[0].mxu0
        %v2632 = vadd.f32 0.001, %v2631
        %v2633 = vpop.f32.mrb[0].mxu0
        %2634 = vmatprep.mubr.f32.mxu0 %v2395
        %2635 = vmatmul.mubr.f32.gmra.mrb[0].mxu0 %v2394
        %v2636 = vpop.f32.mrb[0].mxu0
        %v2637 = vadd.f32 0.001, %v2636
        %v2638 = vpop.f32.mrb[0].mxu0
        %2639 = vmatprep.mubr.f32.mxu0 %v2402
        %2640 = vmatmul.mubr.f32.gmra.mrb[0].mxu0 %v2401
        %v2641 = vpop.f32.mrb[0].mxu0
        %v2642 = vadd.f32 0.001, %v2641
        %v2643 = vpop.f32.mrb[0].mxu0
        %2644 = vmatprep.mubr.f32.mxu0 %v2409
        %2645 = vmatmul.mubr.f32.gmra.mrb[0].mxu0 %v2408
        %v2646 = vpop.f32.mrb[0].mxu0
        %v2647 = vadd.f32 0.001, %v2646
        %v2648 = vpop.f32.mrb[0].mxu0
        %2649 = vmatprep.mubr.f32.mxu0 %v2416
        %2650 = vmatmul.mubr.f32.gmra.mrb[0].mxu0 %v2415
        %v2651 = vpop.f32.mrb[0].mxu0
        %v2652 = vadd.f32 0.001, %v2651
        %v2653 = vpop.f32.mrb[0].mxu0
        %2654 = vmatprep.mubr.f32.mxu0 %v2423
        %2655 = vmatmul.mubr.f32.gmra.mrb[0].mxu0 %v2422
        %v2656 = vpop.f32.mrb[0].mxu0
        %v2657 = vadd.f32 0.001, %v2656
        %v2658 = vpop.f32.mrb[0].mxu0
        %2659 = vmatprep.mubr.f32.mxu0 %v2430
        %2660 = vmatmul.mubr.f32.gmra.mrb[0].mxu0 %v2429
        %v2661 = vpop.f32.mrb[0].mxu0
        %v2662 = vadd.f32 0.001, %v2661
        %v2663 = vpop.f32.mrb[0].mxu0
        %2664 = vdwg.mxu0
        %2665 = vmatprep.subr.mxu0 0.0
        %2666 = vmatpush1.msra.mxu0 %v2468
        %2667 = vmatprep.subr.mxu0 0.0
        %2668 = vmatpush1.msra.mxu0 %v2469
        %2669 = vmatprep.subr.mxu0 0.0
        %2670 = vmatpush1.msra.mxu0 %v2470
        %2671 = vmatprep.subr.mxu0 0.0
        %2672 = vmatpush1.msra.mxu0 %v2471
        %2673 = vmatprep.subr.mxu0 0.0
        %2674 = vmatpush1.msra.mxu0 %v2472
        %2675 = vmatprep.subr.mxu0 0.0
        %2676 = vmatpush1.msra.mxu0 %v2473
        %2677 = vmatprep.subr.mxu0 0.0
        %2678 = vmatpush1.msra.mxu0 %v2474
        %2679 = vmatprep.subr.mxu0 0.0
        %2680 = vmatpush1.msra.mxu0 %v2475
        %2681 = vmatprep.subr.mxu0 0.0
        %2682 = vmatpush1.msra.mxu0 %v2476
        %2683 = vmatprep.subr.mxu0 0.0
        %2684 = vmatpush1.msra.mxu0 %v2477
        %2685 = vmatprep.subr.mxu0 0.0
        %2686 = vmatpush1.msra.mxu0 %v2478
        %2687 = vmatprep.subr.mxu0 0.0
        %2688 = vmatpush1.msra.mxu0 %v2479
        %2689 = vmatprep.subr.mxu0 0.0
        %2690 = vmatpush1.msra.mxu0 %v2480
        %2691 = vmatprep.subr.mxu0 0.0
        %2692 = vmatpush1.msra.mxu0 %v2481
        %2693 = vmatprep.subr.mxu0 0.0
        %2694 = vmatpush1.msra.mxu0 %v2482
        %2695 = vmatprep.subr.mxu0 0.0
        %2696 = vmatpush1.msra.mxu0 %v2483
        %2697 = vmatprep.subr.mxu0 0.0
        %2698 = vmatpush1.msra.mxu0 %v2484
        %2699 = vmatprep.subr.mxu0 0.0
        %2700 = vmatpush1.msra.mxu0 %v2485
        %2701 = vmatprep.subr.mxu0 0.0
        %2702 = vmatpush1.msra.mxu0 %v2486
        %2703 = vmatprep.subr.mxu0 0.0
        %2704 = vmatpush1.msra.mxu0 %v2487
        %2705 = vmatprep.subr.mxu0 0.0
        %2706 = vmatpush1.msra.mxu0 %v2488
        %2707 = vmatprep.subr.mxu0 0.0
        %2708 = vmatpush1.msra.mxu0 %v2489
        %2709 = vmatprep.subr.mxu0 0.0
        %2710 = vmatpush1.msra.mxu0 %v2490
        %2711 = vmatprep.subr.mxu0 0.0
        %2712 = vmatpush1.msra.mxu0 %v2491
        %2713 = vmatprep.subr.mxu0 0.0
        %2714 = vmatpush1.msra.mxu0 %v2492
        %2715 = vmatprep.subr.mxu0 0.0
        %2716 = vmatpush1.msra.mxu0 %v2493
        %2717 = vmatprep.subr.mxu0 0.0
        %2718 = vmatpush1.msra.mxu0 %v2494
        %2719 = vmatprep.subr.mxu0 0.0
        %2720 = vmatpush1.msra.mxu0 %v2495
        %2721 = vmatprep.subr.mxu0 0.0
        %2722 = vmatpush1.msra.mxu0 %v2496
        %2723 = vmatprep.subr.mxu0 0.0
        %2724 = vmatpush1.msra.mxu0 %v2497
        %2725 = vmatprep.subr.mxu0 0.0
        %2726 = vmatpush1.msra.mxu0 %v2498
        %2727 = vmatprep.subr.mxu0 0.0
        %2728 = vmatpush1.msra.mxu0 %v2499
        %2729 = vmatprep.mubr.f32.mxu0 %v2383
        %2730 = vmatmul.mubr.f32.gmra.mrb[0].mxu0 %v2382
        %v2731 = vpop.f32.mrb[0].mxu0
        %v2732 = vadd.f32 %v2627, %v2731
        %v2733 = vpop.f32.mrb[0].mxu0
        %2734 = vmatprep.mubr.f32.mxu0 %v2390
        %2735 = vmatmul.mubr.f32.gmra.mrb[0].mxu0 %v2389
        %v2736 = vpop.f32.mrb[0].mxu0
        %v2737 = vadd.f32 %v2632, %v2736
        %v2738 = vpop.f32.mrb[0].mxu0
        %2739 = vmatprep.mubr.f32.mxu0 %v2397
        %2740 = vmatmul.mubr.f32.gmra.mrb[0].mxu0 %v2396
        %v2741 = vpop.f32.mrb[0].mxu0
        %v2742 = vadd.f32 %v2637, %v2741
        %v2743 = vpop.f32.mrb[0].mxu0
        %2744 = vmatprep.mubr.f32.mxu0 %v2404
        %2745 = vmatmul.mubr.f32.gmra.mrb[0].mxu0 %v2403
        %v2746 = vpop.f32.mrb[0].mxu0
        %v2747 = vadd.f32 %v2642, %v2746
        %v2748 = vpop.f32.mrb[0].mxu0
        %2749 = vmatprep.mubr.f32.mxu0 %v2411
        %2750 = vmatmul.mubr.f32.gmra.mrb[0].mxu0 %v2410
        %v2751 = vpop.f32.mrb[0].mxu0
        %v2752 = vadd.f32 %v2647, %v2751
        %v2753 = vpop.f32.mrb[0].mxu0
        %2754 = vmatprep.mubr.f32.mxu0 %v2418
        %2755 = vmatmul.mubr.f32.gmra.mrb[0].mxu0 %v2417
        %v2756 = vpop.f32.mrb[0].mxu0
        %v2757 = vadd.f32 %v2652, %v2756
        %v2758 = vpop.f32.mrb[0].mxu0
        %2759 = vmatprep.mubr.f32.mxu0 %v2425
        %2760 = vmatmul.mubr.f32.gmra.mrb[0].mxu0 %v2424
        %v2761 = vpop.f32.mrb[0].mxu0
        %v2762 = vadd.f32 %v2657, %v2761
        %v2763 = vpop.f32.mrb[0].mxu0
        %2764 = vmatprep.mubr.f32.mxu0 %v2432
        %2765 = vmatmul.mubr.f32.gmra.mrb[0].mxu0 %v2431
        %v2766 = vpop.f32.mrb[0].mxu0
        %v2767 = vadd.f32 %v2662, %v2766
        %v2768 = vpop.f32.mrb[0].mxu0
        %2769 = vdwg.mxu0
        %2770 = vmatprep.subr.mxu0 0.0
        %2771 = vmatpush1.msra.mxu0 %v2500
        %2772 = vmatprep.subr.mxu0 0.0
        %2773 = vmatpush1.msra.mxu0 %v2501
        %2774 = vmatprep.subr.mxu0 0.0
        %2775 = vmatpush1.msra.mxu0 %v2502
        %2776 = vmatprep.subr.mxu0 0.0
        %2777 = vmatpush1.msra.mxu0 %v2503
        %2778 = vmatprep.subr.mxu0 0.0
        %2779 = vmatpush1.msra.mxu0 %v2504
        %2780 = vmatprep.subr.mxu0 0.0
        %2781 = vmatpush1.msra.mxu0 %v2505
        %2782 = vmatprep.subr.mxu0 0.0
        %2783 = vmatpush1.msra.mxu0 %v2506
        %2784 = vmatprep.subr.mxu0 0.0
        %2785 = vmatpush1.msra.mxu0 %v2507
        %2786 = vmatprep.subr.mxu0 0.0
        %2787 = vmatpush1.msra.mxu0 %v2508
        %2788 = vmatprep.subr.mxu0 0.0
        %2789 = vmatpush1.msra.mxu0 %v2509
        %2790 = vmatprep.subr.mxu0 0.0
        %2791 = vmatpush1.msra.mxu0 %v2510
        %2792 = vmatprep.subr.mxu0 0.0
        %2793 = vmatpush1.msra.mxu0 %v2511
        %2794 = vmatprep.subr.mxu0 0.0
        %2795 = vmatpush1.msra.mxu0 %v2512
        %2796 = vmatprep.subr.mxu0 0.0
        %2797 = vmatpush1.msra.mxu0 %v2513
        %2798 = vmatprep.subr.mxu0 0.0
        %2799 = vmatpush1.msra.mxu0 %v2514
        %2800 = vmatprep.subr.mxu0 0.0
        %2801 = vmatpush1.msra.mxu0 %v2515
        %2802 = vmatprep.subr.mxu0 0.0
        %2803 = vmatpush1.msra.mxu0 %v2516
        %2804 = vmatprep.subr.mxu0 0.0
        %2805 = vmatpush1.msra.mxu0 %v2517
        %2806 = vmatprep.subr.mxu0 0.0
        %2807 = vmatpush1.msra.mxu0 %v2518
        %2808 = vmatprep.subr.mxu0 0.0
        %2809 = vmatpush1.msra.mxu0 %v2519
        %2810 = vmatprep.subr.mxu0 0.0
        %2811 = vmatpush1.msra.mxu0 %v2520
        %2812 = vmatprep.subr.mxu0 0.0
        %2813 = vmatpush1.msra.mxu0 %v2521
        %2814 = vmatprep.subr.mxu0 0.0
        %2815 = vmatpush1.msra.mxu0 %v2522
        %2816 = vmatprep.subr.mxu0 0.0
        %2817 = vmatpush1.msra.mxu0 %v2523
        %2818 = vmatprep.subr.mxu0 0.0
        %2819 = vmatpush1.msra.mxu0 %v2524
        %2820 = vmatprep.subr.mxu0 0.0
        %2821 = vmatpush1.msra.mxu0 %v2525
        %2822 = vmatprep.subr.mxu0 0.0
        %2823 = vmatpush1.msra.mxu0 %v2526
        %2824 = vmatprep.subr.mxu0 0.0
        %2825 = vmatpush1.msra.mxu0 %v2527
        %2826 = vmatprep.subr.mxu0 0.0
        %2827 = vmatpush1.msra.mxu0 %v2528
        %2828 = vmatprep.subr.mxu0 0.0
        %2829 = vmatpush1.msra.mxu0 %v2529
        %2830 = vmatprep.subr.mxu0 0.0
        %2831 = vmatpush1.msra.mxu0 %v2530
        %2832 = vmatprep.subr.mxu0 0.0
        %2833 = vmatpush1.msra.mxu0 %v2531
        %2834 = vmatprep.mubr.f32.mxu0 %v2385
        %2835 = vmatmul.mubr.f32.gmra.mrb[0].mxu0 %v2384
        %v2836 = vpop.f32.mrb[0].mxu0
        %v2837 = vadd.f32 %v2732, %v2836
        %v2838 = vpop.f32.mrb[0].mxu0
        %2839 = vmatprep.mubr.f32.mxu0 %v2392
        %2840 = vmatmul.mubr.f32.gmra.mrb[0].mxu0 %v2391
        %v2841 = vpop.f32.mrb[0].mxu0
        %v2842 = vadd.f32 %v2737, %v2841
        %v2843 = vpop.f32.mrb[0].mxu0
        %2844 = vmatprep.mubr.f32.mxu0 %v2399
        %2845 = vmatmul.mubr.f32.gmra.mrb[0].mxu0 %v2398
        %v2846 = vpop.f32.mrb[0].mxu0
        %v2847 = vadd.f32 %v2742, %v2846
        %v2848 = vpop.f32.mrb[0].mxu0
        %2849 = vmatprep.mubr.f32.mxu0 %v2406
        %2850 = vmatmul.mubr.f32.gmra.mrb[0].mxu0 %v2405
        %v2851 = vpop.f32.mrb[0].mxu0
        %v2852 = vadd.f32 %v2747, %v2851
        %v2853 = vpop.f32.mrb[0].mxu0
        %2854 = vmatprep.mubr.f32.mxu0 %v2413
        %2855 = vmatmul.mubr.f32.gmra.mrb[0].mxu0 %v2412
        %v2856 = vpop.f32.mrb[0].mxu0
        %v2857 = vadd.f32 %v2752, %v2856
        %v2858 = vpop.f32.mrb[0].mxu0
        %2859 = vmatprep.mubr.f32.mxu0 %v2420
        %2860 = vmatmul.mubr.f32.gmra.mrb[0].mxu0 %v2419
        %v2861 = vpop.f32.mrb[0].mxu0
        %v2862 = vadd.f32 %v2757, %v2861
        %v2863 = vpop.f32.mrb[0].mxu0
        %2864 = vmatprep.mubr.f32.mxu0 %v2427
        %2865 = vmatmul.mubr.f32.gmra.mrb[0].mxu0 %v2426
        %v2866 = vpop.f32.mrb[0].mxu0
        %v2867 = vadd.f32 %v2762, %v2866
        %v2868 = vpop.f32.mrb[0].mxu0
        %2869 = vmatprep.mubr.f32.mxu0 %v2434
        %2870 = vmatmul.mubr.f32.gmra.mrb[0].mxu0 %v2433
        %v2871 = vpop.f32.mrb[0].mxu0
        %v2872 = vadd.f32 %v2767, %v2871
        %v2873 = vpop.f32.mrb[0].mxu0
        %2874 = vdwg.mxu0
        %2875 = vmatprep.subr.mxu0 0.0
        %2876 = vmatpush1.msra.mxu0 %v2532
        %2877 = vmatprep.subr.mxu0 0.0
        %2878 = vmatpush1.msra.mxu0 %v2533
        %2879 = vmatprep.subr.mxu0 0.0
        %2880 = vmatpush1.msra.mxu0 %v2534
        %2881 = vmatprep.subr.mxu0 0.0
        %2882 = vmatpush1.msra.mxu0 %v2535
        %2883 = vmatprep.subr.mxu0 0.0
        %2884 = vmatpush1.msra.mxu0 0.0
        %2885 = vmatprep.subr.mxu0 0.0
        %2886 = vmatpush1.msra.mxu0 0.0
        %2887 = vmatprep.subr.mxu0 0.0
        %2888 = vmatpush1.msra.mxu0 0.0
        %2889 = vmatprep.subr.mxu0 0.0
        %2890 = vmatpush1.msra.mxu0 0.0
        %2891 = vmatprep.subr.mxu0 0.0
        %2892 = vmatpush1.msra.mxu0 0.0
        %2893 = vmatprep.subr.mxu0 0.0
        %2894 = vmatpush1.msra.mxu0 0.0
        %2895 = vmatprep.subr.mxu0 0.0
        %2896 = vmatpush1.msra.mxu0 0.0
        %2897 = vmatprep.subr.mxu0 0.0
        %2898 = vmatpush1.msra.mxu0 0.0
        %2899 = vmatprep.subr.mxu0 0.0
        %2900 = vmatpush1.msra.mxu0 0.0
        %2901 = vmatprep.subr.mxu0 0.0
        %2902 = vmatpush1.msra.mxu0 0.0
        %2903 = vmatprep.subr.mxu0 0.0
        %2904 = vmatpush1.msra.mxu0 0.0
        %2905 = vmatprep.subr.mxu0 0.0
        %2906 = vmatpush1.msra.mxu0 0.0
        %2907 = vmatprep.subr.mxu0 0.0
        %2908 = vmatpush1.msra.mxu0 0.0
        %2909 = vmatprep.subr.mxu0 0.0
        %2910 = vmatpush1.msra.mxu0 0.0
        %2911 = vmatprep.subr.mxu0 0.0
        %2912 = vmatpush1.msra.mxu0 0.0
        %2913 = vmatprep.subr.mxu0 0.0
        %2914 = vmatpush1.msra.mxu0 0.0
        %2915 = vmatprep.subr.mxu0 0.0
        %2916 = vmatpush1.msra.mxu0 0.0
        %2917 = vmatprep.subr.mxu0 0.0
        %2918 = vmatpush1.msra.mxu0 0.0
        %2919 = vmatprep.subr.mxu0 0.0
        %2920 = vmatpush1.msra.mxu0 0.0
        %2921 = vmatprep.subr.mxu0 0.0
        %2922 = vmatpush1.msra.mxu0 0.0
        %2923 = vmatprep.subr.mxu0 0.0
        %2924 = vmatpush1.msra.mxu0 0.0
        %2925 = vmatprep.subr.mxu0 0.0
        %2926 = vmatpush1.msra.mxu0 0.0
        %2927 = vmatprep.subr.mxu0 0.0
        %2928 = vmatpush1.msra.mxu0 0.0
        %2929 = vmatprep.subr.mxu0 0.0
        %2930 = vmatpush1.msra.mxu0 0.0
        %2931 = vmatprep.subr.mxu0 0.0
        %2932 = vmatpush1.msra.mxu0 0.0
        %2933 = vmatprep.subr.mxu0 0.0
        %2934 = vmatpush1.msra.mxu0 0.0
        %2935 = vmatprep.subr.mxu0 0.0
        %2936 = vmatpush1.msra.mxu0 0.0
        %2937 = vmatprep.subr.mxu0 0.0
        %2938 = vmatpush1.msra.mxu0 0.0
        %2939 = vmatprep.mubr.f32.mxu0 0.0
        %2940 = vmatmul.mubr.f32.gmra.mrb[0].mxu0 %v2537
        %v2941 = vpop.f32.mrb[0].mxu0
        %v2942 = vadd.f32 %v2837, %v2941
        %v2943 = vpop.f32.mrb[0].mxu0
        %2944 = vmatprep.mubr.f32.mxu0 0.0
        %2945 = vmatmul.mubr.f32.gmra.mrb[0].mxu0 %v2540
        %v2946 = vpop.f32.mrb[0].mxu0
        %v2947 = vadd.f32 %v2842, %v2946
        %v2948 = vpop.f32.mrb[0].mxu0
        %2949 = vmatprep.mubr.f32.mxu0 0.0
        %2950 = vmatmul.mubr.f32.gmra.mrb[0].mxu0 %v2543
        %v2951 = vpop.f32.mrb[0].mxu0
        %v2952 = vadd.f32 %v2847, %v2951
        %v2953 = vpop.f32.mrb[0].mxu0
        %2954 = vmatprep.mubr.f32.mxu0 0.0
        %2955 = vmatmul.mubr.f32.gmra.mrb[0].mxu0 %v2546
        %v2956 = vpop.f32.mrb[0].mxu0
        %v2957 = vadd.f32 %v2852, %v2956
        %v2958 = vpop.f32.mrb[0].mxu0
        %2959 = vmatprep.mubr.f32.mxu0 0.0
        %2960 = vmatmul.mubr.f32.gmra.mrb[0].mxu0 %v2549
        %v2961 = vpop.f32.mrb[0].mxu0
        %v2962 = vadd.f32 %v2857, %v2961
        %v2963 = vpop.f32.mrb[0].mxu0
        %2964 = vmatprep.mubr.f32.mxu0 0.0
        %2965 = vmatmul.mubr.f32.gmra.mrb[0].mxu0 %v2552
        %v2966 = vpop.f32.mrb[0].mxu0
        %v2967 = vadd.f32 %v2862, %v2966
        %v2968 = vpop.f32.mrb[0].mxu0
        %2969 = vmatprep.mubr.f32.mxu0 0.0
        %2970 = vmatmul.mubr.f32.gmra.mrb[0].mxu0 %v2555
        %v2971 = vpop.f32.mrb[0].mxu0
        %v2972 = vadd.f32 %v2867, %v2971
        %v2973 = vpop.f32.mrb[0].mxu0
        %2974 = vmatprep.mubr.f32.mxu0 0.0
        %2975 = vmatmul.mubr.f32.gmra.mrb[0].mxu0 %v2558
        %v2976 = vpop.f32.mrb[0].mxu0
        %v2977 = vadd.f32 %v2872, %v2976
        %v2978 = vpop.f32.mrb[0].mxu0
        %2979 = vdwg.mxu0
        %v2980 = vlog2.pop %v2942
        %v2981 = vmul.f32 %v2980, 0.6931472
        %v2982 = vlog2.pop %v2947
        %v2983 = vmul.f32 %v2982, 0.6931472
        %v2984 = vlog2.pop %v2952
        %v2985 = vmul.f32 %v2984, 0.6931472
        %v2986 = vlog2.pop %v2957
        %v2987 = vmul.f32 %v2986, 0.6931472
        %v2988 = vlog2.pop %v2962
        %v2989 = vmul.f32 %v2988, 0.6931472
        %v2990 = vlog2.pop %v2967
        %v2991 = vmul.f32 %v2990, 0.6931472
        %v2992 = vlog2.pop %v2972
        %v2993 = vmul.f32 %v2992, 0.6931472
        %v2994 = vlog2.pop %v2977
        %v2995 = vmul.f32 %v2994, 0.6931472
        %v2996 = vmul.f32 %v2981, 0.4342945
        %v2997 = vmul.f32 %v2983, 0.4342945
        %v2998 = vmul.f32 %v2985, 0.4342945
        %v2999 = vmul.f32 %v2987, 0.4342945
        %v3000 = vmul.f32 %v2989, 0.4342945
        %v3001 = vmul.f32 %v2991, 0.4342945
        %v3002 = vmul.f32 %v2993, 0.4342945
        %v3003 = vmul.f32 %v2995, 0.4342945
        %vm3004 = vcmask 621568
        %v3005 = vsel %vm3004, %v2996, 0.0
        %3006 = vadd.xlane.f32.xlu0 %v3005
        %v3007 = vpop.xlane.xlu0 %3006
        %v3008 = vsel %vm3004, %v2997, 0.0
        %3009 = vadd.xlane.f32.xlu0 %v3008
        %v3010 = vpop.xlane.xlu0 %3009
        %v3011 = vsel %vm3004, %v2998, 0.0
        %3012 = vadd.xlane.f32.xlu0 %v3011
        %v3013 = vpop.xlane.xlu0 %3012
        %v3014 = vsel %vm3004, %v2999, 0.0
        %3015 = vadd.xlane.f32.xlu0 %v3014
        %v3016 = vpop.xlane.xlu0 %3015
        %v3017 = vsel %vm3004, %v3000, 0.0
        %3018 = vadd.xlane.f32.xlu0 %v3017
        %v3019 = vpop.xlane.xlu0 %3018
        %v3020 = vsel %vm3004, %v3001, 0.0
        %3021 = vadd.xlane.f32.xlu0 %v3020
        %v3022 = vpop.xlane.xlu0 %3021
        %v3023 = vsel %vm3004, %v3002, 0.0
        %3024 = vadd.xlane.f32.xlu0 %v3023
        %v3025 = vpop.xlane.xlu0 %3024
        %v3026 = vsel %vm3004, %v3003, 0.0
        %3027 = vadd.xlane.f32.xlu0 %v3026
        %v3028 = vpop.xlane.xlu0 %3027
        %v3029 = vrot.slane %v3007, 4
        %v3030 = vadd.f32 %v3007, %v3029
        %v3031 = vrot.slane %v3030, 2
        %v3032 = vadd.f32 %v3030, %v3031
        %v3033 = vrot.slane %v3032, 1
        %v3034 = vadd.f32 %v3032, %v3033
        %v3035 = vrot.slane %v3010, 4
        %v3036 = vadd.f32 %v3010, %v3035
        %v3037 = vrot.slane %v3036, 2
        %v3038 = vadd.f32 %v3036, %v3037
        %v3039 = vrot.slane %v3038, 1
        %v3040 = vadd.f32 %v3038, %v3039
        %v3041 = vrot.slane %v3013, 4
        %v3042 = vadd.f32 %v3013, %v3041
        %v3043 = vrot.slane %v3042, 2
        %v3044 = vadd.f32 %v3042, %v3043
        %v3045 = vrot.slane %v3044, 1
        %v3046 = vadd.f32 %v3044, %v3045
        %v3047 = vrot.slane %v3016, 4
        %v3048 = vadd.f32 %v3016, %v3047
        %v3049 = vrot.slane %v3048, 2
        %v3050 = vadd.f32 %v3048, %v3049
        %v3051 = vrot.slane %v3050, 1
        %v3052 = vadd.f32 %v3050, %v3051
        %v3053 = vrot.slane %v3019, 4
        %v3054 = vadd.f32 %v3019, %v3053
        %v3055 = vrot.slane %v3054, 2
        %v3056 = vadd.f32 %v3054, %v3055
        %v3057 = vrot.slane %v3056, 1
        %v3058 = vadd.f32 %v3056, %v3057
        %v3059 = vrot.slane %v3022, 4
        %v3060 = vadd.f32 %v3022, %v3059
        %v3061 = vrot.slane %v3060, 2
        %v3062 = vadd.f32 %v3060, %v3061
        %v3063 = vrot.slane %v3062, 1
        %v3064 = vadd.f32 %v3062, %v3063
        %v3065 = vrot.slane %v3025, 4
        %v3066 = vadd.f32 %v3025, %v3065
        %v3067 = vrot.slane %v3066, 2
        %v3068 = vadd.f32 %v3066, %v3067
        %v3069 = vrot.slane %v3068, 1
        %v3070 = vadd.f32 %v3068, %v3069
        %v3071 = vrot.slane %v3028, 4
        %v3072 = vadd.f32 %v3028, %v3071
        %v3073 = vrot.slane %v3072, 2
        %v3074 = vadd.f32 %v3072, %v3073
        %v3075 = vrot.slane %v3074, 1
        %v3076 = vadd.f32 %v3074, %v3075
        %v3077 = vmul.f32 %v2996, %v2996
        %v3078 = vmul.f32 %v2997, %v2997
        %v3079 = vmul.f32 %v2998, %v2998
        %v3080 = vmul.f32 %v2999, %v2999
        %v3081 = vmul.f32 %v3000, %v3000
        %v3082 = vmul.f32 %v3001, %v3001
        %v3083 = vmul.f32 %v3002, %v3002
        %v3084 = vmul.f32 %v3003, %v3003
        %v3085 = vsel %vm3004, %v3077, 0.0
        %3086 = vadd.xlane.f32.xlu0 %v3085
        %v3087 = vpop.xlane.xlu0 %3086
        %v3088 = vsel %vm3004, %v3078, 0.0
        %3089 = vadd.xlane.f32.xlu0 %v3088
        %v3090 = vpop.xlane.xlu0 %3089
        %v3091 = vsel %vm3004, %v3079, 0.0
        %3092 = vadd.xlane.f32.xlu0 %v3091
        %v3093 = vpop.xlane.xlu0 %3092
        %v3094 = vsel %vm3004, %v3080, 0.0
        %3095 = vadd.xlane.f32.xlu0 %v3094
        %v3096 = vpop.xlane.xlu0 %3095
        %v3097 = vsel %vm3004, %v3081, 0.0
        %3098 = vadd.xlane.f32.xlu0 %v3097
        %v3099 = vpop.xlane.xlu0 %3098
        %v3100 = vsel %vm3004, %v3082, 0.0
        %3101 = vadd.xlane.f32.xlu0 %v3100
        %v3102 = vpop.xlane.xlu0 %3101
        %v3103 = vsel %vm3004, %v3083, 0.0
        %3104 = vadd.xlane.f32.xlu0 %v3103
        %v3105 = vpop.xlane.xlu0 %3104
        %v3106 = vsel %vm3004, %v3084, 0.0
        %3107 = vadd.xlane.f32.xlu0 %v3106
        %v3108 = vpop.xlane.xlu0 %3107
        %v3109 = vrot.slane %v3087, 4
        %v3110 = vadd.f32 %v3087, %v3109
        %v3111 = vrot.slane %v3110, 2
        %v3112 = vadd.f32 %v3110, %v3111
        %v3113 = vrot.slane %v3112, 1
        %v3114 = vadd.f32 %v3112, %v3113
        %v3115 = vrot.slane %v3090, 4
        %v3116 = vadd.f32 %v3090, %v3115
        %v3117 = vrot.slane %v3116, 2
        %v3118 = vadd.f32 %v3116, %v3117
        %v3119 = vrot.slane %v3118, 1
        %v3120 = vadd.f32 %v3118, %v3119
        %v3121 = vrot.slane %v3093, 4
        %v3122 = vadd.f32 %v3093, %v3121
        %v3123 = vrot.slane %v3122, 2
        %v3124 = vadd.f32 %v3122, %v3123
        %v3125 = vrot.slane %v3124, 1
        %v3126 = vadd.f32 %v3124, %v3125
        %v3127 = vrot.slane %v3096, 4
        %v3128 = vadd.f32 %v3096, %v3127
        %v3129 = vrot.slane %v3128, 2
        %v3130 = vadd.f32 %v3128, %v3129
        %v3131 = vrot.slane %v3130, 1
        %v3132 = vadd.f32 %v3130, %v3131
        %v3133 = vrot.slane %v3099, 4
        %v3134 = vadd.f32 %v3099, %v3133
        %v3135 = vrot.slane %v3134, 2
        %v3136 = vadd.f32 %v3134, %v3135
        %v3137 = vrot.slane %v3136, 1
        %v3138 = vadd.f32 %v3136, %v3137
        %v3139 = vrot.slane %v3102, 4
        %v3140 = vadd.f32 %v3102, %v3139
        %v3141 = vrot.slane %v3140, 2
        %v3142 = vadd.f32 %v3140, %v3141
        %v3143 = vrot.slane %v3142, 1
        %v3144 = vadd.f32 %v3142, %v3143
        %v3145 = vrot.slane %v3105, 4
        %v3146 = vadd.f32 %v3105, %v3145
        %v3147 = vrot.slane %v3146, 2
        %v3148 = vadd.f32 %v3146, %v3147
        %v3149 = vrot.slane %v3148, 1
        %v3150 = vadd.f32 %v3148, %v3149
        %v3151 = vrot.slane %v3108, 4
        %v3152 = vadd.f32 %v3108, %v3151
        %v3153 = vrot.slane %v3152, 2
        %v3154 = vadd.f32 %v3152, %v3153
        %v3155 = vrot.slane %v3154, 1
        %v3156 = vadd.f32 %v3154, %v3155
        %v3157 = vrcp.pop 608.0
        %v3158 = vmul.f32 %v3034, %v3157
        %v3159 = vmul.f32 %v3040, %v3157
        %v3160 = vmul.f32 %v3046, %v3157
        %v3161 = vmul.f32 %v3052, %v3157
        %v3162 = vmul.f32 %v3058, %v3157
        %v3163 = vmul.f32 %v3064, %v3157
        %v3164 = vmul.f32 %v3070, %v3157
        %v3165 = vmul.f32 %v3076, %v3157
        %v3166 = vmul.f32 %v3114, %v3157
        %v3167 = vmul.f32 %v3120, %v3157
        %v3168 = vmul.f32 %v3126, %v3157
        %v3169 = vmul.f32 %v3132, %v3157
        %v3170 = vmul.f32 %v3138, %v3157
        %v3171 = vmul.f32 %v3144, %v3157
        %v3172 = vmul.f32 %v3150, %v3157
        %v3173 = vmul.f32 %v3156, %v3157
        %v3174 = vmul.f32 %v3158, %v3158
        %v3175 = vmul.f32 %v3159, %v3159
        %v3176 = vmul.f32 %v3160, %v3160
        %v3177 = vmul.f32 %v3161, %v3161
        %v3178 = vmul.f32 %v3162, %v3162
        %v3179 = vmul.f32 %v3163, %v3163
        %v3180 = vmul.f32 %v3164, %v3164
        %v3181 = vmul.f32 %v3165, %v3165
        %v3182 = vsub.f32 %v3166, %v3174
        %v3183 = vsub.f32 %v3167, %v3175
        %v3184 = vsub.f32 %v3168, %v3176
        %v3185 = vsub.f32 %v3169, %v3177
        %v3186 = vsub.f32 %v3170, %v3178
        %v3187 = vsub.f32 %v3171, %v3179
        %v3188 = vsub.f32 %v3172, %v3180
        %v3189 = vsub.f32 %v3173, %v3181
        %v3190 = vmax.f32 %v3182, 0.0
        %v3191 = vmax.f32 %v3183, 0.0
        %v3192 = vmax.f32 %v3184, 0.0
        %v3193 = vmax.f32 %v3185, 0.0
        %v3194 = vmax.f32 %v3186, 0.0
        %v3195 = vmax.f32 %v3187, 0.0
        %v3196 = vmax.f32 %v3188, 0.0
        %v3197 = vmax.f32 %v3189, 0.0
        %v3198 = vsub.f32 %v2996, %v3158
        %v3199 = vsub.f32 %v2997, %v3159
        %v3200 = vsub.f32 %v2998, %v3160
        %v3201 = vsub.f32 %v2999, %v3161
        %v3202 = vsub.f32 %v3000, %v3162
        %v3203 = vsub.f32 %v3001, %v3163
        %v3204 = vsub.f32 %v3002, %v3164
        %v3205 = vsub.f32 %v3003, %v3165
        %v3206 = vadd.f32 %v3190, 1e-05
        %v3207 = vadd.f32 %v3191, 1e-05
        %v3208 = vadd.f32 %v3192, 1e-05
        %v3209 = vadd.f32 %v3193, 1e-05
        %v3210 = vadd.f32 %v3194, 1e-05
        %v3211 = vadd.f32 %v3195, 1e-05
        %v3212 = vadd.f32 %v3196, 1e-05
        %v3213 = vadd.f32 %v3197, 1e-05
        %v3214 = vrsqrt.pop %v3206
        %v3215 = vrsqrt.pop %v3207
        %v3216 = vrsqrt.pop %v3208
        %v3217 = vrsqrt.pop %v3209
        %v3218 = vrsqrt.pop %v3210
        %v3219 = vrsqrt.pop %v3211
        %v3220 = vrsqrt.pop %v3212
        %v3221 = vrsqrt.pop %v3213
        %v3222 = vmul.f32 %v3198, %v3214
        %v3223 = vmul.f32 %v3199, %v3215
        %v3224 = vmul.f32 %v3200, %v3216
        %v3225 = vmul.f32 %v3201, %v3217
        %v3226 = vmul.f32 %v3202, %v3218
        %v3227 = vmul.f32 %v3203, %v3219
        %v3228 = vmul.f32 %v3204, %v3220
        %v3229 = vmul.f32 %v3205, %v3221
        %v3230 = vmax.f32 %v3222, 0.0
        %v3231 = vmax.f32 %v3223, 0.0
        %v3232 = vmax.f32 %v3224, 0.0
        %v3233 = vmax.f32 %v3225, 0.0
        %v3234 = vmax.f32 %v3226, 0.0
        %v3235 = vmax.f32 %v3227, 0.0
        %v3236 = vmax.f32 %v3228, 0.0
        %v3237 = vmax.f32 %v3229, 0.0
        %v3238 = vld [vmem:[%s3] sm:$0xff]
        %v3239 = vld [vmem:[%s3 + $0x8] sm:$0xff]
        %v3240 = vld [vmem:[%s3 + $0x10] sm:$0xff]
        %v3241 = vld [vmem:[%s3 + $0x18] sm:$0xff]
        %v3242 = vld [vmem:[%s3 + $0x20] sm:$0xff]
        %v3243 = vld [vmem:[%s3 + $0x28] sm:$0xff]
        %v3244 = vld [vmem:[%s3 + $0x30] sm:$0xff]
        %v3245 = vld [vmem:[%s3 + $0x38] sm:$0xff]
        %v3246 = vld [vmem:[%s3 + $0x40] sm:$0xff]
        %v3247 = vld [vmem:[%s3 + $0x48] sm:$0xff]
        %v3248 = vld [vmem:[%s3 + $0x50] sm:$0xff]
        %v3249 = vld [vmem:[%s3 + $0x58] sm:$0xff]
        %v3250 = vld [vmem:[%s3 + $0x60] sm:$0xff]
        %v3251 = vld [vmem:[%s3 + $0x68] sm:$0xff]
        %v3252 = vld [vmem:[%s3 + $0x70] sm:$0xff]
        %v3253 = vld [vmem:[%s3 + $0x78] sm:$0xff]
        %v3254 = vld [vmem:[%s3 + $0x80] sm:$0xff]
        %v3255 = vld [vmem:[%s3 + $0x88] sm:$0xff]
        %v3256 = vld [vmem:[%s3 + $0x90] sm:$0xff]
        %v3257 = vld [vmem:[%s3 + $0x98] sm:$0xff]
        %v3258 = vld [vmem:[%s3 + $0xa0] sm:$0xff]
        %v3259 = vld [vmem:[%s3 + $0xa8] sm:$0xff]
        %v3260 = vld [vmem:[%s3 + $0xb0] sm:$0xff]
        %v3261 = vld [vmem:[%s3 + $0xb8] sm:$0xff]
        %v3262 = vld [vmem:[%s3 + $0xc0] sm:$0xff]
        %v3263 = vld [vmem:[%s3 + $0xc8] sm:$0xff]
        %v3264 = vld [vmem:[%s3 + $0xd0] sm:$0xff]
        %v3265 = vld [vmem:[%s3 + $0xd8] sm:$0xff]
        %v3266 = vld [vmem:[%s3 + $0xe0] sm:$0xff]
        %v3267 = vld [vmem:[%s3 + $0xe8] sm:$0xff]
        %v3268 = vld [vmem:[%s3 + $0xf0] sm:$0xff]
        %v3269 = vld [vmem:[%s3 + $0xf8] sm:$0xff]
        %v3270 = vld [vmem:[%s3 + $0x100] sm:$0xff]
        %v3271 = vld [vmem:[%s3 + $0x108] sm:$0xff]
        %v3272 = vld [vmem:[%s3 + $0x110] sm:$0xff]
        %v3273 = vld [vmem:[%s3 + $0x118] sm:$0xff]
        %v3274 = vld [vmem:[%s3 + $0x120] sm:$0xff]
        %v3275 = vld [vmem:[%s3 + $0x128] sm:$0xff]
        %v3276 = vld [vmem:[%s3 + $0x130] sm:$0xff]
        %v3277 = vld [vmem:[%s3 + $0x138] sm:$0xff]
        %v3278 = vld [vmem:[%s3 + $0x140] sm:$0xff]
        %v3279 = vld [vmem:[%s3 + $0x148] sm:$0xff]
        %v3280 = vld [vmem:[%s3 + $0x150] sm:$0xff]
        %v3281 = vld [vmem:[%s3 + $0x158] sm:$0xff]
        %v3282 = vld [vmem:[%s3 + $0x160] sm:$0xff]
        %v3283 = vld [vmem:[%s3 + $0x168] sm:$0xff]
        %v3284 = vld [vmem:[%s3 + $0x170] sm:$0xff]
        %v3285 = vld [vmem:[%s3 + $0x178] sm:$0xff]
        %vm3286 = vcmask 1048160
        %3287 = vrot.lane.b32.xlu0 %v3230, 76
        %v3288 = vpop.permute.xlu0 %3287
        %v3289 = vsel %vm3286, %v3288, %v3230
        %3290 = vrot.lane.b32.xlu0 %v3231, 76
        %v3291 = vpop.permute.xlu0 %3290
        %v3292 = vsel %vm3286, %v3291, %v3231
        %3293 = vrot.lane.b32.xlu0 %v3232, 76
        %v3294 = vpop.permute.xlu0 %3293
        %v3295 = vsel %vm3286, %v3294, %v3232
        %3296 = vrot.lane.b32.xlu0 %v3233, 76
        %v3297 = vpop.permute.xlu0 %3296
        %v3298 = vsel %vm3286, %v3297, %v3233
        %3299 = vrot.lane.b32.xlu0 %v3234, 76
        %v3300 = vpop.permute.xlu0 %3299
        %v3301 = vsel %vm3286, %v3300, %v3234
        %3302 = vrot.lane.b32.xlu0 %v3235, 76
        %v3303 = vpop.permute.xlu0 %3302
        %v3304 = vsel %vm3286, %v3303, %v3235
        %3305 = vrot.lane.b32.xlu0 %v3236, 76
        %v3306 = vpop.permute.xlu0 %3305
        %v3307 = vsel %vm3286, %v3306, %v3236
        %3308 = vrot.lane.b32.xlu0 %v3237, 76
        %v3309 = vpop.permute.xlu0 %3308
        %v3310 = vsel %vm3286, %v3309, %v3237
        %3311 = vrot.lane.b32.xlu0 %v3289, 76
        %v3312 = vpop.permute.xlu0 %3311
        %3313 = vrot.lane.b32.xlu0 %v3292, 76
        %v3314 = vpop.permute.xlu0 %3313
        %3315 = vrot.lane.b32.xlu0 %v3295, 76
        %v3316 = vpop.permute.xlu0 %3315
        %3317 = vrot.lane.b32.xlu0 %v3298, 76
        %v3318 = vpop.permute.xlu0 %3317
        %3319 = vrot.lane.b32.xlu0 %v3301, 76
        %v3320 = vpop.permute.xlu0 %3319
        %3321 = vrot.lane.b32.xlu0 %v3304, 76
        %v3322 = vpop.permute.xlu0 %3321
        %3323 = vrot.lane.b32.xlu0 %v3307, 76
        %v3324 = vpop.permute.xlu0 %3323
        %3325 = vrot.lane.b32.xlu0 %v3310, 76
        %v3326 = vpop.permute.xlu0 %3325
        %v3327 = vsel %vm3286, %v3312, %v3230
        %v3328 = vsel %vm3286, %v3314, %v3231
        %v3329 = vsel %vm3286, %v3316, %v3232
        %v3330 = vsel %vm3286, %v3318, %v3233
        %v3331 = vsel %vm3286, %v3320, %v3234
        %v3332 = vsel %vm3286, %v3322, %v3235
        %v3333 = vsel %vm3286, %v3324, %v3236
        %v3334 = vsel %vm3286, %v3326, %v3237
        %s3335 = scalar_lea.vmem %s3, 384
        %v3336 = vld [vmem:[%s3335] sm:$0xff]
        %v3337 = vld [vmem:[%s3335 + $0x8] sm:$0xff]
        %v3338 = vld [vmem:[%s3335 + $0x10] sm:$0xff]
        %v3339 = vld [vmem:[%s3335 + $0x18] sm:$0xff]
        %v3340 = vld [vmem:[%s3335 + $0x20] sm:$0xff]
        %v3341 = vld [vmem:[%s3335 + $0x28] sm:$0xff]
        %v3342 = vld [vmem:[%s3335 + $0x30] sm:$0xff]
        %v3343 = vld [vmem:[%s3335 + $0x38] sm:$0xff]
        %v3344 = vld [vmem:[%s3335 + $0x40] sm:$0xff]
        %v3345 = vld [vmem:[%s3335 + $0x48] sm:$0xff]
        %v3346 = vld [vmem:[%s3335 + $0x50] sm:$0xff]
        %v3347 = vld [vmem:[%s3335 + $0x58] sm:$0xff]
        %v3348 = vld [vmem:[%s3335 + $0x60] sm:$0xff]
        %v3349 = vld [vmem:[%s3335 + $0x68] sm:$0xff]
        %v3350 = vld [vmem:[%s3335 + $0x70] sm:$0xff]
        %v3351 = vld [vmem:[%s3335 + $0x78] sm:$0xff]
        %v3352 = vld [vmem:[%s3335 + $0x80] sm:$0xff]
        %v3353 = vld [vmem:[%s3335 + $0x88] sm:$0xff]
        %v3354 = vld [vmem:[%s3335 + $0x90] sm:$0xff]
        %v3355 = vld [vmem:[%s3335 + $0x98] sm:$0xff]
        %v3356 = vld [vmem:[%s3335 + $0xa0] sm:$0xff]
        %v3357 = vld [vmem:[%s3335 + $0xa8] sm:$0xff]
        %v3358 = vld [vmem:[%s3335 + $0xb0] sm:$0xff]
        %v3359 = vld [vmem:[%s3335 + $0xb8] sm:$0xff]
        %v3360 = vld [vmem:[%s3335 + $0xc0] sm:$0xff]
        %v3361 = vld [vmem:[%s3335 + $0xc8] sm:$0xff]
        %v3362 = vld [vmem:[%s3335 + $0xd0] sm:$0xff]
        %v3363 = vld [vmem:[%s3335 + $0xd8] sm:$0xff]
        %v3364 = vld [vmem:[%s3335 + $0xe0] sm:$0xff]
        %v3365 = vld [vmem:[%s3335 + $0xe8] sm:$0xff]
        %v3366 = vld [vmem:[%s3335 + $0xf0] sm:$0xff]
        %v3367 = vld [vmem:[%s3335 + $0xf8] sm:$0xff]
        %v3368 = vld [vmem:[%s3335 + $0x100] sm:$0xff]
        %v3369 = vld [vmem:[%s3335 + $0x108] sm:$0xff]
        %v3370 = vld [vmem:[%s3335 + $0x110] sm:$0xff]
        %v3371 = vld [vmem:[%s3335 + $0x118] sm:$0xff]
        %v3372 = vld [vmem:[%s3335 + $0x120] sm:$0xff]
        %v3373 = vld [vmem:[%s3335 + $0x128] sm:$0xff]
        %v3374 = vld [vmem:[%s3335 + $0x130] sm:$0xff]
        %v3375 = vld [vmem:[%s3335 + $0x138] sm:$0xff]
        %v3376 = vld [vmem:[%s3335 + $0x140] sm:$0xff]
        %v3377 = vld [vmem:[%s3335 + $0x148] sm:$0xff]
        %v3378 = vld [vmem:[%s3335 + $0x150] sm:$0xff]
        %v3379 = vld [vmem:[%s3335 + $0x158] sm:$0xff]
        %v3380 = vld [vmem:[%s3335 + $0x160] sm:$0xff]
        %v3381 = vld [vmem:[%s3335 + $0x168] sm:$0xff]
        %v3382 = vld [vmem:[%s3335 + $0x170] sm:$0xff]
        %v3383 = vld [vmem:[%s3335 + $0x178] sm:$0xff]
        %3392 = vrot.lane.b32.xlu0 %v3327, 127
        %v3393 = vpop.permute.xlu0 %3392
        %3394 = vrot.lane.b32.xlu0 %v3328, 127
        %v3395 = vpop.permute.xlu0 %3394
        %3396 = vrot.lane.b32.xlu0 %v3329, 127
        %v3397 = vpop.permute.xlu0 %3396
        %3398 = vrot.lane.b32.xlu0 %v3330, 127
        %v3399 = vpop.permute.xlu0 %3398
        %3400 = vrot.lane.b32.xlu0 %v3331, 127
        %v3401 = vpop.permute.xlu0 %3400
        %3402 = vrot.lane.b32.xlu0 %v3332, 127
        %v3403 = vpop.permute.xlu0 %3402
        %3404 = vrot.lane.b32.xlu0 %v3333, 127
        %v3405 = vpop.permute.xlu0 %3404
        %3406 = vrot.lane.b32.xlu0 %v3334, 127
        %v3407 = vpop.permute.xlu0 %3406
        %vm3416 = vcmask 523264
        %v3418 = vsel %vm3416, %v3336, 0
        %v3421 = vsel %vm3416, %v3337, 0
        %v3424 = vsel %vm3416, %v3338, 0
        %v3427 = vsel %vm3416, %v3339, 0
        %v3430 = vsel %vm3416, %v3340, 0
        %v3433 = vsel %vm3416, %v3341, 0
        %v3436 = vsel %vm3416, %v3342, 0
        %v3439 = vsel %vm3416, %v3343, 0
        %v3442 = vsel %vm3416, %v3344, 0
        %v3445 = vsel %vm3416, %v3345, 0
        %v3448 = vsel %vm3416, %v3346, 0
        %v3451 = vsel %vm3416, %v3347, 0
        %v3454 = vsel %vm3416, %v3348, 0
        %v3457 = vsel %vm3416, %v3349, 0
        %v3460 = vsel %vm3416, %v3350, 0
        %v3463 = vsel %vm3416, %v3351, 0
        %v3466 = vsel %vm3416, %v3352, 0
        %v3469 = vsel %vm3416, %v3353, 0
        %v3472 = vsel %vm3416, %v3354, 0
        %v3475 = vsel %vm3416, %v3355, 0
        %v3478 = vsel %vm3416, %v3356, 0
        %v3481 = vsel %vm3416, %v3357, 0
        %v3484 = vsel %vm3416, %v3358, 0
        %v3487 = vsel %vm3416, %v3359, 0
        %v3490 = vsel %vm3416, %v3360, 0
        %v3493 = vsel %vm3416, %v3361, 0
        %v3496 = vsel %vm3416, %v3362, 0
        %v3499 = vsel %vm3416, %v3363, 0
        %v3502 = vsel %vm3416, %v3364, 0
        %v3505 = vsel %vm3416, %v3365, 0
        %v3508 = vsel %vm3416, %v3366, 0
        %v3511 = vsel %vm3416, %v3367, 0
        %v3514 = vsel %vm3416, %v3368, 0
        %v3517 = vsel %vm3416, %v3369, 0
        %v3520 = vsel %vm3416, %v3370, 0
        %v3523 = vsel %vm3416, %v3371, 0
        %v3526 = vsel %vm3416, %v3372, 0
        %v3529 = vsel %vm3416, %v3373, 0
        %v3532 = vsel %vm3416, %v3374, 0
        %v3535 = vsel %vm3416, %v3375, 0
        %v3538 = vsel %vm3416, %v3376, 0
        %v3541 = vsel %vm3416, %v3377, 0
        %v3544 = vsel %vm3416, %v3378, 0
        %v3547 = vsel %vm3416, %v3379, 0
        %v3550 = vsel %vm3416, %v3380, 0
        %v3553 = vsel %vm3416, %v3381, 0
        %v3556 = vsel %vm3416, %v3382, 0
        %v3559 = vsel %vm3416, %v3383, 0
        %3561 = vmatprep.subr.mxu0 0.0
        %3562 = vmatpush1.msra.mxu0 %v3393
        %3563 = vmatprep.subr.mxu0 0.0
        %3564 = vmatpush1.msra.mxu0 %v3395
        %3565 = vmatprep.subr.mxu0 0.0
        %3566 = vmatpush1.msra.mxu0 %v3397
        %3567 = vmatprep.subr.mxu0 0.0
        %3568 = vmatpush1.msra.mxu0 %v3399
        %3569 = vmatprep.subr.mxu0 0.0
        %3570 = vmatpush1.msra.mxu0 %v3401
        %3571 = vmatprep.subr.mxu0 0.0
        %3572 = vmatpush1.msra.mxu0 %v3403
        %3573 = vmatprep.subr.mxu0 0.0
        %3574 = vmatpush1.msra.mxu0 %v3405
        %3575 = vmatprep.subr.mxu0 0.0
        %3576 = vmatpush1.msra.mxu0 %v3407
        %3577 = vmatprep.subr.mxu0 0.0
        %3578 = vmatpush1.msra.mxu0 0.0
        %3579 = vmatprep.subr.mxu0 0.0
        %3580 = vmatpush1.msra.mxu0 0.0
        %3581 = vmatprep.subr.mxu0 0.0
        %3582 = vmatpush1.msra.mxu0 0.0
        %3583 = vmatprep.subr.mxu0 0.0
        %3584 = vmatpush1.msra.mxu0 0.0
        %3585 = vmatprep.subr.mxu0 0.0
        %3586 = vmatpush1.msra.mxu0 0.0
        %3587 = vmatprep.subr.mxu0 0.0
        %3588 = vmatpush1.msra.mxu0 0.0
        %3589 = vmatprep.subr.mxu0 0.0
        %3590 = vmatpush1.msra.mxu0 0.0
        %3591 = vmatprep.subr.mxu0 0.0
        %3592 = vmatpush1.msra.mxu0 0.0
        %3593 = vmatprep.subr.mxu0 0.0
        %3594 = vmatpush1.msra.mxu0 0.0
        %3595 = vmatprep.subr.mxu0 0.0
        %3596 = vmatpush1.msra.mxu0 0.0
        %3597 = vmatprep.subr.mxu0 0.0
        %3598 = vmatpush1.msra.mxu0 0.0
        %3599 = vmatprep.subr.mxu0 0.0
        %3600 = vmatpush1.msra.mxu0 0.0
        %3601 = vmatprep.subr.mxu0 0.0
        %3602 = vmatpush1.msra.mxu0 0.0
        %3603 = vmatprep.subr.mxu0 0.0
        %3604 = vmatpush1.msra.mxu0 0.0
        %3605 = vmatprep.subr.mxu0 0.0
        %3606 = vmatpush1.msra.mxu0 0.0
        %3607 = vmatprep.subr.mxu0 0.0
        %3608 = vmatpush1.msra.mxu0 0.0
        %3609 = vmatprep.subr.mxu0 0.0
        %3610 = vmatpush1.msra.mxu0 0.0
        %3611 = vmatprep.subr.mxu0 0.0
        %3612 = vmatpush1.msra.mxu0 0.0
        %3613 = vmatprep.subr.mxu0 0.0
        %3614 = vmatpush1.msra.mxu0 0.0
        %3615 = vmatprep.subr.mxu0 0.0
        %3616 = vmatpush1.msra.mxu0 0.0
        %3617 = vmatprep.subr.mxu0 0.0
        %3618 = vmatpush1.msra.mxu0 0.0
        %3619 = vmatprep.subr.mxu0 0.0
        %3620 = vmatpush1.msra.mxu0 0.0
        %3621 = vmatprep.subr.mxu0 0.0
        %3622 = vmatpush1.msra.mxu0 0.0
        %3623 = vmatprep.subr.mxu0 0.0
        %3624 = vmatpush1.msra.mxu0 0.0
        %3625 = vmatprep.mubr.f32.mxu0 0.0
        %3626 = vmatmul.mubr.f32.gmra.mrb[0].mxu0 %v3418
        %v3627 = vpop.f32.mrb[0].mxu0
        %v3628 = vadd.f32 0.0, %v3627
        %v3629 = vpop.f32.mrb[0].mxu0
        %3630 = vmatprep.mubr.f32.mxu0 0.0
        %3631 = vmatmul.mubr.f32.gmra.mrb[0].mxu0 %v3421
        %v3632 = vpop.f32.mrb[0].mxu0
        %v3633 = vadd.f32 0.0, %v3632
        %v3634 = vpop.f32.mrb[0].mxu0
        %3635 = vmatprep.mubr.f32.mxu0 0.0
        %3636 = vmatmul.mubr.f32.gmra.mrb[0].mxu0 %v3424
        %v3637 = vpop.f32.mrb[0].mxu0
        %v3638 = vadd.f32 0.0, %v3637
        %v3639 = vpop.f32.mrb[0].mxu0
        %3640 = vmatprep.mubr.f32.mxu0 0.0
        %3641 = vmatmul.mubr.f32.gmra.mrb[0].mxu0 %v3427
        %v3642 = vpop.f32.mrb[0].mxu0
        %v3643 = vadd.f32 0.0, %v3642
        %v3644 = vpop.f32.mrb[0].mxu0
        %3645 = vmatprep.mubr.f32.mxu0 0.0
        %3646 = vmatmul.mubr.f32.gmra.mrb[0].mxu0 %v3430
        %v3647 = vpop.f32.mrb[0].mxu0
        %v3648 = vadd.f32 0.0, %v3647
        %v3649 = vpop.f32.mrb[0].mxu0
        %3650 = vmatprep.mubr.f32.mxu0 0.0
        %3651 = vmatmul.mubr.f32.gmra.mrb[0].mxu0 %v3433
        %v3652 = vpop.f32.mrb[0].mxu0
        %v3653 = vadd.f32 0.0, %v3652
        %v3654 = vpop.f32.mrb[0].mxu0
        %3655 = vmatprep.mubr.f32.mxu0 0.0
        %3656 = vmatmul.mubr.f32.gmra.mrb[0].mxu0 %v3436
        %v3657 = vpop.f32.mrb[0].mxu0
        %v3658 = vadd.f32 0.0, %v3657
        %v3659 = vpop.f32.mrb[0].mxu0
        %3660 = vmatprep.mubr.f32.mxu0 0.0
        %3661 = vmatmul.mubr.f32.gmra.mrb[0].mxu0 %v3439
        %v3662 = vpop.f32.mrb[0].mxu0
        %v3663 = vadd.f32 0.0, %v3662
        %v3664 = vpop.f32.mrb[0].mxu0
        %3665 = vmatprep.mubr.f32.mxu0 0.0
        %3666 = vmatmul.mubr.f32.gmra.mrb[0].mxu0 %v3442
        %v3667 = vpop.f32.mrb[0].mxu0
        %v3668 = vadd.f32 0.0, %v3667
        %v3669 = vpop.f32.mrb[0].mxu0
        %3670 = vmatprep.mubr.f32.mxu0 0.0
        %3671 = vmatmul.mubr.f32.gmra.mrb[0].mxu0 %v3445
        %v3672 = vpop.f32.mrb[0].mxu0
        %v3673 = vadd.f32 0.0, %v3672
        %v3674 = vpop.f32.mrb[0].mxu0
        %3675 = vmatprep.mubr.f32.mxu0 0.0
        %3676 = vmatmul.mubr.f32.gmra.mrb[0].mxu0 %v3448
        %v3677 = vpop.f32.mrb[0].mxu0
        %v3678 = vadd.f32 0.0, %v3677
        %v3679 = vpop.f32.mrb[0].mxu0
        %3680 = vmatprep.mubr.f32.mxu0 0.0
        %3681 = vmatmul.mubr.f32.gmra.mrb[0].mxu0 %v3451
        %v3682 = vpop.f32.mrb[0].mxu0
        %v3683 = vadd.f32 0.0, %v3682
        %v3684 = vpop.f32.mrb[0].mxu0
        %3685 = vmatprep.mubr.f32.mxu0 0.0
        %3686 = vmatmul.mubr.f32.gmra.mrb[0].mxu0 %v3454
        %v3687 = vpop.f32.mrb[0].mxu0
        %v3688 = vadd.f32 0.0, %v3687
        %v3689 = vpop.f32.mrb[0].mxu0
        %3690 = vmatprep.mubr.f32.mxu0 0.0
        %3691 = vmatmul.mubr.f32.gmra.mrb[0].mxu0 %v3457
        %v3692 = vpop.f32.mrb[0].mxu0
        %v3693 = vadd.f32 0.0, %v3692
        %v3694 = vpop.f32.mrb[0].mxu0
        %3695 = vmatprep.mubr.f32.mxu0 0.0
        %3696 = vmatmul.mubr.f32.gmra.mrb[0].mxu0 %v3460
        %v3697 = vpop.f32.mrb[0].mxu0
        %v3698 = vadd.f32 0.0, %v3697
        %v3699 = vpop.f32.mrb[0].mxu0
        %3700 = vmatprep.mubr.f32.mxu0 0.0
        %3701 = vmatmul.mubr.f32.gmra.mrb[0].mxu0 %v3463
        %v3702 = vpop.f32.mrb[0].mxu0
        %v3703 = vadd.f32 0.0, %v3702
        %v3704 = vpop.f32.mrb[0].mxu0
        %3705 = vmatprep.mubr.f32.mxu0 0.0
        %3706 = vmatmul.mubr.f32.gmra.mrb[0].mxu0 %v3466
        %v3707 = vpop.f32.mrb[0].mxu0
        %v3708 = vadd.f32 0.0, %v3707
        %v3709 = vpop.f32.mrb[0].mxu0
        %3710 = vmatprep.mubr.f32.mxu0 0.0
        %3711 = vmatmul.mubr.f32.gmra.mrb[0].mxu0 %v3469
        %v3712 = vpop.f32.mrb[0].mxu0
        %v3713 = vadd.f32 0.0, %v3712
        %v3714 = vpop.f32.mrb[0].mxu0
        %3715 = vmatprep.mubr.f32.mxu0 0.0
        %3716 = vmatmul.mubr.f32.gmra.mrb[0].mxu0 %v3472
        %v3717 = vpop.f32.mrb[0].mxu0
        %v3718 = vadd.f32 0.0, %v3717
        %v3719 = vpop.f32.mrb[0].mxu0
        %3720 = vmatprep.mubr.f32.mxu0 0.0
        %3721 = vmatmul.mubr.f32.gmra.mrb[0].mxu0 %v3475
        %v3722 = vpop.f32.mrb[0].mxu0
        %v3723 = vadd.f32 0.0, %v3722
        %v3724 = vpop.f32.mrb[0].mxu0
        %3725 = vmatprep.mubr.f32.mxu0 0.0
        %3726 = vmatmul.mubr.f32.gmra.mrb[0].mxu0 %v3478
        %v3727 = vpop.f32.mrb[0].mxu0
        %v3728 = vadd.f32 0.0, %v3727
        %v3729 = vpop.f32.mrb[0].mxu0
        %3730 = vmatprep.mubr.f32.mxu0 0.0
        %3731 = vmatmul.mubr.f32.gmra.mrb[0].mxu0 %v3481
        %v3732 = vpop.f32.mrb[0].mxu0
        %v3733 = vadd.f32 0.0, %v3732
        %v3734 = vpop.f32.mrb[0].mxu0
        %3735 = vmatprep.mubr.f32.mxu0 0.0
        %3736 = vmatmul.mubr.f32.gmra.mrb[0].mxu0 %v3484
        %v3737 = vpop.f32.mrb[0].mxu0
        %v3738 = vadd.f32 0.0, %v3737
        %v3739 = vpop.f32.mrb[0].mxu0
        %3740 = vmatprep.mubr.f32.mxu0 0.0
        %3741 = vmatmul.mubr.f32.gmra.mrb[0].mxu0 %v3487
        %v3742 = vpop.f32.mrb[0].mxu0
        %v3743 = vadd.f32 0.0, %v3742
        %v3744 = vpop.f32.mrb[0].mxu0
        %3745 = vmatprep.mubr.f32.mxu0 0.0
        %3746 = vmatmul.mubr.f32.gmra.mrb[0].mxu0 %v3490
        %v3747 = vpop.f32.mrb[0].mxu0
        %v3748 = vadd.f32 0.0, %v3747
        %v3749 = vpop.f32.mrb[0].mxu0
        %3750 = vmatprep.mubr.f32.mxu0 0.0
        %3751 = vmatmul.mubr.f32.gmra.mrb[0].mxu0 %v3493
        %v3752 = vpop.f32.mrb[0].mxu0
        %v3753 = vadd.f32 0.0, %v3752
        %v3754 = vpop.f32.mrb[0].mxu0
        %3755 = vmatprep.mubr.f32.mxu0 0.0
        %3756 = vmatmul.mubr.f32.gmra.mrb[0].mxu0 %v3496
        %v3757 = vpop.f32.mrb[0].mxu0
        %v3758 = vadd.f32 0.0, %v3757
        %v3759 = vpop.f32.mrb[0].mxu0
        %3760 = vmatprep.mubr.f32.mxu0 0.0
        %3761 = vmatmul.mubr.f32.gmra.mrb[0].mxu0 %v3499
        %v3762 = vpop.f32.mrb[0].mxu0
        %v3763 = vadd.f32 0.0, %v3762
        %v3764 = vpop.f32.mrb[0].mxu0
        %3765 = vmatprep.mubr.f32.mxu0 0.0
        %3766 = vmatmul.mubr.f32.gmra.mrb[0].mxu0 %v3502
        %v3767 = vpop.f32.mrb[0].mxu0
        %v3768 = vadd.f32 0.0, %v3767
        %v3769 = vpop.f32.mrb[0].mxu0
        %3770 = vmatprep.mubr.f32.mxu0 0.0
        %3771 = vmatmul.mubr.f32.gmra.mrb[0].mxu0 %v3505
        %v3772 = vpop.f32.mrb[0].mxu0
        %v3773 = vadd.f32 0.0, %v3772
        %v3774 = vpop.f32.mrb[0].mxu0
        %3775 = vmatprep.mubr.f32.mxu0 0.0
        %3776 = vmatmul.mubr.f32.gmra.mrb[0].mxu0 %v3508
        %v3777 = vpop.f32.mrb[0].mxu0
        %v3778 = vadd.f32 0.0, %v3777
        %v3779 = vpop.f32.mrb[0].mxu0
        %3780 = vmatprep.mubr.f32.mxu0 0.0
        %3781 = vmatmul.mubr.f32.gmra.mrb[0].mxu0 %v3511
        %v3782 = vpop.f32.mrb[0].mxu0
        %v3783 = vadd.f32 0.0, %v3782
        %v3784 = vpop.f32.mrb[0].mxu0
        %3785 = vmatprep.mubr.f32.mxu0 0.0
        %3786 = vmatmul.mubr.f32.gmra.mrb[0].mxu0 %v3514
        %v3787 = vpop.f32.mrb[0].mxu0
        %v3788 = vadd.f32 0.0, %v3787
        %v3789 = vpop.f32.mrb[0].mxu0
        %3790 = vmatprep.mubr.f32.mxu0 0.0
        %3791 = vmatmul.mubr.f32.gmra.mrb[0].mxu0 %v3517
        %v3792 = vpop.f32.mrb[0].mxu0
        %v3793 = vadd.f32 0.0, %v3792
        %v3794 = vpop.f32.mrb[0].mxu0
        %3795 = vmatprep.mubr.f32.mxu0 0.0
        %3796 = vmatmul.mubr.f32.gmra.mrb[0].mxu0 %v3520
        %v3797 = vpop.f32.mrb[0].mxu0
        %v3798 = vadd.f32 0.0, %v3797
        %v3799 = vpop.f32.mrb[0].mxu0
        %3800 = vmatprep.mubr.f32.mxu0 0.0
        %3801 = vmatmul.mubr.f32.gmra.mrb[0].mxu0 %v3523
        %v3802 = vpop.f32.mrb[0].mxu0
        %v3803 = vadd.f32 0.0, %v3802
        %v3804 = vpop.f32.mrb[0].mxu0
        %3805 = vmatprep.mubr.f32.mxu0 0.0
        %3806 = vmatmul.mubr.f32.gmra.mrb[0].mxu0 %v3526
        %v3807 = vpop.f32.mrb[0].mxu0
        %v3808 = vadd.f32 0.0, %v3807
        %v3809 = vpop.f32.mrb[0].mxu0
        %3810 = vmatprep.mubr.f32.mxu0 0.0
        %3811 = vmatmul.mubr.f32.gmra.mrb[0].mxu0 %v3529
        %v3812 = vpop.f32.mrb[0].mxu0
        %v3813 = vadd.f32 0.0, %v3812
        %v3814 = vpop.f32.mrb[0].mxu0
        %3815 = vmatprep.mubr.f32.mxu0 0.0
        %3816 = vmatmul.mubr.f32.gmra.mrb[0].mxu0 %v3532
        %v3817 = vpop.f32.mrb[0].mxu0
        %v3818 = vadd.f32 0.0, %v3817
        %v3819 = vpop.f32.mrb[0].mxu0
        %3820 = vmatprep.mubr.f32.mxu0 0.0
        %3821 = vmatmul.mubr.f32.gmra.mrb[0].mxu0 %v3535
        %v3822 = vpop.f32.mrb[0].mxu0
        %v3823 = vadd.f32 0.0, %v3822
        %v3824 = vpop.f32.mrb[0].mxu0
        %3825 = vmatprep.mubr.f32.mxu0 0.0
        %3826 = vmatmul.mubr.f32.gmra.mrb[0].mxu0 %v3538
        %v3827 = vpop.f32.mrb[0].mxu0
        %v3828 = vadd.f32 0.0, %v3827
        %v3829 = vpop.f32.mrb[0].mxu0
        %3830 = vmatprep.mubr.f32.mxu0 0.0
        %3831 = vmatmul.mubr.f32.gmra.mrb[0].mxu0 %v3541
        %v3832 = vpop.f32.mrb[0].mxu0
        %v3833 = vadd.f32 0.0, %v3832
        %v3834 = vpop.f32.mrb[0].mxu0
        %3835 = vmatprep.mubr.f32.mxu0 0.0
        %3836 = vmatmul.mubr.f32.gmra.mrb[0].mxu0 %v3544
        %v3837 = vpop.f32.mrb[0].mxu0
        %v3838 = vadd.f32 0.0, %v3837
        %v3839 = vpop.f32.mrb[0].mxu0
        %3840 = vmatprep.mubr.f32.mxu0 0.0
        %3841 = vmatmul.mubr.f32.gmra.mrb[0].mxu0 %v3547
        %v3842 = vpop.f32.mrb[0].mxu0
        %v3843 = vadd.f32 0.0, %v3842
        %v3844 = vpop.f32.mrb[0].mxu0
        %3845 = vmatprep.mubr.f32.mxu0 0.0
        %3846 = vmatmul.mubr.f32.gmra.mrb[0].mxu0 %v3550
        %v3847 = vpop.f32.mrb[0].mxu0
        %v3848 = vadd.f32 0.0, %v3847
        %v3849 = vpop.f32.mrb[0].mxu0
        %3850 = vmatprep.mubr.f32.mxu0 0.0
        %3851 = vmatmul.mubr.f32.gmra.mrb[0].mxu0 %v3553
        %v3852 = vpop.f32.mrb[0].mxu0
        %v3853 = vadd.f32 0.0, %v3852
        %v3854 = vpop.f32.mrb[0].mxu0
        %3855 = vmatprep.mubr.f32.mxu0 0.0
        %3856 = vmatmul.mubr.f32.gmra.mrb[0].mxu0 %v3556
        %v3857 = vpop.f32.mrb[0].mxu0
        %v3858 = vadd.f32 0.0, %v3857
        %v3859 = vpop.f32.mrb[0].mxu0
        %3860 = vmatprep.mubr.f32.mxu0 0.0
        %3861 = vmatmul.mubr.f32.gmra.mrb[0].mxu0 %v3559
        %v3862 = vpop.f32.mrb[0].mxu0
        %v3863 = vadd.f32 0.0, %v3862
        %v3864 = vpop.f32.mrb[0].mxu0
        %3865 = vdwg.mxu0
        %v3867 = vsel %vm3416, %v3238, 0
        %v3870 = vsel %vm3416, %v3239, 0
        %v3873 = vsel %vm3416, %v3240, 0
        %v3876 = vsel %vm3416, %v3241, 0
        %v3879 = vsel %vm3416, %v3242, 0
        %v3882 = vsel %vm3416, %v3243, 0
        %v3885 = vsel %vm3416, %v3244, 0
        %v3888 = vsel %vm3416, %v3245, 0
        %v3891 = vsel %vm3416, %v3246, 0
        %v3894 = vsel %vm3416, %v3247, 0
        %v3897 = vsel %vm3416, %v3248, 0
        %v3900 = vsel %vm3416, %v3249, 0
        %v3903 = vsel %vm3416, %v3250, 0
        %v3906 = vsel %vm3416, %v3251, 0
        %v3909 = vsel %vm3416, %v3252, 0
        %v3912 = vsel %vm3416, %v3253, 0
        %v3915 = vsel %vm3416, %v3254, 0
        %v3918 = vsel %vm3416, %v3255, 0
        %v3921 = vsel %vm3416, %v3256, 0
        %v3924 = vsel %vm3416, %v3257, 0
        %v3927 = vsel %vm3416, %v3258, 0
        %v3930 = vsel %vm3416, %v3259, 0
        %v3933 = vsel %vm3416, %v3260, 0
        %v3936 = vsel %vm3416, %v3261, 0
        %v3939 = vsel %vm3416, %v3262, 0
        %v3942 = vsel %vm3416, %v3263, 0
        %v3945 = vsel %vm3416, %v3264, 0
        %v3948 = vsel %vm3416, %v3265, 0
        %v3951 = vsel %vm3416, %v3266, 0
        %v3954 = vsel %vm3416, %v3267, 0
        %v3957 = vsel %vm3416, %v3268, 0
        %v3960 = vsel %vm3416, %v3269, 0
        %v3963 = vsel %vm3416, %v3270, 0
        %v3966 = vsel %vm3416, %v3271, 0
        %v3969 = vsel %vm3416, %v3272, 0
        %v3972 = vsel %vm3416, %v3273, 0
        %v3975 = vsel %vm3416, %v3274, 0
        %v3978 = vsel %vm3416, %v3275, 0
        %v3981 = vsel %vm3416, %v3276, 0
        %v3984 = vsel %vm3416, %v3277, 0
        %v3987 = vsel %vm3416, %v3278, 0
        %v3990 = vsel %vm3416, %v3279, 0
        %v3993 = vsel %vm3416, %v3280, 0
        %v3996 = vsel %vm3416, %v3281, 0
        %v3999 = vsel %vm3416, %v3282, 0
        %v4002 = vsel %vm3416, %v3283, 0
        %v4005 = vsel %vm3416, %v3284, 0
        %v4008 = vsel %vm3416, %v3285, 0
        %4010 = vmatprep.subr.mxu0 0.0
        %4011 = vmatpush1.msra.mxu0 %v3230
        %4012 = vmatprep.subr.mxu0 0.0
        %4013 = vmatpush1.msra.mxu0 %v3231
        %4014 = vmatprep.subr.mxu0 0.0
        %4015 = vmatpush1.msra.mxu0 %v3232
        %4016 = vmatprep.subr.mxu0 0.0
        %4017 = vmatpush1.msra.mxu0 %v3233
        %4018 = vmatprep.subr.mxu0 0.0
        %4019 = vmatpush1.msra.mxu0 %v3234
        %4020 = vmatprep.subr.mxu0 0.0
        %4021 = vmatpush1.msra.mxu0 %v3235
        %4022 = vmatprep.subr.mxu0 0.0
        %4023 = vmatpush1.msra.mxu0 %v3236
        %4024 = vmatprep.subr.mxu0 0.0
        %4025 = vmatpush1.msra.mxu0 %v3237
        %4026 = vmatprep.subr.mxu0 0.0
        %4027 = vmatpush1.msra.mxu0 0.0
        %4028 = vmatprep.subr.mxu0 0.0
        %4029 = vmatpush1.msra.mxu0 0.0
        %4030 = vmatprep.subr.mxu0 0.0
        %4031 = vmatpush1.msra.mxu0 0.0
        %4032 = vmatprep.subr.mxu0 0.0
        %4033 = vmatpush1.msra.mxu0 0.0
        %4034 = vmatprep.subr.mxu0 0.0
        %4035 = vmatpush1.msra.mxu0 0.0
        %4036 = vmatprep.subr.mxu0 0.0
        %4037 = vmatpush1.msra.mxu0 0.0
        %4038 = vmatprep.subr.mxu0 0.0
        %4039 = vmatpush1.msra.mxu0 0.0
        %4040 = vmatprep.subr.mxu0 0.0
        %4041 = vmatpush1.msra.mxu0 0.0
        %4042 = vmatprep.subr.mxu0 0.0
        %4043 = vmatpush1.msra.mxu0 0.0
        %4044 = vmatprep.subr.mxu0 0.0
        %4045 = vmatpush1.msra.mxu0 0.0
        %4046 = vmatprep.subr.mxu0 0.0
        %4047 = vmatpush1.msra.mxu0 0.0
        %4048 = vmatprep.subr.mxu0 0.0
        %4049 = vmatpush1.msra.mxu0 0.0
        %4050 = vmatprep.subr.mxu0 0.0
        %4051 = vmatpush1.msra.mxu0 0.0
        %4052 = vmatprep.subr.mxu0 0.0
        %4053 = vmatpush1.msra.mxu0 0.0
        %4054 = vmatprep.subr.mxu0 0.0
        %4055 = vmatpush1.msra.mxu0 0.0
        %4056 = vmatprep.subr.mxu0 0.0
        %4057 = vmatpush1.msra.mxu0 0.0
        %4058 = vmatprep.subr.mxu0 0.0
        %4059 = vmatpush1.msra.mxu0 0.0
        %4060 = vmatprep.subr.mxu0 0.0
        %4061 = vmatpush1.msra.mxu0 0.0
        %4062 = vmatprep.subr.mxu0 0.0
        %4063 = vmatpush1.msra.mxu0 0.0
        %4064 = vmatprep.subr.mxu0 0.0
        %4065 = vmatpush1.msra.mxu0 0.0
        %4066 = vmatprep.subr.mxu0 0.0
        %4067 = vmatpush1.msra.mxu0 0.0
        %4068 = vmatprep.subr.mxu0 0.0
        %4069 = vmatpush1.msra.mxu0 0.0
        %4070 = vmatprep.subr.mxu0 0.0
        %4071 = vmatpush1.msra.mxu0 0.0
        %4072 = vmatprep.subr.mxu0 0.0
        %4073 = vmatpush1.msra.mxu0 0.0
        %4074 = vmatprep.mubr.f32.mxu0 0.0
        %4075 = vmatmul.mubr.f32.gmra.mrb[0].mxu0 %v3867
        %v4076 = vpop.f32.mrb[0].mxu0
        %v4077 = vadd.f32 %v3628, %v4076
        %v4078 = vpop.f32.mrb[0].mxu0
        %4079 = vmatprep.mubr.f32.mxu0 0.0
        %4080 = vmatmul.mubr.f32.gmra.mrb[0].mxu0 %v3870
        %v4081 = vpop.f32.mrb[0].mxu0
        %v4082 = vadd.f32 %v3633, %v4081
        %v4083 = vpop.f32.mrb[0].mxu0
        %4084 = vmatprep.mubr.f32.mxu0 0.0
        %4085 = vmatmul.mubr.f32.gmra.mrb[0].mxu0 %v3873
        %v4086 = vpop.f32.mrb[0].mxu0
        %v4087 = vadd.f32 %v3638, %v4086
        %v4088 = vpop.f32.mrb[0].mxu0
        %4089 = vmatprep.mubr.f32.mxu0 0.0
        %4090 = vmatmul.mubr.f32.gmra.mrb[0].mxu0 %v3876
        %v4091 = vpop.f32.mrb[0].mxu0
        %v4092 = vadd.f32 %v3643, %v4091
        %v4093 = vpop.f32.mrb[0].mxu0
        %4094 = vmatprep.mubr.f32.mxu0 0.0
        %4095 = vmatmul.mubr.f32.gmra.mrb[0].mxu0 %v3879
        %v4096 = vpop.f32.mrb[0].mxu0
        %v4097 = vadd.f32 %v3648, %v4096
        %v4098 = vpop.f32.mrb[0].mxu0
        %4099 = vmatprep.mubr.f32.mxu0 0.0
        %4100 = vmatmul.mubr.f32.gmra.mrb[0].mxu0 %v3882
        %v4101 = vpop.f32.mrb[0].mxu0
        %v4102 = vadd.f32 %v3653, %v4101
        %v4103 = vpop.f32.mrb[0].mxu0
        %4104 = vmatprep.mubr.f32.mxu0 0.0
        %4105 = vmatmul.mubr.f32.gmra.mrb[0].mxu0 %v3885
        %v4106 = vpop.f32.mrb[0].mxu0
        %v4107 = vadd.f32 %v3658, %v4106
        %v4108 = vpop.f32.mrb[0].mxu0
        %4109 = vmatprep.mubr.f32.mxu0 0.0
        %4110 = vmatmul.mubr.f32.gmra.mrb[0].mxu0 %v3888
        %v4111 = vpop.f32.mrb[0].mxu0
        %v4112 = vadd.f32 %v3663, %v4111
        %v4113 = vpop.f32.mrb[0].mxu0
        %4114 = vmatprep.mubr.f32.mxu0 0.0
        %4115 = vmatmul.mubr.f32.gmra.mrb[0].mxu0 %v3891
        %v4116 = vpop.f32.mrb[0].mxu0
        %v4117 = vadd.f32 %v3668, %v4116
        %v4118 = vpop.f32.mrb[0].mxu0
        %4119 = vmatprep.mubr.f32.mxu0 0.0
        %4120 = vmatmul.mubr.f32.gmra.mrb[0].mxu0 %v3894
        %v4121 = vpop.f32.mrb[0].mxu0
        %v4122 = vadd.f32 %v3673, %v4121
        %v4123 = vpop.f32.mrb[0].mxu0
        %4124 = vmatprep.mubr.f32.mxu0 0.0
        %4125 = vmatmul.mubr.f32.gmra.mrb[0].mxu0 %v3897
        %v4126 = vpop.f32.mrb[0].mxu0
        %v4127 = vadd.f32 %v3678, %v4126
        %v4128 = vpop.f32.mrb[0].mxu0
        %4129 = vmatprep.mubr.f32.mxu0 0.0
        %4130 = vmatmul.mubr.f32.gmra.mrb[0].mxu0 %v3900
        %v4131 = vpop.f32.mrb[0].mxu0
        %v4132 = vadd.f32 %v3683, %v4131
        %v4133 = vpop.f32.mrb[0].mxu0
        %4134 = vmatprep.mubr.f32.mxu0 0.0
        %4135 = vmatmul.mubr.f32.gmra.mrb[0].mxu0 %v3903
        %v4136 = vpop.f32.mrb[0].mxu0
        %v4137 = vadd.f32 %v3688, %v4136
        %v4138 = vpop.f32.mrb[0].mxu0
        %4139 = vmatprep.mubr.f32.mxu0 0.0
        %4140 = vmatmul.mubr.f32.gmra.mrb[0].mxu0 %v3906
        %v4141 = vpop.f32.mrb[0].mxu0
        %v4142 = vadd.f32 %v3693, %v4141
        %v4143 = vpop.f32.mrb[0].mxu0
        %4144 = vmatprep.mubr.f32.mxu0 0.0
        %4145 = vmatmul.mubr.f32.gmra.mrb[0].mxu0 %v3909
        %v4146 = vpop.f32.mrb[0].mxu0
        %v4147 = vadd.f32 %v3698, %v4146
        %v4148 = vpop.f32.mrb[0].mxu0
        %4149 = vmatprep.mubr.f32.mxu0 0.0
        %4150 = vmatmul.mubr.f32.gmra.mrb[0].mxu0 %v3912
        %v4151 = vpop.f32.mrb[0].mxu0
        %v4152 = vadd.f32 %v3703, %v4151
        %v4153 = vpop.f32.mrb[0].mxu0
        %4154 = vmatprep.mubr.f32.mxu0 0.0
        %4155 = vmatmul.mubr.f32.gmra.mrb[0].mxu0 %v3915
        %v4156 = vpop.f32.mrb[0].mxu0
        %v4157 = vadd.f32 %v3708, %v4156
        %v4158 = vpop.f32.mrb[0].mxu0
        %4159 = vmatprep.mubr.f32.mxu0 0.0
        %4160 = vmatmul.mubr.f32.gmra.mrb[0].mxu0 %v3918
        %v4161 = vpop.f32.mrb[0].mxu0
        %v4162 = vadd.f32 %v3713, %v4161
        %v4163 = vpop.f32.mrb[0].mxu0
        %4164 = vmatprep.mubr.f32.mxu0 0.0
        %4165 = vmatmul.mubr.f32.gmra.mrb[0].mxu0 %v3921
        %v4166 = vpop.f32.mrb[0].mxu0
        %v4167 = vadd.f32 %v3718, %v4166
        %v4168 = vpop.f32.mrb[0].mxu0
        %4169 = vmatprep.mubr.f32.mxu0 0.0
        %4170 = vmatmul.mubr.f32.gmra.mrb[0].mxu0 %v3924
        %v4171 = vpop.f32.mrb[0].mxu0
        %v4172 = vadd.f32 %v3723, %v4171
        %v4173 = vpop.f32.mrb[0].mxu0
        %4174 = vmatprep.mubr.f32.mxu0 0.0
        %4175 = vmatmul.mubr.f32.gmra.mrb[0].mxu0 %v3927
        %v4176 = vpop.f32.mrb[0].mxu0
        %v4177 = vadd.f32 %v3728, %v4176
        %v4178 = vpop.f32.mrb[0].mxu0
        %4179 = vmatprep.mubr.f32.mxu0 0.0
        %4180 = vmatmul.mubr.f32.gmra.mrb[0].mxu0 %v3930
        %v4181 = vpop.f32.mrb[0].mxu0
        %v4182 = vadd.f32 %v3733, %v4181
        %v4183 = vpop.f32.mrb[0].mxu0
        %4184 = vmatprep.mubr.f32.mxu0 0.0
        %4185 = vmatmul.mubr.f32.gmra.mrb[0].mxu0 %v3933
        %v4186 = vpop.f32.mrb[0].mxu0
        %v4187 = vadd.f32 %v3738, %v4186
        %v4188 = vpop.f32.mrb[0].mxu0
        %4189 = vmatprep.mubr.f32.mxu0 0.0
        %4190 = vmatmul.mubr.f32.gmra.mrb[0].mxu0 %v3936
        %v4191 = vpop.f32.mrb[0].mxu0
        %v4192 = vadd.f32 %v3743, %v4191
        %v4193 = vpop.f32.mrb[0].mxu0
        %4194 = vmatprep.mubr.f32.mxu0 0.0
        %4195 = vmatmul.mubr.f32.gmra.mrb[0].mxu0 %v3939
        %v4196 = vpop.f32.mrb[0].mxu0
        %v4197 = vadd.f32 %v3748, %v4196
        %v4198 = vpop.f32.mrb[0].mxu0
        %4199 = vmatprep.mubr.f32.mxu0 0.0
        %4200 = vmatmul.mubr.f32.gmra.mrb[0].mxu0 %v3942
        %v4201 = vpop.f32.mrb[0].mxu0
        %v4202 = vadd.f32 %v3753, %v4201
        %v4203 = vpop.f32.mrb[0].mxu0
        %4204 = vmatprep.mubr.f32.mxu0 0.0
        %4205 = vmatmul.mubr.f32.gmra.mrb[0].mxu0 %v3945
        %v4206 = vpop.f32.mrb[0].mxu0
        %v4207 = vadd.f32 %v3758, %v4206
        %v4208 = vpop.f32.mrb[0].mxu0
        %4209 = vmatprep.mubr.f32.mxu0 0.0
        %4210 = vmatmul.mubr.f32.gmra.mrb[0].mxu0 %v3948
        %v4211 = vpop.f32.mrb[0].mxu0
        %v4212 = vadd.f32 %v3763, %v4211
        %v4213 = vpop.f32.mrb[0].mxu0
        %4214 = vmatprep.mubr.f32.mxu0 0.0
        %4215 = vmatmul.mubr.f32.gmra.mrb[0].mxu0 %v3951
        %v4216 = vpop.f32.mrb[0].mxu0
        %v4217 = vadd.f32 %v3768, %v4216
        %v4218 = vpop.f32.mrb[0].mxu0
        %4219 = vmatprep.mubr.f32.mxu0 0.0
        %4220 = vmatmul.mubr.f32.gmra.mrb[0].mxu0 %v3954
        %v4221 = vpop.f32.mrb[0].mxu0
        %v4222 = vadd.f32 %v3773, %v4221
        %v4223 = vpop.f32.mrb[0].mxu0
        %4224 = vmatprep.mubr.f32.mxu0 0.0
        %4225 = vmatmul.mubr.f32.gmra.mrb[0].mxu0 %v3957
        %v4226 = vpop.f32.mrb[0].mxu0
        %v4227 = vadd.f32 %v3778, %v4226
        %v4228 = vpop.f32.mrb[0].mxu0
        %4229 = vmatprep.mubr.f32.mxu0 0.0
        %4230 = vmatmul.mubr.f32.gmra.mrb[0].mxu0 %v3960
        %v4231 = vpop.f32.mrb[0].mxu0
        %v4232 = vadd.f32 %v3783, %v4231
        %v4233 = vpop.f32.mrb[0].mxu0
        %4234 = vmatprep.mubr.f32.mxu0 0.0
        %4235 = vmatmul.mubr.f32.gmra.mrb[0].mxu0 %v3963
        %v4236 = vpop.f32.mrb[0].mxu0
        %v4237 = vadd.f32 %v3788, %v4236
        %v4238 = vpop.f32.mrb[0].mxu0
        %4239 = vmatprep.mubr.f32.mxu0 0.0
        %4240 = vmatmul.mubr.f32.gmra.mrb[0].mxu0 %v3966
        %v4241 = vpop.f32.mrb[0].mxu0
        %v4242 = vadd.f32 %v3793, %v4241
        %v4243 = vpop.f32.mrb[0].mxu0
        %4244 = vmatprep.mubr.f32.mxu0 0.0
        %4245 = vmatmul.mubr.f32.gmra.mrb[0].mxu0 %v3969
        %v4246 = vpop.f32.mrb[0].mxu0
        %v4247 = vadd.f32 %v3798, %v4246
        %v4248 = vpop.f32.mrb[0].mxu0
        %4249 = vmatprep.mubr.f32.mxu0 0.0
        %4250 = vmatmul.mubr.f32.gmra.mrb[0].mxu0 %v3972
        %v4251 = vpop.f32.mrb[0].mxu0
        %v4252 = vadd.f32 %v3803, %v4251
        %v4253 = vpop.f32.mrb[0].mxu0
        %4254 = vmatprep.mubr.f32.mxu0 0.0
        %4255 = vmatmul.mubr.f32.gmra.mrb[0].mxu0 %v3975
        %v4256 = vpop.f32.mrb[0].mxu0
        %v4257 = vadd.f32 %v3808, %v4256
        %v4258 = vpop.f32.mrb[0].mxu0
        %4259 = vmatprep.mubr.f32.mxu0 0.0
        %4260 = vmatmul.mubr.f32.gmra.mrb[0].mxu0 %v3978
        %v4261 = vpop.f32.mrb[0].mxu0
        %v4262 = vadd.f32 %v3813, %v4261
        %v4263 = vpop.f32.mrb[0].mxu0
        %4264 = vmatprep.mubr.f32.mxu0 0.0
        %4265 = vmatmul.mubr.f32.gmra.mrb[0].mxu0 %v3981
        %v4266 = vpop.f32.mrb[0].mxu0
        %v4267 = vadd.f32 %v3818, %v4266
        %v4268 = vpop.f32.mrb[0].mxu0
        %4269 = vmatprep.mubr.f32.mxu0 0.0
        %4270 = vmatmul.mubr.f32.gmra.mrb[0].mxu0 %v3984
        %v4271 = vpop.f32.mrb[0].mxu0
        %v4272 = vadd.f32 %v3823, %v4271
        %v4273 = vpop.f32.mrb[0].mxu0
        %4274 = vmatprep.mubr.f32.mxu0 0.0
        %4275 = vmatmul.mubr.f32.gmra.mrb[0].mxu0 %v3987
        %v4276 = vpop.f32.mrb[0].mxu0
        %v4277 = vadd.f32 %v3828, %v4276
        %v4278 = vpop.f32.mrb[0].mxu0
        %4279 = vmatprep.mubr.f32.mxu0 0.0
        %4280 = vmatmul.mubr.f32.gmra.mrb[0].mxu0 %v3990
        %v4281 = vpop.f32.mrb[0].mxu0
        %v4282 = vadd.f32 %v3833, %v4281
        %v4283 = vpop.f32.mrb[0].mxu0
        %4284 = vmatprep.mubr.f32.mxu0 0.0
        %4285 = vmatmul.mubr.f32.gmra.mrb[0].mxu0 %v3993
        %v4286 = vpop.f32.mrb[0].mxu0
        %v4287 = vadd.f32 %v3838, %v4286
        %v4288 = vpop.f32.mrb[0].mxu0
        %4289 = vmatprep.mubr.f32.mxu0 0.0
        %4290 = vmatmul.mubr.f32.gmra.mrb[0].mxu0 %v3996
        %v4291 = vpop.f32.mrb[0].mxu0
        %v4292 = vadd.f32 %v3843, %v4291
        %v4293 = vpop.f32.mrb[0].mxu0
        %4294 = vmatprep.mubr.f32.mxu0 0.0
        %4295 = vmatmul.mubr.f32.gmra.mrb[0].mxu0 %v3999
        %v4296 = vpop.f32.mrb[0].mxu0
        %v4297 = vadd.f32 %v3848, %v4296
        %v4298 = vpop.f32.mrb[0].mxu0
        %4299 = vmatprep.mubr.f32.mxu0 0.0
        %4300 = vmatmul.mubr.f32.gmra.mrb[0].mxu0 %v4002
        %v4301 = vpop.f32.mrb[0].mxu0
        %v4302 = vadd.f32 %v3853, %v4301
        %v4303 = vpop.f32.mrb[0].mxu0
        %4304 = vmatprep.mubr.f32.mxu0 0.0
        %4305 = vmatmul.mubr.f32.gmra.mrb[0].mxu0 %v4005
        %v4306 = vpop.f32.mrb[0].mxu0
        %v4307 = vadd.f32 %v3858, %v4306
        %v4308 = vpop.f32.mrb[0].mxu0
        %4309 = vmatprep.mubr.f32.mxu0 0.0
        %4310 = vmatmul.mubr.f32.gmra.mrb[0].mxu0 %v4008
        %v4311 = vpop.f32.mrb[0].mxu0
        %v4312 = vadd.f32 %v3863, %v4311
        %v4313 = vpop.f32.mrb[0].mxu0
        %4314 = vdwg.mxu0
        %s4315 = scalar_lea.vmem %s3, 768
        %v4316 = vld [vmem:[%s4315] sm:$0xff]
        %v4317 = vld [vmem:[%s4315 + $0x8] sm:$0xff]
        %v4318 = vld [vmem:[%s4315 + $0x10] sm:$0xff]
        %v4319 = vld [vmem:[%s4315 + $0x18] sm:$0xff]
        %v4320 = vld [vmem:[%s4315 + $0x20] sm:$0xff]
        %v4321 = vld [vmem:[%s4315 + $0x28] sm:$0xff]
        %v4322 = vld [vmem:[%s4315 + $0x30] sm:$0xff]
        %v4323 = vld [vmem:[%s4315 + $0x38] sm:$0xff]
        %v4324 = vld [vmem:[%s4315 + $0x40] sm:$0xff]
        %v4325 = vld [vmem:[%s4315 + $0x48] sm:$0xff]
        %v4326 = vld [vmem:[%s4315 + $0x50] sm:$0xff]
        %v4327 = vld [vmem:[%s4315 + $0x58] sm:$0xff]
        %v4328 = vld [vmem:[%s4315 + $0x60] sm:$0xff]
        %v4329 = vld [vmem:[%s4315 + $0x68] sm:$0xff]
        %v4330 = vld [vmem:[%s4315 + $0x70] sm:$0xff]
        %v4331 = vld [vmem:[%s4315 + $0x78] sm:$0xff]
        %v4332 = vld [vmem:[%s4315 + $0x80] sm:$0xff]
        %v4333 = vld [vmem:[%s4315 + $0x88] sm:$0xff]
        %v4334 = vld [vmem:[%s4315 + $0x90] sm:$0xff]
        %v4335 = vld [vmem:[%s4315 + $0x98] sm:$0xff]
        %v4336 = vld [vmem:[%s4315 + $0xa0] sm:$0xff]
        %v4337 = vld [vmem:[%s4315 + $0xa8] sm:$0xff]
        %v4338 = vld [vmem:[%s4315 + $0xb0] sm:$0xff]
        %v4339 = vld [vmem:[%s4315 + $0xb8] sm:$0xff]
        %v4340 = vld [vmem:[%s4315 + $0xc0] sm:$0xff]
        %v4341 = vld [vmem:[%s4315 + $0xc8] sm:$0xff]
        %v4342 = vld [vmem:[%s4315 + $0xd0] sm:$0xff]
        %v4343 = vld [vmem:[%s4315 + $0xd8] sm:$0xff]
        %v4344 = vld [vmem:[%s4315 + $0xe0] sm:$0xff]
        %v4345 = vld [vmem:[%s4315 + $0xe8] sm:$0xff]
        %v4346 = vld [vmem:[%s4315 + $0xf0] sm:$0xff]
        %v4347 = vld [vmem:[%s4315 + $0xf8] sm:$0xff]
        %v4348 = vld [vmem:[%s4315 + $0x100] sm:$0xff]
        %v4349 = vld [vmem:[%s4315 + $0x108] sm:$0xff]
        %v4350 = vld [vmem:[%s4315 + $0x110] sm:$0xff]
        %v4351 = vld [vmem:[%s4315 + $0x118] sm:$0xff]
        %v4352 = vld [vmem:[%s4315 + $0x120] sm:$0xff]
        %v4353 = vld [vmem:[%s4315 + $0x128] sm:$0xff]
        %v4354 = vld [vmem:[%s4315 + $0x130] sm:$0xff]
        %v4355 = vld [vmem:[%s4315 + $0x138] sm:$0xff]
        %v4356 = vld [vmem:[%s4315 + $0x140] sm:$0xff]
        %v4357 = vld [vmem:[%s4315 + $0x148] sm:$0xff]
        %v4358 = vld [vmem:[%s4315 + $0x150] sm:$0xff]
        %v4359 = vld [vmem:[%s4315 + $0x158] sm:$0xff]
        %v4360 = vld [vmem:[%s4315 + $0x160] sm:$0xff]
        %v4361 = vld [vmem:[%s4315 + $0x168] sm:$0xff]
        %v4362 = vld [vmem:[%s4315 + $0x170] sm:$0xff]
        %v4363 = vld [vmem:[%s4315 + $0x178] sm:$0xff]
        %4364 = vrot.lane.b32.xlu0 %v3327, 126
        %v4365 = vpop.permute.xlu0 %4364
        %4366 = vrot.lane.b32.xlu0 %v3328, 126
        %v4367 = vpop.permute.xlu0 %4366
        %4368 = vrot.lane.b32.xlu0 %v3329, 126
        %v4369 = vpop.permute.xlu0 %4368
        %4370 = vrot.lane.b32.xlu0 %v3330, 126
        %v4371 = vpop.permute.xlu0 %4370
        %4372 = vrot.lane.b32.xlu0 %v3331, 126
        %v4373 = vpop.permute.xlu0 %4372
        %4374 = vrot.lane.b32.xlu0 %v3332, 126
        %v4375 = vpop.permute.xlu0 %4374
        %4376 = vrot.lane.b32.xlu0 %v3333, 126
        %v4377 = vpop.permute.xlu0 %4376
        %4378 = vrot.lane.b32.xlu0 %v3334, 126
        %v4379 = vpop.permute.xlu0 %4378
        %v4389 = vsel %vm3416, %v4316, 0
        %v4392 = vsel %vm3416, %v4317, 0
        %v4395 = vsel %vm3416, %v4318, 0
        %v4398 = vsel %vm3416, %v4319, 0
        %v4401 = vsel %vm3416, %v4320, 0
        %v4404 = vsel %vm3416, %v4321, 0
        %v4407 = vsel %vm3416, %v4322, 0
        %v4410 = vsel %vm3416, %v4323, 0
        %v4413 = vsel %vm3416, %v4324, 0
        %v4416 = vsel %vm3416, %v4325, 0
        %v4419 = vsel %vm3416, %v4326, 0
        %v4422 = vsel %vm3416, %v4327, 0
        %v4425 = vsel %vm3416, %v4328, 0
        %v4428 = vsel %vm3416, %v4329, 0
        %v4431 = vsel %vm3416, %v4330, 0
        %v4434 = vsel %vm3416, %v4331, 0
        %v4437 = vsel %vm3416, %v4332, 0
        %v4440 = vsel %vm3416, %v4333, 0
        %v4443 = vsel %vm3416, %v4334, 0
        %v4446 = vsel %vm3416, %v4335, 0
        %v4449 = vsel %vm3416, %v4336, 0
        %v4452 = vsel %vm3416, %v4337, 0
        %v4455 = vsel %vm3416, %v4338, 0
        %v4458 = vsel %vm3416, %v4339, 0
        %v4461 = vsel %vm3416, %v4340, 0
        %v4464 = vsel %vm3416, %v4341, 0
        %v4467 = vsel %vm3416, %v4342, 0
        %v4470 = vsel %vm3416, %v4343, 0
        %v4473 = vsel %vm3416, %v4344, 0
        %v4476 = vsel %vm3416, %v4345, 0
        %v4479 = vsel %vm3416, %v4346, 0
        %v4482 = vsel %vm3416, %v4347, 0
        %v4485 = vsel %vm3416, %v4348, 0
        %v4488 = vsel %vm3416, %v4349, 0
        %v4491 = vsel %vm3416, %v4350, 0
        %v4494 = vsel %vm3416, %v4351, 0
        %v4497 = vsel %vm3416, %v4352, 0
        %v4500 = vsel %vm3416, %v4353, 0
        %v4503 = vsel %vm3416, %v4354, 0
        %v4506 = vsel %vm3416, %v4355, 0
        %v4509 = vsel %vm3416, %v4356, 0
        %v4512 = vsel %vm3416, %v4357, 0
        %v4515 = vsel %vm3416, %v4358, 0
        %v4518 = vsel %vm3416, %v4359, 0
        %v4521 = vsel %vm3416, %v4360, 0
        %v4524 = vsel %vm3416, %v4361, 0
        %v4527 = vsel %vm3416, %v4362, 0
        %v4530 = vsel %vm3416, %v4363, 0
        %4532 = vmatprep.subr.mxu0 0.0
        %4533 = vmatpush1.msra.mxu0 %v4365
        %4534 = vmatprep.subr.mxu0 0.0
        %4535 = vmatpush1.msra.mxu0 %v4367
        %4536 = vmatprep.subr.mxu0 0.0
        %4537 = vmatpush1.msra.mxu0 %v4369
        %4538 = vmatprep.subr.mxu0 0.0
        %4539 = vmatpush1.msra.mxu0 %v4371
        %4540 = vmatprep.subr.mxu0 0.0
        %4541 = vmatpush1.msra.mxu0 %v4373
        %4542 = vmatprep.subr.mxu0 0.0
        %4543 = vmatpush1.msra.mxu0 %v4375
        %4544 = vmatprep.subr.mxu0 0.0
        %4545 = vmatpush1.msra.mxu0 %v4377
        %4546 = vmatprep.subr.mxu0 0.0
        %4547 = vmatpush1.msra.mxu0 %v4379
        %4548 = vmatprep.subr.mxu0 0.0
        %4549 = vmatpush1.msra.mxu0 0.0
        %4550 = vmatprep.subr.mxu0 0.0
        %4551 = vmatpush1.msra.mxu0 0.0
        %4552 = vmatprep.subr.mxu0 0.0
        %4553 = vmatpush1.msra.mxu0 0.0
        %4554 = vmatprep.subr.mxu0 0.0
        %4555 = vmatpush1.msra.mxu0 0.0
        %4556 = vmatprep.subr.mxu0 0.0
        %4557 = vmatpush1.msra.mxu0 0.0
        %4558 = vmatprep.subr.mxu0 0.0
        %4559 = vmatpush1.msra.mxu0 0.0
        %4560 = vmatprep.subr.mxu0 0.0
        %4561 = vmatpush1.msra.mxu0 0.0
        %4562 = vmatprep.subr.mxu0 0.0
        %4563 = vmatpush1.msra.mxu0 0.0
        %4564 = vmatprep.subr.mxu0 0.0
        %4565 = vmatpush1.msra.mxu0 0.0
        %4566 = vmatprep.subr.mxu0 0.0
        %4567 = vmatpush1.msra.mxu0 0.0
        %4568 = vmatprep.subr.mxu0 0.0
        %4569 = vmatpush1.msra.mxu0 0.0
        %4570 = vmatprep.subr.mxu0 0.0
        %4571 = vmatpush1.msra.mxu0 0.0
        %4572 = vmatprep.subr.mxu0 0.0
        %4573 = vmatpush1.msra.mxu0 0.0
        %4574 = vmatprep.subr.mxu0 0.0
        %4575 = vmatpush1.msra.mxu0 0.0
        %4576 = vmatprep.subr.mxu0 0.0
        %4577 = vmatpush1.msra.mxu0 0.0
        %4578 = vmatprep.subr.mxu0 0.0
        %4579 = vmatpush1.msra.mxu0 0.0
        %4580 = vmatprep.subr.mxu0 0.0
        %4581 = vmatpush1.msra.mxu0 0.0
        %4582 = vmatprep.subr.mxu0 0.0
        %4583 = vmatpush1.msra.mxu0 0.0
        %4584 = vmatprep.subr.mxu0 0.0
        %4585 = vmatpush1.msra.mxu0 0.0
        %4586 = vmatprep.subr.mxu0 0.0
        %4587 = vmatpush1.msra.mxu0 0.0
        %4588 = vmatprep.subr.mxu0 0.0
        %4589 = vmatpush1.msra.mxu0 0.0
        %4590 = vmatprep.subr.mxu0 0.0
        %4591 = vmatpush1.msra.mxu0 0.0
        %4592 = vmatprep.subr.mxu0 0.0
        %4593 = vmatpush1.msra.mxu0 0.0
        %4594 = vmatprep.subr.mxu0 0.0
        %4595 = vmatpush1.msra.mxu0 0.0
        %4596 = vmatprep.mubr.f32.mxu0 0.0
        %4597 = vmatmul.mubr.f32.gmra.mrb[0].mxu0 %v4389
        %v4598 = vpop.f32.mrb[0].mxu0
        %v4599 = vadd.f32 0.0, %v4598
        %v4600 = vpop.f32.mrb[0].mxu0
        %4601 = vmatprep.mubr.f32.mxu0 0.0
        %4602 = vmatmul.mubr.f32.gmra.mrb[0].mxu0 %v4392
        %v4603 = vpop.f32.mrb[0].mxu0
        %v4604 = vadd.f32 0.0, %v4603
        %v4605 = vpop.f32.mrb[0].mxu0
        %4606 = vmatprep.mubr.f32.mxu0 0.0
        %4607 = vmatmul.mubr.f32.gmra.mrb[0].mxu0 %v4395
        %v4608 = vpop.f32.mrb[0].mxu0
        %v4609 = vadd.f32 0.0, %v4608
        %v4610 = vpop.f32.mrb[0].mxu0
        %4611 = vmatprep.mubr.f32.mxu0 0.0
        %4612 = vmatmul.mubr.f32.gmra.mrb[0].mxu0 %v4398
        %v4613 = vpop.f32.mrb[0].mxu0
        %v4614 = vadd.f32 0.0, %v4613
        %v4615 = vpop.f32.mrb[0].mxu0
        %4616 = vmatprep.mubr.f32.mxu0 0.0
        %4617 = vmatmul.mubr.f32.gmra.mrb[0].mxu0 %v4401
        %v4618 = vpop.f32.mrb[0].mxu0
        %v4619 = vadd.f32 0.0, %v4618
        %v4620 = vpop.f32.mrb[0].mxu0
        %4621 = vmatprep.mubr.f32.mxu0 0.0
        %4622 = vmatmul.mubr.f32.gmra.mrb[0].mxu0 %v4404
        %v4623 = vpop.f32.mrb[0].mxu0
        %v4624 = vadd.f32 0.0, %v4623
        %v4625 = vpop.f32.mrb[0].mxu0
        %4626 = vmatprep.mubr.f32.mxu0 0.0
        %4627 = vmatmul.mubr.f32.gmra.mrb[0].mxu0 %v4407
        %v4628 = vpop.f32.mrb[0].mxu0
        %v4629 = vadd.f32 0.0, %v4628
        %v4630 = vpop.f32.mrb[0].mxu0
        %4631 = vmatprep.mubr.f32.mxu0 0.0
        %4632 = vmatmul.mubr.f32.gmra.mrb[0].mxu0 %v4410
        %v4633 = vpop.f32.mrb[0].mxu0
        %v4634 = vadd.f32 0.0, %v4633
        %v4635 = vpop.f32.mrb[0].mxu0
        %4636 = vmatprep.mubr.f32.mxu0 0.0
        %4637 = vmatmul.mubr.f32.gmra.mrb[0].mxu0 %v4413
        %v4638 = vpop.f32.mrb[0].mxu0
        %v4639 = vadd.f32 0.0, %v4638
        %v4640 = vpop.f32.mrb[0].mxu0
        %4641 = vmatprep.mubr.f32.mxu0 0.0
        %4642 = vmatmul.mubr.f32.gmra.mrb[0].mxu0 %v4416
        %v4643 = vpop.f32.mrb[0].mxu0
        %v4644 = vadd.f32 0.0, %v4643
        %v4645 = vpop.f32.mrb[0].mxu0
        %4646 = vmatprep.mubr.f32.mxu0 0.0
        %4647 = vmatmul.mubr.f32.gmra.mrb[0].mxu0 %v4419
        %v4648 = vpop.f32.mrb[0].mxu0
        %v4649 = vadd.f32 0.0, %v4648
        %v4650 = vpop.f32.mrb[0].mxu0
        %4651 = vmatprep.mubr.f32.mxu0 0.0
        %4652 = vmatmul.mubr.f32.gmra.mrb[0].mxu0 %v4422
        %v4653 = vpop.f32.mrb[0].mxu0
        %v4654 = vadd.f32 0.0, %v4653
        %v4655 = vpop.f32.mrb[0].mxu0
        %4656 = vmatprep.mubr.f32.mxu0 0.0
        %4657 = vmatmul.mubr.f32.gmra.mrb[0].mxu0 %v4425
        %v4658 = vpop.f32.mrb[0].mxu0
        %v4659 = vadd.f32 0.0, %v4658
        %v4660 = vpop.f32.mrb[0].mxu0
        %4661 = vmatprep.mubr.f32.mxu0 0.0
        %4662 = vmatmul.mubr.f32.gmra.mrb[0].mxu0 %v4428
        %v4663 = vpop.f32.mrb[0].mxu0
        %v4664 = vadd.f32 0.0, %v4663
        %v4665 = vpop.f32.mrb[0].mxu0
        %4666 = vmatprep.mubr.f32.mxu0 0.0
        %4667 = vmatmul.mubr.f32.gmra.mrb[0].mxu0 %v4431
        %v4668 = vpop.f32.mrb[0].mxu0
        %v4669 = vadd.f32 0.0, %v4668
        %v4670 = vpop.f32.mrb[0].mxu0
        %4671 = vmatprep.mubr.f32.mxu0 0.0
        %4672 = vmatmul.mubr.f32.gmra.mrb[0].mxu0 %v4434
        %v4673 = vpop.f32.mrb[0].mxu0
        %v4674 = vadd.f32 0.0, %v4673
        %v4675 = vpop.f32.mrb[0].mxu0
        %4676 = vmatprep.mubr.f32.mxu0 0.0
        %4677 = vmatmul.mubr.f32.gmra.mrb[0].mxu0 %v4437
        %v4678 = vpop.f32.mrb[0].mxu0
        %v4679 = vadd.f32 0.0, %v4678
        %v4680 = vpop.f32.mrb[0].mxu0
        %4681 = vmatprep.mubr.f32.mxu0 0.0
        %4682 = vmatmul.mubr.f32.gmra.mrb[0].mxu0 %v4440
        %v4683 = vpop.f32.mrb[0].mxu0
        %v4684 = vadd.f32 0.0, %v4683
        %v4685 = vpop.f32.mrb[0].mxu0
        %4686 = vmatprep.mubr.f32.mxu0 0.0
        %4687 = vmatmul.mubr.f32.gmra.mrb[0].mxu0 %v4443
        %v4688 = vpop.f32.mrb[0].mxu0
        %v4689 = vadd.f32 0.0, %v4688
        %v4690 = vpop.f32.mrb[0].mxu0
        %4691 = vmatprep.mubr.f32.mxu0 0.0
        %4692 = vmatmul.mubr.f32.gmra.mrb[0].mxu0 %v4446
        %v4693 = vpop.f32.mrb[0].mxu0
        %v4694 = vadd.f32 0.0, %v4693
        %v4695 = vpop.f32.mrb[0].mxu0
        %4696 = vmatprep.mubr.f32.mxu0 0.0
        %4697 = vmatmul.mubr.f32.gmra.mrb[0].mxu0 %v4449
        %v4698 = vpop.f32.mrb[0].mxu0
        %v4699 = vadd.f32 0.0, %v4698
        %v4700 = vpop.f32.mrb[0].mxu0
        %4701 = vmatprep.mubr.f32.mxu0 0.0
        %4702 = vmatmul.mubr.f32.gmra.mrb[0].mxu0 %v4452
        %v4703 = vpop.f32.mrb[0].mxu0
        %v4704 = vadd.f32 0.0, %v4703
        %v4705 = vpop.f32.mrb[0].mxu0
        %4706 = vmatprep.mubr.f32.mxu0 0.0
        %4707 = vmatmul.mubr.f32.gmra.mrb[0].mxu0 %v4455
        %v4708 = vpop.f32.mrb[0].mxu0
        %v4709 = vadd.f32 0.0, %v4708
        %v4710 = vpop.f32.mrb[0].mxu0
        %4711 = vmatprep.mubr.f32.mxu0 0.0
        %4712 = vmatmul.mubr.f32.gmra.mrb[0].mxu0 %v4458
        %v4713 = vpop.f32.mrb[0].mxu0
        %v4714 = vadd.f32 0.0, %v4713
        %v4715 = vpop.f32.mrb[0].mxu0
        %4716 = vmatprep.mubr.f32.mxu0 0.0
        %4717 = vmatmul.mubr.f32.gmra.mrb[0].mxu0 %v4461
        %v4718 = vpop.f32.mrb[0].mxu0
        %v4719 = vadd.f32 0.0, %v4718
        %v4720 = vpop.f32.mrb[0].mxu0
        %4721 = vmatprep.mubr.f32.mxu0 0.0
        %4722 = vmatmul.mubr.f32.gmra.mrb[0].mxu0 %v4464
        %v4723 = vpop.f32.mrb[0].mxu0
        %v4724 = vadd.f32 0.0, %v4723
        %v4725 = vpop.f32.mrb[0].mxu0
        %4726 = vmatprep.mubr.f32.mxu0 0.0
        %4727 = vmatmul.mubr.f32.gmra.mrb[0].mxu0 %v4467
        %v4728 = vpop.f32.mrb[0].mxu0
        %v4729 = vadd.f32 0.0, %v4728
        %v4730 = vpop.f32.mrb[0].mxu0
        %4731 = vmatprep.mubr.f32.mxu0 0.0
        %4732 = vmatmul.mubr.f32.gmra.mrb[0].mxu0 %v4470
        %v4733 = vpop.f32.mrb[0].mxu0
        %v4734 = vadd.f32 0.0, %v4733
        %v4735 = vpop.f32.mrb[0].mxu0
        %4736 = vmatprep.mubr.f32.mxu0 0.0
        %4737 = vmatmul.mubr.f32.gmra.mrb[0].mxu0 %v4473
        %v4738 = vpop.f32.mrb[0].mxu0
        %v4739 = vadd.f32 0.0, %v4738
        %v4740 = vpop.f32.mrb[0].mxu0
        %4741 = vmatprep.mubr.f32.mxu0 0.0
        %4742 = vmatmul.mubr.f32.gmra.mrb[0].mxu0 %v4476
        %v4743 = vpop.f32.mrb[0].mxu0
        %v4744 = vadd.f32 0.0, %v4743
        %v4745 = vpop.f32.mrb[0].mxu0
        %4746 = vmatprep.mubr.f32.mxu0 0.0
        %4747 = vmatmul.mubr.f32.gmra.mrb[0].mxu0 %v4479
        %v4748 = vpop.f32.mrb[0].mxu0
        %v4749 = vadd.f32 0.0, %v4748
        %v4750 = vpop.f32.mrb[0].mxu0
        %4751 = vmatprep.mubr.f32.mxu0 0.0
        %4752 = vmatmul.mubr.f32.gmra.mrb[0].mxu0 %v4482
        %v4753 = vpop.f32.mrb[0].mxu0
        %v4754 = vadd.f32 0.0, %v4753
        %v4755 = vpop.f32.mrb[0].mxu0
        %4756 = vmatprep.mubr.f32.mxu0 0.0
        %4757 = vmatmul.mubr.f32.gmra.mrb[0].mxu0 %v4485
        %v4758 = vpop.f32.mrb[0].mxu0
        %v4759 = vadd.f32 0.0, %v4758
        %v4760 = vpop.f32.mrb[0].mxu0
        %4761 = vmatprep.mubr.f32.mxu0 0.0
        %4762 = vmatmul.mubr.f32.gmra.mrb[0].mxu0 %v4488
        %v4763 = vpop.f32.mrb[0].mxu0
        %v4764 = vadd.f32 0.0, %v4763
        %v4765 = vpop.f32.mrb[0].mxu0
        %4766 = vmatprep.mubr.f32.mxu0 0.0
        %4767 = vmatmul.mubr.f32.gmra.mrb[0].mxu0 %v4491
        %v4768 = vpop.f32.mrb[0].mxu0
        %v4769 = vadd.f32 0.0, %v4768
        %v4770 = vpop.f32.mrb[0].mxu0
        %4771 = vmatprep.mubr.f32.mxu0 0.0
        %4772 = vmatmul.mubr.f32.gmra.mrb[0].mxu0 %v4494
        %v4773 = vpop.f32.mrb[0].mxu0
        %v4774 = vadd.f32 0.0, %v4773
        %v4775 = vpop.f32.mrb[0].mxu0
        %4776 = vmatprep.mubr.f32.mxu0 0.0
        %4777 = vmatmul.mubr.f32.gmra.mrb[0].mxu0 %v4497
        %v4778 = vpop.f32.mrb[0].mxu0
        %v4779 = vadd.f32 0.0, %v4778
        %v4780 = vpop.f32.mrb[0].mxu0
        %4781 = vmatprep.mubr.f32.mxu0 0.0
        %4782 = vmatmul.mubr.f32.gmra.mrb[0].mxu0 %v4500
        %v4783 = vpop.f32.mrb[0].mxu0
        %v4784 = vadd.f32 0.0, %v4783
        %v4785 = vpop.f32.mrb[0].mxu0
        %4786 = vmatprep.mubr.f32.mxu0 0.0
        %4787 = vmatmul.mubr.f32.gmra.mrb[0].mxu0 %v4503
        %v4788 = vpop.f32.mrb[0].mxu0
        %v4789 = vadd.f32 0.0, %v4788
        %v4790 = vpop.f32.mrb[0].mxu0
        %4791 = vmatprep.mubr.f32.mxu0 0.0
        %4792 = vmatmul.mubr.f32.gmra.mrb[0].mxu0 %v4506
        %v4793 = vpop.f32.mrb[0].mxu0
        %v4794 = vadd.f32 0.0, %v4793
        %v4795 = vpop.f32.mrb[0].mxu0
        %4796 = vmatprep.mubr.f32.mxu0 0.0
        %4797 = vmatmul.mubr.f32.gmra.mrb[0].mxu0 %v4509
        %v4798 = vpop.f32.mrb[0].mxu0
        %v4799 = vadd.f32 0.0, %v4798
        %v4800 = vpop.f32.mrb[0].mxu0
        %4801 = vmatprep.mubr.f32.mxu0 0.0
        %4802 = vmatmul.mubr.f32.gmra.mrb[0].mxu0 %v4512
        %v4803 = vpop.f32.mrb[0].mxu0
        %v4804 = vadd.f32 0.0, %v4803
        %v4805 = vpop.f32.mrb[0].mxu0
        %4806 = vmatprep.mubr.f32.mxu0 0.0
        %4807 = vmatmul.mubr.f32.gmra.mrb[0].mxu0 %v4515
        %v4808 = vpop.f32.mrb[0].mxu0
        %v4809 = vadd.f32 0.0, %v4808
        %v4810 = vpop.f32.mrb[0].mxu0
        %4811 = vmatprep.mubr.f32.mxu0 0.0
        %4812 = vmatmul.mubr.f32.gmra.mrb[0].mxu0 %v4518
        %v4813 = vpop.f32.mrb[0].mxu0
        %v4814 = vadd.f32 0.0, %v4813
        %v4815 = vpop.f32.mrb[0].mxu0
        %4816 = vmatprep.mubr.f32.mxu0 0.0
        %4817 = vmatmul.mubr.f32.gmra.mrb[0].mxu0 %v4521
        %v4818 = vpop.f32.mrb[0].mxu0
        %v4819 = vadd.f32 0.0, %v4818
        %v4820 = vpop.f32.mrb[0].mxu0
        %4821 = vmatprep.mubr.f32.mxu0 0.0
        %4822 = vmatmul.mubr.f32.gmra.mrb[0].mxu0 %v4524
        %v4823 = vpop.f32.mrb[0].mxu0
        %v4824 = vadd.f32 0.0, %v4823
        %v4825 = vpop.f32.mrb[0].mxu0
        %4826 = vmatprep.mubr.f32.mxu0 0.0
        %4827 = vmatmul.mubr.f32.gmra.mrb[0].mxu0 %v4527
        %v4828 = vpop.f32.mrb[0].mxu0
        %v4829 = vadd.f32 0.0, %v4828
        %v4830 = vpop.f32.mrb[0].mxu0
        %4831 = vmatprep.mubr.f32.mxu0 0.0
        %4832 = vmatmul.mubr.f32.gmra.mrb[0].mxu0 %v4530
        %v4833 = vpop.f32.mrb[0].mxu0
        %v4834 = vadd.f32 0.0, %v4833
        %v4835 = vpop.f32.mrb[0].mxu0
        %4836 = vdwg.mxu0
        %v4837 = vadd.f32 %v4077, %v4599
        %v4838 = vadd.f32 %v4082, %v4604
        %v4839 = vadd.f32 %v4087, %v4609
        %v4840 = vadd.f32 %v4092, %v4614
        %v4841 = vadd.f32 %v4097, %v4619
        %v4842 = vadd.f32 %v4102, %v4624
        %v4843 = vadd.f32 %v4107, %v4629
        %v4844 = vadd.f32 %v4112, %v4634
        %v4845 = vadd.f32 %v4117, %v4639
        %v4846 = vadd.f32 %v4122, %v4644
        %v4847 = vadd.f32 %v4127, %v4649
        %v4848 = vadd.f32 %v4132, %v4654
        %v4849 = vadd.f32 %v4137, %v4659
        %v4850 = vadd.f32 %v4142, %v4664
        %v4851 = vadd.f32 %v4147, %v4669
        %v4852 = vadd.f32 %v4152, %v4674
        %v4853 = vadd.f32 %v4157, %v4679
        %v4854 = vadd.f32 %v4162, %v4684
        %v4855 = vadd.f32 %v4167, %v4689
        %v4856 = vadd.f32 %v4172, %v4694
        %v4857 = vadd.f32 %v4177, %v4699
        %v4858 = vadd.f32 %v4182, %v4704
        %v4859 = vadd.f32 %v4187, %v4709
        %v4860 = vadd.f32 %v4192, %v4714
        %v4861 = vadd.f32 %v4197, %v4719
        %v4862 = vadd.f32 %v4202, %v4724
        %v4863 = vadd.f32 %v4207, %v4729
        %v4864 = vadd.f32 %v4212, %v4734
        %v4865 = vadd.f32 %v4217, %v4739
        %v4866 = vadd.f32 %v4222, %v4744
        %v4867 = vadd.f32 %v4227, %v4749
        %v4868 = vadd.f32 %v4232, %v4754
        %v4869 = vadd.f32 %v4237, %v4759
        %v4870 = vadd.f32 %v4242, %v4764
        %v4871 = vadd.f32 %v4247, %v4769
        %v4872 = vadd.f32 %v4252, %v4774
        %v4873 = vadd.f32 %v4257, %v4779
        %v4874 = vadd.f32 %v4262, %v4784
        %v4875 = vadd.f32 %v4267, %v4789
        %v4876 = vadd.f32 %v4272, %v4794
        %v4877 = vadd.f32 %v4277, %v4799
        %v4878 = vadd.f32 %v4282, %v4804
        %v4879 = vadd.f32 %v4287, %v4809
        %v4880 = vadd.f32 %v4292, %v4814
        %v4881 = vadd.f32 %v4297, %v4819
        %v4882 = vadd.f32 %v4302, %v4824
        %v4883 = vadd.f32 %v4307, %v4829
        %v4884 = vadd.f32 %v4312, %v4834
        %4885 = vrot.lane.b32.xlu0 %v4837, 76
        %v4886 = vpop.permute.xlu0 %4885
        %v4887 = vsel %vm3286, %v4886, %v4837
        %4888 = vrot.lane.b32.xlu0 %v4838, 76
        %v4889 = vpop.permute.xlu0 %4888
        %v4890 = vsel %vm3286, %v4889, %v4838
        %4891 = vrot.lane.b32.xlu0 %v4839, 76
        %v4892 = vpop.permute.xlu0 %4891
        %v4893 = vsel %vm3286, %v4892, %v4839
        %4894 = vrot.lane.b32.xlu0 %v4840, 76
        %v4895 = vpop.permute.xlu0 %4894
        %v4896 = vsel %vm3286, %v4895, %v4840
        %4897 = vrot.lane.b32.xlu0 %v4841, 76
        %v4898 = vpop.permute.xlu0 %4897
        %v4899 = vsel %vm3286, %v4898, %v4841
        %4900 = vrot.lane.b32.xlu0 %v4842, 76
        %v4901 = vpop.permute.xlu0 %4900
        %v4902 = vsel %vm3286, %v4901, %v4842
        %4903 = vrot.lane.b32.xlu0 %v4843, 76
        %v4904 = vpop.permute.xlu0 %4903
        %v4905 = vsel %vm3286, %v4904, %v4843
        %4906 = vrot.lane.b32.xlu0 %v4844, 76
        %v4907 = vpop.permute.xlu0 %4906
        %v4908 = vsel %vm3286, %v4907, %v4844
        %4909 = vrot.lane.b32.xlu0 %v4845, 76
        %v4910 = vpop.permute.xlu0 %4909
        %v4911 = vsel %vm3286, %v4910, %v4845
        %4912 = vrot.lane.b32.xlu0 %v4846, 76
        %v4913 = vpop.permute.xlu0 %4912
        %v4914 = vsel %vm3286, %v4913, %v4846
        %4915 = vrot.lane.b32.xlu0 %v4847, 76
        %v4916 = vpop.permute.xlu0 %4915
        %v4917 = vsel %vm3286, %v4916, %v4847
        %4918 = vrot.lane.b32.xlu0 %v4848, 76
        %v4919 = vpop.permute.xlu0 %4918
        %v4920 = vsel %vm3286, %v4919, %v4848
        %4921 = vrot.lane.b32.xlu0 %v4849, 76
        %v4922 = vpop.permute.xlu0 %4921
        %v4923 = vsel %vm3286, %v4922, %v4849
        %4924 = vrot.lane.b32.xlu0 %v4850, 76
        %v4925 = vpop.permute.xlu0 %4924
        %v4926 = vsel %vm3286, %v4925, %v4850
        %4927 = vrot.lane.b32.xlu0 %v4851, 76
        %v4928 = vpop.permute.xlu0 %4927
        %v4929 = vsel %vm3286, %v4928, %v4851
        %4930 = vrot.lane.b32.xlu0 %v4852, 76
        %v4931 = vpop.permute.xlu0 %4930
        %v4932 = vsel %vm3286, %v4931, %v4852
        %4933 = vrot.lane.b32.xlu0 %v4853, 76
        %v4934 = vpop.permute.xlu0 %4933
        %v4935 = vsel %vm3286, %v4934, %v4853
        %4936 = vrot.lane.b32.xlu0 %v4854, 76
        %v4937 = vpop.permute.xlu0 %4936
        %v4938 = vsel %vm3286, %v4937, %v4854
        %4939 = vrot.lane.b32.xlu0 %v4855, 76
        %v4940 = vpop.permute.xlu0 %4939
        %v4941 = vsel %vm3286, %v4940, %v4855
        %4942 = vrot.lane.b32.xlu0 %v4856, 76
        %v4943 = vpop.permute.xlu0 %4942
        %v4944 = vsel %vm3286, %v4943, %v4856
        %4945 = vrot.lane.b32.xlu0 %v4857, 76
        %v4946 = vpop.permute.xlu0 %4945
        %v4947 = vsel %vm3286, %v4946, %v4857
        %4948 = vrot.lane.b32.xlu0 %v4858, 76
        %v4949 = vpop.permute.xlu0 %4948
        %v4950 = vsel %vm3286, %v4949, %v4858
        %4951 = vrot.lane.b32.xlu0 %v4859, 76
        %v4952 = vpop.permute.xlu0 %4951
        %v4953 = vsel %vm3286, %v4952, %v4859
        %4954 = vrot.lane.b32.xlu0 %v4860, 76
        %v4955 = vpop.permute.xlu0 %4954
        %v4956 = vsel %vm3286, %v4955, %v4860
        %4957 = vrot.lane.b32.xlu0 %v4861, 76
        %v4958 = vpop.permute.xlu0 %4957
        %v4959 = vsel %vm3286, %v4958, %v4861
        %4960 = vrot.lane.b32.xlu0 %v4862, 76
        %v4961 = vpop.permute.xlu0 %4960
        %v4962 = vsel %vm3286, %v4961, %v4862
        %4963 = vrot.lane.b32.xlu0 %v4863, 76
        %v4964 = vpop.permute.xlu0 %4963
        %v4965 = vsel %vm3286, %v4964, %v4863
        %4966 = vrot.lane.b32.xlu0 %v4864, 76
        %v4967 = vpop.permute.xlu0 %4966
        %v4968 = vsel %vm3286, %v4967, %v4864
        %4969 = vrot.lane.b32.xlu0 %v4865, 76
        %v4970 = vpop.permute.xlu0 %4969
        %v4971 = vsel %vm3286, %v4970, %v4865
        %4972 = vrot.lane.b32.xlu0 %v4866, 76
        %v4973 = vpop.permute.xlu0 %4972
        %v4974 = vsel %vm3286, %v4973, %v4866
        %4975 = vrot.lane.b32.xlu0 %v4867, 76
        %v4976 = vpop.permute.xlu0 %4975
        %v4977 = vsel %vm3286, %v4976, %v4867
        %4978 = vrot.lane.b32.xlu0 %v4868, 76
        %v4979 = vpop.permute.xlu0 %4978
        %v4980 = vsel %vm3286, %v4979, %v4868
        %4981 = vrot.lane.b32.xlu0 %v4869, 76
        %v4982 = vpop.permute.xlu0 %4981
        %v4983 = vsel %vm3286, %v4982, %v4869
        %4984 = vrot.lane.b32.xlu0 %v4870, 76
        %v4985 = vpop.permute.xlu0 %4984
        %v4986 = vsel %vm3286, %v4985, %v4870
        %4987 = vrot.lane.b32.xlu0 %v4871, 76
        %v4988 = vpop.permute.xlu0 %4987
        %v4989 = vsel %vm3286, %v4988, %v4871
        %4990 = vrot.lane.b32.xlu0 %v4872, 76
        %v4991 = vpop.permute.xlu0 %4990
        %v4992 = vsel %vm3286, %v4991, %v4872
        %4993 = vrot.lane.b32.xlu0 %v4873, 76
        %v4994 = vpop.permute.xlu0 %4993
        %v4995 = vsel %vm3286, %v4994, %v4873
        %4996 = vrot.lane.b32.xlu0 %v4874, 76
        %v4997 = vpop.permute.xlu0 %4996
        %v4998 = vsel %vm3286, %v4997, %v4874
        %4999 = vrot.lane.b32.xlu0 %v4875, 76
        %v5000 = vpop.permute.xlu0 %4999
        %v5001 = vsel %vm3286, %v5000, %v4875
        %5002 = vrot.lane.b32.xlu0 %v4876, 76
        %v5003 = vpop.permute.xlu0 %5002
        %v5004 = vsel %vm3286, %v5003, %v4876
        %5005 = vrot.lane.b32.xlu0 %v4877, 76
        %v5006 = vpop.permute.xlu0 %5005
        %v5007 = vsel %vm3286, %v5006, %v4877
        %5008 = vrot.lane.b32.xlu0 %v4878, 76
        %v5009 = vpop.permute.xlu0 %5008
        %v5010 = vsel %vm3286, %v5009, %v4878
        %5011 = vrot.lane.b32.xlu0 %v4879, 76
        %v5012 = vpop.permute.xlu0 %5011
        %v5013 = vsel %vm3286, %v5012, %v4879
        %5014 = vrot.lane.b32.xlu0 %v4880, 76
        %v5015 = vpop.permute.xlu0 %5014
        %v5016 = vsel %vm3286, %v5015, %v4880
        %5017 = vrot.lane.b32.xlu0 %v4881, 76
        %v5018 = vpop.permute.xlu0 %5017
        %v5019 = vsel %vm3286, %v5018, %v4881
        %5020 = vrot.lane.b32.xlu0 %v4882, 76
        %v5021 = vpop.permute.xlu0 %5020
        %v5022 = vsel %vm3286, %v5021, %v4882
        %5023 = vrot.lane.b32.xlu0 %v4883, 76
        %v5024 = vpop.permute.xlu0 %5023
        %v5025 = vsel %vm3286, %v5024, %v4883
        %5026 = vrot.lane.b32.xlu0 %v4884, 76
        %v5027 = vpop.permute.xlu0 %5026
        %v5028 = vsel %vm3286, %v5027, %v4884
        %5029 = vrot.lane.b32.xlu0 %v4887, 76
        %v5030 = vpop.permute.xlu0 %5029
        %5031 = vrot.lane.b32.xlu0 %v4890, 76
        %v5032 = vpop.permute.xlu0 %5031
        %5033 = vrot.lane.b32.xlu0 %v4893, 76
        %v5034 = vpop.permute.xlu0 %5033
        %5035 = vrot.lane.b32.xlu0 %v4896, 76
        %v5036 = vpop.permute.xlu0 %5035
        %5037 = vrot.lane.b32.xlu0 %v4899, 76
        %v5038 = vpop.permute.xlu0 %5037
        %5039 = vrot.lane.b32.xlu0 %v4902, 76
        %v5040 = vpop.permute.xlu0 %5039
        %5041 = vrot.lane.b32.xlu0 %v4905, 76
        %v5042 = vpop.permute.xlu0 %5041
        %5043 = vrot.lane.b32.xlu0 %v4908, 76
        %v5044 = vpop.permute.xlu0 %5043
        %5045 = vrot.lane.b32.xlu0 %v4911, 76
        %v5046 = vpop.permute.xlu0 %5045
        %5047 = vrot.lane.b32.xlu0 %v4914, 76
        %v5048 = vpop.permute.xlu0 %5047
        %5049 = vrot.lane.b32.xlu0 %v4917, 76
        %v5050 = vpop.permute.xlu0 %5049
        %5051 = vrot.lane.b32.xlu0 %v4920, 76
        %v5052 = vpop.permute.xlu0 %5051
        %5053 = vrot.lane.b32.xlu0 %v4923, 76
        %v5054 = vpop.permute.xlu0 %5053
        %5055 = vrot.lane.b32.xlu0 %v4926, 76
        %v5056 = vpop.permute.xlu0 %5055
        %5057 = vrot.lane.b32.xlu0 %v4929, 76
        %v5058 = vpop.permute.xlu0 %5057
        %5059 = vrot.lane.b32.xlu0 %v4932, 76
        %v5060 = vpop.permute.xlu0 %5059
        %5061 = vrot.lane.b32.xlu0 %v4935, 76
        %v5062 = vpop.permute.xlu0 %5061
        %5063 = vrot.lane.b32.xlu0 %v4938, 76
        %v5064 = vpop.permute.xlu0 %5063
        %5065 = vrot.lane.b32.xlu0 %v4941, 76
        %v5066 = vpop.permute.xlu0 %5065
        %5067 = vrot.lane.b32.xlu0 %v4944, 76
        %v5068 = vpop.permute.xlu0 %5067
        %5069 = vrot.lane.b32.xlu0 %v4947, 76
        %v5070 = vpop.permute.xlu0 %5069
        %5071 = vrot.lane.b32.xlu0 %v4950, 76
        %v5072 = vpop.permute.xlu0 %5071
        %5073 = vrot.lane.b32.xlu0 %v4953, 76
        %v5074 = vpop.permute.xlu0 %5073
        %5075 = vrot.lane.b32.xlu0 %v4956, 76
        %v5076 = vpop.permute.xlu0 %5075
        %5077 = vrot.lane.b32.xlu0 %v4959, 76
        %v5078 = vpop.permute.xlu0 %5077
        %5079 = vrot.lane.b32.xlu0 %v4962, 76
        %v5080 = vpop.permute.xlu0 %5079
        %5081 = vrot.lane.b32.xlu0 %v4965, 76
        %v5082 = vpop.permute.xlu0 %5081
        %5083 = vrot.lane.b32.xlu0 %v4968, 76
        %v5084 = vpop.permute.xlu0 %5083
        %5085 = vrot.lane.b32.xlu0 %v4971, 76
        %v5086 = vpop.permute.xlu0 %5085
        %5087 = vrot.lane.b32.xlu0 %v4974, 76
        %v5088 = vpop.permute.xlu0 %5087
        %5089 = vrot.lane.b32.xlu0 %v4977, 76
        %v5090 = vpop.permute.xlu0 %5089
        %5091 = vrot.lane.b32.xlu0 %v4980, 76
        %v5092 = vpop.permute.xlu0 %5091
        %5093 = vrot.lane.b32.xlu0 %v4983, 76
        %v5094 = vpop.permute.xlu0 %5093
        %5095 = vrot.lane.b32.xlu0 %v4986, 76
        %v5096 = vpop.permute.xlu0 %5095
        %5097 = vrot.lane.b32.xlu0 %v4989, 76
        %v5098 = vpop.permute.xlu0 %5097
        %5099 = vrot.lane.b32.xlu0 %v4992, 76
        %v5100 = vpop.permute.xlu0 %5099
        %5101 = vrot.lane.b32.xlu0 %v4995, 76
        %v5102 = vpop.permute.xlu0 %5101
        %5103 = vrot.lane.b32.xlu0 %v4998, 76
        %v5104 = vpop.permute.xlu0 %5103
        %5105 = vrot.lane.b32.xlu0 %v5001, 76
        %v5106 = vpop.permute.xlu0 %5105
        %5107 = vrot.lane.b32.xlu0 %v5004, 76
        %v5108 = vpop.permute.xlu0 %5107
        %5109 = vrot.lane.b32.xlu0 %v5007, 76
        %v5110 = vpop.permute.xlu0 %5109
        %5111 = vrot.lane.b32.xlu0 %v5010, 76
        %v5112 = vpop.permute.xlu0 %5111
        %5113 = vrot.lane.b32.xlu0 %v5013, 76
        %v5114 = vpop.permute.xlu0 %5113
        %5115 = vrot.lane.b32.xlu0 %v5016, 76
        %v5116 = vpop.permute.xlu0 %5115
        %5117 = vrot.lane.b32.xlu0 %v5019, 76
        %v5118 = vpop.permute.xlu0 %5117
        %5119 = vrot.lane.b32.xlu0 %v5022, 76
        %v5120 = vpop.permute.xlu0 %5119
        %5121 = vrot.lane.b32.xlu0 %v5025, 76
        %v5122 = vpop.permute.xlu0 %5121
        %5123 = vrot.lane.b32.xlu0 %v5028, 76
        %v5124 = vpop.permute.xlu0 %5123
        %v5125 = vsel %vm3286, %v5030, %v4837
        %v5126 = vsel %vm3286, %v5032, %v4838
        %v5127 = vsel %vm3286, %v5034, %v4839
        %v5128 = vsel %vm3286, %v5036, %v4840
        %v5129 = vsel %vm3286, %v5038, %v4841
        %v5130 = vsel %vm3286, %v5040, %v4842
        %v5131 = vsel %vm3286, %v5042, %v4843
        %v5132 = vsel %vm3286, %v5044, %v4844
        %v5133 = vsel %vm3286, %v5046, %v4845
        %v5134 = vsel %vm3286, %v5048, %v4846
        %v5135 = vsel %vm3286, %v5050, %v4847
        %v5136 = vsel %vm3286, %v5052, %v4848
        %v5137 = vsel %vm3286, %v5054, %v4849
        %v5138 = vsel %vm3286, %v5056, %v4850
        %v5139 = vsel %vm3286, %v5058, %v4851
        %v5140 = vsel %vm3286, %v5060, %v4852
        %v5141 = vsel %vm3286, %v5062, %v4853
        %v5142 = vsel %vm3286, %v5064, %v4854
        %v5143 = vsel %vm3286, %v5066, %v4855
        %v5144 = vsel %vm3286, %v5068, %v4856
        %v5145 = vsel %vm3286, %v5070, %v4857
        %v5146 = vsel %vm3286, %v5072, %v4858
        %v5147 = vsel %vm3286, %v5074, %v4859
        %v5148 = vsel %vm3286, %v5076, %v4860
        %v5149 = vsel %vm3286, %v5078, %v4861
        %v5150 = vsel %vm3286, %v5080, %v4862
        %v5151 = vsel %vm3286, %v5082, %v4863
        %v5152 = vsel %vm3286, %v5084, %v4864
        %v5153 = vsel %vm3286, %v5086, %v4865
        %v5154 = vsel %vm3286, %v5088, %v4866
        %v5155 = vsel %vm3286, %v5090, %v4867
        %v5156 = vsel %vm3286, %v5092, %v4868
        %v5157 = vsel %vm3286, %v5094, %v4869
        %v5158 = vsel %vm3286, %v5096, %v4870
        %v5159 = vsel %vm3286, %v5098, %v4871
        %v5160 = vsel %vm3286, %v5100, %v4872
        %v5161 = vsel %vm3286, %v5102, %v4873
        %v5162 = vsel %vm3286, %v5104, %v4874
        %v5163 = vsel %vm3286, %v5106, %v4875
        %v5164 = vsel %vm3286, %v5108, %v4876
        %v5165 = vsel %vm3286, %v5110, %v4877
        %v5166 = vsel %vm3286, %v5112, %v4878
        %v5167 = vsel %vm3286, %v5114, %v4879
        %v5168 = vsel %vm3286, %v5116, %v4880
        %v5169 = vsel %vm3286, %v5118, %v4881
        %v5170 = vsel %vm3286, %v5120, %v4882
        %v5171 = vsel %vm3286, %v5122, %v4883
        %v5172 = vsel %vm3286, %v5124, %v4884
        %5221 = vrot.lane.b32.xlu0 %v5125, 127
        %v5222 = vpop.permute.xlu0 %5221
        %5223 = vrot.lane.b32.xlu0 %v5126, 127
        %v5224 = vpop.permute.xlu0 %5223
        %5225 = vrot.lane.b32.xlu0 %v5127, 127
        %v5226 = vpop.permute.xlu0 %5225
        %5227 = vrot.lane.b32.xlu0 %v5128, 127
        %v5228 = vpop.permute.xlu0 %5227
        %5229 = vrot.lane.b32.xlu0 %v5129, 127
        %v5230 = vpop.permute.xlu0 %5229
        %5231 = vrot.lane.b32.xlu0 %v5130, 127
        %v5232 = vpop.permute.xlu0 %5231
        %5233 = vrot.lane.b32.xlu0 %v5131, 127
        %v5234 = vpop.permute.xlu0 %5233
        %5235 = vrot.lane.b32.xlu0 %v5132, 127
        %v5236 = vpop.permute.xlu0 %5235
        %5237 = vrot.lane.b32.xlu0 %v5133, 127
        %v5238 = vpop.permute.xlu0 %5237
        %5239 = vrot.lane.b32.xlu0 %v5134, 127
        %v5240 = vpop.permute.xlu0 %5239
        %5241 = vrot.lane.b32.xlu0 %v5135, 127
        %v5242 = vpop.permute.xlu0 %5241
        %5243 = vrot.lane.b32.xlu0 %v5136, 127
        %v5244 = vpop.permute.xlu0 %5243
        %5245 = vrot.lane.b32.xlu0 %v5137, 127
        %v5246 = vpop.permute.xlu0 %5245
        %5247 = vrot.lane.b32.xlu0 %v5138, 127
        %v5248 = vpop.permute.xlu0 %5247
        %5249 = vrot.lane.b32.xlu0 %v5139, 127
        %v5250 = vpop.permute.xlu0 %5249
        %5251 = vrot.lane.b32.xlu0 %v5140, 127
        %v5252 = vpop.permute.xlu0 %5251
        %5253 = vrot.lane.b32.xlu0 %v5141, 127
        %v5254 = vpop.permute.xlu0 %5253
        %5255 = vrot.lane.b32.xlu0 %v5142, 127
        %v5256 = vpop.permute.xlu0 %5255
        %5257 = vrot.lane.b32.xlu0 %v5143, 127
        %v5258 = vpop.permute.xlu0 %5257
        %5259 = vrot.lane.b32.xlu0 %v5144, 127
        %v5260 = vpop.permute.xlu0 %5259
        %5261 = vrot.lane.b32.xlu0 %v5145, 127
        %v5262 = vpop.permute.xlu0 %5261
        %5263 = vrot.lane.b32.xlu0 %v5146, 127
        %v5264 = vpop.permute.xlu0 %5263
        %5265 = vrot.lane.b32.xlu0 %v5147, 127
        %v5266 = vpop.permute.xlu0 %5265
        %5267 = vrot.lane.b32.xlu0 %v5148, 127
        %v5268 = vpop.permute.xlu0 %5267
        %5269 = vrot.lane.b32.xlu0 %v5149, 127
        %v5270 = vpop.permute.xlu0 %5269
        %5271 = vrot.lane.b32.xlu0 %v5150, 127
        %v5272 = vpop.permute.xlu0 %5271
        %5273 = vrot.lane.b32.xlu0 %v5151, 127
        %v5274 = vpop.permute.xlu0 %5273
        %5275 = vrot.lane.b32.xlu0 %v5152, 127
        %v5276 = vpop.permute.xlu0 %5275
        %5277 = vrot.lane.b32.xlu0 %v5153, 127
        %v5278 = vpop.permute.xlu0 %5277
        %5279 = vrot.lane.b32.xlu0 %v5154, 127
        %v5280 = vpop.permute.xlu0 %5279
        %5281 = vrot.lane.b32.xlu0 %v5155, 127
        %v5282 = vpop.permute.xlu0 %5281
        %5283 = vrot.lane.b32.xlu0 %v5156, 127
        %v5284 = vpop.permute.xlu0 %5283
        %5285 = vrot.lane.b32.xlu0 %v5157, 127
        %v5286 = vpop.permute.xlu0 %5285
        %5287 = vrot.lane.b32.xlu0 %v5158, 127
        %v5288 = vpop.permute.xlu0 %5287
        %5289 = vrot.lane.b32.xlu0 %v5159, 127
        %v5290 = vpop.permute.xlu0 %5289
        %5291 = vrot.lane.b32.xlu0 %v5160, 127
        %v5292 = vpop.permute.xlu0 %5291
        %5293 = vrot.lane.b32.xlu0 %v5161, 127
        %v5294 = vpop.permute.xlu0 %5293
        %5295 = vrot.lane.b32.xlu0 %v5162, 127
        %v5296 = vpop.permute.xlu0 %5295
        %5297 = vrot.lane.b32.xlu0 %v5163, 127
        %v5298 = vpop.permute.xlu0 %5297
        %5299 = vrot.lane.b32.xlu0 %v5164, 127
        %v5300 = vpop.permute.xlu0 %5299
        %5301 = vrot.lane.b32.xlu0 %v5165, 127
        %v5302 = vpop.permute.xlu0 %5301
        %5303 = vrot.lane.b32.xlu0 %v5166, 127
        %v5304 = vpop.permute.xlu0 %5303
        %5305 = vrot.lane.b32.xlu0 %v5167, 127
        %v5306 = vpop.permute.xlu0 %5305
        %5307 = vrot.lane.b32.xlu0 %v5168, 127
        %v5308 = vpop.permute.xlu0 %5307
        %5309 = vrot.lane.b32.xlu0 %v5169, 127
        %v5310 = vpop.permute.xlu0 %5309
        %5311 = vrot.lane.b32.xlu0 %v5170, 127
        %v5312 = vpop.permute.xlu0 %5311
        %5313 = vrot.lane.b32.xlu0 %v5171, 127
        %v5314 = vpop.permute.xlu0 %5313
        %5315 = vrot.lane.b32.xlu0 %v5172, 127
        %v5316 = vpop.permute.xlu0 %5315
        %v5365 = vmax.f32 %v4837, %v5222
        %v5366 = vmax.f32 %v4838, %v5224
        %v5367 = vmax.f32 %v4839, %v5226
        %v5368 = vmax.f32 %v4840, %v5228
        %v5369 = vmax.f32 %v4841, %v5230
        %v5370 = vmax.f32 %v4842, %v5232
        %v5371 = vmax.f32 %v4843, %v5234
        %v5372 = vmax.f32 %v4844, %v5236
        %v5373 = vmax.f32 %v4845, %v5238
        %v5374 = vmax.f32 %v4846, %v5240
        %v5375 = vmax.f32 %v4847, %v5242
        %v5376 = vmax.f32 %v4848, %v5244
        %v5377 = vmax.f32 %v4849, %v5246
        %v5378 = vmax.f32 %v4850, %v5248
        %v5379 = vmax.f32 %v4851, %v5250
        %v5380 = vmax.f32 %v4852, %v5252
        %v5381 = vmax.f32 %v4853, %v5254
        %v5382 = vmax.f32 %v4854, %v5256
        %v5383 = vmax.f32 %v4855, %v5258
        %v5384 = vmax.f32 %v4856, %v5260
        %v5385 = vmax.f32 %v4857, %v5262
        %v5386 = vmax.f32 %v4858, %v5264
        %v5387 = vmax.f32 %v4859, %v5266
        %v5388 = vmax.f32 %v4860, %v5268
        %v5389 = vmax.f32 %v4861, %v5270
        %v5390 = vmax.f32 %v4862, %v5272
        %v5391 = vmax.f32 %v4863, %v5274
        %v5392 = vmax.f32 %v4864, %v5276
        %v5393 = vmax.f32 %v4865, %v5278
        %v5394 = vmax.f32 %v4866, %v5280
        %v5395 = vmax.f32 %v4867, %v5282
        %v5396 = vmax.f32 %v4868, %v5284
        %v5397 = vmax.f32 %v4869, %v5286
        %v5398 = vmax.f32 %v4870, %v5288
        %v5399 = vmax.f32 %v4871, %v5290
        %v5400 = vmax.f32 %v4872, %v5292
        %v5401 = vmax.f32 %v4873, %v5294
        %v5402 = vmax.f32 %v4874, %v5296
        %v5403 = vmax.f32 %v4875, %v5298
        %v5404 = vmax.f32 %v4876, %v5300
        %v5405 = vmax.f32 %v4877, %v5302
        %v5406 = vmax.f32 %v4878, %v5304
        %v5407 = vmax.f32 %v4879, %v5306
        %v5408 = vmax.f32 %v4880, %v5308
        %v5409 = vmax.f32 %v4881, %v5310
        %v5410 = vmax.f32 %v4882, %v5312
        %v5411 = vmax.f32 %v4883, %v5314
        %v5412 = vmax.f32 %v4884, %v5316
        %v5413 = vmax.f32 %v5365, %v5389
        %v5414 = vmax.f32 %v5366, %v5390
        %v5415 = vmax.f32 %v5367, %v5391
        %v5416 = vmax.f32 %v5368, %v5392
        %v5417 = vmax.f32 %v5369, %v5393
        %v5418 = vmax.f32 %v5370, %v5394
        %v5419 = vmax.f32 %v5371, %v5395
        %v5420 = vmax.f32 %v5372, %v5396
        %v5421 = vmax.f32 %v5373, %v5397
        %v5422 = vmax.f32 %v5374, %v5398
        %v5423 = vmax.f32 %v5375, %v5399
        %v5424 = vmax.f32 %v5376, %v5400
        %v5425 = vmax.f32 %v5377, %v5401
        %v5426 = vmax.f32 %v5378, %v5402
        %v5427 = vmax.f32 %v5379, %v5403
        %v5428 = vmax.f32 %v5380, %v5404
        %v5429 = vmax.f32 %v5381, %v5405
        %v5430 = vmax.f32 %v5382, %v5406
        %v5431 = vmax.f32 %v5383, %v5407
        %v5432 = vmax.f32 %v5384, %v5408
        %v5433 = vmax.f32 %v5385, %v5409
        %v5434 = vmax.f32 %v5386, %v5410
        %v5435 = vmax.f32 %v5387, %v5411
        %v5436 = vmax.f32 %v5388, %v5412
        %v5437 = vld [vmem:[%s4] sm:$0xff]
        %v5438 = vld [vmem:[%s4 + $0x8] sm:$0xff]
        %v5439 = vld [vmem:[%s4 + $0x10] sm:$0xff]
        %v5440 = vld [vmem:[%s4 + $0x18] sm:$0xff]
        %v5441 = vld [vmem:[%s4 + $0x20] sm:$0xff]
        %v5442 = vld [vmem:[%s4 + $0x28] sm:$0xff]
        %v5443 = vld [vmem:[%s4 + $0x30] sm:$0xff]
        %v5444 = vld [vmem:[%s4 + $0x38] sm:$0xff]
        %v5445 = vld [vmem:[%s4 + $0x40] sm:$0xff]
        %v5446 = vld [vmem:[%s4 + $0x48] sm:$0xf]
        %v5447 = vld [vmem:[%s5] sm:$0xff]
        %v5448 = vld [vmem:[%s5 + $0x8] sm:$0xff]
        %v5449 = vld [vmem:[%s5 + $0x10] sm:$0xff]
        %v5450 = vld [vmem:[%s5 + $0x18] sm:$0xff]
        %v5451 = vld [vmem:[%s5 + $0x20] sm:$0xff]
        %v5452 = vld [vmem:[%s5 + $0x28] sm:$0xff]
        %v5453 = vld [vmem:[%s5 + $0x30] sm:$0xff]
        %v5454 = vld [vmem:[%s5 + $0x38] sm:$0xff]
        %v5455 = vld [vmem:[%s5 + $0x40] sm:$0xff]
        %v5456 = vld [vmem:[%s5 + $0x48] sm:$0xff]
        %v5457 = vld [vmem:[%s5 + $0x50] sm:$0xff]
        %v5458 = vld [vmem:[%s5 + $0x58] sm:$0xff]
        %v5459 = vld [vmem:[%s5 + $0x60] sm:$0xff]
        %v5460 = vld [vmem:[%s5 + $0x68] sm:$0xff]
        %v5461 = vld [vmem:[%s5 + $0x70] sm:$0xff]
        %v5462 = vld [vmem:[%s5 + $0x78] sm:$0xff]
        %v5463 = vld [vmem:[%s5 + $0x80] sm:$0xff]
        %v5464 = vld [vmem:[%s5 + $0x88] sm:$0xff]
        %v5465 = vld [vmem:[%s5 + $0x90] sm:$0xff]
        %v5466 = vld [vmem:[%s5 + $0x98] sm:$0xff]
        %v5467 = vld [vmem:[%s5 + $0xa0] sm:$0xff]
        %v5468 = vld [vmem:[%s5 + $0xa8] sm:$0xff]
        %v5469 = vld [vmem:[%s5 + $0xb0] sm:$0xff]
        %v5470 = vld [vmem:[%s5 + $0xb8] sm:$0xff]
        %5472 = vset.pattern.permute.xlu0 0
        %5473 = vperm.xlu0 %5472, %v5447
        %v5474 = vpop.permute.xlu0 %5473
        %5477 = vset.pattern.permute.xlu0 0
        %5478 = vperm.xlu0 %5477, %v5448
        %v5479 = vpop.permute.xlu0 %5478
        %5482 = vset.pattern.permute.xlu0 0
        %5483 = vperm.xlu0 %5482, %v5449
        %v5484 = vpop.permute.xlu0 %5483
        %5487 = vset.pattern.permute.xlu0 0
        %5488 = vperm.xlu0 %5487, %v5450
        %v5489 = vpop.permute.xlu0 %5488
        %5492 = vset.pattern.permute.xlu0 0
        %5493 = vperm.xlu0 %5492, %v5451
        %v5494 = vpop.permute.xlu0 %5493
        %5497 = vset.pattern.permute.xlu0 0
        %5498 = vperm.xlu0 %5497, %v5452
        %v5499 = vpop.permute.xlu0 %5498
        %5502 = vset.pattern.permute.xlu0 0
        %5503 = vperm.xlu0 %5502, %v5453
        %v5504 = vpop.permute.xlu0 %5503
        %5507 = vset.pattern.permute.xlu0 0
        %5508 = vperm.xlu0 %5507, %v5454
        %v5509 = vpop.permute.xlu0 %5508
        %5512 = vset.pattern.permute.xlu0 0
        %5513 = vperm.xlu0 %5512, %v5455
        %v5514 = vpop.permute.xlu0 %5513
        %5517 = vset.pattern.permute.xlu0 0
        %5518 = vperm.xlu0 %5517, %v5456
        %v5519 = vpop.permute.xlu0 %5518
        %5522 = vset.pattern.permute.xlu0 0
        %5523 = vperm.xlu0 %5522, %v5457
        %v5524 = vpop.permute.xlu0 %5523
        %5527 = vset.pattern.permute.xlu0 0
        %5528 = vperm.xlu0 %5527, %v5458
        %v5529 = vpop.permute.xlu0 %5528
        %5532 = vset.pattern.permute.xlu0 0
        %5533 = vperm.xlu0 %5532, %v5459
        %v5534 = vpop.permute.xlu0 %5533
        %5537 = vset.pattern.permute.xlu0 0
        %5538 = vperm.xlu0 %5537, %v5460
        %v5539 = vpop.permute.xlu0 %5538
        %5542 = vset.pattern.permute.xlu0 0
        %5543 = vperm.xlu0 %5542, %v5461
        %v5544 = vpop.permute.xlu0 %5543
        %5547 = vset.pattern.permute.xlu0 0
        %5548 = vperm.xlu0 %5547, %v5462
        %v5549 = vpop.permute.xlu0 %5548
        %5552 = vset.pattern.permute.xlu0 0
        %5553 = vperm.xlu0 %5552, %v5463
        %v5554 = vpop.permute.xlu0 %5553
        %5557 = vset.pattern.permute.xlu0 0
        %5558 = vperm.xlu0 %5557, %v5464
        %v5559 = vpop.permute.xlu0 %5558
        %5562 = vset.pattern.permute.xlu0 0
        %5563 = vperm.xlu0 %5562, %v5465
        %v5564 = vpop.permute.xlu0 %5563
        %5567 = vset.pattern.permute.xlu0 0
        %5568 = vperm.xlu0 %5567, %v5466
        %v5569 = vpop.permute.xlu0 %5568
        %5572 = vset.pattern.permute.xlu0 0
        %5573 = vperm.xlu0 %5572, %v5467
        %v5574 = vpop.permute.xlu0 %5573
        %5577 = vset.pattern.permute.xlu0 0
        %5578 = vperm.xlu0 %5577, %v5468
        %v5579 = vpop.permute.xlu0 %5578
        %5582 = vset.pattern.permute.xlu0 0
        %5583 = vperm.xlu0 %5582, %v5469
        %v5584 = vpop.permute.xlu0 %5583
        %5587 = vset.pattern.permute.xlu0 0
        %5588 = vperm.xlu0 %5587, %v5470
        %v5589 = vpop.permute.xlu0 %5588
        %v5592 = vsel %vm3004, %v5413, 0
        %v5595 = vsel %vm3004, %v5414, 0
        %v5598 = vsel %vm3004, %v5415, 0
        %v5601 = vsel %vm3004, %v5416, 0
        %v5604 = vsel %vm3004, %v5417, 0
        %v5607 = vsel %vm3004, %v5418, 0
        %v5610 = vsel %vm3004, %v5419, 0
        %v5613 = vsel %vm3004, %v5420, 0
        %v5616 = vsel %vm3004, %v5421, 0
        %v5619 = vsel %vm3004, %v5422, 0
        %v5622 = vsel %vm3004, %v5423, 0
        %v5625 = vsel %vm3004, %v5424, 0
        %v5628 = vsel %vm3004, %v5425, 0
        %v5631 = vsel %vm3004, %v5426, 0
        %v5634 = vsel %vm3004, %v5427, 0
        %v5637 = vsel %vm3004, %v5428, 0
        %v5640 = vsel %vm3004, %v5429, 0
        %v5643 = vsel %vm3004, %v5430, 0
        %v5646 = vsel %vm3004, %v5431, 0
        %v5649 = vsel %vm3004, %v5432, 0
        %v5652 = vsel %vm3004, %v5433, 0
        %v5655 = vsel %vm3004, %v5434, 0
        %v5658 = vsel %vm3004, %v5435, 0
        %v5661 = vsel %vm3004, %v5436, 0
        %vm5663 = vcmask 1043456
        %v5665 = vsel %vm5663, %v5446, 0
        %5667 = vmatprep.subr.mxu0 0.0
        %5668 = vmatpush1.msra.mxu0 %v5437
        %5669 = vmatprep.subr.mxu0 0.0
        %5670 = vmatpush1.msra.mxu0 %v5438
        %5671 = vmatprep.subr.mxu0 0.0
        %5672 = vmatpush1.msra.mxu0 %v5439
        %5673 = vmatprep.subr.mxu0 0.0
        %5674 = vmatpush1.msra.mxu0 %v5440
        %5675 = vmatprep.subr.mxu0 0.0
        %5676 = vmatpush1.msra.mxu0 %v5441
        %5677 = vmatprep.subr.mxu0 0.0
        %5678 = vmatpush1.msra.mxu0 %v5442
        %5679 = vmatprep.subr.mxu0 0.0
        %5680 = vmatpush1.msra.mxu0 %v5443
        %5681 = vmatprep.subr.mxu0 0.0
        %5682 = vmatpush1.msra.mxu0 %v5444
        %5683 = vmatprep.subr.mxu0 0.0
        %5684 = vmatpush1.msra.mxu0 %v5445
        %5685 = vmatprep.subr.mxu0 0.0
        %5686 = vmatpush1.msra.mxu0 %v5665
        %5687 = vmatprep.subr.mxu0 0.0
        %5688 = vmatpush1.msra.mxu0 0.0
        %5689 = vmatprep.subr.mxu0 0.0
        %5690 = vmatpush1.msra.mxu0 0.0
        %5691 = vmatprep.subr.mxu0 0.0
        %5692 = vmatpush1.msra.mxu0 0.0
        %5693 = vmatprep.subr.mxu0 0.0
        %5694 = vmatpush1.msra.mxu0 0.0
        %5695 = vmatprep.subr.mxu0 0.0
        %5696 = vmatpush1.msra.mxu0 0.0
        %5697 = vmatprep.subr.mxu0 0.0
        %5698 = vmatpush1.msra.mxu0 0.0
        %5699 = vmatprep.subr.mxu0 0.0
        %5700 = vmatpush1.msra.mxu0 0.0
        %5701 = vmatprep.subr.mxu0 0.0
        %5702 = vmatpush1.msra.mxu0 0.0
        %5703 = vmatprep.subr.mxu0 0.0
        %5704 = vmatpush1.msra.mxu0 0.0
        %5705 = vmatprep.subr.mxu0 0.0
        %5706 = vmatpush1.msra.mxu0 0.0
        %5707 = vmatprep.subr.mxu0 0.0
        %5708 = vmatpush1.msra.mxu0 0.0
        %5709 = vmatprep.subr.mxu0 0.0
        %5710 = vmatpush1.msra.mxu0 0.0
        %5711 = vmatprep.subr.mxu0 0.0
        %5712 = vmatpush1.msra.mxu0 0.0
        %5713 = vmatprep.subr.mxu0 0.0
        %5714 = vmatpush1.msra.mxu0 0.0
        %5715 = vmatprep.subr.mxu0 0.0
        %5716 = vmatpush1.msra.mxu0 0.0
        %5717 = vmatprep.subr.mxu0 0.0
        %5718 = vmatpush1.msra.mxu0 0.0
        %5719 = vmatprep.subr.mxu0 0.0
        %5720 = vmatpush1.msra.mxu0 0.0
        %5721 = vmatprep.subr.mxu0 0.0
        %5722 = vmatpush1.msra.mxu0 0.0
        %5723 = vmatprep.subr.mxu0 0.0
        %5724 = vmatpush1.msra.mxu0 0.0
        %5725 = vmatprep.subr.mxu0 0.0
        %5726 = vmatpush1.msra.mxu0 0.0
        %5727 = vmatprep.subr.mxu0 0.0
        %5728 = vmatpush1.msra.mxu0 0.0
        %5729 = vmatprep.subr.mxu0 0.0
        %5730 = vmatpush1.msra.mxu0 0.0
        %5731 = vmatprep.mubr.f32.mxu0 0.0
        %5732 = vmatmul.mubr.f32.gmra.mrb[0].mxu0 %v5592
        %v5733 = vpop.f32.mrb[0].mxu0
        %v5734 = vadd.f32 %v5474, %v5733
        %v5735 = vpop.f32.mrb[0].mxu0
        %5736 = vmatprep.mubr.f32.mxu0 0.0
        %5737 = vmatmul.mubr.f32.gmra.mrb[0].mxu0 %v5595
        %v5738 = vpop.f32.mrb[0].mxu0
        %v5739 = vadd.f32 %v5479, %v5738
        %v5740 = vpop.f32.mrb[0].mxu0
        %5741 = vmatprep.mubr.f32.mxu0 0.0
        %5742 = vmatmul.mubr.f32.gmra.mrb[0].mxu0 %v5598
        %v5743 = vpop.f32.mrb[0].mxu0
        %v5744 = vadd.f32 %v5484, %v5743
        %v5745 = vpop.f32.mrb[0].mxu0
        %5746 = vmatprep.mubr.f32.mxu0 0.0
        %5747 = vmatmul.mubr.f32.gmra.mrb[0].mxu0 %v5601
        %v5748 = vpop.f32.mrb[0].mxu0
        %v5749 = vadd.f32 %v5489, %v5748
        %v5750 = vpop.f32.mrb[0].mxu0
        %5751 = vmatprep.mubr.f32.mxu0 0.0
        %5752 = vmatmul.mubr.f32.gmra.mrb[0].mxu0 %v5604
        %v5753 = vpop.f32.mrb[0].mxu0
        %v5754 = vadd.f32 %v5494, %v5753
        %v5755 = vpop.f32.mrb[0].mxu0
        %5756 = vmatprep.mubr.f32.mxu0 0.0
        %5757 = vmatmul.mubr.f32.gmra.mrb[0].mxu0 %v5607
        %v5758 = vpop.f32.mrb[0].mxu0
        %v5759 = vadd.f32 %v5499, %v5758
        %v5760 = vpop.f32.mrb[0].mxu0
        %5761 = vmatprep.mubr.f32.mxu0 0.0
        %5762 = vmatmul.mubr.f32.gmra.mrb[0].mxu0 %v5610
        %v5763 = vpop.f32.mrb[0].mxu0
        %v5764 = vadd.f32 %v5504, %v5763
        %v5765 = vpop.f32.mrb[0].mxu0
        %5766 = vmatprep.mubr.f32.mxu0 0.0
        %5767 = vmatmul.mubr.f32.gmra.mrb[0].mxu0 %v5613
        %v5768 = vpop.f32.mrb[0].mxu0
        %v5769 = vadd.f32 %v5509, %v5768
        %v5770 = vpop.f32.mrb[0].mxu0
        %5771 = vmatprep.mubr.f32.mxu0 0.0
        %5772 = vmatmul.mubr.f32.gmra.mrb[0].mxu0 %v5616
        %v5773 = vpop.f32.mrb[0].mxu0
        %v5774 = vadd.f32 %v5514, %v5773
        %v5775 = vpop.f32.mrb[0].mxu0
        %5776 = vmatprep.mubr.f32.mxu0 0.0
        %5777 = vmatmul.mubr.f32.gmra.mrb[0].mxu0 %v5619
        %v5778 = vpop.f32.mrb[0].mxu0
        %v5779 = vadd.f32 %v5519, %v5778
        %v5780 = vpop.f32.mrb[0].mxu0
        %5781 = vmatprep.mubr.f32.mxu0 0.0
        %5782 = vmatmul.mubr.f32.gmra.mrb[0].mxu0 %v5622
        %v5783 = vpop.f32.mrb[0].mxu0
        %v5784 = vadd.f32 %v5524, %v5783
        %v5785 = vpop.f32.mrb[0].mxu0
        %5786 = vmatprep.mubr.f32.mxu0 0.0
        %5787 = vmatmul.mubr.f32.gmra.mrb[0].mxu0 %v5625
        %v5788 = vpop.f32.mrb[0].mxu0
        %v5789 = vadd.f32 %v5529, %v5788
        %v5790 = vpop.f32.mrb[0].mxu0
        %5791 = vmatprep.mubr.f32.mxu0 0.0
        %5792 = vmatmul.mubr.f32.gmra.mrb[0].mxu0 %v5628
        %v5793 = vpop.f32.mrb[0].mxu0
        %v5794 = vadd.f32 %v5534, %v5793
        %v5795 = vpop.f32.mrb[0].mxu0
        %5796 = vmatprep.mubr.f32.mxu0 0.0
        %5797 = vmatmul.mubr.f32.gmra.mrb[0].mxu0 %v5631
        %v5798 = vpop.f32.mrb[0].mxu0
        %v5799 = vadd.f32 %v5539, %v5798
        %v5800 = vpop.f32.mrb[0].mxu0
        %5801 = vmatprep.mubr.f32.mxu0 0.0
        %5802 = vmatmul.mubr.f32.gmra.mrb[0].mxu0 %v5634
        %v5803 = vpop.f32.mrb[0].mxu0
        %v5804 = vadd.f32 %v5544, %v5803
        %v5805 = vpop.f32.mrb[0].mxu0
        %5806 = vmatprep.mubr.f32.mxu0 0.0
        %5807 = vmatmul.mubr.f32.gmra.mrb[0].mxu0 %v5637
        %v5808 = vpop.f32.mrb[0].mxu0
        %v5809 = vadd.f32 %v5549, %v5808
        %v5810 = vpop.f32.mrb[0].mxu0
        %5811 = vmatprep.mubr.f32.mxu0 0.0
        %5812 = vmatmul.mubr.f32.gmra.mrb[0].mxu0 %v5640
        %v5813 = vpop.f32.mrb[0].mxu0
        %v5814 = vadd.f32 %v5554, %v5813
        %v5815 = vpop.f32.mrb[0].mxu0
        %5816 = vmatprep.mubr.f32.mxu0 0.0
        %5817 = vmatmul.mubr.f32.gmra.mrb[0].mxu0 %v5643
        %v5818 = vpop.f32.mrb[0].mxu0
        %v5819 = vadd.f32 %v5559, %v5818
        %v5820 = vpop.f32.mrb[0].mxu0
        %5821 = vmatprep.mubr.f32.mxu0 0.0
        %5822 = vmatmul.mubr.f32.gmra.mrb[0].mxu0 %v5646
        %v5823 = vpop.f32.mrb[0].mxu0
        %v5824 = vadd.f32 %v5564, %v5823
        %v5825 = vpop.f32.mrb[0].mxu0
        %5826 = vmatprep.mubr.f32.mxu0 0.0
        %5827 = vmatmul.mubr.f32.gmra.mrb[0].mxu0 %v5649
        %v5828 = vpop.f32.mrb[0].mxu0
        %v5829 = vadd.f32 %v5569, %v5828
        %v5830 = vpop.f32.mrb[0].mxu0
        %5831 = vmatprep.mubr.f32.mxu0 0.0
        %5832 = vmatmul.mubr.f32.gmra.mrb[0].mxu0 %v5652
        %v5833 = vpop.f32.mrb[0].mxu0
        %v5834 = vadd.f32 %v5574, %v5833
        %v5835 = vpop.f32.mrb[0].mxu0
        %5836 = vmatprep.mubr.f32.mxu0 0.0
        %5837 = vmatmul.mubr.f32.gmra.mrb[0].mxu0 %v5655
        %v5838 = vpop.f32.mrb[0].mxu0
        %v5839 = vadd.f32 %v5579, %v5838
        %v5840 = vpop.f32.mrb[0].mxu0
        %5841 = vmatprep.mubr.f32.mxu0 0.0
        %5842 = vmatmul.mubr.f32.gmra.mrb[0].mxu0 %v5658
        %v5843 = vpop.f32.mrb[0].mxu0
        %v5844 = vadd.f32 %v5584, %v5843
        %v5845 = vpop.f32.mrb[0].mxu0
        %5846 = vmatprep.mubr.f32.mxu0 0.0
        %5847 = vmatmul.mubr.f32.gmra.mrb[0].mxu0 %v5661
        %v5848 = vpop.f32.mrb[0].mxu0
        %v5849 = vadd.f32 %v5589, %v5848
        %v5850 = vpop.f32.mrb[0].mxu0
        %5851 = vdwg.mxu0
        %vm5852 = vcmask 302080
        %v5853 = vsel %vm5852, %v5734, 0.0
        %5854 = vadd.xlane.f32.xlu0 %v5853
        %v5855 = vpop.xlane.xlu0 %5854
        %v5856 = vsel %vm5852, %v5739, 0.0
        %5857 = vadd.xlane.f32.xlu0 %v5856
        %v5858 = vpop.xlane.xlu0 %5857
        %v5859 = vsel %vm5852, %v5744, 0.0
        %5860 = vadd.xlane.f32.xlu0 %v5859
        %v5861 = vpop.xlane.xlu0 %5860
        %v5862 = vsel %vm5852, %v5749, 0.0
        %5863 = vadd.xlane.f32.xlu0 %v5862
        %v5864 = vpop.xlane.xlu0 %5863
        %v5865 = vsel %vm5852, %v5754, 0.0
        %5866 = vadd.xlane.f32.xlu0 %v5865
        %v5867 = vpop.xlane.xlu0 %5866
        %v5868 = vsel %vm5852, %v5759, 0.0
        %5869 = vadd.xlane.f32.xlu0 %v5868
        %v5870 = vpop.xlane.xlu0 %5869
        %v5871 = vsel %vm5852, %v5764, 0.0
        %5872 = vadd.xlane.f32.xlu0 %v5871
        %v5873 = vpop.xlane.xlu0 %5872
        %v5874 = vsel %vm5852, %v5769, 0.0
        %5875 = vadd.xlane.f32.xlu0 %v5874
        %v5876 = vpop.xlane.xlu0 %5875
        %v5877 = vsel %vm5852, %v5774, 0.0
        %5878 = vadd.xlane.f32.xlu0 %v5877
        %v5879 = vpop.xlane.xlu0 %5878
        %v5880 = vsel %vm5852, %v5779, 0.0
        %5881 = vadd.xlane.f32.xlu0 %v5880
        %v5882 = vpop.xlane.xlu0 %5881
        %v5883 = vsel %vm5852, %v5784, 0.0
        %5884 = vadd.xlane.f32.xlu0 %v5883
        %v5885 = vpop.xlane.xlu0 %5884
        %v5886 = vsel %vm5852, %v5789, 0.0
        %5887 = vadd.xlane.f32.xlu0 %v5886
        %v5888 = vpop.xlane.xlu0 %5887
        %v5889 = vsel %vm5852, %v5794, 0.0
        %5890 = vadd.xlane.f32.xlu0 %v5889
        %v5891 = vpop.xlane.xlu0 %5890
        %v5892 = vsel %vm5852, %v5799, 0.0
        %5893 = vadd.xlane.f32.xlu0 %v5892
        %v5894 = vpop.xlane.xlu0 %5893
        %v5895 = vsel %vm5852, %v5804, 0.0
        %5896 = vadd.xlane.f32.xlu0 %v5895
        %v5897 = vpop.xlane.xlu0 %5896
        %v5898 = vsel %vm5852, %v5809, 0.0
        %5899 = vadd.xlane.f32.xlu0 %v5898
        %v5900 = vpop.xlane.xlu0 %5899
        %v5901 = vsel %vm5852, %v5814, 0.0
        %5902 = vadd.xlane.f32.xlu0 %v5901
        %v5903 = vpop.xlane.xlu0 %5902
        %v5904 = vsel %vm5852, %v5819, 0.0
        %5905 = vadd.xlane.f32.xlu0 %v5904
        %v5906 = vpop.xlane.xlu0 %5905
        %v5907 = vsel %vm5852, %v5824, 0.0
        %5908 = vadd.xlane.f32.xlu0 %v5907
        %v5909 = vpop.xlane.xlu0 %5908
        %v5910 = vsel %vm5852, %v5829, 0.0
        %5911 = vadd.xlane.f32.xlu0 %v5910
        %v5912 = vpop.xlane.xlu0 %5911
        %v5913 = vsel %vm5852, %v5834, 0.0
        %5914 = vadd.xlane.f32.xlu0 %v5913
        %v5915 = vpop.xlane.xlu0 %5914
        %v5916 = vsel %vm5852, %v5839, 0.0
        %5917 = vadd.xlane.f32.xlu0 %v5916
        %v5918 = vpop.xlane.xlu0 %5917
        %v5919 = vsel %vm5852, %v5844, 0.0
        %5920 = vadd.xlane.f32.xlu0 %v5919
        %v5921 = vpop.xlane.xlu0 %5920
        %v5922 = vsel %vm5852, %v5849, 0.0
        %5923 = vadd.xlane.f32.xlu0 %v5922
        %v5924 = vpop.xlane.xlu0 %5923
        %v5925 = vadd.f32 %v5855, %v5858
        %v5926 = vadd.f32 %v5925, %v5861
        %v5927 = vrot.slane %v5926, 4
        %v5928 = vadd.f32 %v5926, %v5927
        %v5929 = vrot.slane %v5928, 2
        %v5930 = vadd.f32 %v5928, %v5929
        %v5931 = vrot.slane %v5930, 1
        %v5932 = vadd.f32 %v5930, %v5931
        %v5933 = vadd.f32 %v5864, %v5867
        %v5934 = vadd.f32 %v5933, %v5870
        %v5935 = vrot.slane %v5934, 4
        %v5936 = vadd.f32 %v5934, %v5935
        %v5937 = vrot.slane %v5936, 2
        %v5938 = vadd.f32 %v5936, %v5937
        %v5939 = vrot.slane %v5938, 1
        %v5940 = vadd.f32 %v5938, %v5939
        %v5941 = vadd.f32 %v5873, %v5876
        %v5942 = vadd.f32 %v5941, %v5879
        %v5943 = vrot.slane %v5942, 4
        %v5944 = vadd.f32 %v5942, %v5943
        %v5945 = vrot.slane %v5944, 2
        %v5946 = vadd.f32 %v5944, %v5945
        %v5947 = vrot.slane %v5946, 1
        %v5948 = vadd.f32 %v5946, %v5947
        %v5949 = vadd.f32 %v5882, %v5885
        %v5950 = vadd.f32 %v5949, %v5888
        %v5951 = vrot.slane %v5950, 4
        %v5952 = vadd.f32 %v5950, %v5951
        %v5953 = vrot.slane %v5952, 2
        %v5954 = vadd.f32 %v5952, %v5953
        %v5955 = vrot.slane %v5954, 1
        %v5956 = vadd.f32 %v5954, %v5955
        %v5957 = vadd.f32 %v5891, %v5894
        %v5958 = vadd.f32 %v5957, %v5897
        %v5959 = vrot.slane %v5958, 4
        %v5960 = vadd.f32 %v5958, %v5959
        %v5961 = vrot.slane %v5960, 2
        %v5962 = vadd.f32 %v5960, %v5961
        %v5963 = vrot.slane %v5962, 1
        %v5964 = vadd.f32 %v5962, %v5963
        %v5965 = vadd.f32 %v5900, %v5903
        %v5966 = vadd.f32 %v5965, %v5906
        %v5967 = vrot.slane %v5966, 4
        %v5968 = vadd.f32 %v5966, %v5967
        %v5969 = vrot.slane %v5968, 2
        %v5970 = vadd.f32 %v5968, %v5969
        %v5971 = vrot.slane %v5970, 1
        %v5972 = vadd.f32 %v5970, %v5971
        %v5973 = vadd.f32 %v5909, %v5912
        %v5974 = vadd.f32 %v5973, %v5915
        %v5975 = vrot.slane %v5974, 4
        %v5976 = vadd.f32 %v5974, %v5975
        %v5977 = vrot.slane %v5976, 2
        %v5978 = vadd.f32 %v5976, %v5977
        %v5979 = vrot.slane %v5978, 1
        %v5980 = vadd.f32 %v5978, %v5979
        %v5981 = vadd.f32 %v5918, %v5921
        %v5982 = vadd.f32 %v5981, %v5924
        %v5983 = vrot.slane %v5982, 4
        %v5984 = vadd.f32 %v5982, %v5983
        %v5985 = vrot.slane %v5984, 2
        %v5986 = vadd.f32 %v5984, %v5985
        %v5987 = vrot.slane %v5986, 1
        %v5988 = vadd.f32 %v5986, %v5987
        %v5989 = vmul.f32 %v5734, %v5734
        %v5990 = vmul.f32 %v5739, %v5739
        %v5991 = vmul.f32 %v5744, %v5744
        %v5992 = vmul.f32 %v5749, %v5749
        %v5993 = vmul.f32 %v5754, %v5754
        %v5994 = vmul.f32 %v5759, %v5759
        %v5995 = vmul.f32 %v5764, %v5764
        %v5996 = vmul.f32 %v5769, %v5769
        %v5997 = vmul.f32 %v5774, %v5774
        %v5998 = vmul.f32 %v5779, %v5779
        %v5999 = vmul.f32 %v5784, %v5784
        %v6000 = vmul.f32 %v5789, %v5789
        %v6001 = vmul.f32 %v5794, %v5794
        %v6002 = vmul.f32 %v5799, %v5799
        %v6003 = vmul.f32 %v5804, %v5804
        %v6004 = vmul.f32 %v5809, %v5809
        %v6005 = vmul.f32 %v5814, %v5814
        %v6006 = vmul.f32 %v5819, %v5819
        %v6007 = vmul.f32 %v5824, %v5824
        %v6008 = vmul.f32 %v5829, %v5829
        %v6009 = vmul.f32 %v5834, %v5834
        %v6010 = vmul.f32 %v5839, %v5839
        %v6011 = vmul.f32 %v5844, %v5844
        %v6012 = vmul.f32 %v5849, %v5849
        %v6013 = vsel %vm5852, %v5989, 0.0
        %6014 = vadd.xlane.f32.xlu0 %v6013
        %v6015 = vpop.xlane.xlu0 %6014
        %v6016 = vsel %vm5852, %v5990, 0.0
        %6017 = vadd.xlane.f32.xlu0 %v6016
        %v6018 = vpop.xlane.xlu0 %6017
        %v6019 = vsel %vm5852, %v5991, 0.0
        %6020 = vadd.xlane.f32.xlu0 %v6019
        %v6021 = vpop.xlane.xlu0 %6020
        %v6022 = vsel %vm5852, %v5992, 0.0
        %6023 = vadd.xlane.f32.xlu0 %v6022
        %v6024 = vpop.xlane.xlu0 %6023
        %v6025 = vsel %vm5852, %v5993, 0.0
        %6026 = vadd.xlane.f32.xlu0 %v6025
        %v6027 = vpop.xlane.xlu0 %6026
        %v6028 = vsel %vm5852, %v5994, 0.0
        %6029 = vadd.xlane.f32.xlu0 %v6028
        %v6030 = vpop.xlane.xlu0 %6029
        %v6031 = vsel %vm5852, %v5995, 0.0
        %6032 = vadd.xlane.f32.xlu0 %v6031
        %v6033 = vpop.xlane.xlu0 %6032
        %v6034 = vsel %vm5852, %v5996, 0.0
        %6035 = vadd.xlane.f32.xlu0 %v6034
        %v6036 = vpop.xlane.xlu0 %6035
        %v6037 = vsel %vm5852, %v5997, 0.0
        %6038 = vadd.xlane.f32.xlu0 %v6037
        %v6039 = vpop.xlane.xlu0 %6038
        %v6040 = vsel %vm5852, %v5998, 0.0
        %6041 = vadd.xlane.f32.xlu0 %v6040
        %v6042 = vpop.xlane.xlu0 %6041
        %v6043 = vsel %vm5852, %v5999, 0.0
        %6044 = vadd.xlane.f32.xlu0 %v6043
        %v6045 = vpop.xlane.xlu0 %6044
        %v6046 = vsel %vm5852, %v6000, 0.0
        %6047 = vadd.xlane.f32.xlu0 %v6046
        %v6048 = vpop.xlane.xlu0 %6047
        %v6049 = vsel %vm5852, %v6001, 0.0
        %6050 = vadd.xlane.f32.xlu0 %v6049
        %v6051 = vpop.xlane.xlu0 %6050
        %v6052 = vsel %vm5852, %v6002, 0.0
        %6053 = vadd.xlane.f32.xlu0 %v6052
        %v6054 = vpop.xlane.xlu0 %6053
        %v6055 = vsel %vm5852, %v6003, 0.0
        %6056 = vadd.xlane.f32.xlu0 %v6055
        %v6057 = vpop.xlane.xlu0 %6056
        %v6058 = vsel %vm5852, %v6004, 0.0
        %6059 = vadd.xlane.f32.xlu0 %v6058
        %v6060 = vpop.xlane.xlu0 %6059
        %v6061 = vsel %vm5852, %v6005, 0.0
        %6062 = vadd.xlane.f32.xlu0 %v6061
        %v6063 = vpop.xlane.xlu0 %6062
        %v6064 = vsel %vm5852, %v6006, 0.0
        %6065 = vadd.xlane.f32.xlu0 %v6064
        %v6066 = vpop.xlane.xlu0 %6065
        %v6067 = vsel %vm5852, %v6007, 0.0
        %6068 = vadd.xlane.f32.xlu0 %v6067
        %v6069 = vpop.xlane.xlu0 %6068
        %v6070 = vsel %vm5852, %v6008, 0.0
        %6071 = vadd.xlane.f32.xlu0 %v6070
        %v6072 = vpop.xlane.xlu0 %6071
        %v6073 = vsel %vm5852, %v6009, 0.0
        %6074 = vadd.xlane.f32.xlu0 %v6073
        %v6075 = vpop.xlane.xlu0 %6074
        %v6076 = vsel %vm5852, %v6010, 0.0
        %6077 = vadd.xlane.f32.xlu0 %v6076
        %v6078 = vpop.xlane.xlu0 %6077
        %v6079 = vsel %vm5852, %v6011, 0.0
        %6080 = vadd.xlane.f32.xlu0 %v6079
        %v6081 = vpop.xlane.xlu0 %6080
        %v6082 = vsel %vm5852, %v6012, 0.0
        %6083 = vadd.xlane.f32.xlu0 %v6082
        %v6084 = vpop.xlane.xlu0 %6083
        %v6085 = vadd.f32 %v6015, %v6018
        %v6086 = vadd.f32 %v6085, %v6021
        %v6087 = vrot.slane %v6086, 4
        %v6088 = vadd.f32 %v6086, %v6087
        %v6089 = vrot.slane %v6088, 2
        %v6090 = vadd.f32 %v6088, %v6089
        %v6091 = vrot.slane %v6090, 1
        %v6092 = vadd.f32 %v6090, %v6091
        %v6093 = vadd.f32 %v6024, %v6027
        %v6094 = vadd.f32 %v6093, %v6030
        %v6095 = vrot.slane %v6094, 4
        %v6096 = vadd.f32 %v6094, %v6095
        %v6097 = vrot.slane %v6096, 2
        %v6098 = vadd.f32 %v6096, %v6097
        %v6099 = vrot.slane %v6098, 1
        %v6100 = vadd.f32 %v6098, %v6099
        %v6101 = vadd.f32 %v6033, %v6036
        %v6102 = vadd.f32 %v6101, %v6039
        %v6103 = vrot.slane %v6102, 4
        %v6104 = vadd.f32 %v6102, %v6103
        %v6105 = vrot.slane %v6104, 2
        %v6106 = vadd.f32 %v6104, %v6105
        %v6107 = vrot.slane %v6106, 1
        %v6108 = vadd.f32 %v6106, %v6107
        %v6109 = vadd.f32 %v6042, %v6045
        %v6110 = vadd.f32 %v6109, %v6048
        %v6111 = vrot.slane %v6110, 4
        %v6112 = vadd.f32 %v6110, %v6111
        %v6113 = vrot.slane %v6112, 2
        %v6114 = vadd.f32 %v6112, %v6113
        %v6115 = vrot.slane %v6114, 1
        %v6116 = vadd.f32 %v6114, %v6115
        %v6117 = vadd.f32 %v6051, %v6054
        %v6118 = vadd.f32 %v6117, %v6057
        %v6119 = vrot.slane %v6118, 4
        %v6120 = vadd.f32 %v6118, %v6119
        %v6121 = vrot.slane %v6120, 2
        %v6122 = vadd.f32 %v6120, %v6121
        %v6123 = vrot.slane %v6122, 1
        %v6124 = vadd.f32 %v6122, %v6123
        %v6125 = vadd.f32 %v6060, %v6063
        %v6126 = vadd.f32 %v6125, %v6066
        %v6127 = vrot.slane %v6126, 4
        %v6128 = vadd.f32 %v6126, %v6127
        %v6129 = vrot.slane %v6128, 2
        %v6130 = vadd.f32 %v6128, %v6129
        %v6131 = vrot.slane %v6130, 1
        %v6132 = vadd.f32 %v6130, %v6131
        %v6133 = vadd.f32 %v6069, %v6072
        %v6134 = vadd.f32 %v6133, %v6075
        %v6135 = vrot.slane %v6134, 4
        %v6136 = vadd.f32 %v6134, %v6135
        %v6137 = vrot.slane %v6136, 2
        %v6138 = vadd.f32 %v6136, %v6137
        %v6139 = vrot.slane %v6138, 1
        %v6140 = vadd.f32 %v6138, %v6139
        %v6141 = vadd.f32 %v6078, %v6081
        %v6142 = vadd.f32 %v6141, %v6084
        %v6143 = vrot.slane %v6142, 4
        %v6144 = vadd.f32 %v6142, %v6143
        %v6145 = vrot.slane %v6144, 2
        %v6146 = vadd.f32 %v6144, %v6145
        %v6147 = vrot.slane %v6146, 1
        %v6148 = vadd.f32 %v6146, %v6147
        %v6149 = vrcp.pop 888.0
        %v6150 = vmul.f32 %v5932, %v6149
        %v6151 = vmul.f32 %v5940, %v6149
        %v6152 = vmul.f32 %v5948, %v6149
        %v6153 = vmul.f32 %v5956, %v6149
        %v6154 = vmul.f32 %v5964, %v6149
        %v6155 = vmul.f32 %v5972, %v6149
        %v6156 = vmul.f32 %v5980, %v6149
        %v6157 = vmul.f32 %v5988, %v6149
        %v6158 = vmul.f32 %v6092, %v6149
        %v6159 = vmul.f32 %v6100, %v6149
        %v6160 = vmul.f32 %v6108, %v6149
        %v6161 = vmul.f32 %v6116, %v6149
        %v6162 = vmul.f32 %v6124, %v6149
        %v6163 = vmul.f32 %v6132, %v6149
        %v6164 = vmul.f32 %v6140, %v6149
        %v6165 = vmul.f32 %v6148, %v6149
        %v6166 = vmul.f32 %v6150, %v6150
        %v6167 = vmul.f32 %v6151, %v6151
        %v6168 = vmul.f32 %v6152, %v6152
        %v6169 = vmul.f32 %v6153, %v6153
        %v6170 = vmul.f32 %v6154, %v6154
        %v6171 = vmul.f32 %v6155, %v6155
        %v6172 = vmul.f32 %v6156, %v6156
        %v6173 = vmul.f32 %v6157, %v6157
        %v6174 = vsub.f32 %v6158, %v6166
        %v6175 = vsub.f32 %v6159, %v6167
        %v6176 = vsub.f32 %v6160, %v6168
        %v6177 = vsub.f32 %v6161, %v6169
        %v6178 = vsub.f32 %v6162, %v6170
        %v6179 = vsub.f32 %v6163, %v6171
        %v6180 = vsub.f32 %v6164, %v6172
        %v6181 = vsub.f32 %v6165, %v6173
        %v6182 = vmax.f32 %v6174, 0.0
        %v6183 = vmax.f32 %v6175, 0.0
        %v6184 = vmax.f32 %v6176, 0.0
        %v6185 = vmax.f32 %v6177, 0.0
        %v6186 = vmax.f32 %v6178, 0.0
        %v6187 = vmax.f32 %v6179, 0.0
        %v6188 = vmax.f32 %v6180, 0.0
        %v6189 = vmax.f32 %v6181, 0.0
        %v6190 = vsub.f32 %v5734, %v6150
        %v6191 = vsub.f32 %v5739, %v6150
        %v6192 = vsub.f32 %v5744, %v6150
        %v6193 = vsub.f32 %v5749, %v6151
        %v6194 = vsub.f32 %v5754, %v6151
        %v6195 = vsub.f32 %v5759, %v6151
        %v6196 = vsub.f32 %v5764, %v6152
        %v6197 = vsub.f32 %v5769, %v6152
        %v6198 = vsub.f32 %v5774, %v6152
        %v6199 = vsub.f32 %v5779, %v6153
        %v6200 = vsub.f32 %v5784, %v6153
        %v6201 = vsub.f32 %v5789, %v6153
        %v6202 = vsub.f32 %v5794, %v6154
        %v6203 = vsub.f32 %v5799, %v6154
        %v6204 = vsub.f32 %v5804, %v6154
        %v6205 = vsub.f32 %v5809, %v6155
        %v6206 = vsub.f32 %v5814, %v6155
        %v6207 = vsub.f32 %v5819, %v6155
        %v6208 = vsub.f32 %v5824, %v6156
        %v6209 = vsub.f32 %v5829, %v6156
        %v6210 = vsub.f32 %v5834, %v6156
        %v6211 = vsub.f32 %v5839, %v6157
        %v6212 = vsub.f32 %v5844, %v6157
        %v6213 = vsub.f32 %v5849, %v6157
        %v6214 = vadd.f32 %v6182, 1e-05
        %v6215 = vadd.f32 %v6183, 1e-05
        %v6216 = vadd.f32 %v6184, 1e-05
        %v6217 = vadd.f32 %v6185, 1e-05
        %v6218 = vadd.f32 %v6186, 1e-05
        %v6219 = vadd.f32 %v6187, 1e-05
        %v6220 = vadd.f32 %v6188, 1e-05
        %v6221 = vadd.f32 %v6189, 1e-05
        %v6222 = vrsqrt.pop %v6214
        %v6223 = vrsqrt.pop %v6215
        %v6224 = vrsqrt.pop %v6216
        %v6225 = vrsqrt.pop %v6217
        %v6226 = vrsqrt.pop %v6218
        %v6227 = vrsqrt.pop %v6219
        %v6228 = vrsqrt.pop %v6220
        %v6229 = vrsqrt.pop %v6221
        %v6230 = vmul.f32 %v6190, %v6222
        %v6231 = vmul.f32 %v6191, %v6222
        %v6232 = vmul.f32 %v6192, %v6222
        %v6233 = vmul.f32 %v6193, %v6223
        %v6234 = vmul.f32 %v6194, %v6223
        %v6235 = vmul.f32 %v6195, %v6223
        %v6236 = vmul.f32 %v6196, %v6224
        %v6237 = vmul.f32 %v6197, %v6224
        %v6238 = vmul.f32 %v6198, %v6224
        %v6239 = vmul.f32 %v6199, %v6225
        %v6240 = vmul.f32 %v6200, %v6225
        %v6241 = vmul.f32 %v6201, %v6225
        %v6242 = vmul.f32 %v6202, %v6226
        %v6243 = vmul.f32 %v6203, %v6226
        %v6244 = vmul.f32 %v6204, %v6226
        %v6245 = vmul.f32 %v6205, %v6227
        %v6246 = vmul.f32 %v6206, %v6227
        %v6247 = vmul.f32 %v6207, %v6227
        %v6248 = vmul.f32 %v6208, %v6228
        %v6249 = vmul.f32 %v6209, %v6228
        %v6250 = vmul.f32 %v6210, %v6228
        %v6251 = vmul.f32 %v6211, %v6229
        %v6252 = vmul.f32 %v6212, %v6229
        %v6253 = vmul.f32 %v6213, %v6229
        %vm6254 = vcmp.gt.f32.partialorder %v6230, 0.0
        %vm6255 = vcmp.gt.f32.partialorder %v6231, 0.0
        %vm6256 = vcmp.gt.f32.partialorder %v6232, 0.0
        %vm6257 = vcmp.gt.f32.partialorder %v6233, 0.0
        %vm6258 = vcmp.gt.f32.partialorder %v6234, 0.0
        %vm6259 = vcmp.gt.f32.partialorder %v6235, 0.0
        %vm6260 = vcmp.gt.f32.partialorder %v6236, 0.0
        %vm6261 = vcmp.gt.f32.partialorder %v6237, 0.0
        %vm6262 = vcmp.gt.f32.partialorder %v6238, 0.0
        %vm6263 = vcmp.gt.f32.partialorder %v6239, 0.0
        %vm6264 = vcmp.gt.f32.partialorder %v6240, 0.0
        %vm6265 = vcmp.gt.f32.partialorder %v6241, 0.0
        %vm6266 = vcmp.gt.f32.partialorder %v6242, 0.0
        %vm6267 = vcmp.gt.f32.partialorder %v6243, 0.0
        %vm6268 = vcmp.gt.f32.partialorder %v6244, 0.0
        %vm6269 = vcmp.gt.f32.partialorder %v6245, 0.0
        %vm6270 = vcmp.gt.f32.partialorder %v6246, 0.0
        %vm6271 = vcmp.gt.f32.partialorder %v6247, 0.0
        %vm6272 = vcmp.gt.f32.partialorder %v6248, 0.0
        %vm6273 = vcmp.gt.f32.partialorder %v6249, 0.0
        %vm6274 = vcmp.gt.f32.partialorder %v6250, 0.0
        %vm6275 = vcmp.gt.f32.partialorder %v6251, 0.0
        %vm6276 = vcmp.gt.f32.partialorder %v6252, 0.0
        %vm6277 = vcmp.gt.f32.partialorder %v6253, 0.0
        %v6278 = vmul.f32 %v6230, 0.2
        %v6279 = vmul.f32 %v6231, 0.2
        %v6280 = vmul.f32 %v6232, 0.2
        %v6281 = vmul.f32 %v6233, 0.2
        %v6282 = vmul.f32 %v6234, 0.2
        %v6283 = vmul.f32 %v6235, 0.2
        %v6284 = vmul.f32 %v6236, 0.2
        %v6285 = vmul.f32 %v6237, 0.2
        %v6286 = vmul.f32 %v6238, 0.2
        %v6287 = vmul.f32 %v6239, 0.2
        %v6288 = vmul.f32 %v6240, 0.2
        %v6289 = vmul.f32 %v6241, 0.2
        %v6290 = vmul.f32 %v6242, 0.2
        %v6291 = vmul.f32 %v6243, 0.2
        %v6292 = vmul.f32 %v6244, 0.2
        %v6293 = vmul.f32 %v6245, 0.2
        %v6294 = vmul.f32 %v6246, 0.2
        %v6295 = vmul.f32 %v6247, 0.2
        %v6296 = vmul.f32 %v6248, 0.2
        %v6297 = vmul.f32 %v6249, 0.2
        %v6298 = vmul.f32 %v6250, 0.2
        %v6299 = vmul.f32 %v6251, 0.2
        %v6300 = vmul.f32 %v6252, 0.2
        %v6301 = vmul.f32 %v6253, 0.2
        %v6302 = vsel %vm6254, %v6230, %v6278
        %v6303 = vsel %vm6255, %v6231, %v6279
        %v6304 = vsel %vm6256, %v6232, %v6280
        %v6305 = vsel %vm6257, %v6233, %v6281
        %v6306 = vsel %vm6258, %v6234, %v6282
        %v6307 = vsel %vm6259, %v6235, %v6283
        %v6308 = vsel %vm6260, %v6236, %v6284
        %v6309 = vsel %vm6261, %v6237, %v6285
        %v6310 = vsel %vm6262, %v6238, %v6286
        %v6311 = vsel %vm6263, %v6239, %v6287
        %v6312 = vsel %vm6264, %v6240, %v6288
        %v6313 = vsel %vm6265, %v6241, %v6289
        %v6314 = vsel %vm6266, %v6242, %v6290
        %v6315 = vsel %vm6267, %v6243, %v6291
        %v6316 = vsel %vm6268, %v6244, %v6292
        %v6317 = vsel %vm6269, %v6245, %v6293
        %v6318 = vsel %vm6270, %v6246, %v6294
        %v6319 = vsel %vm6271, %v6247, %v6295
        %v6320 = vsel %vm6272, %v6248, %v6296
        %v6321 = vsel %vm6273, %v6249, %v6297
        %v6322 = vsel %vm6274, %v6250, %v6298
        %v6323 = vsel %vm6275, %v6251, %v6299
        %v6324 = vsel %vm6276, %v6252, %v6300
        %v6325 = vsel %vm6277, %v6253, %v6301
        %6326 = vst.msk [vmem:[%s244] sm:$0xff] %vm5852, %v6302
        %6327 = vst.msk [vmem:[%s244 + $0x8] sm:$0xff] %vm5852, %v6303
        %6328 = vst.msk [vmem:[%s244 + $0x10] sm:$0xff] %vm5852, %v6304
        %6329 = vst.msk [vmem:[%s244 + $0x18] sm:$0xff] %vm5852, %v6305
        %6330 = vst.msk [vmem:[%s244 + $0x20] sm:$0xff] %vm5852, %v6306
        %6331 = vst.msk [vmem:[%s244 + $0x28] sm:$0xff] %vm5852, %v6307
        %6332 = vst.msk [vmem:[%s244 + $0x30] sm:$0xff] %vm5852, %v6308
        %6333 = vst.msk [vmem:[%s244 + $0x38] sm:$0xff] %vm5852, %v6309
        %6334 = vst.msk [vmem:[%s244 + $0x40] sm:$0xff] %vm5852, %v6310
        %6335 = vst.msk [vmem:[%s244 + $0x48] sm:$0xff] %vm5852, %v6311
        %6336 = vst.msk [vmem:[%s244 + $0x50] sm:$0xff] %vm5852, %v6312
        %6337 = vst.msk [vmem:[%s244 + $0x58] sm:$0xff] %vm5852, %v6313
        %6338 = vst.msk [vmem:[%s244 + $0x60] sm:$0xff] %vm5852, %v6314
        %6339 = vst.msk [vmem:[%s244 + $0x68] sm:$0xff] %vm5852, %v6315
        %6340 = vst.msk [vmem:[%s244 + $0x70] sm:$0xff] %vm5852, %v6316
        %6341 = vst.msk [vmem:[%s244 + $0x78] sm:$0xff] %vm5852, %v6317
        %6342 = vst.msk [vmem:[%s244 + $0x80] sm:$0xff] %vm5852, %v6318
        %6343 = vst.msk [vmem:[%s244 + $0x88] sm:$0xff] %vm5852, %v6319
        %6344 = vst.msk [vmem:[%s244 + $0x90] sm:$0xff] %vm5852, %v6320
        %6345 = vst.msk [vmem:[%s244 + $0x98] sm:$0xff] %vm5852, %v6321
        %6346 = vst.msk [vmem:[%s244 + $0xa0] sm:$0xff] %vm5852, %v6322
        %6347 = vst.msk [vmem:[%s244 + $0xa8] sm:$0xff] %vm5852, %v6323
        %6348 = vst.msk [vmem:[%s244 + $0xb0] sm:$0xff] %vm5852, %v6324
        %6349 = vst.msk [vmem:[%s244 + $0xb8] sm:$0xff] %vm5852, %v6325
        %s6350 = sand.u32 %s159, 1
        %s6351 = scalar_lea.sflag [#allocation4], %s6350
        %s6352 = sand.u32 %s159, 1
        %s6353 = smul.addr %s6352, 192
        %s6354 = scalar_lea.vmem [#allocation3], %s6353
        // Predicated region
        $region45: #{tpu_custom_call.1} parent=43 // pred_check
          %p6355 = pneg %p169
        $region46: #{tpu_custom_call.1} parent=43 // pred_check_branch
          %6357 = sbr.rel (%p6355) target = $region48
        $region47: #{tpu_custom_call.1} parent=43 // pred_region
          %s6358 = smul.u32 8, %s20
          %s6360 = ssub.s32 3072, 3072
          %6361 = vsyncadd %s6351, %s6360
          %s6362 = smul.addr %s6358, 3
          %s6363 = smul.addr %s6362, 128
          %s6364 = scalar_lea.hbm %s6, %s6363
          %s6365 = sshll.u32 %s6354, 4
          %s6366 = int_to_ptr.vmem [resolvable:$true] %s6365
          %6371 = dma.vmem_to_hbm [thread:$0]  %s6366, 3072, %s6364, %s6351, 128, 128, 8
        $region48: #{tpu_custom_call.1} parent=43 // pred_fallthru
          _
      $region44: #{tpu_custom_call.1} parent=5 // pred_fallthru
        _
      %p6372 = scmp.le.s32.totalorder 2, %s15
      // Predicated region
      $region49: #{tpu_custom_call.1} parent=5 // pred_check
        %p6373 = pneg %p6372
      $region50: #{tpu_custom_call.1} parent=5 // pred_check_branch
        %6375 = sbr.rel (%p6373) target = $region52
      $region51: #{tpu_custom_call.1} parent=5 // pred_region
        %s6376 = ssub.s32 %s15, 2
        // Predicated region
        $region53: #{tpu_custom_call.1} parent=51 // pred_check
          %p6377 = pneg %p175
        $region54: #{tpu_custom_call.1} parent=51 // pred_check_branch
          %6379 = sbr.rel (%p6377) target = $region56
        $region55: #{tpu_custom_call.1} parent=51 // pred_region
          %s6380 = sand.u32 %s160, 1
          %s6381 = scalar_lea.sflag [#allocation4], %s6380
          %s6382 = sand.u32 %s160, 1
          %s6383 = smul.addr %s6382, 192
          %s6384 = scalar_lea.vmem [#allocation3], %s6383
          %6385 = dma.done %s6381, 3072
        $region56: #{tpu_custom_call.1} parent=51 // pred_fallthru
          _
      $region52: #{tpu_custom_call.1} parent=5 // pred_fallthru
        _
    $region6: #{tpu_custom_call.1} parent=1 // loop_footer
      %s19 = sadd.s32 1, %s15
    $region7: #{tpu_custom_call.1} parent=1 // loop_footer_branch
      %14 = sbr.rel target = $region3
    $region8: #{tpu_custom_call.1} parent=1 // loop_exit
      _
    %6386 = vsyncpa [#allocation4], 1
    %s6387 = scalar_lea.sflag [#allocation4], 1
    %6388 = vsyncpa %s6387, 1

</llo_original>
